<compile_context>
chip_gen: v7x
topology: tpu7x:2x2x1
jax: 0.10.0
libtpu: 0.0.40
codegen_flags: <defaults>
</compile_context>

<pallas_src>
import numpy as np
import jax
import jax.numpy as jnp
from jax import lax
from jax.experimental import pallas as pl
from jax.experimental.pallas import tpu as pltpu

# ---- model hyperparameters (match PartAtt defaults) -------------------------
IN_DIM = 16                        # small synthetic input feature dim
OUT_DIM = 128                      # PartAtt default out_dim
N_LAYERS = 3                       # PartAtt default -> 2 SelfAttLayer blocks
N_HIDDEN = N_LAYERS - 1
HEADS = 4
REDUCE = 2
DIM_HEAD = OUT_DIM // HEADS        # 32
DHQ = DIM_HEAD // REDUCE           # 16 (q/k per-head dim)
QK_DIM = OUT_DIM // REDUCE         # 64 (== HEADS * DHQ)
SCALE = DIM_HEAD ** (-0.5)         # faithful to PyTorch: dim_head**-0.5
FFN_DIM = 2 * OUT_DIM              # 256
LN_EPS = 1e-5
SEQ_LEN = 8                        # tokens per sequence (L)

# ---- packing layout ----------------------------------------------------------
IN_PAD = 128                       # input feature dim zero-padded to 128 lanes
W_LANES = 2 * OUT_DIM              # 256 lanes in the weight/bias slabs
LAYER_W_ROWS = 3 * OUT_DIM + FFN_DIM   # qkv(128) + concat(128) + ffn1(128) + ffn2(256)
LAYER_B_ROWS = 8                   # qkv_b, cb, f1b, f2b, n1g, n1b, n2g, n2b
TB = 16                            # sequences per grid tile -> 128-row tiles


def _round_up(a, m):
    return (a + m - 1) // m * m


# ---------------------------- kernel helpers ----------------------------------
def _bf16_dot(a, w):
    """Single-pass MXU dot: bf16 operands, f32 accumulation."""
    return jnp.dot(a.astype(jnp.bfloat16), w, preferred_element_type=jnp.float32)


def _layernorm(x, gamma, beta):
    """Single-pass LayerNorm: var = E[x^2] - mu^2 (f32, eps matches PyTorch)."""
    inv_n = 1.0 / x.shape[-1]
    mu = jnp.sum(x, axis=-1, keepdims=True) * inv_n
    ex2 = jnp.sum(x * x, axis=-1, keepdims=True) * inv_n
    var = ex2 - mu * mu
    return (x - mu) * lax.rsqrt(var + LN_EPS) * gamma + beta


# ---------------------------- fused kernel ------------------------------------
def make_kernel(n_layers, tb, L):
    HL = HEADS * L
    R = tb * L

    def kernel(x_ref, w_ref, b_ref, m_ref, out_ref):
        # Attention block-diagonal constants (loaded once, reused by every layer).
        k_mask = m_ref[0:HL, 0:QK_DIM]             # (HL, 64)  0/1
        g_mat = m_ref[HL:2 * HL, 0:HL]             # (HL, HL)  same-head group sums
        v_mask = m_ref[2 * HL:3 * HL, 0:OUT_DIM]   # (HL, 128) 0/1

        # in_layer: x @ W_in + b_in (input features zero-padded to 128 -> exact).
        x = _bf16_dot(x_ref[...], w_ref[0:IN_PAD, 0:OUT_DIM]) + b_ref[0:1, 0:OUT_DIM]

        for i in range(n_layers):
            wb = IN_PAD + i * LAYER_W_ROWS
            bb = 1 + i * LAYER_B_ROWS

            # Fused QKV projection, one bf16 MXU pass; slab = [Wv | Wq*scale | Wk].
            qkv = _bf16_dot(x, w_ref[wb:wb + OUT_DIM, :]) + b_ref[bb:bb + 1, :]
            v = qkv[:, 0:OUT_DIM]                      # (R, 128) vreg-aligned slice
            q = qkv[:, OUT_DIM:OUT_DIM + QK_DIM]       # (R, 64)  scale already folded
            k = qkv[:, OUT_DIM + QK_DIM:]              # (R, 64)

            # Per-sequence, block-diagonal-over-heads attention.
            q3 = q.reshape(tb, L, QK_DIM).astype(jnp.bfloat16)
            k3 = k.reshape(tb, L, QK_DIM)
            v3 = v.reshape(tb, L, OUT_DIM)
            # tile along sublanes, mask in f32 (exact 0/1), cast at the MXU operand
            k_bd = (jnp.concatenate([k3] * HEADS, axis=1) * k_mask).astype(jnp.bfloat16)
            v_bd = (jnp.concatenate([v3] * HEADS, axis=1) * v_mask).astype(jnp.bfloat16)

            # All head scores per sequence in one batched bf16 MXU pass: (tb, L, HL).
            scores = jnp.einsum('bld,brd->blr', q3, k_bd,
                                preferred_element_type=jnp.float32)
            # Global per-row max shift (constant per row -> identical softmax).
            scores = scores - jnp.max(scores, axis=-1, keepdims=True)
            e = jnp.exp(scores).reshape(R, HL)
            # Per-head-group denominators; kept f32 (tiny dot) per correctness note.
            denom = jnp.dot(e, g_mat, preferred_element_type=jnp.float32)
            att = (e * pl.reciprocal(denom, approx=True)).reshape(tb, L, HL)

            # Heads come out already concatenated in the right lane order.
            attn_out = jnp.einsum('blr,brd->bld', att.astype(jnp.bfloat16), v_bd,
                                  preferred_element_type=jnp.float32).reshape(R, OUT_DIM)

            # Residual + concat projection + norm1.
            x = (x + _bf16_dot(attn_out, w_ref[wb + OUT_DIM:wb + 2 * OUT_DIM, 0:OUT_DIM])
                 + b_ref[bb + 1:bb + 2, 0:OUT_DIM])
            x = _layernorm(x, b_ref[bb + 4:bb + 5, 0:OUT_DIM],
                           b_ref[bb + 5:bb + 6, 0:OUT_DIM])

            # FFN (Linear -> ReLU -> Linear); dropout p=0.0 is identity.
            h = jnp.maximum(
                _bf16_dot(x, w_ref[wb + 2 * OUT_DIM:wb + 3 * OUT_DIM, :])
                + b_ref[bb + 2:bb + 3, :], 0.0)
            x = (x + _bf16_dot(h, w_ref[wb + 3 * OUT_DIM:wb + 3 * OUT_DIM + FFN_DIM,
                                        0:OUT_DIM])
                 + b_ref[bb + 3:bb + 4, 0:OUT_DIM])
            x = _layernorm(x, b_ref[bb + 6:bb + 7, 0:OUT_DIM],
                           b_ref[bb + 7:bb + 8, 0:OUT_DIM])

        out_ref[...] = x.astype(out_ref.dtype)

    return kernel


# ---------------------------- wrapper -----------------------------------------
def _build_mask_slab(L):
    """Host-built (numpy) block-diagonal attention constants packed into one array."""
    HL = HEADS * L
    r = np.arange(HL)[:, None]
    k_mask = (r // L == (np.arange(QK_DIM)[None, :] // DHQ)).astype(np.float32)
    g_mat = (r // L == (np.arange(HL)[None, :] // L)).astype(np.float32)
    v_mask = (r // L == (np.arange(OUT_DIM)[None, :] // DIM_HEAD)).astype(np.float32)
    m = np.zeros((3 * HL, OUT_DIM), np.float32)
    m[0:HL, 0:QK_DIM] = k_mask
    m[HL:2 * HL, 0:HL] = g_mat
    m[2 * HL:3 * HL, :] = v_mask
    return jnp.asarray(m)


def _cost_estimate(total_rows, L, n_layers, args, out_bytes):
    HL = HEADS * L
    per_row_layer = (2 * OUT_DIM * (2 * OUT_DIM)    # fused QKV
                     + 2 * QK_DIM * HL              # scores
                     + 2 * HL * HL                  # per-head denom sums
                     + 2 * HL * OUT_DIM             # att @ V_bd
                     + 2 * OUT_DIM * OUT_DIM        # concat proj
                     + 2 * OUT_DIM * FFN_DIM        # ffn1
                     + 2 * FFN_DIM * OUT_DIM)       # ffn2
    flops = int(total_rows * (2 * IN_PAD * OUT_DIM + n_layers * per_row_layer))
    transcendentals = int(total_rows * n_layers * (2 * HL + 2))
    bytes_accessed = int(sum(int(a.size) * a.dtype.itemsize for a in args) + out_bytes)
    return pl.CostEstimate(flops=flops, transcendentals=transcendentals,
                           bytes_accessed=bytes_accessed)


def part_att_forward(xs, w_slab, b_slab, *, tb=TB):
    """Batched PartAtt forward: xs is (B, L, in_dim) (or a single (L, in_dim)
    sequence); each sequence is processed exactly like PartAtt.forward."""
    squeeze = xs.ndim == 2
    if squeeze:
        xs = xs[None]
    B, L, d_in = xs.shape
    assert d_in <= IN_PAD and HEADS * L <= OUT_DIM and L % 8 == 0

    n_layers = (w_slab.shape[0] - IN_PAD) // LAYER_W_ROWS
    Bp = _round_up(B, tb)
    R = tb * L

    # zero-pad batch to a multiple of the tile and features to IN_PAD (exact).
    x_pad = jnp.zeros((Bp, L, IN_PAD), jnp.float32)
    x_pad = x_pad.at[:B, :, :d_in].set(xs.astype(jnp.float32))
    x_flat = x_pad.reshape(Bp * L, IN_PAD)

    m_slab = _build_mask_slab(L)
    kernel = make_kernel(n_layers, tb, L)
    args = (x_flat, w_slab, b_slab, m_slab)

    out = pl.pallas_call(
        kernel,
        out_shape=jax.ShapeDtypeStruct((Bp * L, OUT_DIM), jnp.float32),
        grid=(Bp // tb,),
        in_specs=[
            pl.BlockSpec((R, IN_PAD), lambda i: (i, 0)),      # activation tile
            pl.BlockSpec(w_slab.shape, lambda i: (0, 0)),     # bf16 weights, resident
            pl.BlockSpec(b_slab.shape, lambda i: (0, 0)),     # f32 biases/LN, resident
            pl.BlockSpec(m_slab.shape, lambda i: (0, 0)),     # f32 attn masks, resident
        ],
        out_specs=pl.BlockSpec((R, OUT_DIM), lambda i: (i, 0)),
        compiler_params=pltpu.CompilerParams(dimension_semantics=("parallel",)),
        cost_estimate=_cost_estimate(Bp * L, L, n_layers, args, Bp * L * OUT_DIM * 4),
    )(*args)

    out = out.reshape(Bp, L, OUT_DIM)[:B]
    return out[0] if squeeze else out


# ---------------------------- param init --------------------------------------
def init_params(key):
    """Builds the packed slabs (kernel inputs) and an unpacked copy for the reference."""
    def dense(k, fan_in, fan_out):
        kw, kb = jax.random.split(k)
        w = jax.random.normal(kw, (fan_in, fan_out), jnp.float32) * 0.05
        b = jax.random.normal(kb, (fan_out,), jnp.float32) * 0.01
        return w, b

    keys = jax.random.split(key, 1 + N_HIDDEN)
    in_w, in_b = dense(keys[0], IN_DIM, OUT_DIM)

    w_rows = IN_PAD + N_HIDDEN * LAYER_W_ROWS
    b_rows = _round_up(1 + N_HIDDEN * LAYER_B_ROWS, 8)
    w_slab = jnp.zeros((w_rows, W_LANES), jnp.float32)
    b_slab = jnp.zeros((b_rows, W_LANES), jnp.float32)

    w_slab = w_slab.at[:IN_DIM, :OUT_DIM].set(in_w)      # rows 16..127 stay zero
    b_slab = b_slab.at[0, :OUT_DIM].set(in_b)

    layers = []
    for i in range(N_HIDDEN):
        ks = jax.random.split(keys[1 + i], 6)
        qw, qb = dense(ks[0], OUT_DIM, QK_DIM)
        kw, kb = dense(ks[1], OUT_DIM, QK_DIM)
        vw, vb = dense(ks[2], OUT_DIM, OUT_DIM)
        cw, cb = dense(ks[3], OUT_DIM, OUT_DIM)
        f1w, f1b = dense(ks[4], OUT_DIM, FFN_DIM)
        f2w, f2b = dense(ks[5], FFN_DIM, OUT_DIM)
        n1g = jnp.ones((OUT_DIM,), jnp.float32); n1b = jnp.zeros((OUT_DIM,), jnp.float32)
        n2g = jnp.ones((OUT_DIM,), jnp.float32); n2b = jnp.zeros((OUT_DIM,), jnp.float32)

        # fold the softmax scale into the q projection (static weight transform)
        qw_s, qb_s = qw * SCALE, qb * SCALE

        wb = IN_PAD + i * LAYER_W_ROWS
        w_slab = w_slab.at[wb:wb + OUT_DIM, 0:OUT_DIM].set(vw)                    # Wv
        w_slab = w_slab.at[wb:wb + OUT_DIM, OUT_DIM:OUT_DIM + QK_DIM].set(qw_s)   # Wq*scale
        w_slab = w_slab.at[wb:wb + OUT_DIM, OUT_DIM + QK_DIM:].set(kw)            # Wk
        w_slab = w_slab.at[wb + OUT_DIM:wb + 2 * OUT_DIM, 0:OUT_DIM].set(cw)
        w_slab = w_slab.at[wb + 2 * OUT_DIM:wb + 3 * OUT_DIM, :].set(f1w)
        w_slab = w_slab.at[wb + 3 * OUT_DIM:wb + 3 * OUT_DIM + FFN_DIM, 0:OUT_DIM].set(f2w)

        bb = 1 + i * LAYER_B_ROWS
        b_slab = b_slab.at[bb, 0:OUT_DIM].set(vb)
        b_slab = b_slab.at[bb, OUT_DIM:OUT_DIM + QK_DIM].set(qb_s)
        b_slab = b_slab.at[bb, OUT_DIM + QK_DIM:].set(kb)
        b_slab = b_slab.at[bb + 1, 0:OUT_DIM].set(cb)
        b_slab = b_slab.at[bb + 2, :].set(f1b)
        b_slab = b_slab.at[bb + 3, 0:OUT_DIM].set(f2b)
        b_slab = b_slab.at[bb + 4, 0:OUT_DIM].set(n1g)
        b_slab = b_slab.at[bb + 5, 0:OUT_DIM].set(n1b)
        b_slab = b_slab.at[bb + 6, 0:OUT_DIM].set(n2g)
        b_slab = b_slab.at[bb + 7, 0:OUT_DIM].set(n2b)

        layers.append(dict(
            qw=qw_s.astype(jnp.bfloat16), qb=qb_s, kw=kw.astype(jnp.bfloat16), kb=kb,
            vw=vw.astype(jnp.bfloat16), vb=vb, cw=cw.astype(jnp.bfloat16), cb=cb,
            f1w=f1w.astype(jnp.bfloat16), f1b=f1b, f2w=f2w.astype(jnp.bfloat16), f2b=f2b,
            n1g=n1g, n1b=n1b, n2g=n2g, n2b=n2b))

    ref_params = dict(in_w=in_w.astype(jnp.bfloat16), in_b=in_b, layers=layers)
    return (w_slab.astype(jnp.bfloat16), b_slab), ref_params


# ---------------------------- reference (pure JAX) -----------------------------
def reference_forward(xs, params):
    """Structured exactly like the PyTorch module (per-head reshape/transpose
    attention).  The softmax scale is pre-folded into Wq/bq, which is
    mathematically identical to PyTorch's `q * self.scale`."""
    def one_seq(x):
        x = jnp.dot(x.astype(jnp.bfloat16), params["in_w"],
                    preferred_element_type=jnp.float32) + params["in_b"]
        L = x.shape[0]
        for p in params["layers"]:
            q = jnp.dot(x.astype(jnp.bfloat16), p["qw"],
                        preferred_element_type=jnp.float32) + p["qb"]
            k = jnp.dot(x.astype(jnp.bfloat16), p["kw"],
                        preferred_element_type=jnp.float32) + p["kb"]
            v = jnp.dot(x.astype(jnp.bfloat16), p["vw"],
                        preferred_element_type=jnp.float32) + p["vb"]
            q = q.reshape(L, HEADS, DHQ).transpose(1, 0, 2)
            k = k.reshape(L, HEADS, DHQ).transpose(1, 0, 2)
            v = v.reshape(L, HEADS, DIM_HEAD).transpose(1, 0, 2)
            s = jnp.einsum('hqd,hkd->hqk', q.astype(jnp.bfloat16), k.astype(jnp.bfloat16),
                           preferred_element_type=jnp.float32)
            att = jax.nn.softmax(s, axis=-1)
            o = jnp.einsum('hqk,hkd->hqd', att.astype(jnp.bfloat16), v.astype(jnp.bfloat16),
                           preferred_element_type=jnp.float32)
            o = o.transpose(1, 0, 2).reshape(L, OUT_DIM)
            x = x + jnp.dot(o.astype(jnp.bfloat16), p["cw"],
                            preferred_element_type=jnp.float32) + p["cb"]
            mu = x.mean(-1, keepdims=True)
            var = ((x - mu) ** 2).mean(-1, keepdims=True)
            x = (x - mu) / jnp.sqrt(var + LN_EPS) * p["n1g"] + p["n1b"]
            h = jnp.maximum(jnp.dot(x.astype(jnp.bfloat16), p["f1w"],
                                    preferred_element_type=jnp.float32) + p["f1b"], 0.0)
            x = x + jnp.dot(h.astype(jnp.bfloat16), p["f2w"],
                            preferred_element_type=jnp.float32) + p["f2b"]
            mu = x.mean(-1, keepdims=True)
            var = ((x - mu) ** 2).mean(-1, keepdims=True)
            x = (x - mu) / jnp.sqrt(var + LN_EPS) * p["n2g"] + p["n2b"]
        return x
    return jax.vmap(one_seq)(xs)


# ---------------------------- main ---------------------------------------------
if __name__ == "__main__":
    key = jax.random.PRNGKey(0)
    k_x, k_p = jax.random.split(key)

    B = 64   # batch of independent sequences (PartAtt.forward applied to each)
    xs = jax.random.normal(k_x, (B, SEQ_LEN, IN_DIM), jnp.float32)
    (w_slab, b_slab), ref_params = init_params(k_p)

    out = part_att_forward(xs, w_slab, b_slab)
    out = jax.block_until_ready(out)

    ref = reference_forward(xs, ref_params)
    assert out.shape == (B, SEQ_LEN, OUT_DIM)
    err = float(jnp.max(jnp.abs(out - ref)))
    # tolerance covers the approx-reciprocal softmax normalization; both sides use
    # the identical bf16-operand / f32-accumulate matmul recipe.
    assert jnp.allclose(out, ref, atol=5e-3, rtol=5e-3), f"max abs err {err}"

    print("KERNEL_OK")
</pallas_src>

<mosaic_0001>
module attributes {stable_mosaic.version = 11 : i64} {
  func.func @kernel(%arg0: i32, %arg1: memref<128x128xf32, #tpu.memory_space<vmem>>, %arg2: memref<1408x256xbf16, #tpu.memory_space<vmem>>, %arg3: memref<24x256xf32, #tpu.memory_space<vmem>>, %arg4: memref<96x128xf32, #tpu.memory_space<vmem>>, %arg5: memref<128x128xf32, #tpu.memory_space<vmem>>) attributes {dimension_semantics = [#tpu.dimension_semantics<parallel>], iteration_bounds = array<i64: 4>, scalar_prefetch = 0 : i64, scratch_operands = 0 : i64, tpu.core_type = #tpu.core_type<tc>, window_params = [{transform_indices = @transform_0, window_bounds = array<i64: 128, 128>}, {pipeline_mode = #tpu.pipeline_mode<synchronous>, transform_indices = @transform_1, window_bounds = array<i64: 1408, 256>}, {pipeline_mode = #tpu.pipeline_mode<synchronous>, transform_indices = @transform_2, window_bounds = array<i64: 24, 256>}, {pipeline_mode = #tpu.pipeline_mode<synchronous>, transform_indices = @transform_3, window_bounds = array<i64: 96, 128>}, {transform_indices = @transform_4, window_bounds = array<i64: 128, 128>}]} {
    %c0 = arith.constant 0 : index
    %c0_0 = arith.constant 0 : index
    %0 = vector.load %arg4[%c0, %c0_0] : memref<96x128xf32, #tpu.memory_space<vmem>>, vector<32x64xf32>
    %c32 = arith.constant 32 : index
    %c0_1 = arith.constant 0 : index
    %1 = vector.load %arg4[%c32, %c0_1] : memref<96x128xf32, #tpu.memory_space<vmem>>, vector<32x32xf32>
    %c64 = arith.constant 64 : index
    %c0_2 = arith.constant 0 : index
    %2 = vector.load %arg4[%c64, %c0_2] : memref<96x128xf32, #tpu.memory_space<vmem>>, vector<32x128xf32>
    %c0_3 = arith.constant 0 : index
    %c0_4 = arith.constant 0 : index
    %3 = vector.load %arg1[%c0_3, %c0_4] : memref<128x128xf32, #tpu.memory_space<vmem>>, vector<128x128xf32>
    %c0_5 = arith.constant 0 : index
    %c0_6 = arith.constant 0 : index
    %4 = vector.load %arg2[%c0_5, %c0_6] : memref<1408x256xbf16, #tpu.memory_space<vmem>>, vector<128x128xbf16>
    %5 = arith.truncf %3 : vector<128x128xf32> to vector<128x128xbf16>
    %cst = arith.constant dense<0.000000e+00> : vector<128x128xf32>
    %6 = tpu.matmul %5, %4, %cst {dimension_numbers = #tpu.dot_dimension_numbers<[1], [0], [0], [1], [0, 0, 1, 1], [], []>} : vector<128x128xbf16>, vector<128x128xbf16>, vector<128x128xf32> -> vector<128x128xf32>
    %c0_7 = arith.constant 0 : index
    %c0_8 = arith.constant 0 : index
    %7 = vector.load %arg3[%c0_7, %c0_8] : memref<24x256xf32, #tpu.memory_space<vmem>>, vector<1x128xf32>
    %8 = vector.broadcast %7 : vector<1x128xf32> to vector<128x128xf32>
    %9 = arith.addf %6, %8 : vector<128x128xf32>
    %c128 = arith.constant 128 : index
    %c0_9 = arith.constant 0 : index
    %10 = vector.load %arg2[%c128, %c0_9] : memref<1408x256xbf16, #tpu.memory_space<vmem>>, vector<128x256xbf16>
    %11 = arith.truncf %9 : vector<128x128xf32> to vector<128x128xbf16>
    %cst_10 = arith.constant dense<0.000000e+00> : vector<128x256xf32>
    %12 = tpu.matmul %11, %10, %cst_10 {dimension_numbers = #tpu.dot_dimension_numbers<[1], [0], [0], [1], [0, 0, 1, 1], [], []>} : vector<128x128xbf16>, vector<128x256xbf16>, vector<128x256xf32> -> vector<128x256xf32>
    %c1 = arith.constant 1 : index
    %c0_11 = arith.constant 0 : index
    %13 = vector.load %arg3[%c1, %c0_11] : memref<24x256xf32, #tpu.memory_space<vmem>>, vector<1x256xf32>
    %14 = vector.broadcast %13 : vector<1x256xf32> to vector<128x256xf32>
    %15 = arith.addf %12, %14 : vector<128x256xf32>
    %16 = vector.extract_strided_slice %15 {offsets = [0, 0], sizes = [128, 128], strides = [1, 1]} : vector<128x256xf32> to vector<128x128xf32>
    %17 = vector.extract_strided_slice %15 {offsets = [0, 128], sizes = [128, 64], strides = [1, 1]} : vector<128x256xf32> to vector<128x64xf32>
    %18 = vector.extract_strided_slice %15 {offsets = [0, 192], sizes = [128, 64], strides = [1, 1]} : vector<128x256xf32> to vector<128x64xf32>
    %19 = vector.shape_cast %17 : vector<128x64xf32> to vector<16x8x64xf32>
    %20 = arith.truncf %19 : vector<16x8x64xf32> to vector<16x8x64xbf16>
    %21 = vector.shape_cast %18 : vector<128x64xf32> to vector<16x8x64xf32>
    %22 = vector.shape_cast %16 : vector<128x128xf32> to vector<16x8x128xf32>
    %23 = tpu.concatenate %21, %21, %21, %21 in 1 : vector<16x8x64xf32>, vector<16x8x64xf32>, vector<16x8x64xf32>, vector<16x8x64xf32> -> vector<16x32x64xf32>
    %24 = vector.shape_cast %0 : vector<32x64xf32> to vector<1x32x64xf32>
    %25 = vector.broadcast %24 : vector<1x32x64xf32> to vector<16x32x64xf32>
    %26 = arith.mulf %23, %25 : vector<16x32x64xf32>
    %27 = arith.truncf %26 : vector<16x32x64xf32> to vector<16x32x64xbf16>
    %28 = tpu.concatenate %22, %22, %22, %22 in 1 : vector<16x8x128xf32>, vector<16x8x128xf32>, vector<16x8x128xf32>, vector<16x8x128xf32> -> vector<16x32x128xf32>
    %29 = vector.shape_cast %2 : vector<32x128xf32> to vector<1x32x128xf32>
    %30 = vector.broadcast %29 : vector<1x32x128xf32> to vector<16x32x128xf32>
    %31 = arith.mulf %28, %30 : vector<16x32x128xf32>
    %32 = arith.truncf %31 : vector<16x32x128xf32> to vector<16x32x128xbf16>
    "tpu.trace_start"() <{level = 10 : i32, message = "bld,brd->blr"}> : () -> ()
    %cst_12 = arith.constant dense<0.000000e+00> : vector<16x8x32xf32>
    %33 = tpu.matmul %20, %27, %cst_12 {dimension_numbers = #tpu.dot_dimension_numbers<[2], [2], [1], [1], [0, 0, 0, 1, 1, 1], [0], [0]>} : vector<16x8x64xbf16>, vector<16x32x64xbf16>, vector<16x8x32xf32> -> vector<16x8x32xf32>
    "tpu.trace_stop"() : () -> ()
    %cst_13 = arith.constant dense<0xFF800000> : vector<16x8xf32>
    %34 = vector.multi_reduction <maximumf>, %33, %cst_13 [2] : vector<16x8x32xf32> to vector<16x8xf32>
    %35 = vector.shape_cast %34 : vector<16x8xf32> to vector<16x8x1xf32>
    %36 = vector.broadcast %35 : vector<16x8x1xf32> to vector<16x8x32xf32>
    %37 = arith.subf %33, %36 : vector<16x8x32xf32>
    %38 = math.exp %37 : vector<16x8x32xf32>
    %39 = vector.shape_cast %38 : vector<16x8x32xf32> to vector<128x32xf32>
    %cst_14 = arith.constant dense<0.000000e+00> : vector<128x32xf32>
    %40 = tpu.matmul %39, %1, %cst_14 {dimension_numbers = #tpu.dot_dimension_numbers<[1], [0], [0], [1], [0, 0, 1, 1], [], []>} : vector<128x32xf32>, vector<32x32xf32>, vector<128x32xf32> -> vector<128x32xf32>
    %41 = tpu.reciprocal %40 {approx = true} : vector<128x32xf32> -> vector<128x32xf32>
    %42 = arith.mulf %39, %41 : vector<128x32xf32>
    %43 = vector.shape_cast %42 : vector<128x32xf32> to vector<16x8x32xf32>
    %44 = arith.truncf %43 : vector<16x8x32xf32> to vector<16x8x32xbf16>
    "tpu.trace_start"() <{level = 10 : i32, message = "blr,brd->bld"}> : () -> ()
    %cst_15 = arith.constant dense<0.000000e+00> : vector<16x8x128xf32>
    %45 = tpu.matmul %44, %32, %cst_15 {dimension_numbers = #tpu.dot_dimension_numbers<[2], [1], [1], [2], [0, 0, 0, 1, 1, 2], [0], [0]>} : vector<16x8x32xbf16>, vector<16x32x128xbf16>, vector<16x8x128xf32> -> vector<16x8x128xf32>
    "tpu.trace_stop"() : () -> ()
    %46 = vector.shape_cast %45 : vector<16x8x128xf32> to vector<128x128xf32>
    %c256 = arith.constant 256 : index
    %c0_16 = arith.constant 0 : index
    %47 = vector.load %arg2[%c256, %c0_16] : memref<1408x256xbf16, #tpu.memory_space<vmem>>, vector<128x128xbf16>
    %48 = arith.truncf %46 : vector<128x128xf32> to vector<128x128xbf16>
    %cst_17 = arith.constant dense<0.000000e+00> : vector<128x128xf32>
    %49 = tpu.matmul %48, %47, %cst_17 {dimension_numbers = #tpu.dot_dimension_numbers<[1], [0], [0], [1], [0, 0, 1, 1], [], []>} : vector<128x128xbf16>, vector<128x128xbf16>, vector<128x128xf32> -> vector<128x128xf32>
    %50 = arith.addf %9, %49 : vector<128x128xf32>
    %c2 = arith.constant 2 : index
    %c0_18 = arith.constant 0 : index
    %51 = vector.load %arg3[%c2, %c0_18] : memref<24x256xf32, #tpu.memory_space<vmem>>, vector<1x128xf32>
    %52 = vector.broadcast %51 : vector<1x128xf32> to vector<128x128xf32>
    %53 = arith.addf %50, %52 : vector<128x128xf32>
    %c5 = arith.constant 5 : index
    %c0_19 = arith.constant 0 : index
    %54 = vector.load %arg3[%c5, %c0_19] : memref<24x256xf32, #tpu.memory_space<vmem>>, vector<1x128xf32>
    %c6 = arith.constant 6 : index
    %c0_20 = arith.constant 0 : index
    %55 = vector.load %arg3[%c6, %c0_20] : memref<24x256xf32, #tpu.memory_space<vmem>>, vector<1x128xf32>
    %cst_21 = arith.constant dense<0.000000e+00> : vector<128xf32>
    %56 = vector.multi_reduction <add>, %53, %cst_21 [1] : vector<128x128xf32> to vector<128xf32>
    %57 = vector.shape_cast %56 : vector<128xf32> to vector<128x1xf32>
    %cst_22 = arith.constant 7.812500e-03 : f32
    %58 = vector.broadcast %cst_22 : f32 to vector<128x1xf32>
    %59 = arith.mulf %57, %58 : vector<128x1xf32>
    %60 = arith.mulf %53, %53 : vector<128x128xf32>
    %cst_23 = arith.constant dense<0.000000e+00> : vector<128xf32>
    %61 = vector.multi_reduction <add>, %60, %cst_23 [1] : vector<128x128xf32> to vector<128xf32>
    %62 = vector.shape_cast %61 : vector<128xf32> to vector<128x1xf32>
    %cst_24 = arith.constant 7.812500e-03 : f32
    %63 = vector.broadcast %cst_24 : f32 to vector<128x1xf32>
    %64 = arith.mulf %62, %63 : vector<128x1xf32>
    %65 = arith.mulf %59, %59 : vector<128x1xf32>
    %66 = arith.subf %64, %65 : vector<128x1xf32>
    %67 = vector.broadcast %59 : vector<128x1xf32> to vector<128x128xf32>
    %68 = arith.subf %53, %67 : vector<128x128xf32>
    %cst_25 = arith.constant 9.99999974E-6 : f32
    %69 = vector.broadcast %cst_25 : f32 to vector<128x1xf32>
    %70 = arith.addf %66, %69 : vector<128x1xf32>
    %71 = math.rsqrt %70 : vector<128x1xf32>
    %72 = vector.broadcast %71 : vector<128x1xf32> to vector<128x128xf32>
    %73 = arith.mulf %68, %72 : vector<128x128xf32>
    %74 = vector.broadcast %54 : vector<1x128xf32> to vector<128x128xf32>
    %75 = arith.mulf %73, %74 : vector<128x128xf32>
    %76 = vector.broadcast %55 : vector<1x128xf32> to vector<128x128xf32>
    %77 = arith.addf %75, %76 : vector<128x128xf32>
    %c384 = arith.constant 384 : index
    %c0_26 = arith.constant 0 : index
    %78 = vector.load %arg2[%c384, %c0_26] : memref<1408x256xbf16, #tpu.memory_space<vmem>>, vector<128x256xbf16>
    %79 = arith.truncf %77 : vector<128x128xf32> to vector<128x128xbf16>
    %cst_27 = arith.constant dense<0.000000e+00> : vector<128x256xf32>
    %80 = tpu.matmul %79, %78, %cst_27 {dimension_numbers = #tpu.dot_dimension_numbers<[1], [0], [0], [1], [0, 0, 1, 1], [], []>} : vector<128x128xbf16>, vector<128x256xbf16>, vector<128x256xf32> -> vector<128x256xf32>
    %c3 = arith.constant 3 : index
    %c0_28 = arith.constant 0 : index
    %81 = vector.load %arg3[%c3, %c0_28] : memref<24x256xf32, #tpu.memory_space<vmem>>, vector<1x256xf32>
    %82 = vector.broadcast %81 : vector<1x256xf32> to vector<128x256xf32>
    %83 = arith.addf %80, %82 : vector<128x256xf32>
    %cst_29 = arith.constant 0.000000e+00 : f32
    %84 = vector.broadcast %cst_29 : f32 to vector<128x256xf32>
    %85 = arith.maximumf %83, %84 : vector<128x256xf32>
    %c512 = arith.constant 512 : index
    %c0_30 = arith.constant 0 : index
    %86 = vector.load %arg2[%c512, %c0_30] : memref<1408x256xbf16, #tpu.memory_space<vmem>>, vector<256x128xbf16>
    %87 = arith.truncf %85 : vector<128x256xf32> to vector<128x256xbf16>
    %cst_31 = arith.constant dense<0.000000e+00> : vector<128x128xf32>
    %88 = tpu.matmul %87, %86, %cst_31 {dimension_numbers = #tpu.dot_dimension_numbers<[1], [0], [0], [1], [0, 0, 1, 1], [], []>} : vector<128x256xbf16>, vector<256x128xbf16>, vector<128x128xf32> -> vector<128x128xf32>
    %89 = arith.addf %77, %88 : vector<128x128xf32>
    %c4 = arith.constant 4 : index
    %c0_32 = arith.constant 0 : index
    %90 = vector.load %arg3[%c4, %c0_32] : memref<24x256xf32, #tpu.memory_space<vmem>>, vector<1x128xf32>
    %91 = vector.broadcast %90 : vector<1x128xf32> to vector<128x128xf32>
    %92 = arith.addf %89, %91 : vector<128x128xf32>
    %c7 = arith.constant 7 : index
    %c0_33 = arith.constant 0 : index
    %93 = vector.load %arg3[%c7, %c0_33] : memref<24x256xf32, #tpu.memory_space<vmem>>, vector<1x128xf32>
    %c8 = arith.constant 8 : index
    %c0_34 = arith.constant 0 : index
    %94 = vector.load %arg3[%c8, %c0_34] : memref<24x256xf32, #tpu.memory_space<vmem>>, vector<1x128xf32>
    %cst_35 = arith.constant dense<0.000000e+00> : vector<128xf32>
    %95 = vector.multi_reduction <add>, %92, %cst_35 [1] : vector<128x128xf32> to vector<128xf32>
    %96 = vector.shape_cast %95 : vector<128xf32> to vector<128x1xf32>
    %cst_36 = arith.constant 7.812500e-03 : f32
    %97 = vector.broadcast %cst_36 : f32 to vector<128x1xf32>
    %98 = arith.mulf %96, %97 : vector<128x1xf32>
    %99 = arith.mulf %92, %92 : vector<128x128xf32>
    %cst_37 = arith.constant dense<0.000000e+00> : vector<128xf32>
    %100 = vector.multi_reduction <add>, %99, %cst_37 [1] : vector<128x128xf32> to vector<128xf32>
    %101 = vector.shape_cast %100 : vector<128xf32> to vector<128x1xf32>
    %cst_38 = arith.constant 7.812500e-03 : f32
    %102 = vector.broadcast %cst_38 : f32 to vector<128x1xf32>
    %103 = arith.mulf %101, %102 : vector<128x1xf32>
    %104 = arith.mulf %98, %98 : vector<128x1xf32>
    %105 = arith.subf %103, %104 : vector<128x1xf32>
    %106 = vector.broadcast %98 : vector<128x1xf32> to vector<128x128xf32>
    %107 = arith.subf %92, %106 : vector<128x128xf32>
    %cst_39 = arith.constant 9.99999974E-6 : f32
    %108 = vector.broadcast %cst_39 : f32 to vector<128x1xf32>
    %109 = arith.addf %105, %108 : vector<128x1xf32>
    %110 = math.rsqrt %109 : vector<128x1xf32>
    %111 = vector.broadcast %110 : vector<128x1xf32> to vector<128x128xf32>
    %112 = arith.mulf %107, %111 : vector<128x128xf32>
    %113 = vector.broadcast %93 : vector<1x128xf32> to vector<128x128xf32>
    %114 = arith.mulf %112, %113 : vector<128x128xf32>
    %115 = vector.broadcast %94 : vector<1x128xf32> to vector<128x128xf32>
    %116 = arith.addf %114, %115 : vector<128x128xf32>
    %c768 = arith.constant 768 : index
    %c0_40 = arith.constant 0 : index
    %117 = vector.load %arg2[%c768, %c0_40] : memref<1408x256xbf16, #tpu.memory_space<vmem>>, vector<128x256xbf16>
    %118 = arith.truncf %116 : vector<128x128xf32> to vector<128x128xbf16>
    %cst_41 = arith.constant dense<0.000000e+00> : vector<128x256xf32>
    %119 = tpu.matmul %118, %117, %cst_41 {dimension_numbers = #tpu.dot_dimension_numbers<[1], [0], [0], [1], [0, 0, 1, 1], [], []>} : vector<128x128xbf16>, vector<128x256xbf16>, vector<128x256xf32> -> vector<128x256xf32>
    %c9 = arith.constant 9 : index
    %c0_42 = arith.constant 0 : index
    %120 = vector.load %arg3[%c9, %c0_42] : memref<24x256xf32, #tpu.memory_space<vmem>>, vector<1x256xf32>
    %121 = vector.broadcast %120 : vector<1x256xf32> to vector<128x256xf32>
    %122 = arith.addf %119, %121 : vector<128x256xf32>
    %123 = vector.extract_strided_slice %122 {offsets = [0, 0], sizes = [128, 128], strides = [1, 1]} : vector<128x256xf32> to vector<128x128xf32>
    %124 = vector.extract_strided_slice %122 {offsets = [0, 128], sizes = [128, 64], strides = [1, 1]} : vector<128x256xf32> to vector<128x64xf32>
    %125 = vector.extract_strided_slice %122 {offsets = [0, 192], sizes = [128, 64], strides = [1, 1]} : vector<128x256xf32> to vector<128x64xf32>
    %126 = vector.shape_cast %124 : vector<128x64xf32> to vector<16x8x64xf32>
    %127 = arith.truncf %126 : vector<16x8x64xf32> to vector<16x8x64xbf16>
    %128 = vector.shape_cast %125 : vector<128x64xf32> to vector<16x8x64xf32>
    %129 = vector.shape_cast %123 : vector<128x128xf32> to vector<16x8x128xf32>
    %130 = tpu.concatenate %128, %128, %128, %128 in 1 : vector<16x8x64xf32>, vector<16x8x64xf32>, vector<16x8x64xf32>, vector<16x8x64xf32> -> vector<16x32x64xf32>
    %131 = vector.shape_cast %0 : vector<32x64xf32> to vector<1x32x64xf32>
    %132 = vector.broadcast %131 : vector<1x32x64xf32> to vector<16x32x64xf32>
    %133 = arith.mulf %130, %132 : vector<16x32x64xf32>
    %134 = arith.truncf %133 : vector<16x32x64xf32> to vector<16x32x64xbf16>
    %135 = tpu.concatenate %129, %129, %129, %129 in 1 : vector<16x8x128xf32>, vector<16x8x128xf32>, vector<16x8x128xf32>, vector<16x8x128xf32> -> vector<16x32x128xf32>
    %136 = vector.shape_cast %2 : vector<32x128xf32> to vector<1x32x128xf32>
    %137 = vector.broadcast %136 : vector<1x32x128xf32> to vector<16x32x128xf32>
    %138 = arith.mulf %135, %137 : vector<16x32x128xf32>
    %139 = arith.truncf %138 : vector<16x32x128xf32> to vector<16x32x128xbf16>
    "tpu.trace_start"() <{level = 10 : i32, message = "bld,brd->blr"}> : () -> ()
    %cst_43 = arith.constant dense<0.000000e+00> : vector<16x8x32xf32>
    %140 = tpu.matmul %127, %134, %cst_43 {dimension_numbers = #tpu.dot_dimension_numbers<[2], [2], [1], [1], [0, 0, 0, 1, 1, 1], [0], [0]>} : vector<16x8x64xbf16>, vector<16x32x64xbf16>, vector<16x8x32xf32> -> vector<16x8x32xf32>
    "tpu.trace_stop"() : () -> ()
    %cst_44 = arith.constant dense<0xFF800000> : vector<16x8xf32>
    %141 = vector.multi_reduction <maximumf>, %140, %cst_44 [2] : vector<16x8x32xf32> to vector<16x8xf32>
    %142 = vector.shape_cast %141 : vector<16x8xf32> to vector<16x8x1xf32>
    %143 = vector.broadcast %142 : vector<16x8x1xf32> to vector<16x8x32xf32>
    %144 = arith.subf %140, %143 : vector<16x8x32xf32>
    %145 = math.exp %144 : vector<16x8x32xf32>
    %146 = vector.shape_cast %145 : vector<16x8x32xf32> to vector<128x32xf32>
    %cst_45 = arith.constant dense<0.000000e+00> : vector<128x32xf32>
    %147 = tpu.matmul %146, %1, %cst_45 {dimension_numbers = #tpu.dot_dimension_numbers<[1], [0], [0], [1], [0, 0, 1, 1], [], []>} : vector<128x32xf32>, vector<32x32xf32>, vector<128x32xf32> -> vector<128x32xf32>
    %148 = tpu.reciprocal %147 {approx = true} : vector<128x32xf32> -> vector<128x32xf32>
    %149 = arith.mulf %146, %148 : vector<128x32xf32>
    %150 = vector.shape_cast %149 : vector<128x32xf32> to vector<16x8x32xf32>
    %151 = arith.truncf %150 : vector<16x8x32xf32> to vector<16x8x32xbf16>
    "tpu.trace_start"() <{level = 10 : i32, message = "blr,brd->bld"}> : () -> ()
    %cst_46 = arith.constant dense<0.000000e+00> : vector<16x8x128xf32>
    %152 = tpu.matmul %151, %139, %cst_46 {dimension_numbers = #tpu.dot_dimension_numbers<[2], [1], [1], [2], [0, 0, 0, 1, 1, 2], [0], [0]>} : vector<16x8x32xbf16>, vector<16x32x128xbf16>, vector<16x8x128xf32> -> vector<16x8x128xf32>
    "tpu.trace_stop"() : () -> ()
    %153 = vector.shape_cast %152 : vector<16x8x128xf32> to vector<128x128xf32>
    %c896 = arith.constant 896 : index
    %c0_47 = arith.constant 0 : index
    %154 = vector.load %arg2[%c896, %c0_47] : memref<1408x256xbf16, #tpu.memory_space<vmem>>, vector<128x128xbf16>
    %155 = arith.truncf %153 : vector<128x128xf32> to vector<128x128xbf16>
    %cst_48 = arith.constant dense<0.000000e+00> : vector<128x128xf32>
    %156 = tpu.matmul %155, %154, %cst_48 {dimension_numbers = #tpu.dot_dimension_numbers<[1], [0], [0], [1], [0, 0, 1, 1], [], []>} : vector<128x128xbf16>, vector<128x128xbf16>, vector<128x128xf32> -> vector<128x128xf32>
    %157 = arith.addf %116, %156 : vector<128x128xf32>
    %c10 = arith.constant 10 : index
    %c0_49 = arith.constant 0 : index
    %158 = vector.load %arg3[%c10, %c0_49] : memref<24x256xf32, #tpu.memory_space<vmem>>, vector<1x128xf32>
    %159 = vector.broadcast %158 : vector<1x128xf32> to vector<128x128xf32>
    %160 = arith.addf %157, %159 : vector<128x128xf32>
    %c13 = arith.constant 13 : index
    %c0_50 = arith.constant 0 : index
    %161 = vector.load %arg3[%c13, %c0_50] : memref<24x256xf32, #tpu.memory_space<vmem>>, vector<1x128xf32>
    %c14 = arith.constant 14 : index
    %c0_51 = arith.constant 0 : index
    %162 = vector.load %arg3[%c14, %c0_51] : memref<24x256xf32, #tpu.memory_space<vmem>>, vector<1x128xf32>
    %cst_52 = arith.constant dense<0.000000e+00> : vector<128xf32>
    %163 = vector.multi_reduction <add>, %160, %cst_52 [1] : vector<128x128xf32> to vector<128xf32>
    %164 = vector.shape_cast %163 : vector<128xf32> to vector<128x1xf32>
    %cst_53 = arith.constant 7.812500e-03 : f32
    %165 = vector.broadcast %cst_53 : f32 to vector<128x1xf32>
    %166 = arith.mulf %164, %165 : vector<128x1xf32>
    %167 = arith.mulf %160, %160 : vector<128x128xf32>
    %cst_54 = arith.constant dense<0.000000e+00> : vector<128xf32>
    %168 = vector.multi_reduction <add>, %167, %cst_54 [1] : vector<128x128xf32> to vector<128xf32>
    %169 = vector.shape_cast %168 : vector<128xf32> to vector<128x1xf32>
    %cst_55 = arith.constant 7.812500e-03 : f32
    %170 = vector.broadcast %cst_55 : f32 to vector<128x1xf32>
    %171 = arith.mulf %169, %170 : vector<128x1xf32>
    %172 = arith.mulf %166, %166 : vector<128x1xf32>
    %173 = arith.subf %171, %172 : vector<128x1xf32>
    %174 = vector.broadcast %166 : vector<128x1xf32> to vector<128x128xf32>
    %175 = arith.subf %160, %174 : vector<128x128xf32>
    %cst_56 = arith.constant 9.99999974E-6 : f32
    %176 = vector.broadcast %cst_56 : f32 to vector<128x1xf32>
    %177 = arith.addf %173, %176 : vector<128x1xf32>
    %178 = math.rsqrt %177 : vector<128x1xf32>
    %179 = vector.broadcast %178 : vector<128x1xf32> to vector<128x128xf32>
    %180 = arith.mulf %175, %179 : vector<128x128xf32>
    %181 = vector.broadcast %161 : vector<1x128xf32> to vector<128x128xf32>
    %182 = arith.mulf %180, %181 : vector<128x128xf32>
    %183 = vector.broadcast %162 : vector<1x128xf32> to vector<128x128xf32>
    %184 = arith.addf %182, %183 : vector<128x128xf32>
    %c1024 = arith.constant 1024 : index
    %c0_57 = arith.constant 0 : index
    %185 = vector.load %arg2[%c1024, %c0_57] : memref<1408x256xbf16, #tpu.memory_space<vmem>>, vector<128x256xbf16>
    %186 = arith.truncf %184 : vector<128x128xf32> to vector<128x128xbf16>
    %cst_58 = arith.constant dense<0.000000e+00> : vector<128x256xf32>
    %187 = tpu.matmul %186, %185, %cst_58 {dimension_numbers = #tpu.dot_dimension_numbers<[1], [0], [0], [1], [0, 0, 1, 1], [], []>} : vector<128x128xbf16>, vector<128x256xbf16>, vector<128x256xf32> -> vector<128x256xf32>
    %c11 = arith.constant 11 : index
    %c0_59 = arith.constant 0 : index
    %188 = vector.load %arg3[%c11, %c0_59] : memref<24x256xf32, #tpu.memory_space<vmem>>, vector<1x256xf32>
    %189 = vector.broadcast %188 : vector<1x256xf32> to vector<128x256xf32>
    %190 = arith.addf %187, %189 : vector<128x256xf32>
    %cst_60 = arith.constant 0.000000e+00 : f32
    %191 = vector.broadcast %cst_60 : f32 to vector<128x256xf32>
    %192 = arith.maximumf %190, %191 : vector<128x256xf32>
    %c1152 = arith.constant 1152 : index
    %c0_61 = arith.constant 0 : index
    %193 = vector.load %arg2[%c1152, %c0_61] : memref<1408x256xbf16, #tpu.memory_space<vmem>>, vector<256x128xbf16>
    %194 = arith.truncf %192 : vector<128x256xf32> to vector<128x256xbf16>
    %cst_62 = arith.constant dense<0.000000e+00> : vector<128x128xf32>
    %195 = tpu.matmul %194, %193, %cst_62 {dimension_numbers = #tpu.dot_dimension_numbers<[1], [0], [0], [1], [0, 0, 1, 1], [], []>} : vector<128x256xbf16>, vector<256x128xbf16>, vector<128x128xf32> -> vector<128x128xf32>
    %196 = arith.addf %184, %195 : vector<128x128xf32>
    %c12 = arith.constant 12 : index
    %c0_63 = arith.constant 0 : index
    %197 = vector.load %arg3[%c12, %c0_63] : memref<24x256xf32, #tpu.memory_space<vmem>>, vector<1x128xf32>
    %198 = vector.broadcast %197 : vector<1x128xf32> to vector<128x128xf32>
    %199 = arith.addf %196, %198 : vector<128x128xf32>
    %c15 = arith.constant 15 : index
    %c0_64 = arith.constant 0 : index
    %200 = vector.load %arg3[%c15, %c0_64] : memref<24x256xf32, #tpu.memory_space<vmem>>, vector<1x128xf32>
    %c16 = arith.constant 16 : index
    %c0_65 = arith.constant 0 : index
    %201 = vector.load %arg3[%c16, %c0_65] : memref<24x256xf32, #tpu.memory_space<vmem>>, vector<1x128xf32>
    %cst_66 = arith.constant dense<0.000000e+00> : vector<128xf32>
    %202 = vector.multi_reduction <add>, %199, %cst_66 [1] : vector<128x128xf32> to vector<128xf32>
    %203 = vector.shape_cast %202 : vector<128xf32> to vector<128x1xf32>
    %cst_67 = arith.constant 7.812500e-03 : f32
    %204 = vector.broadcast %cst_67 : f32 to vector<128x1xf32>
    %205 = arith.mulf %203, %204 : vector<128x1xf32>
    %206 = arith.mulf %199, %199 : vector<128x128xf32>
    %cst_68 = arith.constant dense<0.000000e+00> : vector<128xf32>
    %207 = vector.multi_reduction <add>, %206, %cst_68 [1] : vector<128x128xf32> to vector<128xf32>
    %208 = vector.shape_cast %207 : vector<128xf32> to vector<128x1xf32>
    %cst_69 = arith.constant 7.812500e-03 : f32
    %209 = vector.broadcast %cst_69 : f32 to vector<128x1xf32>
    %210 = arith.mulf %208, %209 : vector<128x1xf32>
    %211 = arith.mulf %205, %205 : vector<128x1xf32>
    %212 = arith.subf %210, %211 : vector<128x1xf32>
    %213 = vector.broadcast %205 : vector<128x1xf32> to vector<128x128xf32>
    %214 = arith.subf %199, %213 : vector<128x128xf32>
    %cst_70 = arith.constant 9.99999974E-6 : f32
    %215 = vector.broadcast %cst_70 : f32 to vector<128x1xf32>
    %216 = arith.addf %212, %215 : vector<128x1xf32>
    %217 = math.rsqrt %216 : vector<128x1xf32>
    %218 = vector.broadcast %217 : vector<128x1xf32> to vector<128x128xf32>
    %219 = arith.mulf %214, %218 : vector<128x128xf32>
    %220 = vector.broadcast %200 : vector<1x128xf32> to vector<128x128xf32>
    %221 = arith.mulf %219, %220 : vector<128x128xf32>
    %222 = vector.broadcast %201 : vector<1x128xf32> to vector<128x128xf32>
    %223 = arith.addf %221, %222 : vector<128x128xf32>
    %c0_71 = arith.constant 0 : index
    %c0_72 = arith.constant 0 : index
    %224 = vector.load %arg5[%c0_71, %c0_72] : memref<128x128xf32, #tpu.memory_space<vmem>>, vector<128x128xf32>
    tpu.vector_store %arg5[%c0_71, %c0_72], %223 {strides = array<i32>} : memref<128x128xf32, #tpu.memory_space<vmem>>, vector<128x128xf32>,
    return
  }
  func.func @transform_0(%arg0: i32) -> (i32, i32) {
    %c0_i32 = arith.constant 0 : i32
    %c0_i32_0 = arith.constant 0 : i32
    return %arg0, %c0_i32 : i32, i32
  }
  func.func @transform_1(%arg0: i32) -> (i32, i32) {
    %c0_i32 = arith.constant 0 : i32
    %c0_i32_0 = arith.constant 0 : i32
    %c0_i32_1 = arith.constant 0 : i32
    return %c0_i32, %c0_i32_0 : i32, i32
  }
  func.func @transform_2(%arg0: i32) -> (i32, i32) {
    %c0_i32 = arith.constant 0 : i32
    %c0_i32_0 = arith.constant 0 : i32
    %c0_i32_1 = arith.constant 0 : i32
    return %c0_i32, %c0_i32_0 : i32, i32
  }
  func.func @transform_3(%arg0: i32) -> (i32, i32) {
    %c0_i32 = arith.constant 0 : i32
    %c0_i32_0 = arith.constant 0 : i32
    %c0_i32_1 = arith.constant 0 : i32
    return %c0_i32, %c0_i32_0 : i32, i32
  }
  func.func @transform_4(%arg0: i32) -> (i32, i32) {
    %c0_i32 = arith.constant 0 : i32
    %c0_i32_0 = arith.constant 0 : i32
    return %arg0, %c0_i32 : i32, i32
  }
}

</mosaic_0001>

<llo_original>
// kernel: tpu_custom_call.1
$region0: #{tpu_custom_call.1}
  #allocation0 [shape = 'u32[]', space=smem, size = 0x4, offset = 0x4, fixed_abs, tag = 'smem constant byte address 0x4 - core index']
  #allocation1 [shape = 'u32[144,128]{1,0:T(1,128)}', space=vmem, size = 0x12000, scoped, tag = 'internal scratch']
  %s0 = inlined_call_operand.hbm [shape: f32[512,128], index: 0, kind: input, shape index: {}]
  %s1 = inlined_call_operand.hbm [shape: bf16[1408,256], index: 1, kind: input, shape index: {}]
  %s2 = inlined_call_operand.hbm [shape: f32[24,256], index: 2, kind: input, shape index: {}]
  %s3 = inlined_call_operand.hbm [shape: f32[96,128], index: 3, kind: input, shape index: {}]
  %s4 = inlined_call_operand.hbm [shape: f32[512,128], index: 4, kind: output, shape index: {}]
  %s5 = sld [smem:[#allocation0]]
  $region65: #{tpu_custom_call.1} parent=0
    _
  %s7 = ssub.s32 1, %s5
  %s8 = scalar_select 0, %s7, %s5
  $region1: #{tpu_custom_call.1} parent=0
    #allocation2 [shape = 'u8[131072]{0}', space=vmem, size = 0x20000, scoped, tag = 'input window, operand 0']
    #allocation3 [shape = 's32[2]{0}', space=sflag, size = 0x8, scoped, tag = 'scoped memory for tpu_custom_call.1']
    #allocation4 [shape = 's32[2]{0}', space=sflag, size = 0x8, scoped, tag = 'scoped memory for tpu_custom_call.1']
    #allocation5 [shape = 'u8[720896]{0}', space=vmem, size = 0xb0000, scoped, tag = 'input window, operand 1, single buffered']
    #allocation6 [shape = 's32[1]{0}', space=sflag, size = 0x4, scoped, tag = 'scoped memory for tpu_custom_call.1']
    #allocation7 [shape = 'u8[24576]{0}', space=vmem, size = 0x6000, scoped, tag = 'input window, operand 2, single buffered']
    #allocation8 [shape = 'u8[49152]{0}', space=vmem, size = 0xc000, scoped, tag = 'input window, operand 3, single buffered']
    #allocation9 [shape = 's32[1]{0}', space=sflag, size = 0x4, scoped, tag = 'scoped memory for tpu_custom_call.1']
    #allocation10 [shape = 'u8[131072]{0}', space=vmem, size = 0x20000, scoped, tag = 'output window, operand 0']
    %9 = vsyncpa [#allocation3], 0
    %s10 = scalar_lea.sflag [#allocation3], 1
    %11 = vsyncpa %s10, 0
    %12 = vsyncpa [#allocation6], 0
    %13 = vsyncpa [#allocation9], 0
    %14 = vsyncpa [#allocation4], 0
    %s15 = scalar_lea.sflag [#allocation4], 1
    %16 = vsyncpa %s15, 0
    loop: start=0, step=1, limit=6
    $region2: #{tpu_custom_call.1} parent=1 // loop_pre_header
      _
    $region3: #{tpu_custom_call.1} parent=1 // loop_header
      %s18 = sphi 0, %s22
      %p19 = scmp.ge.s32.totalorder %s18, 6
      %s28 = sphi 0, %s30
      %s31 = sphi 0, %s28
      %s32 = sphi 0, %s31
      %s48 = sphi 0, %s32
      %s52 = sphi 0, %s52
      %s54 = sphi 0, %s52
      %s55 = sphi 0, %s54
      %s69 = sphi 0, %s55
      %s73 = sphi 0, %s73
      %s75 = sphi 0, %s73
      %s76 = sphi 0, %s75
      %s90 = sphi 0, %s76
      %s94 = sphi 0, %s94
      %s96 = sphi 0, %s94
      %s97 = sphi 0, %s96
      %s111 = sphi 0, %s97
      %s117 = sphi 0, %s119
      %s120 = sphi 0, %s117
      %s121 = sphi 0, %s120
      %s137 = sphi 0, %s121
    $region4: #{tpu_custom_call.1} parent=1 // loop_header_branch
      %21 = sbr.rel (%p19) target = $region8
    $region5: #{tpu_custom_call.1} parent=1 // loop_body
      %s23 = ssub.s32 %s18, 1
      %s24 = ssub.s32 %s18, 2
      %s25 = sadd.s32 %s18, 1
      %s26 = ssub.s32 %s18, %s25
      %p27 = scmp.eq.s32.totalorder %s26, 0
      %s29 = sadd.s32 %s28, 1
      %s30 = scalar_select %p27, %s28, %s29
      %p33 = pneg %p27
      %p34 = scmp.eq.s32.totalorder %s18, 3
      %p35 = por %p33, %p34
      %p36 = scmp.ne.s32.totalorder %s28, %s31
      %p37 = scmp.eq.s32.totalorder %s18, 0
      %p38 = por %p36, %p37
      %p39 = scmp.ne.s32.totalorder %s28, %s31
      %p40 = scmp.eq.s32.totalorder %s23, 3
      %p41 = por %p39, %p40
      %p42 = scmp.ne.s32.totalorder %s31, %s32
      %p43 = scmp.eq.s32.totalorder %s23, 0
      %p44 = por %p42, %p43
      %p45 = scmp.ne.s32.totalorder %s31, %s32
      %p46 = scmp.eq.s32.totalorder %s24, 3
      %p47 = por %p45, %p46
      %p49 = scmp.ne.s32.totalorder %s32, %s48
      %p50 = scmp.eq.s32.totalorder %s24, 0
      %p51 = por %p49, %p50
      %s53 = sadd.s32 %s52, 1
      %p56 = scmp.eq.s32.totalorder %s18, 3
      %p57 = scmp.ne.s32.totalorder %s52, %s54
      %p58 = scmp.eq.s32.totalorder %s18, 0
      %p59 = por %p57, %p58
      %p60 = scmp.ne.s32.totalorder %s52, %s54
      %p61 = scmp.eq.s32.totalorder %s23, 3
      %p62 = por %p60, %p61
      %p63 = scmp.ne.s32.totalorder %s54, %s55
      %p64 = scmp.eq.s32.totalorder %s23, 0
      %p65 = por %p63, %p64
      %p66 = scmp.ne.s32.totalorder %s54, %s55
      %p67 = scmp.eq.s32.totalorder %s24, 3
      %p68 = por %p66, %p67
      %p70 = scmp.ne.s32.totalorder %s55, %s69
      %p71 = scmp.eq.s32.totalorder %s24, 0
      %p72 = por %p70, %p71
      %s74 = sadd.s32 %s73, 1
      %p77 = scmp.eq.s32.totalorder %s18, 3
      %p78 = scmp.ne.s32.totalorder %s73, %s75
      %p79 = scmp.eq.s32.totalorder %s18, 0
      %p80 = por %p78, %p79
      %p81 = scmp.ne.s32.totalorder %s73, %s75
      %p82 = scmp.eq.s32.totalorder %s23, 3
      %p83 = por %p81, %p82
      %p84 = scmp.ne.s32.totalorder %s75, %s76
      %p85 = scmp.eq.s32.totalorder %s23, 0
      %p86 = por %p84, %p85
      %p87 = scmp.ne.s32.totalorder %s75, %s76
      %p88 = scmp.eq.s32.totalorder %s24, 3
      %p89 = por %p87, %p88
      %p91 = scmp.ne.s32.totalorder %s76, %s90
      %p92 = scmp.eq.s32.totalorder %s24, 0
      %p93 = por %p91, %p92
      %s95 = sadd.s32 %s94, 1
      %p98 = scmp.eq.s32.totalorder %s18, 3
      %p99 = scmp.ne.s32.totalorder %s94, %s96
      %p100 = scmp.eq.s32.totalorder %s18, 0
      %p101 = por %p99, %p100
      %p102 = scmp.ne.s32.totalorder %s94, %s96
      %p103 = scmp.eq.s32.totalorder %s23, 3
      %p104 = por %p102, %p103
      %p105 = scmp.ne.s32.totalorder %s96, %s97
      %p106 = scmp.eq.s32.totalorder %s23, 0
      %p107 = por %p105, %p106
      %p108 = scmp.ne.s32.totalorder %s96, %s97
      %p109 = scmp.eq.s32.totalorder %s24, 3
      %p110 = por %p108, %p109
      %p112 = scmp.ne.s32.totalorder %s97, %s111
      %p113 = scmp.eq.s32.totalorder %s24, 0
      %p114 = por %p112, %p113
      %s115 = ssub.s32 %s18, %s25
      %p116 = scmp.eq.s32.totalorder %s115, 0
      %s118 = sadd.s32 %s117, 1
      %s119 = scalar_select %p116, %s117, %s118
      %p122 = pneg %p116
      %p123 = scmp.eq.s32.totalorder %s18, 3
      %p124 = por %p122, %p123
      %p125 = scmp.ne.s32.totalorder %s117, %s120
      %p126 = scmp.eq.s32.totalorder %s18, 0
      %p127 = por %p125, %p126
      %p128 = scmp.ne.s32.totalorder %s117, %s120
      %p129 = scmp.eq.s32.totalorder %s23, 3
      %p130 = por %p128, %p129
      %p131 = scmp.ne.s32.totalorder %s120, %s121
      %p132 = scmp.eq.s32.totalorder %s23, 0
      %p133 = por %p131, %p132
      %p134 = scmp.ne.s32.totalorder %s120, %s121
      %p135 = scmp.eq.s32.totalorder %s24, 3
      %p136 = por %p134, %p135
      %p138 = scmp.ne.s32.totalorder %s121, %s137
      %p139 = scmp.eq.s32.totalorder %s24, 0
      %p140 = por %p138, %p139
      %p141 = scmp.le.s32.totalorder 1, %s18
      %p142 = scmp.lt.s32.totalorder %s18, 5
      %p143 = pnand %p141, %p142
      %p144 = pneg %p143
      // Predicated region
      $region9: #{tpu_custom_call.1} parent=5 // pred_check
        _
      $region10: #{tpu_custom_call.1} parent=5 // pred_check_branch
        %146 = sbr.rel (%p143) target = $region12
      $region11: #{tpu_custom_call.1} parent=5 // pred_region
        %s147 = ssub.s32 %s18, 1
        // Predicated region
        $region13: #{tpu_custom_call.1} parent=11 // pred_check
          %p148 = pneg %p65
        $region14: #{tpu_custom_call.1} parent=11 // pred_check_branch
          %150 = sbr.rel (%p148) target = $region16
        $region15: #{tpu_custom_call.1} parent=11 // pred_region
          %s152 = ssub.s32 22528, 22528
          %153 = vsyncadd [#allocation6], %s152
          %s154 = sshll.u32 [#allocation5], 4
          %s155 = int_to_ptr.vmem [resolvable:$true] %s154
          %160 = dma.hbm_to_vmem [thread:$0]  %s1, 22528, %s155, [#allocation6], 128, 128, 8
        $region16: #{tpu_custom_call.1} parent=11 // pred_fallthru
          _
        // Predicated region
        $region17: #{tpu_custom_call.1} parent=11 // pred_check
          %p161 = pneg %p86
        $region18: #{tpu_custom_call.1} parent=11 // pred_check_branch
          %163 = sbr.rel (%p161) target = $region20
        $region19: #{tpu_custom_call.1} parent=11 // pred_region
          %s165 = ssub.s32 768, 768
          %166 = vsyncadd [#allocation6], %s165
          %s167 = sshll.u32 [#allocation7], 4
          %s168 = int_to_ptr.vmem [resolvable:$true] %s167
          %173 = dma.hbm_to_vmem [thread:$0]  %s2, 768, %s168, [#allocation6], 256, 256, 16
        $region20: #{tpu_custom_call.1} parent=11 // pred_fallthru
          _
        // Predicated region
        $region21: #{tpu_custom_call.1} parent=11 // pred_check
          %p174 = pneg %p107
        $region22: #{tpu_custom_call.1} parent=11 // pred_check_branch
          %176 = sbr.rel (%p174) target = $region24
        $region23: #{tpu_custom_call.1} parent=11 // pred_region
          %s178 = ssub.s32 1536, 1536
          %179 = vsyncadd [#allocation9], %s178
          %s180 = sshll.u32 [#allocation8], 4
          %s181 = int_to_ptr.vmem [resolvable:$true] %s180
          %186 = dma.hbm_to_vmem [thread:$0]  %s3, 1536, %s181, [#allocation9], 128, 128, 8
        $region24: #{tpu_custom_call.1} parent=11 // pred_fallthru
          _
      $region12: #{tpu_custom_call.1} parent=5 // pred_fallthru
        _
      %p187 = scmp.lt.s32.totalorder %s18, 4
      // Predicated region
      $region25: #{tpu_custom_call.1} parent=5 // pred_check
        %p188 = pneg %p187
      $region26: #{tpu_custom_call.1} parent=5 // pred_check_branch
        %190 = sbr.rel (%p188) target = $region28
      $region27: #{tpu_custom_call.1} parent=5 // pred_region
        // Predicated region
        $region29: #{tpu_custom_call.1} parent=27 // pred_check
          %p191 = pneg %p38
        $region30: #{tpu_custom_call.1} parent=27 // pred_check_branch
          %193 = sbr.rel (%p191) target = $region32
        $region31: #{tpu_custom_call.1} parent=27 // pred_region
          %s194 = sand.u32 %s28, 1
          %s195 = scalar_lea.sflag [#allocation3], %s194
          %s196 = sand.u32 %s28, 1
          %s197 = smul.addr %s196, 128
          %s198 = scalar_lea.vmem [#allocation2], %s197
          %s199 = smul.u32 16, %s18
          %s201 = ssub.s32 2048, 2048
          %202 = vsyncadd %s195, %s201
          %s203 = smul.addr %s199, 128
          %s204 = scalar_lea.hbm %s0, %s203
          %s205 = sshll.u32 %s198, 4
          %s206 = int_to_ptr.vmem [resolvable:$true] %s205
          %211 = dma.hbm_to_vmem [thread:$0]  %s204, 2048, %s206, %s195, 128, 128, 8
        $region32: #{tpu_custom_call.1} parent=27 // pred_fallthru
          _
      $region28: #{tpu_custom_call.1} parent=5 // pred_fallthru
        _
      %p212 = scmp.le.s32.totalorder 1, %s18
      %p213 = scmp.lt.s32.totalorder %s18, 5
      %p214 = pnand %p212, %p213
      %p215 = pneg %p214
      // Predicated region
      $region33: #{tpu_custom_call.1} parent=5 // pred_check
        _
      $region34: #{tpu_custom_call.1} parent=5 // pred_check_branch
        %217 = sbr.rel (%p214) target = $region36
      $region35: #{tpu_custom_call.1} parent=5 // pred_region
        %s218 = ssub.s32 %s18, 1
        %s219 = sand.u32 %s31, 1
        %s220 = scalar_lea.sflag [#allocation3], %s219
        %s221 = sand.u32 %s31, 1
        %s222 = smul.addr %s221, 128
        %s223 = scalar_lea.vmem [#allocation2], %s222
        // Predicated region
        $region37: #{tpu_custom_call.1} parent=35 // pred_check
          %p224 = pneg %p44
        $region38: #{tpu_custom_call.1} parent=35 // pred_check_branch
          %226 = sbr.rel (%p224) target = $region40
        $region39: #{tpu_custom_call.1} parent=35 // pred_region
          %227 = dma.done %s220, 2048
        $region40: #{tpu_custom_call.1} parent=35 // pred_fallthru
          _
        // Predicated region
        $region41: #{tpu_custom_call.1} parent=35 // pred_check
          %p228 = pneg %p65
        $region42: #{tpu_custom_call.1} parent=35 // pred_check_branch
          %230 = sbr.rel (%p228) target = $region44
        $region43: #{tpu_custom_call.1} parent=35 // pred_region
          %231 = dma.done [#allocation6], 22528
        $region44: #{tpu_custom_call.1} parent=35 // pred_fallthru
          _
        // Predicated region
        $region45: #{tpu_custom_call.1} parent=35 // pred_check
          %p232 = pneg %p86
        $region46: #{tpu_custom_call.1} parent=35 // pred_check_branch
          %234 = sbr.rel (%p232) target = $region48
        $region47: #{tpu_custom_call.1} parent=35 // pred_region
          %235 = dma.done [#allocation6], 768
        $region48: #{tpu_custom_call.1} parent=35 // pred_fallthru
          _
        // Predicated region
        $region49: #{tpu_custom_call.1} parent=35 // pred_check
          %p236 = pneg %p107
        $region50: #{tpu_custom_call.1} parent=35 // pred_check_branch
          %238 = sbr.rel (%p236) target = $region52
        $region51: #{tpu_custom_call.1} parent=35 // pred_region
          %239 = dma.done [#allocation9], 1536
        $region52: #{tpu_custom_call.1} parent=35 // pred_fallthru
          _
        %s240 = sand.u32 %s31, 1
        %s241 = scalar_lea.sflag [#allocation3], %s240
        %s242 = sand.u32 %s31, 1
        %s243 = smul.addr %s242, 128
        %s244 = scalar_lea.vmem [#allocation2], %s243
        %p245 = pneg %p44
        %p246 = pneg %p41
        %p247 = pneg %p65
        %p248 = pneg %p62
        %p249 = pneg %p86
        %p250 = pneg %p83
        %p251 = pneg %p107
        %p252 = pneg %p104
        %p253 = pneg %p133
        %p254 = pneg %p130
        %s255 = sand.u32 %s120, 1
        %s256 = scalar_lea.sflag [#allocation4], %s255
        %s257 = sand.u32 %s120, 1
        %s258 = smul.addr %s257, 128
        %s259 = scalar_lea.vmem [#allocation10], %s258
        %s260 = smul.u32 16, %s23
        %s261 = smul.u32 16, %s23
        %v263 = vld [vmem:[#allocation8] sm:$0xff]
        %v264 = vld [vmem:[#allocation8 + $0x8] sm:$0xff]
        %v265 = vld [vmem:[#allocation8 + $0x10] sm:$0xff]
        %v266 = vld [vmem:[#allocation8 + $0x18] sm:$0xff]
        %v267 = vld [vmem:[#allocation8 + $0x20] sm:$0xff]
        %v268 = vld [vmem:[#allocation8 + $0x28] sm:$0xff]
        %v269 = vld [vmem:[#allocation8 + $0x30] sm:$0xff]
        %v270 = vld [vmem:[#allocation8 + $0x38] sm:$0xff]
        %v271 = vld [vmem:[#allocation8 + $0x40] sm:$0xff]
        %v272 = vld [vmem:[#allocation8 + $0x48] sm:$0xff]
        %v273 = vld [vmem:[#allocation8 + $0x50] sm:$0xff]
        %v274 = vld [vmem:[#allocation8 + $0x58] sm:$0xff]
        %v275 = vld [vmem:[%s223] sm:$0xff]
        %v276 = vld [vmem:[%s223 + $0x8] sm:$0xff]
        %v277 = vld [vmem:[%s223 + $0x10] sm:$0xff]
        %v278 = vld [vmem:[%s223 + $0x18] sm:$0xff]
        %v279 = vld [vmem:[%s223 + $0x20] sm:$0xff]
        %v280 = vld [vmem:[%s223 + $0x28] sm:$0xff]
        %v281 = vld [vmem:[%s223 + $0x30] sm:$0xff]
        %v282 = vld [vmem:[%s223 + $0x38] sm:$0xff]
        %v283 = vld [vmem:[%s223 + $0x40] sm:$0xff]
        %v284 = vld [vmem:[%s223 + $0x48] sm:$0xff]
        %v285 = vld [vmem:[%s223 + $0x50] sm:$0xff]
        %v286 = vld [vmem:[%s223 + $0x58] sm:$0xff]
        %v287 = vld [vmem:[%s223 + $0x60] sm:$0xff]
        %v288 = vld [vmem:[%s223 + $0x68] sm:$0xff]
        %v289 = vld [vmem:[%s223 + $0x70] sm:$0xff]
        %v290 = vld [vmem:[%s223 + $0x78] sm:$0xff]
        %v291 = vld [vmem:[#allocation5] sm:$0xf]
        %v292 = vld [vmem:[#allocation5 + $0x8] sm:$0xf]
        %v293 = vld [vmem:[#allocation5 + $0x10] sm:$0xf]
        %v294 = vld [vmem:[#allocation5 + $0x18] sm:$0xf]
        %v295 = vld [vmem:[#allocation5 + $0x20] sm:$0xf]
        %v296 = vld [vmem:[#allocation5 + $0x28] sm:$0xf]
        %v297 = vld [vmem:[#allocation5 + $0x30] sm:$0xf]
        %v298 = vld [vmem:[#allocation5 + $0x38] sm:$0xf]
        %v299 = vld [vmem:[#allocation5 + $0x40] sm:$0xf]
        %v300 = vld [vmem:[#allocation5 + $0x48] sm:$0xf]
        %v301 = vld [vmem:[#allocation5 + $0x50] sm:$0xf]
        %v302 = vld [vmem:[#allocation5 + $0x58] sm:$0xf]
        %v303 = vld [vmem:[#allocation5 + $0x60] sm:$0xf]
        %v304 = vld [vmem:[#allocation5 + $0x68] sm:$0xf]
        %v305 = vld [vmem:[#allocation5 + $0x70] sm:$0xf]
        %v306 = vld [vmem:[#allocation5 + $0x78] sm:$0xf]
        %v307 = vpack.c.bf16 %v276, %v275
        %v308 = vpack.c.bf16 %v278, %v277
        %v309 = vpack.c.bf16 %v280, %v279
        %v310 = vpack.c.bf16 %v282, %v281
        %v311 = vpack.c.bf16 %v284, %v283
        %v312 = vpack.c.bf16 %v286, %v285
        %v313 = vpack.c.bf16 %v288, %v287
        %v314 = vpack.c.bf16 %v290, %v289
        %v315 = vld [vmem:[#allocation7] ss:$0 sm:$0xff]
        %v332 = vunpack.c.l.b16 %v291
        %v333 = vunpack.c.l.b16 %v292
        %v334 = vunpack.c.l.b16 %v293
        %v335 = vunpack.c.l.b16 %v294
        %v336 = vunpack.c.l.b16 %v295
        %v337 = vunpack.c.l.b16 %v296
        %v338 = vunpack.c.l.b16 %v297
        %v339 = vunpack.c.l.b16 %v298
        %v340 = vunpack.c.l.b16 %v299
        %v341 = vunpack.c.l.b16 %v300
        %v342 = vunpack.c.l.b16 %v301
        %v343 = vunpack.c.l.b16 %v302
        %v344 = vunpack.c.l.b16 %v303
        %v345 = vunpack.c.l.b16 %v304
        %v346 = vunpack.c.l.b16 %v305
        %v347 = vunpack.c.l.b16 %v306
        %v348 = vpack.c.b16 %v333, %v332
        %v349 = vpack.c.b16 %v335, %v334
        %v350 = vpack.c.b16 %v337, %v336
        %v351 = vpack.c.b16 %v339, %v338
        %v352 = vpack.c.b16 %v341, %v340
        %v353 = vpack.c.b16 %v343, %v342
        %v354 = vpack.c.b16 %v345, %v344
        %v355 = vpack.c.b16 %v347, %v346
        %364 = vmatprep.subr.bf16.mxu0 0
        %365 = vmatpush1.bf16.msra.mxu0 %v348
        %366 = vmatprep.subr.bf16.mxu0 0
        %367 = vmatpush1.bf16.msra.mxu0 %v349
        %368 = vmatprep.subr.bf16.mxu0 0
        %369 = vmatpush1.bf16.msra.mxu0 %v350
        %370 = vmatprep.subr.bf16.mxu0 0
        %371 = vmatpush1.bf16.msra.mxu0 %v351
        %372 = vmatprep.subr.bf16.mxu0 0
        %373 = vmatpush1.bf16.msra.mxu0 %v352
        %374 = vmatprep.subr.bf16.mxu0 0
        %375 = vmatpush1.bf16.msra.mxu0 %v353
        %376 = vmatprep.subr.bf16.mxu0 0
        %377 = vmatpush1.bf16.msra.mxu0 %v354
        %378 = vmatprep.subr.bf16.mxu0 0
        %379 = vmatpush1.bf16.msra.mxu0 %v355
        %380 = vmatprep.subr.bf16.mxu0 0
        %381 = vmatpush1.bf16.msra.mxu0 0
        %382 = vmatprep.subr.bf16.mxu0 0
        %383 = vmatpush1.bf16.msra.mxu0 0
        %384 = vmatprep.subr.bf16.mxu0 0
        %385 = vmatpush1.bf16.msra.mxu0 0
        %386 = vmatprep.subr.bf16.mxu0 0
        %387 = vmatpush1.bf16.msra.mxu0 0
        %388 = vmatprep.subr.bf16.mxu0 0
        %389 = vmatpush1.bf16.msra.mxu0 0
        %390 = vmatprep.subr.bf16.mxu0 0
        %391 = vmatpush1.bf16.msra.mxu0 0
        %392 = vmatprep.subr.bf16.mxu0 0
        %393 = vmatpush1.bf16.msra.mxu0 0
        %394 = vmatprep.subr.bf16.mxu0 0
        %395 = vmatpush1.bf16.msra.mxu0 0
        %396 = vmatprep.mubr.bf16.mxu0 0
        %397 = vmatmul.mubr.bf16.gmra.mrb[0].mxu0 %v307
        %v398 = vpop.f32.mrb[0].mxu0
        %v399 = vadd.f32 %v315, %v398
        %v400 = vpop.f32.mrb[0].mxu0
        %v401 = vpop.f32.mrb[0].mxu0
        %v402 = vadd.f32 %v315, %v401
        %v403 = vpop.f32.mrb[0].mxu0
        %404 = vmatprep.mubr.bf16.mxu0 0
        %405 = vmatmul.mubr.bf16.gmra.mrb[0].mxu0 %v308
        %v406 = vpop.f32.mrb[0].mxu0
        %v407 = vadd.f32 %v315, %v406
        %v408 = vpop.f32.mrb[0].mxu0
        %v409 = vpop.f32.mrb[0].mxu0
        %v410 = vadd.f32 %v315, %v409
        %v411 = vpop.f32.mrb[0].mxu0
        %412 = vmatprep.mubr.bf16.mxu0 0
        %413 = vmatmul.mubr.bf16.gmra.mrb[0].mxu0 %v309
        %v414 = vpop.f32.mrb[0].mxu0
        %v415 = vadd.f32 %v315, %v414
        %v416 = vpop.f32.mrb[0].mxu0
        %v417 = vpop.f32.mrb[0].mxu0
        %v418 = vadd.f32 %v315, %v417
        %v419 = vpop.f32.mrb[0].mxu0
        %420 = vmatprep.mubr.bf16.mxu0 0
        %421 = vmatmul.mubr.bf16.gmra.mrb[0].mxu0 %v310
        %v422 = vpop.f32.mrb[0].mxu0
        %v423 = vadd.f32 %v315, %v422
        %v424 = vpop.f32.mrb[0].mxu0
        %v425 = vpop.f32.mrb[0].mxu0
        %v426 = vadd.f32 %v315, %v425
        %v427 = vpop.f32.mrb[0].mxu0
        %428 = vmatprep.mubr.bf16.mxu0 0
        %429 = vmatmul.mubr.bf16.gmra.mrb[0].mxu0 %v311
        %v430 = vpop.f32.mrb[0].mxu0
        %v431 = vadd.f32 %v315, %v430
        %v432 = vpop.f32.mrb[0].mxu0
        %v433 = vpop.f32.mrb[0].mxu0
        %v434 = vadd.f32 %v315, %v433
        %v435 = vpop.f32.mrb[0].mxu0
        %436 = vmatprep.mubr.bf16.mxu0 0
        %437 = vmatmul.mubr.bf16.gmra.mrb[0].mxu0 %v312
        %v438 = vpop.f32.mrb[0].mxu0
        %v439 = vadd.f32 %v315, %v438
        %v440 = vpop.f32.mrb[0].mxu0
        %v441 = vpop.f32.mrb[0].mxu0
        %v442 = vadd.f32 %v315, %v441
        %v443 = vpop.f32.mrb[0].mxu0
        %444 = vmatprep.mubr.bf16.mxu0 0
        %445 = vmatmul.mubr.bf16.gmra.mrb[0].mxu0 %v313
        %v446 = vpop.f32.mrb[0].mxu0
        %v447 = vadd.f32 %v315, %v446
        %v448 = vpop.f32.mrb[0].mxu0
        %v449 = vpop.f32.mrb[0].mxu0
        %v450 = vadd.f32 %v315, %v449
        %v451 = vpop.f32.mrb[0].mxu0
        %452 = vmatprep.mubr.bf16.mxu0 0
        %453 = vmatmul.mubr.bf16.gmra.mrb[0].mxu0 %v314
        %v454 = vpop.f32.mrb[0].mxu0
        %v455 = vadd.f32 %v315, %v454
        %v456 = vpop.f32.mrb[0].mxu0
        %v457 = vpop.f32.mrb[0].mxu0
        %v458 = vadd.f32 %v315, %v457
        %v459 = vpop.f32.mrb[0].mxu0
        %460 = vdwg.mxu0
        %v461 = vld [vmem:[#allocation5 + $0x80] sm:$0xff]
        %v462 = vld [vmem:[#allocation5 + $0x88] sm:$0xff]
        %v463 = vld [vmem:[#allocation5 + $0x90] sm:$0xff]
        %v464 = vld [vmem:[#allocation5 + $0x98] sm:$0xff]
        %v465 = vld [vmem:[#allocation5 + $0xa0] sm:$0xff]
        %v466 = vld [vmem:[#allocation5 + $0xa8] sm:$0xff]
        %v467 = vld [vmem:[#allocation5 + $0xb0] sm:$0xff]
        %v468 = vld [vmem:[#allocation5 + $0xb8] sm:$0xff]
        %v469 = vld [vmem:[#allocation5 + $0xc0] sm:$0xff]
        %v470 = vld [vmem:[#allocation5 + $0xc8] sm:$0xff]
        %v471 = vld [vmem:[#allocation5 + $0xd0] sm:$0xff]
        %v472 = vld [vmem:[#allocation5 + $0xd8] sm:$0xff]
        %v473 = vld [vmem:[#allocation5 + $0xe0] sm:$0xff]
        %v474 = vld [vmem:[#allocation5 + $0xe8] sm:$0xff]
        %v475 = vld [vmem:[#allocation5 + $0xf0] sm:$0xff]
        %v476 = vld [vmem:[#allocation5 + $0xf8] sm:$0xff]
        %v477 = vpack.c.bf16 %v402, %v399
        %v478 = vpack.c.bf16 %v410, %v407
        %v479 = vpack.c.bf16 %v418, %v415
        %v480 = vpack.c.bf16 %v426, %v423
        %v481 = vpack.c.bf16 %v434, %v431
        %v482 = vpack.c.bf16 %v442, %v439
        %v483 = vpack.c.bf16 %v450, %v447
        %v484 = vpack.c.bf16 %v458, %v455
        %s485 = scalar_lea.vmem [#allocation7], 1
        %v486 = vld [vmem:[%s485] ss:$8 sm:$0x3]
        %v488 = vlaneseq
        %v489 = vshrl.u32 %v488, 7
        %v490 = vsub.s32 0, %v489
        %v491 = vrot.slane %v486, %v490
        %v492 = vlaneseq
        %v493 = vshrl.u32 %v492, 7
        %v494 = vsub.s32 1, %v493
        %v495 = vrot.slane %v486, %v494
        %v514 = vunpack.c.l.b16 %v461
        %v515 = vunpack.c.h.b16 %v461
        %v516 = vunpack.c.l.b16 %v462
        %v517 = vunpack.c.h.b16 %v462
        %v518 = vunpack.c.l.b16 %v463
        %v519 = vunpack.c.h.b16 %v463
        %v520 = vunpack.c.l.b16 %v464
        %v521 = vunpack.c.h.b16 %v464
        %v522 = vunpack.c.l.b16 %v465
        %v523 = vunpack.c.h.b16 %v465
        %v524 = vunpack.c.l.b16 %v466
        %v525 = vunpack.c.h.b16 %v466
        %v526 = vunpack.c.l.b16 %v467
        %v527 = vunpack.c.h.b16 %v467
        %v528 = vunpack.c.l.b16 %v468
        %v529 = vunpack.c.h.b16 %v468
        %v530 = vunpack.c.l.b16 %v469
        %v531 = vunpack.c.h.b16 %v469
        %v532 = vunpack.c.l.b16 %v470
        %v533 = vunpack.c.h.b16 %v470
        %v534 = vunpack.c.l.b16 %v471
        %v535 = vunpack.c.h.b16 %v471
        %v536 = vunpack.c.l.b16 %v472
        %v537 = vunpack.c.h.b16 %v472
        %v538 = vunpack.c.l.b16 %v473
        %v539 = vunpack.c.h.b16 %v473
        %v540 = vunpack.c.l.b16 %v474
        %v541 = vunpack.c.h.b16 %v474
        %v542 = vunpack.c.l.b16 %v475
        %v543 = vunpack.c.h.b16 %v475
        %v544 = vunpack.c.l.b16 %v476
        %v545 = vunpack.c.h.b16 %v476
        %v546 = vpack.c.b16 %v516, %v514
        %v547 = vpack.c.b16 %v517, %v515
        %v548 = vpack.c.b16 %v520, %v518
        %v549 = vpack.c.b16 %v521, %v519
        %v550 = vpack.c.b16 %v524, %v522
        %v551 = vpack.c.b16 %v525, %v523
        %v552 = vpack.c.b16 %v528, %v526
        %v553 = vpack.c.b16 %v529, %v527
        %v554 = vpack.c.b16 %v532, %v530
        %v555 = vpack.c.b16 %v533, %v531
        %v556 = vpack.c.b16 %v536, %v534
        %v557 = vpack.c.b16 %v537, %v535
        %v558 = vpack.c.b16 %v540, %v538
        %v559 = vpack.c.b16 %v541, %v539
        %v560 = vpack.c.b16 %v544, %v542
        %v561 = vpack.c.b16 %v545, %v543
        %578 = vmatprep.subr.bf16.mxu0 %v547
        %579 = vmatpush1.bf16.msra.mxu0 %v546
        %580 = vmatprep.subr.bf16.mxu0 %v549
        %581 = vmatpush1.bf16.msra.mxu0 %v548
        %582 = vmatprep.subr.bf16.mxu0 %v551
        %583 = vmatpush1.bf16.msra.mxu0 %v550
        %584 = vmatprep.subr.bf16.mxu0 %v553
        %585 = vmatpush1.bf16.msra.mxu0 %v552
        %586 = vmatprep.subr.bf16.mxu0 %v555
        %587 = vmatpush1.bf16.msra.mxu0 %v554
        %588 = vmatprep.subr.bf16.mxu0 %v557
        %589 = vmatpush1.bf16.msra.mxu0 %v556
        %590 = vmatprep.subr.bf16.mxu0 %v559
        %591 = vmatpush1.bf16.msra.mxu0 %v558
        %592 = vmatprep.subr.bf16.mxu0 %v561
        %593 = vmatpush1.bf16.msra.mxu0 %v560
        %594 = vmatprep.subr.bf16.mxu0 0
        %595 = vmatpush1.bf16.msra.mxu0 0
        %596 = vmatprep.subr.bf16.mxu0 0
        %597 = vmatpush1.bf16.msra.mxu0 0
        %598 = vmatprep.subr.bf16.mxu0 0
        %599 = vmatpush1.bf16.msra.mxu0 0
        %600 = vmatprep.subr.bf16.mxu0 0
        %601 = vmatpush1.bf16.msra.mxu0 0
        %602 = vmatprep.subr.bf16.mxu0 0
        %603 = vmatpush1.bf16.msra.mxu0 0
        %604 = vmatprep.subr.bf16.mxu0 0
        %605 = vmatpush1.bf16.msra.mxu0 0
        %606 = vmatprep.subr.bf16.mxu0 0
        %607 = vmatpush1.bf16.msra.mxu0 0
        %608 = vmatprep.subr.bf16.mxu0 0
        %609 = vmatpush1.bf16.msra.mxu0 0
        %610 = vmatprep.mubr.bf16.mxu0 0
        %611 = vmatmul.mubr.bf16.gmra.mrb[0].mxu0 %v477
        %v612 = vpop.f32.mrb[0].mxu0
        %v613 = vadd.f32 %v491, %v612
        %v614 = vpop.f32.mrb[0].mxu0
        %v615 = vadd.f32 %v495, %v614
        %v616 = vpop.f32.mrb[0].mxu0
        %v617 = vadd.f32 %v491, %v616
        %v618 = vpop.f32.mrb[0].mxu0
        %v619 = vadd.f32 %v495, %v618
        %620 = vmatprep.mubr.bf16.mxu0 0
        %621 = vmatmul.mubr.bf16.gmra.mrb[0].mxu0 %v478
        %v622 = vpop.f32.mrb[0].mxu0
        %v623 = vadd.f32 %v491, %v622
        %v624 = vpop.f32.mrb[0].mxu0
        %v625 = vadd.f32 %v495, %v624
        %v626 = vpop.f32.mrb[0].mxu0
        %v627 = vadd.f32 %v491, %v626
        %v628 = vpop.f32.mrb[0].mxu0
        %v629 = vadd.f32 %v495, %v628
        %630 = vmatprep.mubr.bf16.mxu0 0
        %631 = vmatmul.mubr.bf16.gmra.mrb[0].mxu0 %v479
        %v632 = vpop.f32.mrb[0].mxu0
        %v633 = vadd.f32 %v491, %v632
        %v634 = vpop.f32.mrb[0].mxu0
        %v635 = vadd.f32 %v495, %v634
        %v636 = vpop.f32.mrb[0].mxu0
        %v637 = vadd.f32 %v491, %v636
        %v638 = vpop.f32.mrb[0].mxu0
        %v639 = vadd.f32 %v495, %v638
        %640 = vmatprep.mubr.bf16.mxu0 0
        %641 = vmatmul.mubr.bf16.gmra.mrb[0].mxu0 %v480
        %v642 = vpop.f32.mrb[0].mxu0
        %v643 = vadd.f32 %v491, %v642
        %v644 = vpop.f32.mrb[0].mxu0
        %v645 = vadd.f32 %v495, %v644
        %v646 = vpop.f32.mrb[0].mxu0
        %v647 = vadd.f32 %v491, %v646
        %v648 = vpop.f32.mrb[0].mxu0
        %v649 = vadd.f32 %v495, %v648
        %650 = vmatprep.mubr.bf16.mxu0 0
        %651 = vmatmul.mubr.bf16.gmra.mrb[0].mxu0 %v481
        %v652 = vpop.f32.mrb[0].mxu0
        %v653 = vadd.f32 %v491, %v652
        %v654 = vpop.f32.mrb[0].mxu0
        %v655 = vadd.f32 %v495, %v654
        %v656 = vpop.f32.mrb[0].mxu0
        %v657 = vadd.f32 %v491, %v656
        %v658 = vpop.f32.mrb[0].mxu0
        %v659 = vadd.f32 %v495, %v658
        %660 = vmatprep.mubr.bf16.mxu0 0
        %661 = vmatmul.mubr.bf16.gmra.mrb[0].mxu0 %v482
        %v662 = vpop.f32.mrb[0].mxu0
        %v663 = vadd.f32 %v491, %v662
        %v664 = vpop.f32.mrb[0].mxu0
        %v665 = vadd.f32 %v495, %v664
        %v666 = vpop.f32.mrb[0].mxu0
        %v667 = vadd.f32 %v491, %v666
        %v668 = vpop.f32.mrb[0].mxu0
        %v669 = vadd.f32 %v495, %v668
        %670 = vmatprep.mubr.bf16.mxu0 0
        %671 = vmatmul.mubr.bf16.gmra.mrb[0].mxu0 %v483
        %v672 = vpop.f32.mrb[0].mxu0
        %v673 = vadd.f32 %v491, %v672
        %v674 = vpop.f32.mrb[0].mxu0
        %v675 = vadd.f32 %v495, %v674
        %v676 = vpop.f32.mrb[0].mxu0
        %v677 = vadd.f32 %v491, %v676
        %v678 = vpop.f32.mrb[0].mxu0
        %v679 = vadd.f32 %v495, %v678
        %680 = vmatprep.mubr.bf16.mxu0 0
        %681 = vmatmul.mubr.bf16.gmra.mrb[0].mxu0 %v484
        %v682 = vpop.f32.mrb[0].mxu0
        %v683 = vadd.f32 %v491, %v682
        %v684 = vpop.f32.mrb[0].mxu0
        %v685 = vadd.f32 %v495, %v684
        %v686 = vpop.f32.mrb[0].mxu0
        %v687 = vadd.f32 %v491, %v686
        %v688 = vpop.f32.mrb[0].mxu0
        %v689 = vadd.f32 %v495, %v688
        %690 = vdwg.mxu0
        %v691 = vpack.c.bf16 %v615, %v615
        %v692 = vpack.c.bf16 %v619, %v619
        %v693 = vpack.c.bf16 %v625, %v625
        %v694 = vpack.c.bf16 %v629, %v629
        %v695 = vpack.c.bf16 %v635, %v635
        %v696 = vpack.c.bf16 %v639, %v639
        %v697 = vpack.c.bf16 %v645, %v645
        %v698 = vpack.c.bf16 %v649, %v649
        %v699 = vpack.c.bf16 %v655, %v655
        %v700 = vpack.c.bf16 %v659, %v659
        %v701 = vpack.c.bf16 %v665, %v665
        %v702 = vpack.c.bf16 %v669, %v669
        %v703 = vpack.c.bf16 %v675, %v675
        %v704 = vpack.c.bf16 %v679, %v679
        %v705 = vpack.c.bf16 %v685, %v685
        %v706 = vpack.c.bf16 %v689, %v689
        %711 = vrot.lane.b32.xlu0 %v263, 64
        %v712 = vpop.permute.xlu0 %711
        %713 = vrot.lane.b32.xlu0 %v264, 64
        %v714 = vpop.permute.xlu0 %713
        %715 = vrot.lane.b32.xlu0 %v265, 64
        %v716 = vpop.permute.xlu0 %715
        %717 = vrot.lane.b32.xlu0 %v266, 64
        %v718 = vpop.permute.xlu0 %717
        %v723 = vmul.f32 %v615, %v712
        %v724 = vmul.f32 %v615, %v714
        %v725 = vmul.f32 %v615, %v716
        %v726 = vmul.f32 %v615, %v718
        %v727 = vmul.f32 %v619, %v712
        %v728 = vmul.f32 %v619, %v714
        %v729 = vmul.f32 %v619, %v716
        %v730 = vmul.f32 %v619, %v718
        %v731 = vmul.f32 %v625, %v712
        %v732 = vmul.f32 %v625, %v714
        %v733 = vmul.f32 %v625, %v716
        %v734 = vmul.f32 %v625, %v718
        %v735 = vmul.f32 %v629, %v712
        %v736 = vmul.f32 %v629, %v714
        %v737 = vmul.f32 %v629, %v716
        %v738 = vmul.f32 %v629, %v718
        %v739 = vmul.f32 %v635, %v712
        %v740 = vmul.f32 %v635, %v714
        %v741 = vmul.f32 %v635, %v716
        %v742 = vmul.f32 %v635, %v718
        %v743 = vmul.f32 %v639, %v712
        %v744 = vmul.f32 %v639, %v714
        %v745 = vmul.f32 %v639, %v716
        %v746 = vmul.f32 %v639, %v718
        %v747 = vmul.f32 %v645, %v712
        %v748 = vmul.f32 %v645, %v714
        %v749 = vmul.f32 %v645, %v716
        %v750 = vmul.f32 %v645, %v718
        %v751 = vmul.f32 %v649, %v712
        %v752 = vmul.f32 %v649, %v714
        %v753 = vmul.f32 %v649, %v716
        %v754 = vmul.f32 %v649, %v718
        %v755 = vmul.f32 %v655, %v712
        %v756 = vmul.f32 %v655, %v714
        %v757 = vmul.f32 %v655, %v716
        %v758 = vmul.f32 %v655, %v718
        %v759 = vmul.f32 %v659, %v712
        %v760 = vmul.f32 %v659, %v714
        %v761 = vmul.f32 %v659, %v716
        %v762 = vmul.f32 %v659, %v718
        %v763 = vmul.f32 %v665, %v712
        %v764 = vmul.f32 %v665, %v714
        %v765 = vmul.f32 %v665, %v716
        %v766 = vmul.f32 %v665, %v718
        %v767 = vmul.f32 %v669, %v712
        %v768 = vmul.f32 %v669, %v714
        %v769 = vmul.f32 %v669, %v716
        %v770 = vmul.f32 %v669, %v718
        %v771 = vmul.f32 %v675, %v712
        %v772 = vmul.f32 %v675, %v714
        %v773 = vmul.f32 %v675, %v716
        %v774 = vmul.f32 %v675, %v718
        %v775 = vmul.f32 %v679, %v712
        %v776 = vmul.f32 %v679, %v714
        %v777 = vmul.f32 %v679, %v716
        %v778 = vmul.f32 %v679, %v718
        %v779 = vmul.f32 %v685, %v712
        %v780 = vmul.f32 %v685, %v714
        %v781 = vmul.f32 %v685, %v716
        %v782 = vmul.f32 %v685, %v718
        %v783 = vmul.f32 %v689, %v712
        %v784 = vmul.f32 %v689, %v714
        %v785 = vmul.f32 %v689, %v716
        %v786 = vmul.f32 %v689, %v718
        %v787 = vpack.c.bf16 %v724, %v723
        %v788 = vpack.c.bf16 %v726, %v725
        %v789 = vpack.c.bf16 %v728, %v727
        %v790 = vpack.c.bf16 %v730, %v729
        %v791 = vpack.c.bf16 %v732, %v731
        %v792 = vpack.c.bf16 %v734, %v733
        %v793 = vpack.c.bf16 %v736, %v735
        %v794 = vpack.c.bf16 %v738, %v737
        %v795 = vpack.c.bf16 %v740, %v739
        %v796 = vpack.c.bf16 %v742, %v741
        %v797 = vpack.c.bf16 %v744, %v743
        %v798 = vpack.c.bf16 %v746, %v745
        %v799 = vpack.c.bf16 %v748, %v747
        %v800 = vpack.c.bf16 %v750, %v749
        %v801 = vpack.c.bf16 %v752, %v751
        %v802 = vpack.c.bf16 %v754, %v753
        %v803 = vpack.c.bf16 %v756, %v755
        %v804 = vpack.c.bf16 %v758, %v757
        %v805 = vpack.c.bf16 %v760, %v759
        %v806 = vpack.c.bf16 %v762, %v761
        %v807 = vpack.c.bf16 %v764, %v763
        %v808 = vpack.c.bf16 %v766, %v765
        %v809 = vpack.c.bf16 %v768, %v767
        %v810 = vpack.c.bf16 %v770, %v769
        %v811 = vpack.c.bf16 %v772, %v771
        %v812 = vpack.c.bf16 %v774, %v773
        %v813 = vpack.c.bf16 %v776, %v775
        %v814 = vpack.c.bf16 %v778, %v777
        %v815 = vpack.c.bf16 %v780, %v779
        %v816 = vpack.c.bf16 %v782, %v781
        %v817 = vpack.c.bf16 %v784, %v783
        %v818 = vpack.c.bf16 %v786, %v785
        %v819 = vmul.f32 %v613, %v271
        %v820 = vmul.f32 %v613, %v272
        %v821 = vmul.f32 %v613, %v273
        %v822 = vmul.f32 %v613, %v274
        %v823 = vmul.f32 %v617, %v271
        %v824 = vmul.f32 %v617, %v272
        %v825 = vmul.f32 %v617, %v273
        %v826 = vmul.f32 %v617, %v274
        %v827 = vmul.f32 %v623, %v271
        %v828 = vmul.f32 %v623, %v272
        %v829 = vmul.f32 %v623, %v273
        %v830 = vmul.f32 %v623, %v274
        %v831 = vmul.f32 %v627, %v271
        %v832 = vmul.f32 %v627, %v272
        %v833 = vmul.f32 %v627, %v273
        %v834 = vmul.f32 %v627, %v274
        %v835 = vmul.f32 %v633, %v271
        %v836 = vmul.f32 %v633, %v272
        %v837 = vmul.f32 %v633, %v273
        %v838 = vmul.f32 %v633, %v274
        %v839 = vmul.f32 %v637, %v271
        %v840 = vmul.f32 %v637, %v272
        %v841 = vmul.f32 %v637, %v273
        %v842 = vmul.f32 %v637, %v274
        %v843 = vmul.f32 %v643, %v271
        %v844 = vmul.f32 %v643, %v272
        %v845 = vmul.f32 %v643, %v273
        %v846 = vmul.f32 %v643, %v274
        %v847 = vmul.f32 %v647, %v271
        %v848 = vmul.f32 %v647, %v272
        %v849 = vmul.f32 %v647, %v273
        %v850 = vmul.f32 %v647, %v274
        %v851 = vmul.f32 %v653, %v271
        %v852 = vmul.f32 %v653, %v272
        %v853 = vmul.f32 %v653, %v273
        %v854 = vmul.f32 %v653, %v274
        %v855 = vmul.f32 %v657, %v271
        %v856 = vmul.f32 %v657, %v272
        %v857 = vmul.f32 %v657, %v273
        %v858 = vmul.f32 %v657, %v274
        %v859 = vmul.f32 %v663, %v271
        %v860 = vmul.f32 %v663, %v272
        %v861 = vmul.f32 %v663, %v273
        %v862 = vmul.f32 %v663, %v274
        %v863 = vmul.f32 %v667, %v271
        %v864 = vmul.f32 %v667, %v272
        %v865 = vmul.f32 %v667, %v273
        %v866 = vmul.f32 %v667, %v274
        %v867 = vmul.f32 %v673, %v271
        %v868 = vmul.f32 %v673, %v272
        %v869 = vmul.f32 %v673, %v273
        %v870 = vmul.f32 %v673, %v274
        %v871 = vmul.f32 %v677, %v271
        %v872 = vmul.f32 %v677, %v272
        %v873 = vmul.f32 %v677, %v273
        %v874 = vmul.f32 %v677, %v274
        %v875 = vmul.f32 %v683, %v271
        %v876 = vmul.f32 %v683, %v272
        %v877 = vmul.f32 %v683, %v273
        %v878 = vmul.f32 %v683, %v274
        %v879 = vmul.f32 %v687, %v271
        %v880 = vmul.f32 %v687, %v272
        %v881 = vmul.f32 %v687, %v273
        %v882 = vmul.f32 %v687, %v274
        %v883 = vpack.c.bf16 %v820, %v819
        %v884 = vpack.c.bf16 %v822, %v821
        %v885 = vpack.c.bf16 %v824, %v823
        %v886 = vpack.c.bf16 %v826, %v825
        %v887 = vpack.c.bf16 %v828, %v827
        %v888 = vpack.c.bf16 %v830, %v829
        %v889 = vpack.c.bf16 %v832, %v831
        %v890 = vpack.c.bf16 %v834, %v833
        %v891 = vpack.c.bf16 %v836, %v835
        %v892 = vpack.c.bf16 %v838, %v837
        %v893 = vpack.c.bf16 %v840, %v839
        %v894 = vpack.c.bf16 %v842, %v841
        %v895 = vpack.c.bf16 %v844, %v843
        %v896 = vpack.c.bf16 %v846, %v845
        %v897 = vpack.c.bf16 %v848, %v847
        %v898 = vpack.c.bf16 %v850, %v849
        %v899 = vpack.c.bf16 %v852, %v851
        %v900 = vpack.c.bf16 %v854, %v853
        %v901 = vpack.c.bf16 %v856, %v855
        %v902 = vpack.c.bf16 %v858, %v857
        %v903 = vpack.c.bf16 %v860, %v859
        %v904 = vpack.c.bf16 %v862, %v861
        %v905 = vpack.c.bf16 %v864, %v863
        %v906 = vpack.c.bf16 %v866, %v865
        %v907 = vpack.c.bf16 %v868, %v867
        %v908 = vpack.c.bf16 %v870, %v869
        %v909 = vpack.c.bf16 %v872, %v871
        %v910 = vpack.c.bf16 %v874, %v873
        %v911 = vpack.c.bf16 %v876, %v875
        %v912 = vpack.c.bf16 %v878, %v877
        %v913 = vpack.c.bf16 %v880, %v879
        %v914 = vpack.c.bf16 %v882, %v881
        %917 = vrot.lane.b32.xlu0 %v787, 64
        %v918 = vpop.permute.xlu0 %917
        %919 = vrot.lane.b32.xlu0 %v788, 64
        %v920 = vpop.permute.xlu0 %919
        %vm921 = vcmask 523264
        %v923 = vsel %vm921, %v691, 0
        %v926 = vsel %vm921, %v918, 0
        %v929 = vsel %vm921, %v920, 0
        %931 = vmatprep.subr.bf16.mxu0 0
        %932 = vmatpush1.bf16.xpose.msra.mxu0 %v926
        %933 = vmatprep.subr.bf16.mxu0 0
        %934 = vmatpush1.bf16.xpose.msra.mxu0 %v929
        %935 = vmatprep.subr.bf16.mxu0 0
        %936 = vmatpush1.bf16.xpose.msra.mxu0 0
        %937 = vmatprep.subr.bf16.mxu0 0
        %938 = vmatpush1.bf16.xpose.msra.mxu0 0
        %939 = vmatprep.subr.bf16.mxu0 0
        %940 = vmatpush1.bf16.xpose.msra.mxu0 0
        %941 = vmatprep.subr.bf16.mxu0 0
        %942 = vmatpush1.bf16.xpose.msra.mxu0 0
        %943 = vmatprep.subr.bf16.mxu0 0
        %944 = vmatpush1.bf16.xpose.msra.mxu0 0
        %945 = vmatprep.subr.bf16.mxu0 0
        %946 = vmatpush1.bf16.xpose.msra.mxu0 0
        %947 = vmatprep.subr.bf16.mxu0 0
        %948 = vmatpush1.bf16.xpose.msra.mxu0 0
        %949 = vmatprep.subr.bf16.mxu0 0
        %950 = vmatpush1.bf16.xpose.msra.mxu0 0
        %951 = vmatprep.subr.bf16.mxu0 0
        %952 = vmatpush1.bf16.xpose.msra.mxu0 0
        %953 = vmatprep.subr.bf16.mxu0 0
        %954 = vmatpush1.bf16.xpose.msra.mxu0 0
        %955 = vmatprep.subr.bf16.mxu0 0
        %956 = vmatpush1.bf16.xpose.msra.mxu0 0
        %957 = vmatprep.subr.bf16.mxu0 0
        %958 = vmatpush1.bf16.xpose.msra.mxu0 0
        %959 = vmatprep.subr.bf16.mxu0 0
        %960 = vmatpush1.bf16.xpose.msra.mxu0 0
        %961 = vmatprep.subr.bf16.mxu0 0
        %962 = vmatpush1.bf16.xpose.msra.mxu0 0
        %963 = vmatprep.mubr.bf16.mxu0 0
        %964 = vmatmul.mubr.bf16.gmra.mrb[0].mxu0 %v923
        %v965 = vpop.f32.mrb[0].mxu0
        %v966 = vadd.f32 0.0, %v965
        %v967 = vpop.f32.mrb[0].mxu0
        %v968 = vpop.f32.mrb[0].mxu0
        %v969 = vpop.f32.mrb[0].mxu0
        %970 = vdwg.mxu0
        %973 = vrot.lane.b32.xlu0 %v789, 64
        %v974 = vpop.permute.xlu0 %973
        %975 = vrot.lane.b32.xlu0 %v790, 64
        %v976 = vpop.permute.xlu0 %975
        %v978 = vsel %vm921, %v692, 0
        %v981 = vsel %vm921, %v974, 0
        %v984 = vsel %vm921, %v976, 0
        %986 = vmatprep.subr.bf16.mxu0 0
        %987 = vmatpush1.bf16.xpose.msra.mxu0 %v981
        %988 = vmatprep.subr.bf16.mxu0 0
        %989 = vmatpush1.bf16.xpose.msra.mxu0 %v984
        %990 = vmatprep.subr.bf16.mxu0 0
        %991 = vmatpush1.bf16.xpose.msra.mxu0 0
        %992 = vmatprep.subr.bf16.mxu0 0
        %993 = vmatpush1.bf16.xpose.msra.mxu0 0
        %994 = vmatprep.subr.bf16.mxu0 0
        %995 = vmatpush1.bf16.xpose.msra.mxu0 0
        %996 = vmatprep.subr.bf16.mxu0 0
        %997 = vmatpush1.bf16.xpose.msra.mxu0 0
        %998 = vmatprep.subr.bf16.mxu0 0
        %999 = vmatpush1.bf16.xpose.msra.mxu0 0
        %1000 = vmatprep.subr.bf16.mxu0 0
        %1001 = vmatpush1.bf16.xpose.msra.mxu0 0
        %1002 = vmatprep.subr.bf16.mxu0 0
        %1003 = vmatpush1.bf16.xpose.msra.mxu0 0
        %1004 = vmatprep.subr.bf16.mxu0 0
        %1005 = vmatpush1.bf16.xpose.msra.mxu0 0
        %1006 = vmatprep.subr.bf16.mxu0 0
        %1007 = vmatpush1.bf16.xpose.msra.mxu0 0
        %1008 = vmatprep.subr.bf16.mxu0 0
        %1009 = vmatpush1.bf16.xpose.msra.mxu0 0
        %1010 = vmatprep.subr.bf16.mxu0 0
        %1011 = vmatpush1.bf16.xpose.msra.mxu0 0
        %1012 = vmatprep.subr.bf16.mxu0 0
        %1013 = vmatpush1.bf16.xpose.msra.mxu0 0
        %1014 = vmatprep.subr.bf16.mxu0 0
        %1015 = vmatpush1.bf16.xpose.msra.mxu0 0
        %1016 = vmatprep.subr.bf16.mxu0 0
        %1017 = vmatpush1.bf16.xpose.msra.mxu0 0
        %1018 = vmatprep.mubr.bf16.mxu0 0
        %1019 = vmatmul.mubr.bf16.gmra.mrb[0].mxu0 %v978
        %v1020 = vpop.f32.mrb[0].mxu0
        %v1021 = vadd.f32 0.0, %v1020
        %v1022 = vpop.f32.mrb[0].mxu0
        %v1023 = vpop.f32.mrb[0].mxu0
        %v1024 = vpop.f32.mrb[0].mxu0
        %1025 = vdwg.mxu0
        %1028 = vrot.lane.b32.xlu0 %v791, 64
        %v1029 = vpop.permute.xlu0 %1028
        %1030 = vrot.lane.b32.xlu0 %v792, 64
        %v1031 = vpop.permute.xlu0 %1030
        %v1033 = vsel %vm921, %v693, 0
        %v1036 = vsel %vm921, %v1029, 0
        %v1039 = vsel %vm921, %v1031, 0
        %1041 = vmatprep.subr.bf16.mxu0 0
        %1042 = vmatpush1.bf16.xpose.msra.mxu0 %v1036
        %1043 = vmatprep.subr.bf16.mxu0 0
        %1044 = vmatpush1.bf16.xpose.msra.mxu0 %v1039
        %1045 = vmatprep.subr.bf16.mxu0 0
        %1046 = vmatpush1.bf16.xpose.msra.mxu0 0
        %1047 = vmatprep.subr.bf16.mxu0 0
        %1048 = vmatpush1.bf16.xpose.msra.mxu0 0
        %1049 = vmatprep.subr.bf16.mxu0 0
        %1050 = vmatpush1.bf16.xpose.msra.mxu0 0
        %1051 = vmatprep.subr.bf16.mxu0 0
        %1052 = vmatpush1.bf16.xpose.msra.mxu0 0
        %1053 = vmatprep.subr.bf16.mxu0 0
        %1054 = vmatpush1.bf16.xpose.msra.mxu0 0
        %1055 = vmatprep.subr.bf16.mxu0 0
        %1056 = vmatpush1.bf16.xpose.msra.mxu0 0
        %1057 = vmatprep.subr.bf16.mxu0 0
        %1058 = vmatpush1.bf16.xpose.msra.mxu0 0
        %1059 = vmatprep.subr.bf16.mxu0 0
        %1060 = vmatpush1.bf16.xpose.msra.mxu0 0
        %1061 = vmatprep.subr.bf16.mxu0 0
        %1062 = vmatpush1.bf16.xpose.msra.mxu0 0
        %1063 = vmatprep.subr.bf16.mxu0 0
        %1064 = vmatpush1.bf16.xpose.msra.mxu0 0
        %1065 = vmatprep.subr.bf16.mxu0 0
        %1066 = vmatpush1.bf16.xpose.msra.mxu0 0
        %1067 = vmatprep.subr.bf16.mxu0 0
        %1068 = vmatpush1.bf16.xpose.msra.mxu0 0
        %1069 = vmatprep.subr.bf16.mxu0 0
        %1070 = vmatpush1.bf16.xpose.msra.mxu0 0
        %1071 = vmatprep.subr.bf16.mxu0 0
        %1072 = vmatpush1.bf16.xpose.msra.mxu0 0
        %1073 = vmatprep.mubr.bf16.mxu0 0
        %1074 = vmatmul.mubr.bf16.gmra.mrb[0].mxu0 %v1033
        %v1075 = vpop.f32.mrb[0].mxu0
        %v1076 = vadd.f32 0.0, %v1075
        %v1077 = vpop.f32.mrb[0].mxu0
        %v1078 = vpop.f32.mrb[0].mxu0
        %v1079 = vpop.f32.mrb[0].mxu0
        %1080 = vdwg.mxu0
        %1083 = vrot.lane.b32.xlu0 %v793, 64
        %v1084 = vpop.permute.xlu0 %1083
        %1085 = vrot.lane.b32.xlu0 %v794, 64
        %v1086 = vpop.permute.xlu0 %1085
        %v1088 = vsel %vm921, %v694, 0
        %v1091 = vsel %vm921, %v1084, 0
        %v1094 = vsel %vm921, %v1086, 0
        %1096 = vmatprep.subr.bf16.mxu0 0
        %1097 = vmatpush1.bf16.xpose.msra.mxu0 %v1091
        %1098 = vmatprep.subr.bf16.mxu0 0
        %1099 = vmatpush1.bf16.xpose.msra.mxu0 %v1094
        %1100 = vmatprep.subr.bf16.mxu0 0
        %1101 = vmatpush1.bf16.xpose.msra.mxu0 0
        %1102 = vmatprep.subr.bf16.mxu0 0
        %1103 = vmatpush1.bf16.xpose.msra.mxu0 0
        %1104 = vmatprep.subr.bf16.mxu0 0
        %1105 = vmatpush1.bf16.xpose.msra.mxu0 0
        %1106 = vmatprep.subr.bf16.mxu0 0
        %1107 = vmatpush1.bf16.xpose.msra.mxu0 0
        %1108 = vmatprep.subr.bf16.mxu0 0
        %1109 = vmatpush1.bf16.xpose.msra.mxu0 0
        %1110 = vmatprep.subr.bf16.mxu0 0
        %1111 = vmatpush1.bf16.xpose.msra.mxu0 0
        %1112 = vmatprep.subr.bf16.mxu0 0
        %1113 = vmatpush1.bf16.xpose.msra.mxu0 0
        %1114 = vmatprep.subr.bf16.mxu0 0
        %1115 = vmatpush1.bf16.xpose.msra.mxu0 0
        %1116 = vmatprep.subr.bf16.mxu0 0
        %1117 = vmatpush1.bf16.xpose.msra.mxu0 0
        %1118 = vmatprep.subr.bf16.mxu0 0
        %1119 = vmatpush1.bf16.xpose.msra.mxu0 0
        %1120 = vmatprep.subr.bf16.mxu0 0
        %1121 = vmatpush1.bf16.xpose.msra.mxu0 0
        %1122 = vmatprep.subr.bf16.mxu0 0
        %1123 = vmatpush1.bf16.xpose.msra.mxu0 0
        %1124 = vmatprep.subr.bf16.mxu0 0
        %1125 = vmatpush1.bf16.xpose.msra.mxu0 0
        %1126 = vmatprep.subr.bf16.mxu0 0
        %1127 = vmatpush1.bf16.xpose.msra.mxu0 0
        %1128 = vmatprep.mubr.bf16.mxu0 0
        %1129 = vmatmul.mubr.bf16.gmra.mrb[0].mxu0 %v1088
        %v1130 = vpop.f32.mrb[0].mxu0
        %v1131 = vadd.f32 0.0, %v1130
        %v1132 = vpop.f32.mrb[0].mxu0
        %v1133 = vpop.f32.mrb[0].mxu0
        %v1134 = vpop.f32.mrb[0].mxu0
        %1135 = vdwg.mxu0
        %1138 = vrot.lane.b32.xlu0 %v795, 64
        %v1139 = vpop.permute.xlu0 %1138
        %1140 = vrot.lane.b32.xlu0 %v796, 64
        %v1141 = vpop.permute.xlu0 %1140
        %v1143 = vsel %vm921, %v695, 0
        %v1146 = vsel %vm921, %v1139, 0
        %v1149 = vsel %vm921, %v1141, 0
        %1151 = vmatprep.subr.bf16.mxu0 0
        %1152 = vmatpush1.bf16.xpose.msra.mxu0 %v1146
        %1153 = vmatprep.subr.bf16.mxu0 0
        %1154 = vmatpush1.bf16.xpose.msra.mxu0 %v1149
        %1155 = vmatprep.subr.bf16.mxu0 0
        %1156 = vmatpush1.bf16.xpose.msra.mxu0 0
        %1157 = vmatprep.subr.bf16.mxu0 0
        %1158 = vmatpush1.bf16.xpose.msra.mxu0 0
        %1159 = vmatprep.subr.bf16.mxu0 0
        %1160 = vmatpush1.bf16.xpose.msra.mxu0 0
        %1161 = vmatprep.subr.bf16.mxu0 0
        %1162 = vmatpush1.bf16.xpose.msra.mxu0 0
        %1163 = vmatprep.subr.bf16.mxu0 0
        %1164 = vmatpush1.bf16.xpose.msra.mxu0 0
        %1165 = vmatprep.subr.bf16.mxu0 0
        %1166 = vmatpush1.bf16.xpose.msra.mxu0 0
        %1167 = vmatprep.subr.bf16.mxu0 0
        %1168 = vmatpush1.bf16.xpose.msra.mxu0 0
        %1169 = vmatprep.subr.bf16.mxu0 0
        %1170 = vmatpush1.bf16.xpose.msra.mxu0 0
        %1171 = vmatprep.subr.bf16.mxu0 0
        %1172 = vmatpush1.bf16.xpose.msra.mxu0 0
        %1173 = vmatprep.subr.bf16.mxu0 0
        %1174 = vmatpush1.bf16.xpose.msra.mxu0 0
        %1175 = vmatprep.subr.bf16.mxu0 0
        %1176 = vmatpush1.bf16.xpose.msra.mxu0 0
        %1177 = vmatprep.subr.bf16.mxu0 0
        %1178 = vmatpush1.bf16.xpose.msra.mxu0 0
        %1179 = vmatprep.subr.bf16.mxu0 0
        %1180 = vmatpush1.bf16.xpose.msra.mxu0 0
        %1181 = vmatprep.subr.bf16.mxu0 0
        %1182 = vmatpush1.bf16.xpose.msra.mxu0 0
        %1183 = vmatprep.mubr.bf16.mxu0 0
        %1184 = vmatmul.mubr.bf16.gmra.mrb[0].mxu0 %v1143
        %v1185 = vpop.f32.mrb[0].mxu0
        %v1186 = vadd.f32 0.0, %v1185
        %v1187 = vpop.f32.mrb[0].mxu0
        %v1188 = vpop.f32.mrb[0].mxu0
        %v1189 = vpop.f32.mrb[0].mxu0
        %1190 = vdwg.mxu0
        %1193 = vrot.lane.b32.xlu0 %v797, 64
        %v1194 = vpop.permute.xlu0 %1193
        %1195 = vrot.lane.b32.xlu0 %v798, 64
        %v1196 = vpop.permute.xlu0 %1195
        %v1198 = vsel %vm921, %v696, 0
        %v1201 = vsel %vm921, %v1194, 0
        %v1204 = vsel %vm921, %v1196, 0
        %1206 = vmatprep.subr.bf16.mxu0 0
        %1207 = vmatpush1.bf16.xpose.msra.mxu0 %v1201
        %1208 = vmatprep.subr.bf16.mxu0 0
        %1209 = vmatpush1.bf16.xpose.msra.mxu0 %v1204
        %1210 = vmatprep.subr.bf16.mxu0 0
        %1211 = vmatpush1.bf16.xpose.msra.mxu0 0
        %1212 = vmatprep.subr.bf16.mxu0 0
        %1213 = vmatpush1.bf16.xpose.msra.mxu0 0
        %1214 = vmatprep.subr.bf16.mxu0 0
        %1215 = vmatpush1.bf16.xpose.msra.mxu0 0
        %1216 = vmatprep.subr.bf16.mxu0 0
        %1217 = vmatpush1.bf16.xpose.msra.mxu0 0
        %1218 = vmatprep.subr.bf16.mxu0 0
        %1219 = vmatpush1.bf16.xpose.msra.mxu0 0
        %1220 = vmatprep.subr.bf16.mxu0 0
        %1221 = vmatpush1.bf16.xpose.msra.mxu0 0
        %1222 = vmatprep.subr.bf16.mxu0 0
        %1223 = vmatpush1.bf16.xpose.msra.mxu0 0
        %1224 = vmatprep.subr.bf16.mxu0 0
        %1225 = vmatpush1.bf16.xpose.msra.mxu0 0
        %1226 = vmatprep.subr.bf16.mxu0 0
        %1227 = vmatpush1.bf16.xpose.msra.mxu0 0
        %1228 = vmatprep.subr.bf16.mxu0 0
        %1229 = vmatpush1.bf16.xpose.msra.mxu0 0
        %1230 = vmatprep.subr.bf16.mxu0 0
        %1231 = vmatpush1.bf16.xpose.msra.mxu0 0
        %1232 = vmatprep.subr.bf16.mxu0 0
        %1233 = vmatpush1.bf16.xpose.msra.mxu0 0
        %1234 = vmatprep.subr.bf16.mxu0 0
        %1235 = vmatpush1.bf16.xpose.msra.mxu0 0
        %1236 = vmatprep.subr.bf16.mxu0 0
        %1237 = vmatpush1.bf16.xpose.msra.mxu0 0
        %1238 = vmatprep.mubr.bf16.mxu0 0
        %1239 = vmatmul.mubr.bf16.gmra.mrb[0].mxu0 %v1198
        %v1240 = vpop.f32.mrb[0].mxu0
        %v1241 = vadd.f32 0.0, %v1240
        %v1242 = vpop.f32.mrb[0].mxu0
        %v1243 = vpop.f32.mrb[0].mxu0
        %v1244 = vpop.f32.mrb[0].mxu0
        %1245 = vdwg.mxu0
        %1248 = vrot.lane.b32.xlu0 %v799, 64
        %v1249 = vpop.permute.xlu0 %1248
        %1250 = vrot.lane.b32.xlu0 %v800, 64
        %v1251 = vpop.permute.xlu0 %1250
        %v1253 = vsel %vm921, %v697, 0
        %v1256 = vsel %vm921, %v1249, 0
        %v1259 = vsel %vm921, %v1251, 0
        %1261 = vmatprep.subr.bf16.mxu0 0
        %1262 = vmatpush1.bf16.xpose.msra.mxu0 %v1256
        %1263 = vmatprep.subr.bf16.mxu0 0
        %1264 = vmatpush1.bf16.xpose.msra.mxu0 %v1259
        %1265 = vmatprep.subr.bf16.mxu0 0
        %1266 = vmatpush1.bf16.xpose.msra.mxu0 0
        %1267 = vmatprep.subr.bf16.mxu0 0
        %1268 = vmatpush1.bf16.xpose.msra.mxu0 0
        %1269 = vmatprep.subr.bf16.mxu0 0
        %1270 = vmatpush1.bf16.xpose.msra.mxu0 0
        %1271 = vmatprep.subr.bf16.mxu0 0
        %1272 = vmatpush1.bf16.xpose.msra.mxu0 0
        %1273 = vmatprep.subr.bf16.mxu0 0
        %1274 = vmatpush1.bf16.xpose.msra.mxu0 0
        %1275 = vmatprep.subr.bf16.mxu0 0
        %1276 = vmatpush1.bf16.xpose.msra.mxu0 0
        %1277 = vmatprep.subr.bf16.mxu0 0
        %1278 = vmatpush1.bf16.xpose.msra.mxu0 0
        %1279 = vmatprep.subr.bf16.mxu0 0
        %1280 = vmatpush1.bf16.xpose.msra.mxu0 0
        %1281 = vmatprep.subr.bf16.mxu0 0
        %1282 = vmatpush1.bf16.xpose.msra.mxu0 0
        %1283 = vmatprep.subr.bf16.mxu0 0
        %1284 = vmatpush1.bf16.xpose.msra.mxu0 0
        %1285 = vmatprep.subr.bf16.mxu0 0
        %1286 = vmatpush1.bf16.xpose.msra.mxu0 0
        %1287 = vmatprep.subr.bf16.mxu0 0
        %1288 = vmatpush1.bf16.xpose.msra.mxu0 0
        %1289 = vmatprep.subr.bf16.mxu0 0
        %1290 = vmatpush1.bf16.xpose.msra.mxu0 0
        %1291 = vmatprep.subr.bf16.mxu0 0
        %1292 = vmatpush1.bf16.xpose.msra.mxu0 0
        %1293 = vmatprep.mubr.bf16.mxu0 0
        %1294 = vmatmul.mubr.bf16.gmra.mrb[0].mxu0 %v1253
        %v1295 = vpop.f32.mrb[0].mxu0
        %v1296 = vadd.f32 0.0, %v1295
        %v1297 = vpop.f32.mrb[0].mxu0
        %v1298 = vpop.f32.mrb[0].mxu0
        %v1299 = vpop.f32.mrb[0].mxu0
        %1300 = vdwg.mxu0
        %1303 = vrot.lane.b32.xlu0 %v801, 64
        %v1304 = vpop.permute.xlu0 %1303
        %1305 = vrot.lane.b32.xlu0 %v802, 64
        %v1306 = vpop.permute.xlu0 %1305
        %v1308 = vsel %vm921, %v698, 0
        %v1311 = vsel %vm921, %v1304, 0
        %v1314 = vsel %vm921, %v1306, 0
        %1316 = vmatprep.subr.bf16.mxu0 0
        %1317 = vmatpush1.bf16.xpose.msra.mxu0 %v1311
        %1318 = vmatprep.subr.bf16.mxu0 0
        %1319 = vmatpush1.bf16.xpose.msra.mxu0 %v1314
        %1320 = vmatprep.subr.bf16.mxu0 0
        %1321 = vmatpush1.bf16.xpose.msra.mxu0 0
        %1322 = vmatprep.subr.bf16.mxu0 0
        %1323 = vmatpush1.bf16.xpose.msra.mxu0 0
        %1324 = vmatprep.subr.bf16.mxu0 0
        %1325 = vmatpush1.bf16.xpose.msra.mxu0 0
        %1326 = vmatprep.subr.bf16.mxu0 0
        %1327 = vmatpush1.bf16.xpose.msra.mxu0 0
        %1328 = vmatprep.subr.bf16.mxu0 0
        %1329 = vmatpush1.bf16.xpose.msra.mxu0 0
        %1330 = vmatprep.subr.bf16.mxu0 0
        %1331 = vmatpush1.bf16.xpose.msra.mxu0 0
        %1332 = vmatprep.subr.bf16.mxu0 0
        %1333 = vmatpush1.bf16.xpose.msra.mxu0 0
        %1334 = vmatprep.subr.bf16.mxu0 0
        %1335 = vmatpush1.bf16.xpose.msra.mxu0 0
        %1336 = vmatprep.subr.bf16.mxu0 0
        %1337 = vmatpush1.bf16.xpose.msra.mxu0 0
        %1338 = vmatprep.subr.bf16.mxu0 0
        %1339 = vmatpush1.bf16.xpose.msra.mxu0 0
        %1340 = vmatprep.subr.bf16.mxu0 0
        %1341 = vmatpush1.bf16.xpose.msra.mxu0 0
        %1342 = vmatprep.subr.bf16.mxu0 0
        %1343 = vmatpush1.bf16.xpose.msra.mxu0 0
        %1344 = vmatprep.subr.bf16.mxu0 0
        %1345 = vmatpush1.bf16.xpose.msra.mxu0 0
        %1346 = vmatprep.subr.bf16.mxu0 0
        %1347 = vmatpush1.bf16.xpose.msra.mxu0 0
        %1348 = vmatprep.mubr.bf16.mxu0 0
        %1349 = vmatmul.mubr.bf16.gmra.mrb[0].mxu0 %v1308
        %v1350 = vpop.f32.mrb[0].mxu0
        %v1351 = vadd.f32 0.0, %v1350
        %v1352 = vpop.f32.mrb[0].mxu0
        %v1353 = vpop.f32.mrb[0].mxu0
        %v1354 = vpop.f32.mrb[0].mxu0
        %1355 = vdwg.mxu0
        %1358 = vrot.lane.b32.xlu0 %v803, 64
        %v1359 = vpop.permute.xlu0 %1358
        %1360 = vrot.lane.b32.xlu0 %v804, 64
        %v1361 = vpop.permute.xlu0 %1360
        %v1363 = vsel %vm921, %v699, 0
        %v1366 = vsel %vm921, %v1359, 0
        %v1369 = vsel %vm921, %v1361, 0
        %1371 = vmatprep.subr.bf16.mxu0 0
        %1372 = vmatpush1.bf16.xpose.msra.mxu0 %v1366
        %1373 = vmatprep.subr.bf16.mxu0 0
        %1374 = vmatpush1.bf16.xpose.msra.mxu0 %v1369
        %1375 = vmatprep.subr.bf16.mxu0 0
        %1376 = vmatpush1.bf16.xpose.msra.mxu0 0
        %1377 = vmatprep.subr.bf16.mxu0 0
        %1378 = vmatpush1.bf16.xpose.msra.mxu0 0
        %1379 = vmatprep.subr.bf16.mxu0 0
        %1380 = vmatpush1.bf16.xpose.msra.mxu0 0
        %1381 = vmatprep.subr.bf16.mxu0 0
        %1382 = vmatpush1.bf16.xpose.msra.mxu0 0
        %1383 = vmatprep.subr.bf16.mxu0 0
        %1384 = vmatpush1.bf16.xpose.msra.mxu0 0
        %1385 = vmatprep.subr.bf16.mxu0 0
        %1386 = vmatpush1.bf16.xpose.msra.mxu0 0
        %1387 = vmatprep.subr.bf16.mxu0 0
        %1388 = vmatpush1.bf16.xpose.msra.mxu0 0
        %1389 = vmatprep.subr.bf16.mxu0 0
        %1390 = vmatpush1.bf16.xpose.msra.mxu0 0
        %1391 = vmatprep.subr.bf16.mxu0 0
        %1392 = vmatpush1.bf16.xpose.msra.mxu0 0
        %1393 = vmatprep.subr.bf16.mxu0 0
        %1394 = vmatpush1.bf16.xpose.msra.mxu0 0
        %1395 = vmatprep.subr.bf16.mxu0 0
        %1396 = vmatpush1.bf16.xpose.msra.mxu0 0
        %1397 = vmatprep.subr.bf16.mxu0 0
        %1398 = vmatpush1.bf16.xpose.msra.mxu0 0
        %1399 = vmatprep.subr.bf16.mxu0 0
        %1400 = vmatpush1.bf16.xpose.msra.mxu0 0
        %1401 = vmatprep.subr.bf16.mxu0 0
        %1402 = vmatpush1.bf16.xpose.msra.mxu0 0
        %1403 = vmatprep.mubr.bf16.mxu0 0
        %1404 = vmatmul.mubr.bf16.gmra.mrb[0].mxu0 %v1363
        %v1405 = vpop.f32.mrb[0].mxu0
        %v1406 = vadd.f32 0.0, %v1405
        %v1407 = vpop.f32.mrb[0].mxu0
        %v1408 = vpop.f32.mrb[0].mxu0
        %v1409 = vpop.f32.mrb[0].mxu0
        %1410 = vdwg.mxu0
        %1413 = vrot.lane.b32.xlu0 %v805, 64
        %v1414 = vpop.permute.xlu0 %1413
        %1415 = vrot.lane.b32.xlu0 %v806, 64
        %v1416 = vpop.permute.xlu0 %1415
        %v1418 = vsel %vm921, %v700, 0
        %v1421 = vsel %vm921, %v1414, 0
        %v1424 = vsel %vm921, %v1416, 0
        %1426 = vmatprep.subr.bf16.mxu0 0
        %1427 = vmatpush1.bf16.xpose.msra.mxu0 %v1421
        %1428 = vmatprep.subr.bf16.mxu0 0
        %1429 = vmatpush1.bf16.xpose.msra.mxu0 %v1424
        %1430 = vmatprep.subr.bf16.mxu0 0
        %1431 = vmatpush1.bf16.xpose.msra.mxu0 0
        %1432 = vmatprep.subr.bf16.mxu0 0
        %1433 = vmatpush1.bf16.xpose.msra.mxu0 0
        %1434 = vmatprep.subr.bf16.mxu0 0
        %1435 = vmatpush1.bf16.xpose.msra.mxu0 0
        %1436 = vmatprep.subr.bf16.mxu0 0
        %1437 = vmatpush1.bf16.xpose.msra.mxu0 0
        %1438 = vmatprep.subr.bf16.mxu0 0
        %1439 = vmatpush1.bf16.xpose.msra.mxu0 0
        %1440 = vmatprep.subr.bf16.mxu0 0
        %1441 = vmatpush1.bf16.xpose.msra.mxu0 0
        %1442 = vmatprep.subr.bf16.mxu0 0
        %1443 = vmatpush1.bf16.xpose.msra.mxu0 0
        %1444 = vmatprep.subr.bf16.mxu0 0
        %1445 = vmatpush1.bf16.xpose.msra.mxu0 0
        %1446 = vmatprep.subr.bf16.mxu0 0
        %1447 = vmatpush1.bf16.xpose.msra.mxu0 0
        %1448 = vmatprep.subr.bf16.mxu0 0
        %1449 = vmatpush1.bf16.xpose.msra.mxu0 0
        %1450 = vmatprep.subr.bf16.mxu0 0
        %1451 = vmatpush1.bf16.xpose.msra.mxu0 0
        %1452 = vmatprep.subr.bf16.mxu0 0
        %1453 = vmatpush1.bf16.xpose.msra.mxu0 0
        %1454 = vmatprep.subr.bf16.mxu0 0
        %1455 = vmatpush1.bf16.xpose.msra.mxu0 0
        %1456 = vmatprep.subr.bf16.mxu0 0
        %1457 = vmatpush1.bf16.xpose.msra.mxu0 0
        %1458 = vmatprep.mubr.bf16.mxu0 0
        %1459 = vmatmul.mubr.bf16.gmra.mrb[0].mxu0 %v1418
        %v1460 = vpop.f32.mrb[0].mxu0
        %v1461 = vadd.f32 0.0, %v1460
        %v1462 = vpop.f32.mrb[0].mxu0
        %v1463 = vpop.f32.mrb[0].mxu0
        %v1464 = vpop.f32.mrb[0].mxu0
        %1465 = vdwg.mxu0
        %1468 = vrot.lane.b32.xlu0 %v807, 64
        %v1469 = vpop.permute.xlu0 %1468
        %1470 = vrot.lane.b32.xlu0 %v808, 64
        %v1471 = vpop.permute.xlu0 %1470
        %v1473 = vsel %vm921, %v701, 0
        %v1476 = vsel %vm921, %v1469, 0
        %v1479 = vsel %vm921, %v1471, 0
        %1481 = vmatprep.subr.bf16.mxu0 0
        %1482 = vmatpush1.bf16.xpose.msra.mxu0 %v1476
        %1483 = vmatprep.subr.bf16.mxu0 0
        %1484 = vmatpush1.bf16.xpose.msra.mxu0 %v1479
        %1485 = vmatprep.subr.bf16.mxu0 0
        %1486 = vmatpush1.bf16.xpose.msra.mxu0 0
        %1487 = vmatprep.subr.bf16.mxu0 0
        %1488 = vmatpush1.bf16.xpose.msra.mxu0 0
        %1489 = vmatprep.subr.bf16.mxu0 0
        %1490 = vmatpush1.bf16.xpose.msra.mxu0 0
        %1491 = vmatprep.subr.bf16.mxu0 0
        %1492 = vmatpush1.bf16.xpose.msra.mxu0 0
        %1493 = vmatprep.subr.bf16.mxu0 0
        %1494 = vmatpush1.bf16.xpose.msra.mxu0 0
        %1495 = vmatprep.subr.bf16.mxu0 0
        %1496 = vmatpush1.bf16.xpose.msra.mxu0 0
        %1497 = vmatprep.subr.bf16.mxu0 0
        %1498 = vmatpush1.bf16.xpose.msra.mxu0 0
        %1499 = vmatprep.subr.bf16.mxu0 0
        %1500 = vmatpush1.bf16.xpose.msra.mxu0 0
        %1501 = vmatprep.subr.bf16.mxu0 0
        %1502 = vmatpush1.bf16.xpose.msra.mxu0 0
        %1503 = vmatprep.subr.bf16.mxu0 0
        %1504 = vmatpush1.bf16.xpose.msra.mxu0 0
        %1505 = vmatprep.subr.bf16.mxu0 0
        %1506 = vmatpush1.bf16.xpose.msra.mxu0 0
        %1507 = vmatprep.subr.bf16.mxu0 0
        %1508 = vmatpush1.bf16.xpose.msra.mxu0 0
        %1509 = vmatprep.subr.bf16.mxu0 0
        %1510 = vmatpush1.bf16.xpose.msra.mxu0 0
        %1511 = vmatprep.subr.bf16.mxu0 0
        %1512 = vmatpush1.bf16.xpose.msra.mxu0 0
        %1513 = vmatprep.mubr.bf16.mxu0 0
        %1514 = vmatmul.mubr.bf16.gmra.mrb[0].mxu0 %v1473
        %v1515 = vpop.f32.mrb[0].mxu0
        %v1516 = vadd.f32 0.0, %v1515
        %v1517 = vpop.f32.mrb[0].mxu0
        %v1518 = vpop.f32.mrb[0].mxu0
        %v1519 = vpop.f32.mrb[0].mxu0
        %1520 = vdwg.mxu0
        %1523 = vrot.lane.b32.xlu0 %v809, 64
        %v1524 = vpop.permute.xlu0 %1523
        %1525 = vrot.lane.b32.xlu0 %v810, 64
        %v1526 = vpop.permute.xlu0 %1525
        %v1528 = vsel %vm921, %v702, 0
        %v1531 = vsel %vm921, %v1524, 0
        %v1534 = vsel %vm921, %v1526, 0
        %1536 = vmatprep.subr.bf16.mxu0 0
        %1537 = vmatpush1.bf16.xpose.msra.mxu0 %v1531
        %1538 = vmatprep.subr.bf16.mxu0 0
        %1539 = vmatpush1.bf16.xpose.msra.mxu0 %v1534
        %1540 = vmatprep.subr.bf16.mxu0 0
        %1541 = vmatpush1.bf16.xpose.msra.mxu0 0
        %1542 = vmatprep.subr.bf16.mxu0 0
        %1543 = vmatpush1.bf16.xpose.msra.mxu0 0
        %1544 = vmatprep.subr.bf16.mxu0 0
        %1545 = vmatpush1.bf16.xpose.msra.mxu0 0
        %1546 = vmatprep.subr.bf16.mxu0 0
        %1547 = vmatpush1.bf16.xpose.msra.mxu0 0
        %1548 = vmatprep.subr.bf16.mxu0 0
        %1549 = vmatpush1.bf16.xpose.msra.mxu0 0
        %1550 = vmatprep.subr.bf16.mxu0 0
        %1551 = vmatpush1.bf16.xpose.msra.mxu0 0
        %1552 = vmatprep.subr.bf16.mxu0 0
        %1553 = vmatpush1.bf16.xpose.msra.mxu0 0
        %1554 = vmatprep.subr.bf16.mxu0 0
        %1555 = vmatpush1.bf16.xpose.msra.mxu0 0
        %1556 = vmatprep.subr.bf16.mxu0 0
        %1557 = vmatpush1.bf16.xpose.msra.mxu0 0
        %1558 = vmatprep.subr.bf16.mxu0 0
        %1559 = vmatpush1.bf16.xpose.msra.mxu0 0
        %1560 = vmatprep.subr.bf16.mxu0 0
        %1561 = vmatpush1.bf16.xpose.msra.mxu0 0
        %1562 = vmatprep.subr.bf16.mxu0 0
        %1563 = vmatpush1.bf16.xpose.msra.mxu0 0
        %1564 = vmatprep.subr.bf16.mxu0 0
        %1565 = vmatpush1.bf16.xpose.msra.mxu0 0
        %1566 = vmatprep.subr.bf16.mxu0 0
        %1567 = vmatpush1.bf16.xpose.msra.mxu0 0
        %1568 = vmatprep.mubr.bf16.mxu0 0
        %1569 = vmatmul.mubr.bf16.gmra.mrb[0].mxu0 %v1528
        %v1570 = vpop.f32.mrb[0].mxu0
        %v1571 = vadd.f32 0.0, %v1570
        %v1572 = vpop.f32.mrb[0].mxu0
        %v1573 = vpop.f32.mrb[0].mxu0
        %v1574 = vpop.f32.mrb[0].mxu0
        %1575 = vdwg.mxu0
        %1578 = vrot.lane.b32.xlu0 %v811, 64
        %v1579 = vpop.permute.xlu0 %1578
        %1580 = vrot.lane.b32.xlu0 %v812, 64
        %v1581 = vpop.permute.xlu0 %1580
        %v1583 = vsel %vm921, %v703, 0
        %v1586 = vsel %vm921, %v1579, 0
        %v1589 = vsel %vm921, %v1581, 0
        %1591 = vmatprep.subr.bf16.mxu0 0
        %1592 = vmatpush1.bf16.xpose.msra.mxu0 %v1586
        %1593 = vmatprep.subr.bf16.mxu0 0
        %1594 = vmatpush1.bf16.xpose.msra.mxu0 %v1589
        %1595 = vmatprep.subr.bf16.mxu0 0
        %1596 = vmatpush1.bf16.xpose.msra.mxu0 0
        %1597 = vmatprep.subr.bf16.mxu0 0
        %1598 = vmatpush1.bf16.xpose.msra.mxu0 0
        %1599 = vmatprep.subr.bf16.mxu0 0
        %1600 = vmatpush1.bf16.xpose.msra.mxu0 0
        %1601 = vmatprep.subr.bf16.mxu0 0
        %1602 = vmatpush1.bf16.xpose.msra.mxu0 0
        %1603 = vmatprep.subr.bf16.mxu0 0
        %1604 = vmatpush1.bf16.xpose.msra.mxu0 0
        %1605 = vmatprep.subr.bf16.mxu0 0
        %1606 = vmatpush1.bf16.xpose.msra.mxu0 0
        %1607 = vmatprep.subr.bf16.mxu0 0
        %1608 = vmatpush1.bf16.xpose.msra.mxu0 0
        %1609 = vmatprep.subr.bf16.mxu0 0
        %1610 = vmatpush1.bf16.xpose.msra.mxu0 0
        %1611 = vmatprep.subr.bf16.mxu0 0
        %1612 = vmatpush1.bf16.xpose.msra.mxu0 0
        %1613 = vmatprep.subr.bf16.mxu0 0
        %1614 = vmatpush1.bf16.xpose.msra.mxu0 0
        %1615 = vmatprep.subr.bf16.mxu0 0
        %1616 = vmatpush1.bf16.xpose.msra.mxu0 0
        %1617 = vmatprep.subr.bf16.mxu0 0
        %1618 = vmatpush1.bf16.xpose.msra.mxu0 0
        %1619 = vmatprep.subr.bf16.mxu0 0
        %1620 = vmatpush1.bf16.xpose.msra.mxu0 0
        %1621 = vmatprep.subr.bf16.mxu0 0
        %1622 = vmatpush1.bf16.xpose.msra.mxu0 0
        %1623 = vmatprep.mubr.bf16.mxu0 0
        %1624 = vmatmul.mubr.bf16.gmra.mrb[0].mxu0 %v1583
        %v1625 = vpop.f32.mrb[0].mxu0
        %v1626 = vadd.f32 0.0, %v1625
        %v1627 = vpop.f32.mrb[0].mxu0
        %v1628 = vpop.f32.mrb[0].mxu0
        %v1629 = vpop.f32.mrb[0].mxu0
        %1630 = vdwg.mxu0
        %1633 = vrot.lane.b32.xlu0 %v813, 64
        %v1634 = vpop.permute.xlu0 %1633
        %1635 = vrot.lane.b32.xlu0 %v814, 64
        %v1636 = vpop.permute.xlu0 %1635
        %v1638 = vsel %vm921, %v704, 0
        %v1641 = vsel %vm921, %v1634, 0
        %v1644 = vsel %vm921, %v1636, 0
        %1646 = vmatprep.subr.bf16.mxu0 0
        %1647 = vmatpush1.bf16.xpose.msra.mxu0 %v1641
        %1648 = vmatprep.subr.bf16.mxu0 0
        %1649 = vmatpush1.bf16.xpose.msra.mxu0 %v1644
        %1650 = vmatprep.subr.bf16.mxu0 0
        %1651 = vmatpush1.bf16.xpose.msra.mxu0 0
        %1652 = vmatprep.subr.bf16.mxu0 0
        %1653 = vmatpush1.bf16.xpose.msra.mxu0 0
        %1654 = vmatprep.subr.bf16.mxu0 0
        %1655 = vmatpush1.bf16.xpose.msra.mxu0 0
        %1656 = vmatprep.subr.bf16.mxu0 0
        %1657 = vmatpush1.bf16.xpose.msra.mxu0 0
        %1658 = vmatprep.subr.bf16.mxu0 0
        %1659 = vmatpush1.bf16.xpose.msra.mxu0 0
        %1660 = vmatprep.subr.bf16.mxu0 0
        %1661 = vmatpush1.bf16.xpose.msra.mxu0 0
        %1662 = vmatprep.subr.bf16.mxu0 0
        %1663 = vmatpush1.bf16.xpose.msra.mxu0 0
        %1664 = vmatprep.subr.bf16.mxu0 0
        %1665 = vmatpush1.bf16.xpose.msra.mxu0 0
        %1666 = vmatprep.subr.bf16.mxu0 0
        %1667 = vmatpush1.bf16.xpose.msra.mxu0 0
        %1668 = vmatprep.subr.bf16.mxu0 0
        %1669 = vmatpush1.bf16.xpose.msra.mxu0 0
        %1670 = vmatprep.subr.bf16.mxu0 0
        %1671 = vmatpush1.bf16.xpose.msra.mxu0 0
        %1672 = vmatprep.subr.bf16.mxu0 0
        %1673 = vmatpush1.bf16.xpose.msra.mxu0 0
        %1674 = vmatprep.subr.bf16.mxu0 0
        %1675 = vmatpush1.bf16.xpose.msra.mxu0 0
        %1676 = vmatprep.subr.bf16.mxu0 0
        %1677 = vmatpush1.bf16.xpose.msra.mxu0 0
        %1678 = vmatprep.mubr.bf16.mxu0 0
        %1679 = vmatmul.mubr.bf16.gmra.mrb[0].mxu0 %v1638
        %v1680 = vpop.f32.mrb[0].mxu0
        %v1681 = vadd.f32 0.0, %v1680
        %v1682 = vpop.f32.mrb[0].mxu0
        %v1683 = vpop.f32.mrb[0].mxu0
        %v1684 = vpop.f32.mrb[0].mxu0
        %1685 = vdwg.mxu0
        %1688 = vrot.lane.b32.xlu0 %v815, 64
        %v1689 = vpop.permute.xlu0 %1688
        %1690 = vrot.lane.b32.xlu0 %v816, 64
        %v1691 = vpop.permute.xlu0 %1690
        %v1693 = vsel %vm921, %v705, 0
        %v1696 = vsel %vm921, %v1689, 0
        %v1699 = vsel %vm921, %v1691, 0
        %1701 = vmatprep.subr.bf16.mxu0 0
        %1702 = vmatpush1.bf16.xpose.msra.mxu0 %v1696
        %1703 = vmatprep.subr.bf16.mxu0 0
        %1704 = vmatpush1.bf16.xpose.msra.mxu0 %v1699
        %1705 = vmatprep.subr.bf16.mxu0 0
        %1706 = vmatpush1.bf16.xpose.msra.mxu0 0
        %1707 = vmatprep.subr.bf16.mxu0 0
        %1708 = vmatpush1.bf16.xpose.msra.mxu0 0
        %1709 = vmatprep.subr.bf16.mxu0 0
        %1710 = vmatpush1.bf16.xpose.msra.mxu0 0
        %1711 = vmatprep.subr.bf16.mxu0 0
        %1712 = vmatpush1.bf16.xpose.msra.mxu0 0
        %1713 = vmatprep.subr.bf16.mxu0 0
        %1714 = vmatpush1.bf16.xpose.msra.mxu0 0
        %1715 = vmatprep.subr.bf16.mxu0 0
        %1716 = vmatpush1.bf16.xpose.msra.mxu0 0
        %1717 = vmatprep.subr.bf16.mxu0 0
        %1718 = vmatpush1.bf16.xpose.msra.mxu0 0
        %1719 = vmatprep.subr.bf16.mxu0 0
        %1720 = vmatpush1.bf16.xpose.msra.mxu0 0
        %1721 = vmatprep.subr.bf16.mxu0 0
        %1722 = vmatpush1.bf16.xpose.msra.mxu0 0
        %1723 = vmatprep.subr.bf16.mxu0 0
        %1724 = vmatpush1.bf16.xpose.msra.mxu0 0
        %1725 = vmatprep.subr.bf16.mxu0 0
        %1726 = vmatpush1.bf16.xpose.msra.mxu0 0
        %1727 = vmatprep.subr.bf16.mxu0 0
        %1728 = vmatpush1.bf16.xpose.msra.mxu0 0
        %1729 = vmatprep.subr.bf16.mxu0 0
        %1730 = vmatpush1.bf16.xpose.msra.mxu0 0
        %1731 = vmatprep.subr.bf16.mxu0 0
        %1732 = vmatpush1.bf16.xpose.msra.mxu0 0
        %1733 = vmatprep.mubr.bf16.mxu0 0
        %1734 = vmatmul.mubr.bf16.gmra.mrb[0].mxu0 %v1693
        %v1735 = vpop.f32.mrb[0].mxu0
        %v1736 = vadd.f32 0.0, %v1735
        %v1737 = vpop.f32.mrb[0].mxu0
        %v1738 = vpop.f32.mrb[0].mxu0
        %v1739 = vpop.f32.mrb[0].mxu0
        %1740 = vdwg.mxu0
        %1743 = vrot.lane.b32.xlu0 %v817, 64
        %v1744 = vpop.permute.xlu0 %1743
        %1745 = vrot.lane.b32.xlu0 %v818, 64
        %v1746 = vpop.permute.xlu0 %1745
        %v1748 = vsel %vm921, %v706, 0
        %v1751 = vsel %vm921, %v1744, 0
        %v1754 = vsel %vm921, %v1746, 0
        %1756 = vmatprep.subr.bf16.mxu0 0
        %1757 = vmatpush1.bf16.xpose.msra.mxu0 %v1751
        %1758 = vmatprep.subr.bf16.mxu0 0
        %1759 = vmatpush1.bf16.xpose.msra.mxu0 %v1754
        %1760 = vmatprep.subr.bf16.mxu0 0
        %1761 = vmatpush1.bf16.xpose.msra.mxu0 0
        %1762 = vmatprep.subr.bf16.mxu0 0
        %1763 = vmatpush1.bf16.xpose.msra.mxu0 0
        %1764 = vmatprep.subr.bf16.mxu0 0
        %1765 = vmatpush1.bf16.xpose.msra.mxu0 0
        %1766 = vmatprep.subr.bf16.mxu0 0
        %1767 = vmatpush1.bf16.xpose.msra.mxu0 0
        %1768 = vmatprep.subr.bf16.mxu0 0
        %1769 = vmatpush1.bf16.xpose.msra.mxu0 0
        %1770 = vmatprep.subr.bf16.mxu0 0
        %1771 = vmatpush1.bf16.xpose.msra.mxu0 0
        %1772 = vmatprep.subr.bf16.mxu0 0
        %1773 = vmatpush1.bf16.xpose.msra.mxu0 0
        %1774 = vmatprep.subr.bf16.mxu0 0
        %1775 = vmatpush1.bf16.xpose.msra.mxu0 0
        %1776 = vmatprep.subr.bf16.mxu0 0
        %1777 = vmatpush1.bf16.xpose.msra.mxu0 0
        %1778 = vmatprep.subr.bf16.mxu0 0
        %1779 = vmatpush1.bf16.xpose.msra.mxu0 0
        %1780 = vmatprep.subr.bf16.mxu0 0
        %1781 = vmatpush1.bf16.xpose.msra.mxu0 0
        %1782 = vmatprep.subr.bf16.mxu0 0
        %1783 = vmatpush1.bf16.xpose.msra.mxu0 0
        %1784 = vmatprep.subr.bf16.mxu0 0
        %1785 = vmatpush1.bf16.xpose.msra.mxu0 0
        %1786 = vmatprep.subr.bf16.mxu0 0
        %1787 = vmatpush1.bf16.xpose.msra.mxu0 0
        %1788 = vmatprep.mubr.bf16.mxu0 0
        %1789 = vmatmul.mubr.bf16.gmra.mrb[0].mxu0 %v1748
        %v1790 = vpop.f32.mrb[0].mxu0
        %v1791 = vadd.f32 0.0, %v1790
        %v1792 = vpop.f32.mrb[0].mxu0
        %v1793 = vpop.f32.mrb[0].mxu0
        %v1794 = vpop.f32.mrb[0].mxu0
        %1795 = vdwg.mxu0
        %vm1796 = vcmask 261120
        %v1797 = vsel %vm1796, %v966, -inf
        %1798 = vmax.xlane.f32.xlu0 %v1797
        %v1799 = vpop.xlane.xlu0 %1798
        %v1800 = vsel %vm1796, %v1021, -inf
        %1801 = vmax.xlane.f32.xlu0 %v1800
        %v1802 = vpop.xlane.xlu0 %1801
        %v1803 = vsel %vm1796, %v1076, -inf
        %1804 = vmax.xlane.f32.xlu0 %v1803
        %v1805 = vpop.xlane.xlu0 %1804
        %v1806 = vsel %vm1796, %v1131, -inf
        %1807 = vmax.xlane.f32.xlu0 %v1806
        %v1808 = vpop.xlane.xlu0 %1807
        %v1809 = vsel %vm1796, %v1186, -inf
        %1810 = vmax.xlane.f32.xlu0 %v1809
        %v1811 = vpop.xlane.xlu0 %1810
        %v1812 = vsel %vm1796, %v1241, -inf
        %1813 = vmax.xlane.f32.xlu0 %v1812
        %v1814 = vpop.xlane.xlu0 %1813
        %v1815 = vsel %vm1796, %v1296, -inf
        %1816 = vmax.xlane.f32.xlu0 %v1815
        %v1817 = vpop.xlane.xlu0 %1816
        %v1818 = vsel %vm1796, %v1351, -inf
        %1819 = vmax.xlane.f32.xlu0 %v1818
        %v1820 = vpop.xlane.xlu0 %1819
        %v1821 = vsel %vm1796, %v1406, -inf
        %1822 = vmax.xlane.f32.xlu0 %v1821
        %v1823 = vpop.xlane.xlu0 %1822
        %v1824 = vsel %vm1796, %v1461, -inf
        %1825 = vmax.xlane.f32.xlu0 %v1824
        %v1826 = vpop.xlane.xlu0 %1825
        %v1827 = vsel %vm1796, %v1516, -inf
        %1828 = vmax.xlane.f32.xlu0 %v1827
        %v1829 = vpop.xlane.xlu0 %1828
        %v1830 = vsel %vm1796, %v1571, -inf
        %1831 = vmax.xlane.f32.xlu0 %v1830
        %v1832 = vpop.xlane.xlu0 %1831
        %v1833 = vsel %vm1796, %v1626, -inf
        %1834 = vmax.xlane.f32.xlu0 %v1833
        %v1835 = vpop.xlane.xlu0 %1834
        %v1836 = vsel %vm1796, %v1681, -inf
        %1837 = vmax.xlane.f32.xlu0 %v1836
        %v1838 = vpop.xlane.xlu0 %1837
        %v1839 = vsel %vm1796, %v1736, -inf
        %1840 = vmax.xlane.f32.xlu0 %v1839
        %v1841 = vpop.xlane.xlu0 %1840
        %v1842 = vsel %vm1796, %v1791, -inf
        %1843 = vmax.xlane.f32.xlu0 %v1842
        %v1844 = vpop.xlane.xlu0 %1843
        %v1845 = vsub.f32 %v966, %v1799
        %v1846 = vsub.f32 %v1021, %v1802
        %v1847 = vsub.f32 %v1076, %v1805
        %v1848 = vsub.f32 %v1131, %v1808
        %v1849 = vsub.f32 %v1186, %v1811
        %v1850 = vsub.f32 %v1241, %v1814
        %v1851 = vsub.f32 %v1296, %v1817
        %v1852 = vsub.f32 %v1351, %v1820
        %v1853 = vsub.f32 %v1406, %v1823
        %v1854 = vsub.f32 %v1461, %v1826
        %v1855 = vsub.f32 %v1516, %v1829
        %v1856 = vsub.f32 %v1571, %v1832
        %v1857 = vsub.f32 %v1626, %v1835
        %v1858 = vsub.f32 %v1681, %v1838
        %v1859 = vsub.f32 %v1736, %v1841
        %v1860 = vsub.f32 %v1791, %v1844
        %v1861 = vmul.f32 %v1845, 1.442695
        %v1862 = vpow.pop %v1861
        %v1863 = vmul.f32 %v1846, 1.442695
        %v1864 = vpow.pop %v1863
        %v1865 = vmul.f32 %v1847, 1.442695
        %v1866 = vpow.pop %v1865
        %v1867 = vmul.f32 %v1848, 1.442695
        %v1868 = vpow.pop %v1867
        %v1869 = vmul.f32 %v1849, 1.442695
        %v1870 = vpow.pop %v1869
        %v1871 = vmul.f32 %v1850, 1.442695
        %v1872 = vpow.pop %v1871
        %v1873 = vmul.f32 %v1851, 1.442695
        %v1874 = vpow.pop %v1873
        %v1875 = vmul.f32 %v1852, 1.442695
        %v1876 = vpow.pop %v1875
        %v1877 = vmul.f32 %v1853, 1.442695
        %v1878 = vpow.pop %v1877
        %v1879 = vmul.f32 %v1854, 1.442695
        %v1880 = vpow.pop %v1879
        %v1881 = vmul.f32 %v1855, 1.442695
        %v1882 = vpow.pop %v1881
        %v1883 = vmul.f32 %v1856, 1.442695
        %v1884 = vpow.pop %v1883
        %v1885 = vmul.f32 %v1857, 1.442695
        %v1886 = vpow.pop %v1885
        %v1887 = vmul.f32 %v1858, 1.442695
        %v1888 = vpow.pop %v1887
        %v1889 = vmul.f32 %v1859, 1.442695
        %v1890 = vpow.pop %v1889
        %v1891 = vmul.f32 %v1860, 1.442695
        %v1892 = vpow.pop %v1891
        %v1894 = vsel %vm1796, %v1862, 0
        %v1897 = vsel %vm1796, %v1864, 0
        %v1900 = vsel %vm1796, %v1866, 0
        %v1903 = vsel %vm1796, %v1868, 0
        %v1906 = vsel %vm1796, %v1870, 0
        %v1909 = vsel %vm1796, %v1872, 0
        %v1912 = vsel %vm1796, %v1874, 0
        %v1915 = vsel %vm1796, %v1876, 0
        %v1918 = vsel %vm1796, %v1878, 0
        %v1921 = vsel %vm1796, %v1880, 0
        %v1924 = vsel %vm1796, %v1882, 0
        %v1927 = vsel %vm1796, %v1884, 0
        %v1930 = vsel %vm1796, %v1886, 0
        %v1933 = vsel %vm1796, %v1888, 0
        %v1936 = vsel %vm1796, %v1890, 0
        %v1939 = vsel %vm1796, %v1892, 0
        %1941 = vmatprep.subr.mxu0 0.0
        %1942 = vmatpush1.msra.mxu0 %v267
        %1943 = vmatprep.subr.mxu0 0.0
        %1944 = vmatpush1.msra.mxu0 %v268
        %1945 = vmatprep.subr.mxu0 0.0
        %1946 = vmatpush1.msra.mxu0 %v269
        %1947 = vmatprep.subr.mxu0 0.0
        %1948 = vmatpush1.msra.mxu0 %v270
        %1949 = vmatprep.subr.mxu0 0.0
        %1950 = vmatpush1.msra.mxu0 0.0
        %1951 = vmatprep.subr.mxu0 0.0
        %1952 = vmatpush1.msra.mxu0 0.0
        %1953 = vmatprep.subr.mxu0 0.0
        %1954 = vmatpush1.msra.mxu0 0.0
        %1955 = vmatprep.subr.mxu0 0.0
        %1956 = vmatpush1.msra.mxu0 0.0
        %1957 = vmatprep.subr.mxu0 0.0
        %1958 = vmatpush1.msra.mxu0 0.0
        %1959 = vmatprep.subr.mxu0 0.0
        %1960 = vmatpush1.msra.mxu0 0.0
        %1961 = vmatprep.subr.mxu0 0.0
        %1962 = vmatpush1.msra.mxu0 0.0
        %1963 = vmatprep.subr.mxu0 0.0
        %1964 = vmatpush1.msra.mxu0 0.0
        %1965 = vmatprep.subr.mxu0 0.0
        %1966 = vmatpush1.msra.mxu0 0.0
        %1967 = vmatprep.subr.mxu0 0.0
        %1968 = vmatpush1.msra.mxu0 0.0
        %1969 = vmatprep.subr.mxu0 0.0
        %1970 = vmatpush1.msra.mxu0 0.0
        %1971 = vmatprep.subr.mxu0 0.0
        %1972 = vmatpush1.msra.mxu0 0.0
        %1973 = vmatprep.subr.mxu0 0.0
        %1974 = vmatpush1.msra.mxu0 0.0
        %1975 = vmatprep.subr.mxu0 0.0
        %1976 = vmatpush1.msra.mxu0 0.0
        %1977 = vmatprep.subr.mxu0 0.0
        %1978 = vmatpush1.msra.mxu0 0.0
        %1979 = vmatprep.subr.mxu0 0.0
        %1980 = vmatpush1.msra.mxu0 0.0
        %1981 = vmatprep.subr.mxu0 0.0
        %1982 = vmatpush1.msra.mxu0 0.0
        %1983 = vmatprep.subr.mxu0 0.0
        %1984 = vmatpush1.msra.mxu0 0.0
        %1985 = vmatprep.subr.mxu0 0.0
        %1986 = vmatpush1.msra.mxu0 0.0
        %1987 = vmatprep.subr.mxu0 0.0
        %1988 = vmatpush1.msra.mxu0 0.0
        %1989 = vmatprep.subr.mxu0 0.0
        %1990 = vmatpush1.msra.mxu0 0.0
        %1991 = vmatprep.subr.mxu0 0.0
        %1992 = vmatpush1.msra.mxu0 0.0
        %1993 = vmatprep.subr.mxu0 0.0
        %1994 = vmatpush1.msra.mxu0 0.0
        %1995 = vmatprep.subr.mxu0 0.0
        %1996 = vmatpush1.msra.mxu0 0.0
        %1997 = vmatprep.subr.mxu0 0.0
        %1998 = vmatpush1.msra.mxu0 0.0
        %1999 = vmatprep.subr.mxu0 0.0
        %2000 = vmatpush1.msra.mxu0 0.0
        %2001 = vmatprep.subr.mxu0 0.0
        %2002 = vmatpush1.msra.mxu0 0.0
        %2003 = vmatprep.subr.mxu0 0.0
        %2004 = vmatpush1.msra.mxu0 0.0
        %2005 = vmatprep.mubr.f32.mxu0 0.0
        %2006 = vmatmul.mubr.f32.gmra.mrb[0].mxu0 %v1894
        %v2007 = vpop.f32.mrb[0].mxu0
        %v2008 = vadd.f32 0.0, %v2007
        %v2009 = vpop.f32.mrb[0].mxu0
        %2010 = vmatprep.mubr.f32.mxu0 0.0
        %2011 = vmatmul.mubr.f32.gmra.mrb[0].mxu0 %v1897
        %v2012 = vpop.f32.mrb[0].mxu0
        %v2013 = vadd.f32 0.0, %v2012
        %v2014 = vpop.f32.mrb[0].mxu0
        %2015 = vmatprep.mubr.f32.mxu0 0.0
        %2016 = vmatmul.mubr.f32.gmra.mrb[0].mxu0 %v1900
        %v2017 = vpop.f32.mrb[0].mxu0
        %v2018 = vadd.f32 0.0, %v2017
        %v2019 = vpop.f32.mrb[0].mxu0
        %2020 = vmatprep.mubr.f32.mxu0 0.0
        %2021 = vmatmul.mubr.f32.gmra.mrb[0].mxu0 %v1903
        %v2022 = vpop.f32.mrb[0].mxu0
        %v2023 = vadd.f32 0.0, %v2022
        %v2024 = vpop.f32.mrb[0].mxu0
        %2025 = vmatprep.mubr.f32.mxu0 0.0
        %2026 = vmatmul.mubr.f32.gmra.mrb[0].mxu0 %v1906
        %v2027 = vpop.f32.mrb[0].mxu0
        %v2028 = vadd.f32 0.0, %v2027
        %v2029 = vpop.f32.mrb[0].mxu0
        %2030 = vmatprep.mubr.f32.mxu0 0.0
        %2031 = vmatmul.mubr.f32.gmra.mrb[0].mxu0 %v1909
        %v2032 = vpop.f32.mrb[0].mxu0
        %v2033 = vadd.f32 0.0, %v2032
        %v2034 = vpop.f32.mrb[0].mxu0
        %2035 = vmatprep.mubr.f32.mxu0 0.0
        %2036 = vmatmul.mubr.f32.gmra.mrb[0].mxu0 %v1912
        %v2037 = vpop.f32.mrb[0].mxu0
        %v2038 = vadd.f32 0.0, %v2037
        %v2039 = vpop.f32.mrb[0].mxu0
        %2040 = vmatprep.mubr.f32.mxu0 0.0
        %2041 = vmatmul.mubr.f32.gmra.mrb[0].mxu0 %v1915
        %v2042 = vpop.f32.mrb[0].mxu0
        %v2043 = vadd.f32 0.0, %v2042
        %v2044 = vpop.f32.mrb[0].mxu0
        %2045 = vmatprep.mubr.f32.mxu0 0.0
        %2046 = vmatmul.mubr.f32.gmra.mrb[0].mxu0 %v1918
        %v2047 = vpop.f32.mrb[0].mxu0
        %v2048 = vadd.f32 0.0, %v2047
        %v2049 = vpop.f32.mrb[0].mxu0
        %2050 = vmatprep.mubr.f32.mxu0 0.0
        %2051 = vmatmul.mubr.f32.gmra.mrb[0].mxu0 %v1921
        %v2052 = vpop.f32.mrb[0].mxu0
        %v2053 = vadd.f32 0.0, %v2052
        %v2054 = vpop.f32.mrb[0].mxu0
        %2055 = vmatprep.mubr.f32.mxu0 0.0
        %2056 = vmatmul.mubr.f32.gmra.mrb[0].mxu0 %v1924
        %v2057 = vpop.f32.mrb[0].mxu0
        %v2058 = vadd.f32 0.0, %v2057
        %v2059 = vpop.f32.mrb[0].mxu0
        %2060 = vmatprep.mubr.f32.mxu0 0.0
        %2061 = vmatmul.mubr.f32.gmra.mrb[0].mxu0 %v1927
        %v2062 = vpop.f32.mrb[0].mxu0
        %v2063 = vadd.f32 0.0, %v2062
        %v2064 = vpop.f32.mrb[0].mxu0
        %2065 = vmatprep.mubr.f32.mxu0 0.0
        %2066 = vmatmul.mubr.f32.gmra.mrb[0].mxu0 %v1930
        %v2067 = vpop.f32.mrb[0].mxu0
        %v2068 = vadd.f32 0.0, %v2067
        %v2069 = vpop.f32.mrb[0].mxu0
        %2070 = vmatprep.mubr.f32.mxu0 0.0
        %2071 = vmatmul.mubr.f32.gmra.mrb[0].mxu0 %v1933
        %v2072 = vpop.f32.mrb[0].mxu0
        %v2073 = vadd.f32 0.0, %v2072
        %v2074 = vpop.f32.mrb[0].mxu0
        %2075 = vmatprep.mubr.f32.mxu0 0.0
        %2076 = vmatmul.mubr.f32.gmra.mrb[0].mxu0 %v1936
        %v2077 = vpop.f32.mrb[0].mxu0
        %v2078 = vadd.f32 0.0, %v2077
        %v2079 = vpop.f32.mrb[0].mxu0
        %2080 = vmatprep.mubr.f32.mxu0 0.0
        %2081 = vmatmul.mubr.f32.gmra.mrb[0].mxu0 %v1939
        %v2082 = vpop.f32.mrb[0].mxu0
        %v2083 = vadd.f32 0.0, %v2082
        %v2084 = vpop.f32.mrb[0].mxu0
        %2085 = vdwg.mxu0
        %v2086 = vrcp.pop %v2008
        %v2087 = vrcp.pop %v2013
        %v2088 = vrcp.pop %v2018
        %v2089 = vrcp.pop %v2023
        %v2090 = vrcp.pop %v2028
        %v2091 = vrcp.pop %v2033
        %v2092 = vrcp.pop %v2038
        %v2093 = vrcp.pop %v2043
        %v2094 = vrcp.pop %v2048
        %v2095 = vrcp.pop %v2053
        %v2096 = vrcp.pop %v2058
        %v2097 = vrcp.pop %v2063
        %v2098 = vrcp.pop %v2068
        %v2099 = vrcp.pop %v2073
        %v2100 = vrcp.pop %v2078
        %v2101 = vrcp.pop %v2083
        %v2102 = vmul.f32 %v1862, %v2086
        %v2103 = vmul.f32 %v1864, %v2087
        %v2104 = vmul.f32 %v1866, %v2088
        %v2105 = vmul.f32 %v1868, %v2089
        %v2106 = vmul.f32 %v1870, %v2090
        %v2107 = vmul.f32 %v1872, %v2091
        %v2108 = vmul.f32 %v1874, %v2092
        %v2109 = vmul.f32 %v1876, %v2093
        %v2110 = vmul.f32 %v1878, %v2094
        %v2111 = vmul.f32 %v1880, %v2095
        %v2112 = vmul.f32 %v1882, %v2096
        %v2113 = vmul.f32 %v1884, %v2097
        %v2114 = vmul.f32 %v1886, %v2098
        %v2115 = vmul.f32 %v1888, %v2099
        %v2116 = vmul.f32 %v1890, %v2100
        %v2117 = vmul.f32 %v1892, %v2101
        %v2118 = vpack.c.bf16 %v2102, %v2102
        %v2119 = vpack.c.bf16 %v2103, %v2103
        %v2120 = vpack.c.bf16 %v2104, %v2104
        %v2121 = vpack.c.bf16 %v2105, %v2105
        %v2122 = vpack.c.bf16 %v2106, %v2106
        %v2123 = vpack.c.bf16 %v2107, %v2107
        %v2124 = vpack.c.bf16 %v2108, %v2108
        %v2125 = vpack.c.bf16 %v2109, %v2109
        %v2126 = vpack.c.bf16 %v2110, %v2110
        %v2127 = vpack.c.bf16 %v2111, %v2111
        %v2128 = vpack.c.bf16 %v2112, %v2112
        %v2129 = vpack.c.bf16 %v2113, %v2113
        %v2130 = vpack.c.bf16 %v2114, %v2114
        %v2131 = vpack.c.bf16 %v2115, %v2115
        %v2132 = vpack.c.bf16 %v2116, %v2116
        %v2133 = vpack.c.bf16 %v2117, %v2117
        %v2135 = vsel %vm1796, %v2118, 0
        %2137 = vmatprep.subr.bf16.mxu0 0
        %2138 = vmatpush1.bf16.msra.mxu0 %v883
        %2139 = vmatprep.subr.bf16.mxu0 0
        %2140 = vmatpush1.bf16.msra.mxu0 %v884
        %2141 = vmatprep.subr.bf16.mxu0 0
        %2142 = vmatpush1.bf16.msra.mxu0 0
        %2143 = vmatprep.subr.bf16.mxu0 0
        %2144 = vmatpush1.bf16.msra.mxu0 0
        %2145 = vmatprep.subr.bf16.mxu0 0
        %2146 = vmatpush1.bf16.msra.mxu0 0
        %2147 = vmatprep.subr.bf16.mxu0 0
        %2148 = vmatpush1.bf16.msra.mxu0 0
        %2149 = vmatprep.subr.bf16.mxu0 0
        %2150 = vmatpush1.bf16.msra.mxu0 0
        %2151 = vmatprep.subr.bf16.mxu0 0
        %2152 = vmatpush1.bf16.msra.mxu0 0
        %2153 = vmatprep.subr.bf16.mxu0 0
        %2154 = vmatpush1.bf16.msra.mxu0 0
        %2155 = vmatprep.subr.bf16.mxu0 0
        %2156 = vmatpush1.bf16.msra.mxu0 0
        %2157 = vmatprep.subr.bf16.mxu0 0
        %2158 = vmatpush1.bf16.msra.mxu0 0
        %2159 = vmatprep.subr.bf16.mxu0 0
        %2160 = vmatpush1.bf16.msra.mxu0 0
        %2161 = vmatprep.subr.bf16.mxu0 0
        %2162 = vmatpush1.bf16.msra.mxu0 0
        %2163 = vmatprep.subr.bf16.mxu0 0
        %2164 = vmatpush1.bf16.msra.mxu0 0
        %2165 = vmatprep.subr.bf16.mxu0 0
        %2166 = vmatpush1.bf16.msra.mxu0 0
        %2167 = vmatprep.subr.bf16.mxu0 0
        %2168 = vmatpush1.bf16.msra.mxu0 0
        %2169 = vmatprep.mubr.bf16.mxu0 0
        %2170 = vmatmul.mubr.bf16.gmra.mrb[0].mxu0 %v2135
        %v2171 = vpop.f32.mrb[0].mxu0
        %v2172 = vadd.f32 0.0, %v2171
        %v2173 = vpop.f32.mrb[0].mxu0
        %v2174 = vpop.f32.mrb[0].mxu0
        %v2175 = vpop.f32.mrb[0].mxu0
        %2176 = vdwg.mxu0
        %v2178 = vsel %vm1796, %v2119, 0
        %2180 = vmatprep.subr.bf16.mxu0 0
        %2181 = vmatpush1.bf16.msra.mxu0 %v885
        %2182 = vmatprep.subr.bf16.mxu0 0
        %2183 = vmatpush1.bf16.msra.mxu0 %v886
        %2184 = vmatprep.subr.bf16.mxu0 0
        %2185 = vmatpush1.bf16.msra.mxu0 0
        %2186 = vmatprep.subr.bf16.mxu0 0
        %2187 = vmatpush1.bf16.msra.mxu0 0
        %2188 = vmatprep.subr.bf16.mxu0 0
        %2189 = vmatpush1.bf16.msra.mxu0 0
        %2190 = vmatprep.subr.bf16.mxu0 0
        %2191 = vmatpush1.bf16.msra.mxu0 0
        %2192 = vmatprep.subr.bf16.mxu0 0
        %2193 = vmatpush1.bf16.msra.mxu0 0
        %2194 = vmatprep.subr.bf16.mxu0 0
        %2195 = vmatpush1.bf16.msra.mxu0 0
        %2196 = vmatprep.subr.bf16.mxu0 0
        %2197 = vmatpush1.bf16.msra.mxu0 0
        %2198 = vmatprep.subr.bf16.mxu0 0
        %2199 = vmatpush1.bf16.msra.mxu0 0
        %2200 = vmatprep.subr.bf16.mxu0 0
        %2201 = vmatpush1.bf16.msra.mxu0 0
        %2202 = vmatprep.subr.bf16.mxu0 0
        %2203 = vmatpush1.bf16.msra.mxu0 0
        %2204 = vmatprep.subr.bf16.mxu0 0
        %2205 = vmatpush1.bf16.msra.mxu0 0
        %2206 = vmatprep.subr.bf16.mxu0 0
        %2207 = vmatpush1.bf16.msra.mxu0 0
        %2208 = vmatprep.subr.bf16.mxu0 0
        %2209 = vmatpush1.bf16.msra.mxu0 0
        %2210 = vmatprep.subr.bf16.mxu0 0
        %2211 = vmatpush1.bf16.msra.mxu0 0
        %2212 = vmatprep.mubr.bf16.mxu0 0
        %2213 = vmatmul.mubr.bf16.gmra.mrb[0].mxu0 %v2178
        %v2214 = vpop.f32.mrb[0].mxu0
        %v2215 = vadd.f32 0.0, %v2214
        %v2216 = vpop.f32.mrb[0].mxu0
        %v2217 = vpop.f32.mrb[0].mxu0
        %v2218 = vpop.f32.mrb[0].mxu0
        %2219 = vdwg.mxu0
        %v2221 = vsel %vm1796, %v2120, 0
        %2223 = vmatprep.subr.bf16.mxu0 0
        %2224 = vmatpush1.bf16.msra.mxu0 %v887
        %2225 = vmatprep.subr.bf16.mxu0 0
        %2226 = vmatpush1.bf16.msra.mxu0 %v888
        %2227 = vmatprep.subr.bf16.mxu0 0
        %2228 = vmatpush1.bf16.msra.mxu0 0
        %2229 = vmatprep.subr.bf16.mxu0 0
        %2230 = vmatpush1.bf16.msra.mxu0 0
        %2231 = vmatprep.subr.bf16.mxu0 0
        %2232 = vmatpush1.bf16.msra.mxu0 0
        %2233 = vmatprep.subr.bf16.mxu0 0
        %2234 = vmatpush1.bf16.msra.mxu0 0
        %2235 = vmatprep.subr.bf16.mxu0 0
        %2236 = vmatpush1.bf16.msra.mxu0 0
        %2237 = vmatprep.subr.bf16.mxu0 0
        %2238 = vmatpush1.bf16.msra.mxu0 0
        %2239 = vmatprep.subr.bf16.mxu0 0
        %2240 = vmatpush1.bf16.msra.mxu0 0
        %2241 = vmatprep.subr.bf16.mxu0 0
        %2242 = vmatpush1.bf16.msra.mxu0 0
        %2243 = vmatprep.subr.bf16.mxu0 0
        %2244 = vmatpush1.bf16.msra.mxu0 0
        %2245 = vmatprep.subr.bf16.mxu0 0
        %2246 = vmatpush1.bf16.msra.mxu0 0
        %2247 = vmatprep.subr.bf16.mxu0 0
        %2248 = vmatpush1.bf16.msra.mxu0 0
        %2249 = vmatprep.subr.bf16.mxu0 0
        %2250 = vmatpush1.bf16.msra.mxu0 0
        %2251 = vmatprep.subr.bf16.mxu0 0
        %2252 = vmatpush1.bf16.msra.mxu0 0
        %2253 = vmatprep.subr.bf16.mxu0 0
        %2254 = vmatpush1.bf16.msra.mxu0 0
        %2255 = vmatprep.mubr.bf16.mxu0 0
        %2256 = vmatmul.mubr.bf16.gmra.mrb[0].mxu0 %v2221
        %v2257 = vpop.f32.mrb[0].mxu0
        %v2258 = vadd.f32 0.0, %v2257
        %v2259 = vpop.f32.mrb[0].mxu0
        %v2260 = vpop.f32.mrb[0].mxu0
        %v2261 = vpop.f32.mrb[0].mxu0
        %2262 = vdwg.mxu0
        %v2264 = vsel %vm1796, %v2121, 0
        %2266 = vmatprep.subr.bf16.mxu0 0
        %2267 = vmatpush1.bf16.msra.mxu0 %v889
        %2268 = vmatprep.subr.bf16.mxu0 0
        %2269 = vmatpush1.bf16.msra.mxu0 %v890
        %2270 = vmatprep.subr.bf16.mxu0 0
        %2271 = vmatpush1.bf16.msra.mxu0 0
        %2272 = vmatprep.subr.bf16.mxu0 0
        %2273 = vmatpush1.bf16.msra.mxu0 0
        %2274 = vmatprep.subr.bf16.mxu0 0
        %2275 = vmatpush1.bf16.msra.mxu0 0
        %2276 = vmatprep.subr.bf16.mxu0 0
        %2277 = vmatpush1.bf16.msra.mxu0 0
        %2278 = vmatprep.subr.bf16.mxu0 0
        %2279 = vmatpush1.bf16.msra.mxu0 0
        %2280 = vmatprep.subr.bf16.mxu0 0
        %2281 = vmatpush1.bf16.msra.mxu0 0
        %2282 = vmatprep.subr.bf16.mxu0 0
        %2283 = vmatpush1.bf16.msra.mxu0 0
        %2284 = vmatprep.subr.bf16.mxu0 0
        %2285 = vmatpush1.bf16.msra.mxu0 0
        %2286 = vmatprep.subr.bf16.mxu0 0
        %2287 = vmatpush1.bf16.msra.mxu0 0
        %2288 = vmatprep.subr.bf16.mxu0 0
        %2289 = vmatpush1.bf16.msra.mxu0 0
        %2290 = vmatprep.subr.bf16.mxu0 0
        %2291 = vmatpush1.bf16.msra.mxu0 0
        %2292 = vmatprep.subr.bf16.mxu0 0
        %2293 = vmatpush1.bf16.msra.mxu0 0
        %2294 = vmatprep.subr.bf16.mxu0 0
        %2295 = vmatpush1.bf16.msra.mxu0 0
        %2296 = vmatprep.subr.bf16.mxu0 0
        %2297 = vmatpush1.bf16.msra.mxu0 0
        %2298 = vmatprep.mubr.bf16.mxu0 0
        %2299 = vmatmul.mubr.bf16.gmra.mrb[0].mxu0 %v2264
        %v2300 = vpop.f32.mrb[0].mxu0
        %v2301 = vadd.f32 0.0, %v2300
        %v2302 = vpop.f32.mrb[0].mxu0
        %v2303 = vpop.f32.mrb[0].mxu0
        %v2304 = vpop.f32.mrb[0].mxu0
        %2305 = vdwg.mxu0
        %v2307 = vsel %vm1796, %v2122, 0
        %2309 = vmatprep.subr.bf16.mxu0 0
        %2310 = vmatpush1.bf16.msra.mxu0 %v891
        %2311 = vmatprep.subr.bf16.mxu0 0
        %2312 = vmatpush1.bf16.msra.mxu0 %v892
        %2313 = vmatprep.subr.bf16.mxu0 0
        %2314 = vmatpush1.bf16.msra.mxu0 0
        %2315 = vmatprep.subr.bf16.mxu0 0
        %2316 = vmatpush1.bf16.msra.mxu0 0
        %2317 = vmatprep.subr.bf16.mxu0 0
        %2318 = vmatpush1.bf16.msra.mxu0 0
        %2319 = vmatprep.subr.bf16.mxu0 0
        %2320 = vmatpush1.bf16.msra.mxu0 0
        %2321 = vmatprep.subr.bf16.mxu0 0
        %2322 = vmatpush1.bf16.msra.mxu0 0
        %2323 = vmatprep.subr.bf16.mxu0 0
        %2324 = vmatpush1.bf16.msra.mxu0 0
        %2325 = vmatprep.subr.bf16.mxu0 0
        %2326 = vmatpush1.bf16.msra.mxu0 0
        %2327 = vmatprep.subr.bf16.mxu0 0
        %2328 = vmatpush1.bf16.msra.mxu0 0
        %2329 = vmatprep.subr.bf16.mxu0 0
        %2330 = vmatpush1.bf16.msra.mxu0 0
        %2331 = vmatprep.subr.bf16.mxu0 0
        %2332 = vmatpush1.bf16.msra.mxu0 0
        %2333 = vmatprep.subr.bf16.mxu0 0
        %2334 = vmatpush1.bf16.msra.mxu0 0
        %2335 = vmatprep.subr.bf16.mxu0 0
        %2336 = vmatpush1.bf16.msra.mxu0 0
        %2337 = vmatprep.subr.bf16.mxu0 0
        %2338 = vmatpush1.bf16.msra.mxu0 0
        %2339 = vmatprep.subr.bf16.mxu0 0
        %2340 = vmatpush1.bf16.msra.mxu0 0
        %2341 = vmatprep.mubr.bf16.mxu0 0
        %2342 = vmatmul.mubr.bf16.gmra.mrb[0].mxu0 %v2307
        %v2343 = vpop.f32.mrb[0].mxu0
        %v2344 = vadd.f32 0.0, %v2343
        %v2345 = vpop.f32.mrb[0].mxu0
        %v2346 = vpop.f32.mrb[0].mxu0
        %v2347 = vpop.f32.mrb[0].mxu0
        %2348 = vdwg.mxu0
        %v2350 = vsel %vm1796, %v2123, 0
        %2352 = vmatprep.subr.bf16.mxu0 0
        %2353 = vmatpush1.bf16.msra.mxu0 %v893
        %2354 = vmatprep.subr.bf16.mxu0 0
        %2355 = vmatpush1.bf16.msra.mxu0 %v894
        %2356 = vmatprep.subr.bf16.mxu0 0
        %2357 = vmatpush1.bf16.msra.mxu0 0
        %2358 = vmatprep.subr.bf16.mxu0 0
        %2359 = vmatpush1.bf16.msra.mxu0 0
        %2360 = vmatprep.subr.bf16.mxu0 0
        %2361 = vmatpush1.bf16.msra.mxu0 0
        %2362 = vmatprep.subr.bf16.mxu0 0
        %2363 = vmatpush1.bf16.msra.mxu0 0
        %2364 = vmatprep.subr.bf16.mxu0 0
        %2365 = vmatpush1.bf16.msra.mxu0 0
        %2366 = vmatprep.subr.bf16.mxu0 0
        %2367 = vmatpush1.bf16.msra.mxu0 0
        %2368 = vmatprep.subr.bf16.mxu0 0
        %2369 = vmatpush1.bf16.msra.mxu0 0
        %2370 = vmatprep.subr.bf16.mxu0 0
        %2371 = vmatpush1.bf16.msra.mxu0 0
        %2372 = vmatprep.subr.bf16.mxu0 0
        %2373 = vmatpush1.bf16.msra.mxu0 0
        %2374 = vmatprep.subr.bf16.mxu0 0
        %2375 = vmatpush1.bf16.msra.mxu0 0
        %2376 = vmatprep.subr.bf16.mxu0 0
        %2377 = vmatpush1.bf16.msra.mxu0 0
        %2378 = vmatprep.subr.bf16.mxu0 0
        %2379 = vmatpush1.bf16.msra.mxu0 0
        %2380 = vmatprep.subr.bf16.mxu0 0
        %2381 = vmatpush1.bf16.msra.mxu0 0
        %2382 = vmatprep.subr.bf16.mxu0 0
        %2383 = vmatpush1.bf16.msra.mxu0 0
        %2384 = vmatprep.mubr.bf16.mxu0 0
        %2385 = vmatmul.mubr.bf16.gmra.mrb[0].mxu0 %v2350
        %v2386 = vpop.f32.mrb[0].mxu0
        %v2387 = vadd.f32 0.0, %v2386
        %v2388 = vpop.f32.mrb[0].mxu0
        %v2389 = vpop.f32.mrb[0].mxu0
        %v2390 = vpop.f32.mrb[0].mxu0
        %2391 = vdwg.mxu0
        %v2393 = vsel %vm1796, %v2124, 0
        %2395 = vmatprep.subr.bf16.mxu0 0
        %2396 = vmatpush1.bf16.msra.mxu0 %v895
        %2397 = vmatprep.subr.bf16.mxu0 0
        %2398 = vmatpush1.bf16.msra.mxu0 %v896
        %2399 = vmatprep.subr.bf16.mxu0 0
        %2400 = vmatpush1.bf16.msra.mxu0 0
        %2401 = vmatprep.subr.bf16.mxu0 0
        %2402 = vmatpush1.bf16.msra.mxu0 0
        %2403 = vmatprep.subr.bf16.mxu0 0
        %2404 = vmatpush1.bf16.msra.mxu0 0
        %2405 = vmatprep.subr.bf16.mxu0 0
        %2406 = vmatpush1.bf16.msra.mxu0 0
        %2407 = vmatprep.subr.bf16.mxu0 0
        %2408 = vmatpush1.bf16.msra.mxu0 0
        %2409 = vmatprep.subr.bf16.mxu0 0
        %2410 = vmatpush1.bf16.msra.mxu0 0
        %2411 = vmatprep.subr.bf16.mxu0 0
        %2412 = vmatpush1.bf16.msra.mxu0 0
        %2413 = vmatprep.subr.bf16.mxu0 0
        %2414 = vmatpush1.bf16.msra.mxu0 0
        %2415 = vmatprep.subr.bf16.mxu0 0
        %2416 = vmatpush1.bf16.msra.mxu0 0
        %2417 = vmatprep.subr.bf16.mxu0 0
        %2418 = vmatpush1.bf16.msra.mxu0 0
        %2419 = vmatprep.subr.bf16.mxu0 0
        %2420 = vmatpush1.bf16.msra.mxu0 0
        %2421 = vmatprep.subr.bf16.mxu0 0
        %2422 = vmatpush1.bf16.msra.mxu0 0
        %2423 = vmatprep.subr.bf16.mxu0 0
        %2424 = vmatpush1.bf16.msra.mxu0 0
        %2425 = vmatprep.subr.bf16.mxu0 0
        %2426 = vmatpush1.bf16.msra.mxu0 0
        %2427 = vmatprep.mubr.bf16.mxu0 0
        %2428 = vmatmul.mubr.bf16.gmra.mrb[0].mxu0 %v2393
        %v2429 = vpop.f32.mrb[0].mxu0
        %v2430 = vadd.f32 0.0, %v2429
        %v2431 = vpop.f32.mrb[0].mxu0
        %v2432 = vpop.f32.mrb[0].mxu0
        %v2433 = vpop.f32.mrb[0].mxu0
        %2434 = vdwg.mxu0
        %v2436 = vsel %vm1796, %v2125, 0
        %2438 = vmatprep.subr.bf16.mxu0 0
        %2439 = vmatpush1.bf16.msra.mxu0 %v897
        %2440 = vmatprep.subr.bf16.mxu0 0
        %2441 = vmatpush1.bf16.msra.mxu0 %v898
        %2442 = vmatprep.subr.bf16.mxu0 0
        %2443 = vmatpush1.bf16.msra.mxu0 0
        %2444 = vmatprep.subr.bf16.mxu0 0
        %2445 = vmatpush1.bf16.msra.mxu0 0
        %2446 = vmatprep.subr.bf16.mxu0 0
        %2447 = vmatpush1.bf16.msra.mxu0 0
        %2448 = vmatprep.subr.bf16.mxu0 0
        %2449 = vmatpush1.bf16.msra.mxu0 0
        %2450 = vmatprep.subr.bf16.mxu0 0
        %2451 = vmatpush1.bf16.msra.mxu0 0
        %2452 = vmatprep.subr.bf16.mxu0 0
        %2453 = vmatpush1.bf16.msra.mxu0 0
        %2454 = vmatprep.subr.bf16.mxu0 0
        %2455 = vmatpush1.bf16.msra.mxu0 0
        %2456 = vmatprep.subr.bf16.mxu0 0
        %2457 = vmatpush1.bf16.msra.mxu0 0
        %2458 = vmatprep.subr.bf16.mxu0 0
        %2459 = vmatpush1.bf16.msra.mxu0 0
        %2460 = vmatprep.subr.bf16.mxu0 0
        %2461 = vmatpush1.bf16.msra.mxu0 0
        %2462 = vmatprep.subr.bf16.mxu0 0
        %2463 = vmatpush1.bf16.msra.mxu0 0
        %2464 = vmatprep.subr.bf16.mxu0 0
        %2465 = vmatpush1.bf16.msra.mxu0 0
        %2466 = vmatprep.subr.bf16.mxu0 0
        %2467 = vmatpush1.bf16.msra.mxu0 0
        %2468 = vmatprep.subr.bf16.mxu0 0
        %2469 = vmatpush1.bf16.msra.mxu0 0
        %2470 = vmatprep.mubr.bf16.mxu0 0
        %2471 = vmatmul.mubr.bf16.gmra.mrb[0].mxu0 %v2436
        %v2472 = vpop.f32.mrb[0].mxu0
        %v2473 = vadd.f32 0.0, %v2472
        %v2474 = vpop.f32.mrb[0].mxu0
        %v2475 = vpop.f32.mrb[0].mxu0
        %v2476 = vpop.f32.mrb[0].mxu0
        %2477 = vdwg.mxu0
        %v2479 = vsel %vm1796, %v2126, 0
        %2481 = vmatprep.subr.bf16.mxu0 0
        %2482 = vmatpush1.bf16.msra.mxu0 %v899
        %2483 = vmatprep.subr.bf16.mxu0 0
        %2484 = vmatpush1.bf16.msra.mxu0 %v900
        %2485 = vmatprep.subr.bf16.mxu0 0
        %2486 = vmatpush1.bf16.msra.mxu0 0
        %2487 = vmatprep.subr.bf16.mxu0 0
        %2488 = vmatpush1.bf16.msra.mxu0 0
        %2489 = vmatprep.subr.bf16.mxu0 0
        %2490 = vmatpush1.bf16.msra.mxu0 0
        %2491 = vmatprep.subr.bf16.mxu0 0
        %2492 = vmatpush1.bf16.msra.mxu0 0
        %2493 = vmatprep.subr.bf16.mxu0 0
        %2494 = vmatpush1.bf16.msra.mxu0 0
        %2495 = vmatprep.subr.bf16.mxu0 0
        %2496 = vmatpush1.bf16.msra.mxu0 0
        %2497 = vmatprep.subr.bf16.mxu0 0
        %2498 = vmatpush1.bf16.msra.mxu0 0
        %2499 = vmatprep.subr.bf16.mxu0 0
        %2500 = vmatpush1.bf16.msra.mxu0 0
        %2501 = vmatprep.subr.bf16.mxu0 0
        %2502 = vmatpush1.bf16.msra.mxu0 0
        %2503 = vmatprep.subr.bf16.mxu0 0
        %2504 = vmatpush1.bf16.msra.mxu0 0
        %2505 = vmatprep.subr.bf16.mxu0 0
        %2506 = vmatpush1.bf16.msra.mxu0 0
        %2507 = vmatprep.subr.bf16.mxu0 0
        %2508 = vmatpush1.bf16.msra.mxu0 0
        %2509 = vmatprep.subr.bf16.mxu0 0
        %2510 = vmatpush1.bf16.msra.mxu0 0
        %2511 = vmatprep.subr.bf16.mxu0 0
        %2512 = vmatpush1.bf16.msra.mxu0 0
        %2513 = vmatprep.mubr.bf16.mxu0 0
        %2514 = vmatmul.mubr.bf16.gmra.mrb[0].mxu0 %v2479
        %v2515 = vpop.f32.mrb[0].mxu0
        %v2516 = vadd.f32 0.0, %v2515
        %v2517 = vpop.f32.mrb[0].mxu0
        %v2518 = vpop.f32.mrb[0].mxu0
        %v2519 = vpop.f32.mrb[0].mxu0
        %2520 = vdwg.mxu0
        %v2522 = vsel %vm1796, %v2127, 0
        %2524 = vmatprep.subr.bf16.mxu0 0
        %2525 = vmatpush1.bf16.msra.mxu0 %v901
        %2526 = vmatprep.subr.bf16.mxu0 0
        %2527 = vmatpush1.bf16.msra.mxu0 %v902
        %2528 = vmatprep.subr.bf16.mxu0 0
        %2529 = vmatpush1.bf16.msra.mxu0 0
        %2530 = vmatprep.subr.bf16.mxu0 0
        %2531 = vmatpush1.bf16.msra.mxu0 0
        %2532 = vmatprep.subr.bf16.mxu0 0
        %2533 = vmatpush1.bf16.msra.mxu0 0
        %2534 = vmatprep.subr.bf16.mxu0 0
        %2535 = vmatpush1.bf16.msra.mxu0 0
        %2536 = vmatprep.subr.bf16.mxu0 0
        %2537 = vmatpush1.bf16.msra.mxu0 0
        %2538 = vmatprep.subr.bf16.mxu0 0
        %2539 = vmatpush1.bf16.msra.mxu0 0
        %2540 = vmatprep.subr.bf16.mxu0 0
        %2541 = vmatpush1.bf16.msra.mxu0 0
        %2542 = vmatprep.subr.bf16.mxu0 0
        %2543 = vmatpush1.bf16.msra.mxu0 0
        %2544 = vmatprep.subr.bf16.mxu0 0
        %2545 = vmatpush1.bf16.msra.mxu0 0
        %2546 = vmatprep.subr.bf16.mxu0 0
        %2547 = vmatpush1.bf16.msra.mxu0 0
        %2548 = vmatprep.subr.bf16.mxu0 0
        %2549 = vmatpush1.bf16.msra.mxu0 0
        %2550 = vmatprep.subr.bf16.mxu0 0
        %2551 = vmatpush1.bf16.msra.mxu0 0
        %2552 = vmatprep.subr.bf16.mxu0 0
        %2553 = vmatpush1.bf16.msra.mxu0 0
        %2554 = vmatprep.subr.bf16.mxu0 0
        %2555 = vmatpush1.bf16.msra.mxu0 0
        %2556 = vmatprep.mubr.bf16.mxu0 0
        %2557 = vmatmul.mubr.bf16.gmra.mrb[0].mxu0 %v2522
        %v2558 = vpop.f32.mrb[0].mxu0
        %v2559 = vadd.f32 0.0, %v2558
        %v2560 = vpop.f32.mrb[0].mxu0
        %v2561 = vpop.f32.mrb[0].mxu0
        %v2562 = vpop.f32.mrb[0].mxu0
        %2563 = vdwg.mxu0
        %v2565 = vsel %vm1796, %v2128, 0
        %2567 = vmatprep.subr.bf16.mxu0 0
        %2568 = vmatpush1.bf16.msra.mxu0 %v903
        %2569 = vmatprep.subr.bf16.mxu0 0
        %2570 = vmatpush1.bf16.msra.mxu0 %v904
        %2571 = vmatprep.subr.bf16.mxu0 0
        %2572 = vmatpush1.bf16.msra.mxu0 0
        %2573 = vmatprep.subr.bf16.mxu0 0
        %2574 = vmatpush1.bf16.msra.mxu0 0
        %2575 = vmatprep.subr.bf16.mxu0 0
        %2576 = vmatpush1.bf16.msra.mxu0 0
        %2577 = vmatprep.subr.bf16.mxu0 0
        %2578 = vmatpush1.bf16.msra.mxu0 0
        %2579 = vmatprep.subr.bf16.mxu0 0
        %2580 = vmatpush1.bf16.msra.mxu0 0
        %2581 = vmatprep.subr.bf16.mxu0 0
        %2582 = vmatpush1.bf16.msra.mxu0 0
        %2583 = vmatprep.subr.bf16.mxu0 0
        %2584 = vmatpush1.bf16.msra.mxu0 0
        %2585 = vmatprep.subr.bf16.mxu0 0
        %2586 = vmatpush1.bf16.msra.mxu0 0
        %2587 = vmatprep.subr.bf16.mxu0 0
        %2588 = vmatpush1.bf16.msra.mxu0 0
        %2589 = vmatprep.subr.bf16.mxu0 0
        %2590 = vmatpush1.bf16.msra.mxu0 0
        %2591 = vmatprep.subr.bf16.mxu0 0
        %2592 = vmatpush1.bf16.msra.mxu0 0
        %2593 = vmatprep.subr.bf16.mxu0 0
        %2594 = vmatpush1.bf16.msra.mxu0 0
        %2595 = vmatprep.subr.bf16.mxu0 0
        %2596 = vmatpush1.bf16.msra.mxu0 0
        %2597 = vmatprep.subr.bf16.mxu0 0
        %2598 = vmatpush1.bf16.msra.mxu0 0
        %2599 = vmatprep.mubr.bf16.mxu0 0
        %2600 = vmatmul.mubr.bf16.gmra.mrb[0].mxu0 %v2565
        %v2601 = vpop.f32.mrb[0].mxu0
        %v2602 = vadd.f32 0.0, %v2601
        %v2603 = vpop.f32.mrb[0].mxu0
        %v2604 = vpop.f32.mrb[0].mxu0
        %v2605 = vpop.f32.mrb[0].mxu0
        %2606 = vdwg.mxu0
        %v2608 = vsel %vm1796, %v2129, 0
        %2610 = vmatprep.subr.bf16.mxu0 0
        %2611 = vmatpush1.bf16.msra.mxu0 %v905
        %2612 = vmatprep.subr.bf16.mxu0 0
        %2613 = vmatpush1.bf16.msra.mxu0 %v906
        %2614 = vmatprep.subr.bf16.mxu0 0
        %2615 = vmatpush1.bf16.msra.mxu0 0
        %2616 = vmatprep.subr.bf16.mxu0 0
        %2617 = vmatpush1.bf16.msra.mxu0 0
        %2618 = vmatprep.subr.bf16.mxu0 0
        %2619 = vmatpush1.bf16.msra.mxu0 0
        %2620 = vmatprep.subr.bf16.mxu0 0
        %2621 = vmatpush1.bf16.msra.mxu0 0
        %2622 = vmatprep.subr.bf16.mxu0 0
        %2623 = vmatpush1.bf16.msra.mxu0 0
        %2624 = vmatprep.subr.bf16.mxu0 0
        %2625 = vmatpush1.bf16.msra.mxu0 0
        %2626 = vmatprep.subr.bf16.mxu0 0
        %2627 = vmatpush1.bf16.msra.mxu0 0
        %2628 = vmatprep.subr.bf16.mxu0 0
        %2629 = vmatpush1.bf16.msra.mxu0 0
        %2630 = vmatprep.subr.bf16.mxu0 0
        %2631 = vmatpush1.bf16.msra.mxu0 0
        %2632 = vmatprep.subr.bf16.mxu0 0
        %2633 = vmatpush1.bf16.msra.mxu0 0
        %2634 = vmatprep.subr.bf16.mxu0 0
        %2635 = vmatpush1.bf16.msra.mxu0 0
        %2636 = vmatprep.subr.bf16.mxu0 0
        %2637 = vmatpush1.bf16.msra.mxu0 0
        %2638 = vmatprep.subr.bf16.mxu0 0
        %2639 = vmatpush1.bf16.msra.mxu0 0
        %2640 = vmatprep.subr.bf16.mxu0 0
        %2641 = vmatpush1.bf16.msra.mxu0 0
        %2642 = vmatprep.mubr.bf16.mxu0 0
        %2643 = vmatmul.mubr.bf16.gmra.mrb[0].mxu0 %v2608
        %v2644 = vpop.f32.mrb[0].mxu0
        %v2645 = vadd.f32 0.0, %v2644
        %v2646 = vpop.f32.mrb[0].mxu0
        %v2647 = vpop.f32.mrb[0].mxu0
        %v2648 = vpop.f32.mrb[0].mxu0
        %2649 = vdwg.mxu0
        %v2651 = vsel %vm1796, %v2130, 0
        %2653 = vmatprep.subr.bf16.mxu0 0
        %2654 = vmatpush1.bf16.msra.mxu0 %v907
        %2655 = vmatprep.subr.bf16.mxu0 0
        %2656 = vmatpush1.bf16.msra.mxu0 %v908
        %2657 = vmatprep.subr.bf16.mxu0 0
        %2658 = vmatpush1.bf16.msra.mxu0 0
        %2659 = vmatprep.subr.bf16.mxu0 0
        %2660 = vmatpush1.bf16.msra.mxu0 0
        %2661 = vmatprep.subr.bf16.mxu0 0
        %2662 = vmatpush1.bf16.msra.mxu0 0
        %2663 = vmatprep.subr.bf16.mxu0 0
        %2664 = vmatpush1.bf16.msra.mxu0 0
        %2665 = vmatprep.subr.bf16.mxu0 0
        %2666 = vmatpush1.bf16.msra.mxu0 0
        %2667 = vmatprep.subr.bf16.mxu0 0
        %2668 = vmatpush1.bf16.msra.mxu0 0
        %2669 = vmatprep.subr.bf16.mxu0 0
        %2670 = vmatpush1.bf16.msra.mxu0 0
        %2671 = vmatprep.subr.bf16.mxu0 0
        %2672 = vmatpush1.bf16.msra.mxu0 0
        %2673 = vmatprep.subr.bf16.mxu0 0
        %2674 = vmatpush1.bf16.msra.mxu0 0
        %2675 = vmatprep.subr.bf16.mxu0 0
        %2676 = vmatpush1.bf16.msra.mxu0 0
        %2677 = vmatprep.subr.bf16.mxu0 0
        %2678 = vmatpush1.bf16.msra.mxu0 0
        %2679 = vmatprep.subr.bf16.mxu0 0
        %2680 = vmatpush1.bf16.msra.mxu0 0
        %2681 = vmatprep.subr.bf16.mxu0 0
        %2682 = vmatpush1.bf16.msra.mxu0 0
        %2683 = vmatprep.subr.bf16.mxu0 0
        %2684 = vmatpush1.bf16.msra.mxu0 0
        %2685 = vmatprep.mubr.bf16.mxu0 0
        %2686 = vmatmul.mubr.bf16.gmra.mrb[0].mxu0 %v2651
        %v2687 = vpop.f32.mrb[0].mxu0
        %v2688 = vadd.f32 0.0, %v2687
        %v2689 = vpop.f32.mrb[0].mxu0
        %v2690 = vpop.f32.mrb[0].mxu0
        %v2691 = vpop.f32.mrb[0].mxu0
        %2692 = vdwg.mxu0
        %v2694 = vsel %vm1796, %v2131, 0
        %2696 = vmatprep.subr.bf16.mxu0 0
        %2697 = vmatpush1.bf16.msra.mxu0 %v909
        %2698 = vmatprep.subr.bf16.mxu0 0
        %2699 = vmatpush1.bf16.msra.mxu0 %v910
        %2700 = vmatprep.subr.bf16.mxu0 0
        %2701 = vmatpush1.bf16.msra.mxu0 0
        %2702 = vmatprep.subr.bf16.mxu0 0
        %2703 = vmatpush1.bf16.msra.mxu0 0
        %2704 = vmatprep.subr.bf16.mxu0 0
        %2705 = vmatpush1.bf16.msra.mxu0 0
        %2706 = vmatprep.subr.bf16.mxu0 0
        %2707 = vmatpush1.bf16.msra.mxu0 0
        %2708 = vmatprep.subr.bf16.mxu0 0
        %2709 = vmatpush1.bf16.msra.mxu0 0
        %2710 = vmatprep.subr.bf16.mxu0 0
        %2711 = vmatpush1.bf16.msra.mxu0 0
        %2712 = vmatprep.subr.bf16.mxu0 0
        %2713 = vmatpush1.bf16.msra.mxu0 0
        %2714 = vmatprep.subr.bf16.mxu0 0
        %2715 = vmatpush1.bf16.msra.mxu0 0
        %2716 = vmatprep.subr.bf16.mxu0 0
        %2717 = vmatpush1.bf16.msra.mxu0 0
        %2718 = vmatprep.subr.bf16.mxu0 0
        %2719 = vmatpush1.bf16.msra.mxu0 0
        %2720 = vmatprep.subr.bf16.mxu0 0
        %2721 = vmatpush1.bf16.msra.mxu0 0
        %2722 = vmatprep.subr.bf16.mxu0 0
        %2723 = vmatpush1.bf16.msra.mxu0 0
        %2724 = vmatprep.subr.bf16.mxu0 0
        %2725 = vmatpush1.bf16.msra.mxu0 0
        %2726 = vmatprep.subr.bf16.mxu0 0
        %2727 = vmatpush1.bf16.msra.mxu0 0
        %2728 = vmatprep.mubr.bf16.mxu0 0
        %2729 = vmatmul.mubr.bf16.gmra.mrb[0].mxu0 %v2694
        %v2730 = vpop.f32.mrb[0].mxu0
        %v2731 = vadd.f32 0.0, %v2730
        %v2732 = vpop.f32.mrb[0].mxu0
        %v2733 = vpop.f32.mrb[0].mxu0
        %v2734 = vpop.f32.mrb[0].mxu0
        %2735 = vdwg.mxu0
        %v2737 = vsel %vm1796, %v2132, 0
        %2739 = vmatprep.subr.bf16.mxu0 0
        %2740 = vmatpush1.bf16.msra.mxu0 %v911
        %2741 = vmatprep.subr.bf16.mxu0 0
        %2742 = vmatpush1.bf16.msra.mxu0 %v912
        %2743 = vmatprep.subr.bf16.mxu0 0
        %2744 = vmatpush1.bf16.msra.mxu0 0
        %2745 = vmatprep.subr.bf16.mxu0 0
        %2746 = vmatpush1.bf16.msra.mxu0 0
        %2747 = vmatprep.subr.bf16.mxu0 0
        %2748 = vmatpush1.bf16.msra.mxu0 0
        %2749 = vmatprep.subr.bf16.mxu0 0
        %2750 = vmatpush1.bf16.msra.mxu0 0
        %2751 = vmatprep.subr.bf16.mxu0 0
        %2752 = vmatpush1.bf16.msra.mxu0 0
        %2753 = vmatprep.subr.bf16.mxu0 0
        %2754 = vmatpush1.bf16.msra.mxu0 0
        %2755 = vmatprep.subr.bf16.mxu0 0
        %2756 = vmatpush1.bf16.msra.mxu0 0
        %2757 = vmatprep.subr.bf16.mxu0 0
        %2758 = vmatpush1.bf16.msra.mxu0 0
        %2759 = vmatprep.subr.bf16.mxu0 0
        %2760 = vmatpush1.bf16.msra.mxu0 0
        %2761 = vmatprep.subr.bf16.mxu0 0
        %2762 = vmatpush1.bf16.msra.mxu0 0
        %2763 = vmatprep.subr.bf16.mxu0 0
        %2764 = vmatpush1.bf16.msra.mxu0 0
        %2765 = vmatprep.subr.bf16.mxu0 0
        %2766 = vmatpush1.bf16.msra.mxu0 0
        %2767 = vmatprep.subr.bf16.mxu0 0
        %2768 = vmatpush1.bf16.msra.mxu0 0
        %2769 = vmatprep.subr.bf16.mxu0 0
        %2770 = vmatpush1.bf16.msra.mxu0 0
        %2771 = vmatprep.mubr.bf16.mxu0 0
        %2772 = vmatmul.mubr.bf16.gmra.mrb[0].mxu0 %v2737
        %v2773 = vpop.f32.mrb[0].mxu0
        %v2774 = vadd.f32 0.0, %v2773
        %v2775 = vpop.f32.mrb[0].mxu0
        %v2776 = vpop.f32.mrb[0].mxu0
        %v2777 = vpop.f32.mrb[0].mxu0
        %2778 = vdwg.mxu0
        %v2780 = vsel %vm1796, %v2133, 0
        %2782 = vmatprep.subr.bf16.mxu0 0
        %2783 = vmatpush1.bf16.msra.mxu0 %v913
        %2784 = vmatprep.subr.bf16.mxu0 0
        %2785 = vmatpush1.bf16.msra.mxu0 %v914
        %2786 = vmatprep.subr.bf16.mxu0 0
        %2787 = vmatpush1.bf16.msra.mxu0 0
        %2788 = vmatprep.subr.bf16.mxu0 0
        %2789 = vmatpush1.bf16.msra.mxu0 0
        %2790 = vmatprep.subr.bf16.mxu0 0
        %2791 = vmatpush1.bf16.msra.mxu0 0
        %2792 = vmatprep.subr.bf16.mxu0 0
        %2793 = vmatpush1.bf16.msra.mxu0 0
        %2794 = vmatprep.subr.bf16.mxu0 0
        %2795 = vmatpush1.bf16.msra.mxu0 0
        %2796 = vmatprep.subr.bf16.mxu0 0
        %2797 = vmatpush1.bf16.msra.mxu0 0
        %2798 = vmatprep.subr.bf16.mxu0 0
        %2799 = vmatpush1.bf16.msra.mxu0 0
        %2800 = vmatprep.subr.bf16.mxu0 0
        %2801 = vmatpush1.bf16.msra.mxu0 0
        %2802 = vmatprep.subr.bf16.mxu0 0
        %2803 = vmatpush1.bf16.msra.mxu0 0
        %2804 = vmatprep.subr.bf16.mxu0 0
        %2805 = vmatpush1.bf16.msra.mxu0 0
        %2806 = vmatprep.subr.bf16.mxu0 0
        %2807 = vmatpush1.bf16.msra.mxu0 0
        %2808 = vmatprep.subr.bf16.mxu0 0
        %2809 = vmatpush1.bf16.msra.mxu0 0
        %2810 = vmatprep.subr.bf16.mxu0 0
        %2811 = vmatpush1.bf16.msra.mxu0 0
        %2812 = vmatprep.subr.bf16.mxu0 0
        %2813 = vmatpush1.bf16.msra.mxu0 0
        %2814 = vmatprep.mubr.bf16.mxu0 0
        %2815 = vmatmul.mubr.bf16.gmra.mrb[0].mxu0 %v2780
        %v2816 = vpop.f32.mrb[0].mxu0
        %v2817 = vadd.f32 0.0, %v2816
        %v2818 = vpop.f32.mrb[0].mxu0
        %v2819 = vpop.f32.mrb[0].mxu0
        %v2820 = vpop.f32.mrb[0].mxu0
        %2821 = vdwg.mxu0
        %v2822 = vld [vmem:[#allocation5 + $0x100] sm:$0xf]
        %v2823 = vld [vmem:[#allocation5 + $0x108] sm:$0xf]
        %v2824 = vld [vmem:[#allocation5 + $0x110] sm:$0xf]
        %v2825 = vld [vmem:[#allocation5 + $0x118] sm:$0xf]
        %v2826 = vld [vmem:[#allocation5 + $0x120] sm:$0xf]
        %v2827 = vld [vmem:[#allocation5 + $0x128] sm:$0xf]
        %v2828 = vld [vmem:[#allocation5 + $0x130] sm:$0xf]
        %v2829 = vld [vmem:[#allocation5 + $0x138] sm:$0xf]
        %v2830 = vld [vmem:[#allocation5 + $0x140] sm:$0xf]
        %v2831 = vld [vmem:[#allocation5 + $0x148] sm:$0xf]
        %v2832 = vld [vmem:[#allocation5 + $0x150] sm:$0xf]
        %v2833 = vld [vmem:[#allocation5 + $0x158] sm:$0xf]
        %v2834 = vld [vmem:[#allocation5 + $0x160] sm:$0xf]
        %v2835 = vld [vmem:[#allocation5 + $0x168] sm:$0xf]
        %v2836 = vld [vmem:[#allocation5 + $0x170] sm:$0xf]
        %v2837 = vld [vmem:[#allocation5 + $0x178] sm:$0xf]
        %v2838 = vpack.c.bf16 %v2215, %v2172
        %v2839 = vpack.c.bf16 %v2301, %v2258
        %v2840 = vpack.c.bf16 %v2387, %v2344
        %v2841 = vpack.c.bf16 %v2473, %v2430
        %v2842 = vpack.c.bf16 %v2559, %v2516
        %v2843 = vpack.c.bf16 %v2645, %v2602
        %v2844 = vpack.c.bf16 %v2731, %v2688
        %v2845 = vpack.c.bf16 %v2817, %v2774
        %v2862 = vunpack.c.l.b16 %v2822
        %v2863 = vunpack.c.l.b16 %v2823
        %v2864 = vunpack.c.l.b16 %v2824
        %v2865 = vunpack.c.l.b16 %v2825
        %v2866 = vunpack.c.l.b16 %v2826
        %v2867 = vunpack.c.l.b16 %v2827
        %v2868 = vunpack.c.l.b16 %v2828
        %v2869 = vunpack.c.l.b16 %v2829
        %v2870 = vunpack.c.l.b16 %v2830
        %v2871 = vunpack.c.l.b16 %v2831
        %v2872 = vunpack.c.l.b16 %v2832
        %v2873 = vunpack.c.l.b16 %v2833
        %v2874 = vunpack.c.l.b16 %v2834
        %v2875 = vunpack.c.l.b16 %v2835
        %v2876 = vunpack.c.l.b16 %v2836
        %v2877 = vunpack.c.l.b16 %v2837
        %v2878 = vpack.c.b16 %v2863, %v2862
        %v2879 = vpack.c.b16 %v2865, %v2864
        %v2880 = vpack.c.b16 %v2867, %v2866
        %v2881 = vpack.c.b16 %v2869, %v2868
        %v2882 = vpack.c.b16 %v2871, %v2870
        %v2883 = vpack.c.b16 %v2873, %v2872
        %v2884 = vpack.c.b16 %v2875, %v2874
        %v2885 = vpack.c.b16 %v2877, %v2876
        %2894 = vmatprep.subr.bf16.mxu0 0
        %2895 = vmatpush1.bf16.msra.mxu0 %v2878
        %2896 = vmatprep.subr.bf16.mxu0 0
        %2897 = vmatpush1.bf16.msra.mxu0 %v2879
        %2898 = vmatprep.subr.bf16.mxu0 0
        %2899 = vmatpush1.bf16.msra.mxu0 %v2880
        %2900 = vmatprep.subr.bf16.mxu0 0
        %2901 = vmatpush1.bf16.msra.mxu0 %v2881
        %2902 = vmatprep.subr.bf16.mxu0 0
        %2903 = vmatpush1.bf16.msra.mxu0 %v2882
        %2904 = vmatprep.subr.bf16.mxu0 0
        %2905 = vmatpush1.bf16.msra.mxu0 %v2883
        %2906 = vmatprep.subr.bf16.mxu0 0
        %2907 = vmatpush1.bf16.msra.mxu0 %v2884
        %2908 = vmatprep.subr.bf16.mxu0 0
        %2909 = vmatpush1.bf16.msra.mxu0 %v2885
        %2910 = vmatprep.subr.bf16.mxu0 0
        %2911 = vmatpush1.bf16.msra.mxu0 0
        %2912 = vmatprep.subr.bf16.mxu0 0
        %2913 = vmatpush1.bf16.msra.mxu0 0
        %2914 = vmatprep.subr.bf16.mxu0 0
        %2915 = vmatpush1.bf16.msra.mxu0 0
        %2916 = vmatprep.subr.bf16.mxu0 0
        %2917 = vmatpush1.bf16.msra.mxu0 0
        %2918 = vmatprep.subr.bf16.mxu0 0
        %2919 = vmatpush1.bf16.msra.mxu0 0
        %2920 = vmatprep.subr.bf16.mxu0 0
        %2921 = vmatpush1.bf16.msra.mxu0 0
        %2922 = vmatprep.subr.bf16.mxu0 0
        %2923 = vmatpush1.bf16.msra.mxu0 0
        %2924 = vmatprep.subr.bf16.mxu0 0
        %2925 = vmatpush1.bf16.msra.mxu0 0
        %2926 = vmatprep.mubr.bf16.mxu0 0
        %2927 = vmatmul.mubr.bf16.gmra.mrb[0].mxu0 %v2838
        %v2928 = vpop.f32.mrb[0].mxu0
        %v2929 = vadd.f32 0.0, %v2928
        %v2930 = vpop.f32.mrb[0].mxu0
        %v2931 = vpop.f32.mrb[0].mxu0
        %v2932 = vadd.f32 0.0, %v2931
        %v2933 = vpop.f32.mrb[0].mxu0
        %2934 = vmatprep.mubr.bf16.mxu0 0
        %2935 = vmatmul.mubr.bf16.gmra.mrb[0].mxu0 %v2839
        %v2936 = vpop.f32.mrb[0].mxu0
        %v2937 = vadd.f32 0.0, %v2936
        %v2938 = vpop.f32.mrb[0].mxu0
        %v2939 = vpop.f32.mrb[0].mxu0
        %v2940 = vadd.f32 0.0, %v2939
        %v2941 = vpop.f32.mrb[0].mxu0
        %2942 = vmatprep.mubr.bf16.mxu0 0
        %2943 = vmatmul.mubr.bf16.gmra.mrb[0].mxu0 %v2840
        %v2944 = vpop.f32.mrb[0].mxu0
        %v2945 = vadd.f32 0.0, %v2944
        %v2946 = vpop.f32.mrb[0].mxu0
        %v2947 = vpop.f32.mrb[0].mxu0
        %v2948 = vadd.f32 0.0, %v2947
        %v2949 = vpop.f32.mrb[0].mxu0
        %2950 = vmatprep.mubr.bf16.mxu0 0
        %2951 = vmatmul.mubr.bf16.gmra.mrb[0].mxu0 %v2841
        %v2952 = vpop.f32.mrb[0].mxu0
        %v2953 = vadd.f32 0.0, %v2952
        %v2954 = vpop.f32.mrb[0].mxu0
        %v2955 = vpop.f32.mrb[0].mxu0
        %v2956 = vadd.f32 0.0, %v2955
        %v2957 = vpop.f32.mrb[0].mxu0
        %2958 = vmatprep.mubr.bf16.mxu0 0
        %2959 = vmatmul.mubr.bf16.gmra.mrb[0].mxu0 %v2842
        %v2960 = vpop.f32.mrb[0].mxu0
        %v2961 = vadd.f32 0.0, %v2960
        %v2962 = vpop.f32.mrb[0].mxu0
        %v2963 = vpop.f32.mrb[0].mxu0
        %v2964 = vadd.f32 0.0, %v2963
        %v2965 = vpop.f32.mrb[0].mxu0
        %2966 = vmatprep.mubr.bf16.mxu0 0
        %2967 = vmatmul.mubr.bf16.gmra.mrb[0].mxu0 %v2843
        %v2968 = vpop.f32.mrb[0].mxu0
        %v2969 = vadd.f32 0.0, %v2968
        %v2970 = vpop.f32.mrb[0].mxu0
        %v2971 = vpop.f32.mrb[0].mxu0
        %v2972 = vadd.f32 0.0, %v2971
        %v2973 = vpop.f32.mrb[0].mxu0
        %2974 = vmatprep.mubr.bf16.mxu0 0
        %2975 = vmatmul.mubr.bf16.gmra.mrb[0].mxu0 %v2844
        %v2976 = vpop.f32.mrb[0].mxu0
        %v2977 = vadd.f32 0.0, %v2976
        %v2978 = vpop.f32.mrb[0].mxu0
        %v2979 = vpop.f32.mrb[0].mxu0
        %v2980 = vadd.f32 0.0, %v2979
        %v2981 = vpop.f32.mrb[0].mxu0
        %2982 = vmatprep.mubr.bf16.mxu0 0
        %2983 = vmatmul.mubr.bf16.gmra.mrb[0].mxu0 %v2845
        %v2984 = vpop.f32.mrb[0].mxu0
        %v2985 = vadd.f32 0.0, %v2984
        %v2986 = vpop.f32.mrb[0].mxu0
        %v2987 = vpop.f32.mrb[0].mxu0
        %v2988 = vadd.f32 0.0, %v2987
        %v2989 = vpop.f32.mrb[0].mxu0
        %2990 = vdwg.mxu0
        %v2991 = vadd.f32 %v399, %v2929
        %v2992 = vadd.f32 %v402, %v2932
        %v2993 = vadd.f32 %v407, %v2937
        %v2994 = vadd.f32 %v410, %v2940
        %v2995 = vadd.f32 %v415, %v2945
        %v2996 = vadd.f32 %v418, %v2948
        %v2997 = vadd.f32 %v423, %v2953
        %v2998 = vadd.f32 %v426, %v2956
        %v2999 = vadd.f32 %v431, %v2961
        %v3000 = vadd.f32 %v434, %v2964
        %v3001 = vadd.f32 %v439, %v2969
        %v3002 = vadd.f32 %v442, %v2972
        %v3003 = vadd.f32 %v447, %v2977
        %v3004 = vadd.f32 %v450, %v2980
        %v3005 = vadd.f32 %v455, %v2985
        %v3006 = vadd.f32 %v458, %v2988
        %v3007 = vld [vmem:[#allocation7 + $0x2] ss:$0 sm:$0xff]
        %v3008 = vadd.f32 %v2991, %v3007
        %v3009 = vadd.f32 %v2992, %v3007
        %v3010 = vadd.f32 %v2993, %v3007
        %v3011 = vadd.f32 %v2994, %v3007
        %v3012 = vadd.f32 %v2995, %v3007
        %v3013 = vadd.f32 %v2996, %v3007
        %v3014 = vadd.f32 %v2997, %v3007
        %v3015 = vadd.f32 %v2998, %v3007
        %v3016 = vadd.f32 %v2999, %v3007
        %v3017 = vadd.f32 %v3000, %v3007
        %v3018 = vadd.f32 %v3001, %v3007
        %v3019 = vadd.f32 %v3002, %v3007
        %v3020 = vadd.f32 %v3003, %v3007
        %v3021 = vadd.f32 %v3004, %v3007
        %v3022 = vadd.f32 %v3005, %v3007
        %v3023 = vadd.f32 %v3006, %v3007
        %v3024 = vld [vmem:[#allocation7 + $0x5] ss:$0 sm:$0xff]
        %v3025 = vld [vmem:[#allocation7 + $0x6] ss:$0 sm:$0xff]
        %3026 = vadd.xlane.f32.xlu0 %v3008
        %v3027 = vpop.xlane.xlu0 %3026
        %3028 = vadd.xlane.f32.xlu0 %v3009
        %v3029 = vpop.xlane.xlu0 %3028
        %3030 = vadd.xlane.f32.xlu0 %v3010
        %v3031 = vpop.xlane.xlu0 %3030
        %3032 = vadd.xlane.f32.xlu0 %v3011
        %v3033 = vpop.xlane.xlu0 %3032
        %3034 = vadd.xlane.f32.xlu0 %v3012
        %v3035 = vpop.xlane.xlu0 %3034
        %3036 = vadd.xlane.f32.xlu0 %v3013
        %v3037 = vpop.xlane.xlu0 %3036
        %3038 = vadd.xlane.f32.xlu0 %v3014
        %v3039 = vpop.xlane.xlu0 %3038
        %3040 = vadd.xlane.f32.xlu0 %v3015
        %v3041 = vpop.xlane.xlu0 %3040
        %3042 = vadd.xlane.f32.xlu0 %v3016
        %v3043 = vpop.xlane.xlu0 %3042
        %3044 = vadd.xlane.f32.xlu0 %v3017
        %v3045 = vpop.xlane.xlu0 %3044
        %3046 = vadd.xlane.f32.xlu0 %v3018
        %v3047 = vpop.xlane.xlu0 %3046
        %3048 = vadd.xlane.f32.xlu0 %v3019
        %v3049 = vpop.xlane.xlu0 %3048
        %3050 = vadd.xlane.f32.xlu0 %v3020
        %v3051 = vpop.xlane.xlu0 %3050
        %3052 = vadd.xlane.f32.xlu0 %v3021
        %v3053 = vpop.xlane.xlu0 %3052
        %3054 = vadd.xlane.f32.xlu0 %v3022
        %v3055 = vpop.xlane.xlu0 %3054
        %3056 = vadd.xlane.f32.xlu0 %v3023
        %v3057 = vpop.xlane.xlu0 %3056
        %v3058 = vmul.f32 %v3027, 0.0078125
        %v3059 = vmul.f32 %v3029, 0.0078125
        %v3060 = vmul.f32 %v3031, 0.0078125
        %v3061 = vmul.f32 %v3033, 0.0078125
        %v3062 = vmul.f32 %v3035, 0.0078125
        %v3063 = vmul.f32 %v3037, 0.0078125
        %v3064 = vmul.f32 %v3039, 0.0078125
        %v3065 = vmul.f32 %v3041, 0.0078125
        %v3066 = vmul.f32 %v3043, 0.0078125
        %v3067 = vmul.f32 %v3045, 0.0078125
        %v3068 = vmul.f32 %v3047, 0.0078125
        %v3069 = vmul.f32 %v3049, 0.0078125
        %v3070 = vmul.f32 %v3051, 0.0078125
        %v3071 = vmul.f32 %v3053, 0.0078125
        %v3072 = vmul.f32 %v3055, 0.0078125
        %v3073 = vmul.f32 %v3057, 0.0078125
        %v3074 = vmul.f32 %v3008, %v3008
        %v3075 = vmul.f32 %v3009, %v3009
        %v3076 = vmul.f32 %v3010, %v3010
        %v3077 = vmul.f32 %v3011, %v3011
        %v3078 = vmul.f32 %v3012, %v3012
        %v3079 = vmul.f32 %v3013, %v3013
        %v3080 = vmul.f32 %v3014, %v3014
        %v3081 = vmul.f32 %v3015, %v3015
        %v3082 = vmul.f32 %v3016, %v3016
        %v3083 = vmul.f32 %v3017, %v3017
        %v3084 = vmul.f32 %v3018, %v3018
        %v3085 = vmul.f32 %v3019, %v3019
        %v3086 = vmul.f32 %v3020, %v3020
        %v3087 = vmul.f32 %v3021, %v3021
        %v3088 = vmul.f32 %v3022, %v3022
        %v3089 = vmul.f32 %v3023, %v3023
        %3090 = vadd.xlane.f32.xlu0 %v3074
        %v3091 = vpop.xlane.xlu0 %3090
        %3092 = vadd.xlane.f32.xlu0 %v3075
        %v3093 = vpop.xlane.xlu0 %3092
        %3094 = vadd.xlane.f32.xlu0 %v3076
        %v3095 = vpop.xlane.xlu0 %3094
        %3096 = vadd.xlane.f32.xlu0 %v3077
        %v3097 = vpop.xlane.xlu0 %3096
        %3098 = vadd.xlane.f32.xlu0 %v3078
        %v3099 = vpop.xlane.xlu0 %3098
        %3100 = vadd.xlane.f32.xlu0 %v3079
        %v3101 = vpop.xlane.xlu0 %3100
        %3102 = vadd.xlane.f32.xlu0 %v3080
        %v3103 = vpop.xlane.xlu0 %3102
        %3104 = vadd.xlane.f32.xlu0 %v3081
        %v3105 = vpop.xlane.xlu0 %3104
        %3106 = vadd.xlane.f32.xlu0 %v3082
        %v3107 = vpop.xlane.xlu0 %3106
        %3108 = vadd.xlane.f32.xlu0 %v3083
        %v3109 = vpop.xlane.xlu0 %3108
        %3110 = vadd.xlane.f32.xlu0 %v3084
        %v3111 = vpop.xlane.xlu0 %3110
        %3112 = vadd.xlane.f32.xlu0 %v3085
        %v3113 = vpop.xlane.xlu0 %3112
        %3114 = vadd.xlane.f32.xlu0 %v3086
        %v3115 = vpop.xlane.xlu0 %3114
        %3116 = vadd.xlane.f32.xlu0 %v3087
        %v3117 = vpop.xlane.xlu0 %3116
        %3118 = vadd.xlane.f32.xlu0 %v3088
        %v3119 = vpop.xlane.xlu0 %3118
        %3120 = vadd.xlane.f32.xlu0 %v3089
        %v3121 = vpop.xlane.xlu0 %3120
        %v3122 = vmul.f32 %v3091, 0.0078125
        %v3123 = vmul.f32 %v3093, 0.0078125
        %v3124 = vmul.f32 %v3095, 0.0078125
        %v3125 = vmul.f32 %v3097, 0.0078125
        %v3126 = vmul.f32 %v3099, 0.0078125
        %v3127 = vmul.f32 %v3101, 0.0078125
        %v3128 = vmul.f32 %v3103, 0.0078125
        %v3129 = vmul.f32 %v3105, 0.0078125
        %v3130 = vmul.f32 %v3107, 0.0078125
        %v3131 = vmul.f32 %v3109, 0.0078125
        %v3132 = vmul.f32 %v3111, 0.0078125
        %v3133 = vmul.f32 %v3113, 0.0078125
        %v3134 = vmul.f32 %v3115, 0.0078125
        %v3135 = vmul.f32 %v3117, 0.0078125
        %v3136 = vmul.f32 %v3119, 0.0078125
        %v3137 = vmul.f32 %v3121, 0.0078125
        %v3138 = vmul.f32 %v3058, %v3058
        %v3139 = vmul.f32 %v3059, %v3059
        %v3140 = vmul.f32 %v3060, %v3060
        %v3141 = vmul.f32 %v3061, %v3061
        %v3142 = vmul.f32 %v3062, %v3062
        %v3143 = vmul.f32 %v3063, %v3063
        %v3144 = vmul.f32 %v3064, %v3064
        %v3145 = vmul.f32 %v3065, %v3065
        %v3146 = vmul.f32 %v3066, %v3066
        %v3147 = vmul.f32 %v3067, %v3067
        %v3148 = vmul.f32 %v3068, %v3068
        %v3149 = vmul.f32 %v3069, %v3069
        %v3150 = vmul.f32 %v3070, %v3070
        %v3151 = vmul.f32 %v3071, %v3071
        %v3152 = vmul.f32 %v3072, %v3072
        %v3153 = vmul.f32 %v3073, %v3073
        %v3154 = vsub.f32 %v3122, %v3138
        %v3155 = vsub.f32 %v3123, %v3139
        %v3156 = vsub.f32 %v3124, %v3140
        %v3157 = vsub.f32 %v3125, %v3141
        %v3158 = vsub.f32 %v3126, %v3142
        %v3159 = vsub.f32 %v3127, %v3143
        %v3160 = vsub.f32 %v3128, %v3144
        %v3161 = vsub.f32 %v3129, %v3145
        %v3162 = vsub.f32 %v3130, %v3146
        %v3163 = vsub.f32 %v3131, %v3147
        %v3164 = vsub.f32 %v3132, %v3148
        %v3165 = vsub.f32 %v3133, %v3149
        %v3166 = vsub.f32 %v3134, %v3150
        %v3167 = vsub.f32 %v3135, %v3151
        %v3168 = vsub.f32 %v3136, %v3152
        %v3169 = vsub.f32 %v3137, %v3153
        %v3170 = vsub.f32 %v3008, %v3058
        %v3171 = vsub.f32 %v3009, %v3059
        %v3172 = vsub.f32 %v3010, %v3060
        %v3173 = vsub.f32 %v3011, %v3061
        %v3174 = vsub.f32 %v3012, %v3062
        %v3175 = vsub.f32 %v3013, %v3063
        %v3176 = vsub.f32 %v3014, %v3064
        %v3177 = vsub.f32 %v3015, %v3065
        %v3178 = vsub.f32 %v3016, %v3066
        %v3179 = vsub.f32 %v3017, %v3067
        %v3180 = vsub.f32 %v3018, %v3068
        %v3181 = vsub.f32 %v3019, %v3069
        %v3182 = vsub.f32 %v3020, %v3070
        %v3183 = vsub.f32 %v3021, %v3071
        %v3184 = vsub.f32 %v3022, %v3072
        %v3185 = vsub.f32 %v3023, %v3073
        %v3186 = vadd.f32 %v3154, 1e-05
        %v3187 = vadd.f32 %v3155, 1e-05
        %v3188 = vadd.f32 %v3156, 1e-05
        %v3189 = vadd.f32 %v3157, 1e-05
        %v3190 = vadd.f32 %v3158, 1e-05
        %v3191 = vadd.f32 %v3159, 1e-05
        %v3192 = vadd.f32 %v3160, 1e-05
        %v3193 = vadd.f32 %v3161, 1e-05
        %v3194 = vadd.f32 %v3162, 1e-05
        %v3195 = vadd.f32 %v3163, 1e-05
        %v3196 = vadd.f32 %v3164, 1e-05
        %v3197 = vadd.f32 %v3165, 1e-05
        %v3198 = vadd.f32 %v3166, 1e-05
        %v3199 = vadd.f32 %v3167, 1e-05
        %v3200 = vadd.f32 %v3168, 1e-05
        %v3201 = vadd.f32 %v3169, 1e-05
        %v3202 = vrsqrt.pop %v3186
        %v3203 = vrsqrt.pop %v3187
        %v3204 = vrsqrt.pop %v3188
        %v3205 = vrsqrt.pop %v3189
        %v3206 = vrsqrt.pop %v3190
        %v3207 = vrsqrt.pop %v3191
        %v3208 = vrsqrt.pop %v3192
        %v3209 = vrsqrt.pop %v3193
        %v3210 = vrsqrt.pop %v3194
        %v3211 = vrsqrt.pop %v3195
        %v3212 = vrsqrt.pop %v3196
        %v3213 = vrsqrt.pop %v3197
        %v3214 = vrsqrt.pop %v3198
        %v3215 = vrsqrt.pop %v3199
        %v3216 = vrsqrt.pop %v3200
        %v3217 = vrsqrt.pop %v3201
        %v3218 = vmul.f32 %v3170, %v3202
        %v3219 = vmul.f32 %v3171, %v3203
        %v3220 = vmul.f32 %v3172, %v3204
        %v3221 = vmul.f32 %v3173, %v3205
        %v3222 = vmul.f32 %v3174, %v3206
        %v3223 = vmul.f32 %v3175, %v3207
        %v3224 = vmul.f32 %v3176, %v3208
        %v3225 = vmul.f32 %v3177, %v3209
        %v3226 = vmul.f32 %v3178, %v3210
        %v3227 = vmul.f32 %v3179, %v3211
        %v3228 = vmul.f32 %v3180, %v3212
        %v3229 = vmul.f32 %v3181, %v3213
        %v3230 = vmul.f32 %v3182, %v3214
        %v3231 = vmul.f32 %v3183, %v3215
        %v3232 = vmul.f32 %v3184, %v3216
        %v3233 = vmul.f32 %v3185, %v3217
        %v3234 = vmul.f32 %v3218, %v3024
        %v3235 = vmul.f32 %v3219, %v3024
        %v3236 = vmul.f32 %v3220, %v3024
        %v3237 = vmul.f32 %v3221, %v3024
        %v3238 = vmul.f32 %v3222, %v3024
        %v3239 = vmul.f32 %v3223, %v3024
        %v3240 = vmul.f32 %v3224, %v3024
        %v3241 = vmul.f32 %v3225, %v3024
        %v3242 = vmul.f32 %v3226, %v3024
        %v3243 = vmul.f32 %v3227, %v3024
        %v3244 = vmul.f32 %v3228, %v3024
        %v3245 = vmul.f32 %v3229, %v3024
        %v3246 = vmul.f32 %v3230, %v3024
        %v3247 = vmul.f32 %v3231, %v3024
        %v3248 = vmul.f32 %v3232, %v3024
        %v3249 = vmul.f32 %v3233, %v3024
        %v3250 = vadd.f32 %v3234, %v3025
        %v3251 = vadd.f32 %v3235, %v3025
        %v3252 = vadd.f32 %v3236, %v3025
        %v3253 = vadd.f32 %v3237, %v3025
        %v3254 = vadd.f32 %v3238, %v3025
        %v3255 = vadd.f32 %v3239, %v3025
        %v3256 = vadd.f32 %v3240, %v3025
        %v3257 = vadd.f32 %v3241, %v3025
        %v3258 = vadd.f32 %v3242, %v3025
        %v3259 = vadd.f32 %v3243, %v3025
        %v3260 = vadd.f32 %v3244, %v3025
        %v3261 = vadd.f32 %v3245, %v3025
        %v3262 = vadd.f32 %v3246, %v3025
        %v3263 = vadd.f32 %v3247, %v3025
        %v3264 = vadd.f32 %v3248, %v3025
        %v3265 = vadd.f32 %v3249, %v3025
        %v3266 = vld [vmem:[#allocation5 + $0x180] sm:$0xff]
        %v3267 = vld [vmem:[#allocation5 + $0x188] sm:$0xff]
        %v3268 = vld [vmem:[#allocation5 + $0x190] sm:$0xff]
        %v3269 = vld [vmem:[#allocation5 + $0x198] sm:$0xff]
        %v3270 = vld [vmem:[#allocation5 + $0x1a0] sm:$0xff]
        %v3271 = vld [vmem:[#allocation5 + $0x1a8] sm:$0xff]
        %v3272 = vld [vmem:[#allocation5 + $0x1b0] sm:$0xff]
        %v3273 = vld [vmem:[#allocation5 + $0x1b8] sm:$0xff]
        %v3274 = vld [vmem:[#allocation5 + $0x1c0] sm:$0xff]
        %v3275 = vld [vmem:[#allocation5 + $0x1c8] sm:$0xff]
        %v3276 = vld [vmem:[#allocation5 + $0x1d0] sm:$0xff]
        %v3277 = vld [vmem:[#allocation5 + $0x1d8] sm:$0xff]
        %v3278 = vld [vmem:[#allocation5 + $0x1e0] sm:$0xff]
        %v3279 = vld [vmem:[#allocation5 + $0x1e8] sm:$0xff]
        %v3280 = vld [vmem:[#allocation5 + $0x1f0] sm:$0xff]
        %v3281 = vld [vmem:[#allocation5 + $0x1f8] sm:$0xff]
        %v3282 = vpack.c.bf16 %v3251, %v3250
        %v3283 = vpack.c.bf16 %v3253, %v3252
        %v3284 = vpack.c.bf16 %v3255, %v3254
        %v3285 = vpack.c.bf16 %v3257, %v3256
        %v3286 = vpack.c.bf16 %v3259, %v3258
        %v3287 = vpack.c.bf16 %v3261, %v3260
        %v3288 = vpack.c.bf16 %v3263, %v3262
        %v3289 = vpack.c.bf16 %v3265, %v3264
        %s3290 = scalar_lea.vmem [#allocation7], 3
        %v3291 = vld [vmem:[%s3290] ss:$8 sm:$0x3]
        %v3293 = vlaneseq
        %v3294 = vshrl.u32 %v3293, 7
        %v3295 = vsub.s32 0, %v3294
        %v3296 = vrot.slane %v3291, %v3295
        %v3297 = vlaneseq
        %v3298 = vshrl.u32 %v3297, 7
        %v3299 = vsub.s32 1, %v3298
        %v3300 = vrot.slane %v3291, %v3299
        %v3319 = vunpack.c.l.b16 %v3266
        %v3320 = vunpack.c.h.b16 %v3266
        %v3321 = vunpack.c.l.b16 %v3267
        %v3322 = vunpack.c.h.b16 %v3267
        %v3323 = vunpack.c.l.b16 %v3268
        %v3324 = vunpack.c.h.b16 %v3268
        %v3325 = vunpack.c.l.b16 %v3269
        %v3326 = vunpack.c.h.b16 %v3269
        %v3327 = vunpack.c.l.b16 %v3270
        %v3328 = vunpack.c.h.b16 %v3270
        %v3329 = vunpack.c.l.b16 %v3271
        %v3330 = vunpack.c.h.b16 %v3271
        %v3331 = vunpack.c.l.b16 %v3272
        %v3332 = vunpack.c.h.b16 %v3272
        %v3333 = vunpack.c.l.b16 %v3273
        %v3334 = vunpack.c.h.b16 %v3273
        %v3335 = vunpack.c.l.b16 %v3274
        %v3336 = vunpack.c.h.b16 %v3274
        %v3337 = vunpack.c.l.b16 %v3275
        %v3338 = vunpack.c.h.b16 %v3275
        %v3339 = vunpack.c.l.b16 %v3276
        %v3340 = vunpack.c.h.b16 %v3276
        %v3341 = vunpack.c.l.b16 %v3277
        %v3342 = vunpack.c.h.b16 %v3277
        %v3343 = vunpack.c.l.b16 %v3278
        %v3344 = vunpack.c.h.b16 %v3278
        %v3345 = vunpack.c.l.b16 %v3279
        %v3346 = vunpack.c.h.b16 %v3279
        %v3347 = vunpack.c.l.b16 %v3280
        %v3348 = vunpack.c.h.b16 %v3280
        %v3349 = vunpack.c.l.b16 %v3281
        %v3350 = vunpack.c.h.b16 %v3281
        %v3351 = vpack.c.b16 %v3321, %v3319
        %v3352 = vpack.c.b16 %v3322, %v3320
        %v3353 = vpack.c.b16 %v3325, %v3323
        %v3354 = vpack.c.b16 %v3326, %v3324
        %v3355 = vpack.c.b16 %v3329, %v3327
        %v3356 = vpack.c.b16 %v3330, %v3328
        %v3357 = vpack.c.b16 %v3333, %v3331
        %v3358 = vpack.c.b16 %v3334, %v3332
        %v3359 = vpack.c.b16 %v3337, %v3335
        %v3360 = vpack.c.b16 %v3338, %v3336
        %v3361 = vpack.c.b16 %v3341, %v3339
        %v3362 = vpack.c.b16 %v3342, %v3340
        %v3363 = vpack.c.b16 %v3345, %v3343
        %v3364 = vpack.c.b16 %v3346, %v3344
        %v3365 = vpack.c.b16 %v3349, %v3347
        %v3366 = vpack.c.b16 %v3350, %v3348
        %3383 = vmatprep.subr.bf16.mxu0 %v3352
        %3384 = vmatpush1.bf16.msra.mxu0 %v3351
        %3385 = vmatprep.subr.bf16.mxu0 %v3354
        %3386 = vmatpush1.bf16.msra.mxu0 %v3353
        %3387 = vmatprep.subr.bf16.mxu0 %v3356
        %3388 = vmatpush1.bf16.msra.mxu0 %v3355
        %3389 = vmatprep.subr.bf16.mxu0 %v3358
        %3390 = vmatpush1.bf16.msra.mxu0 %v3357
        %3391 = vmatprep.subr.bf16.mxu0 %v3360
        %3392 = vmatpush1.bf16.msra.mxu0 %v3359
        %3393 = vmatprep.subr.bf16.mxu0 %v3362
        %3394 = vmatpush1.bf16.msra.mxu0 %v3361
        %3395 = vmatprep.subr.bf16.mxu0 %v3364
        %3396 = vmatpush1.bf16.msra.mxu0 %v3363
        %3397 = vmatprep.subr.bf16.mxu0 %v3366
        %3398 = vmatpush1.bf16.msra.mxu0 %v3365
        %3399 = vmatprep.subr.bf16.mxu0 0
        %3400 = vmatpush1.bf16.msra.mxu0 0
        %3401 = vmatprep.subr.bf16.mxu0 0
        %3402 = vmatpush1.bf16.msra.mxu0 0
        %3403 = vmatprep.subr.bf16.mxu0 0
        %3404 = vmatpush1.bf16.msra.mxu0 0
        %3405 = vmatprep.subr.bf16.mxu0 0
        %3406 = vmatpush1.bf16.msra.mxu0 0
        %3407 = vmatprep.subr.bf16.mxu0 0
        %3408 = vmatpush1.bf16.msra.mxu0 0
        %3409 = vmatprep.subr.bf16.mxu0 0
        %3410 = vmatpush1.bf16.msra.mxu0 0
        %3411 = vmatprep.subr.bf16.mxu0 0
        %3412 = vmatpush1.bf16.msra.mxu0 0
        %3413 = vmatprep.subr.bf16.mxu0 0
        %3414 = vmatpush1.bf16.msra.mxu0 0
        %3415 = vmatprep.mubr.bf16.mxu0 0
        %3416 = vmatmul.mubr.bf16.gmra.mrb[0].mxu0 %v3282
        %v3417 = vpop.f32.mrb[0].mxu0
        %v3418 = vadd.f32 %v3296, %v3417
        %v3419 = vpop.f32.mrb[0].mxu0
        %v3420 = vadd.f32 %v3300, %v3419
        %v3421 = vpop.f32.mrb[0].mxu0
        %v3422 = vadd.f32 %v3296, %v3421
        %v3423 = vpop.f32.mrb[0].mxu0
        %v3424 = vadd.f32 %v3300, %v3423
        %3425 = vmatprep.mubr.bf16.mxu0 0
        %3426 = vmatmul.mubr.bf16.gmra.mrb[0].mxu0 %v3283
        %v3427 = vpop.f32.mrb[0].mxu0
        %v3428 = vadd.f32 %v3296, %v3427
        %v3429 = vpop.f32.mrb[0].mxu0
        %v3430 = vadd.f32 %v3300, %v3429
        %v3431 = vpop.f32.mrb[0].mxu0
        %v3432 = vadd.f32 %v3296, %v3431
        %v3433 = vpop.f32.mrb[0].mxu0
        %v3434 = vadd.f32 %v3300, %v3433
        %3435 = vmatprep.mubr.bf16.mxu0 0
        %3436 = vmatmul.mubr.bf16.gmra.mrb[0].mxu0 %v3284
        %v3437 = vpop.f32.mrb[0].mxu0
        %v3438 = vadd.f32 %v3296, %v3437
        %v3439 = vpop.f32.mrb[0].mxu0
        %v3440 = vadd.f32 %v3300, %v3439
        %v3441 = vpop.f32.mrb[0].mxu0
        %v3442 = vadd.f32 %v3296, %v3441
        %v3443 = vpop.f32.mrb[0].mxu0
        %v3444 = vadd.f32 %v3300, %v3443
        %3445 = vmatprep.mubr.bf16.mxu0 0
        %3446 = vmatmul.mubr.bf16.gmra.mrb[0].mxu0 %v3285
        %v3447 = vpop.f32.mrb[0].mxu0
        %v3448 = vadd.f32 %v3296, %v3447
        %v3449 = vpop.f32.mrb[0].mxu0
        %v3450 = vadd.f32 %v3300, %v3449
        %v3451 = vpop.f32.mrb[0].mxu0
        %v3452 = vadd.f32 %v3296, %v3451
        %v3453 = vpop.f32.mrb[0].mxu0
        %v3454 = vadd.f32 %v3300, %v3453
        %3455 = vmatprep.mubr.bf16.mxu0 0
        %3456 = vmatmul.mubr.bf16.gmra.mrb[0].mxu0 %v3286
        %v3457 = vpop.f32.mrb[0].mxu0
        %v3458 = vadd.f32 %v3296, %v3457
        %v3459 = vpop.f32.mrb[0].mxu0
        %v3460 = vadd.f32 %v3300, %v3459
        %v3461 = vpop.f32.mrb[0].mxu0
        %v3462 = vadd.f32 %v3296, %v3461
        %v3463 = vpop.f32.mrb[0].mxu0
        %v3464 = vadd.f32 %v3300, %v3463
        %3465 = vmatprep.mubr.bf16.mxu0 0
        %3466 = vmatmul.mubr.bf16.gmra.mrb[0].mxu0 %v3287
        %v3467 = vpop.f32.mrb[0].mxu0
        %v3468 = vadd.f32 %v3296, %v3467
        %v3469 = vpop.f32.mrb[0].mxu0
        %v3470 = vadd.f32 %v3300, %v3469
        %v3471 = vpop.f32.mrb[0].mxu0
        %v3472 = vadd.f32 %v3296, %v3471
        %v3473 = vpop.f32.mrb[0].mxu0
        %v3474 = vadd.f32 %v3300, %v3473
        %3475 = vmatprep.mubr.bf16.mxu0 0
        %3476 = vmatmul.mubr.bf16.gmra.mrb[0].mxu0 %v3288
        %v3477 = vpop.f32.mrb[0].mxu0
        %v3478 = vadd.f32 %v3296, %v3477
        %v3479 = vpop.f32.mrb[0].mxu0
        %v3480 = vadd.f32 %v3300, %v3479
        %v3481 = vpop.f32.mrb[0].mxu0
        %v3482 = vadd.f32 %v3296, %v3481
        %v3483 = vpop.f32.mrb[0].mxu0
        %v3484 = vadd.f32 %v3300, %v3483
        %3485 = vmatprep.mubr.bf16.mxu0 0
        %3486 = vmatmul.mubr.bf16.gmra.mrb[0].mxu0 %v3289
        %v3487 = vpop.f32.mrb[0].mxu0
        %v3488 = vadd.f32 %v3296, %v3487
        %v3489 = vpop.f32.mrb[0].mxu0
        %v3490 = vadd.f32 %v3300, %v3489
        %v3491 = vpop.f32.mrb[0].mxu0
        %v3492 = vadd.f32 %v3296, %v3491
        %v3493 = vpop.f32.mrb[0].mxu0
        %v3494 = vadd.f32 %v3300, %v3493
        %3495 = vdwg.mxu0
        %v3496 = vmax.f32 %v3418, 0.0
        %v3497 = vmax.f32 %v3420, 0.0
        %v3498 = vmax.f32 %v3422, 0.0
        %v3499 = vmax.f32 %v3424, 0.0
        %v3500 = vmax.f32 %v3428, 0.0
        %v3501 = vmax.f32 %v3430, 0.0
        %v3502 = vmax.f32 %v3432, 0.0
        %v3503 = vmax.f32 %v3434, 0.0
        %v3504 = vmax.f32 %v3438, 0.0
        %v3505 = vmax.f32 %v3440, 0.0
        %v3506 = vmax.f32 %v3442, 0.0
        %v3507 = vmax.f32 %v3444, 0.0
        %v3508 = vmax.f32 %v3448, 0.0
        %v3509 = vmax.f32 %v3450, 0.0
        %v3510 = vmax.f32 %v3452, 0.0
        %v3511 = vmax.f32 %v3454, 0.0
        %v3512 = vmax.f32 %v3458, 0.0
        %v3513 = vmax.f32 %v3460, 0.0
        %v3514 = vmax.f32 %v3462, 0.0
        %v3515 = vmax.f32 %v3464, 0.0
        %v3516 = vmax.f32 %v3468, 0.0
        %v3517 = vmax.f32 %v3470, 0.0
        %v3518 = vmax.f32 %v3472, 0.0
        %v3519 = vmax.f32 %v3474, 0.0
        %v3520 = vmax.f32 %v3478, 0.0
        %v3521 = vmax.f32 %v3480, 0.0
        %v3522 = vmax.f32 %v3482, 0.0
        %v3523 = vmax.f32 %v3484, 0.0
        %v3524 = vmax.f32 %v3488, 0.0
        %v3525 = vmax.f32 %v3490, 0.0
        %v3526 = vmax.f32 %v3492, 0.0
        %v3527 = vmax.f32 %v3494, 0.0
        %v3528 = vld [vmem:[#allocation5 + $0x200] sm:$0xf]
        %v3529 = vld [vmem:[#allocation5 + $0x208] sm:$0xf]
        %v3530 = vld [vmem:[#allocation5 + $0x210] sm:$0xf]
        %v3531 = vld [vmem:[#allocation5 + $0x218] sm:$0xf]
        %v3532 = vld [vmem:[#allocation5 + $0x220] sm:$0xf]
        %v3533 = vld [vmem:[#allocation5 + $0x228] sm:$0xf]
        %v3534 = vld [vmem:[#allocation5 + $0x230] sm:$0xf]
        %v3535 = vld [vmem:[#allocation5 + $0x238] sm:$0xf]
        %v3536 = vld [vmem:[#allocation5 + $0x240] sm:$0xf]
        %v3537 = vld [vmem:[#allocation5 + $0x248] sm:$0xf]
        %v3538 = vld [vmem:[#allocation5 + $0x250] sm:$0xf]
        %v3539 = vld [vmem:[#allocation5 + $0x258] sm:$0xf]
        %v3540 = vld [vmem:[#allocation5 + $0x260] sm:$0xf]
        %v3541 = vld [vmem:[#allocation5 + $0x268] sm:$0xf]
        %v3542 = vld [vmem:[#allocation5 + $0x270] sm:$0xf]
        %v3543 = vld [vmem:[#allocation5 + $0x278] sm:$0xf]
        %v3544 = vld [vmem:[#allocation5 + $0x280] sm:$0xf]
        %v3545 = vld [vmem:[#allocation5 + $0x288] sm:$0xf]
        %v3546 = vld [vmem:[#allocation5 + $0x290] sm:$0xf]
        %v3547 = vld [vmem:[#allocation5 + $0x298] sm:$0xf]
        %v3548 = vld [vmem:[#allocation5 + $0x2a0] sm:$0xf]
        %v3549 = vld [vmem:[#allocation5 + $0x2a8] sm:$0xf]
        %v3550 = vld [vmem:[#allocation5 + $0x2b0] sm:$0xf]
        %v3551 = vld [vmem:[#allocation5 + $0x2b8] sm:$0xf]
        %v3552 = vld [vmem:[#allocation5 + $0x2c0] sm:$0xf]
        %v3553 = vld [vmem:[#allocation5 + $0x2c8] sm:$0xf]
        %v3554 = vld [vmem:[#allocation5 + $0x2d0] sm:$0xf]
        %v3555 = vld [vmem:[#allocation5 + $0x2d8] sm:$0xf]
        %v3556 = vld [vmem:[#allocation5 + $0x2e0] sm:$0xf]
        %v3557 = vld [vmem:[#allocation5 + $0x2e8] sm:$0xf]
        %v3558 = vld [vmem:[#allocation5 + $0x2f0] sm:$0xf]
        %v3559 = vld [vmem:[#allocation5 + $0x2f8] sm:$0xf]
        %v3560 = vpack.c.bf16 %v3498, %v3496
        %v3561 = vpack.c.bf16 %v3499, %v3497
        %v3562 = vpack.c.bf16 %v3502, %v3500
        %v3563 = vpack.c.bf16 %v3503, %v3501
        %v3564 = vpack.c.bf16 %v3506, %v3504
        %v3565 = vpack.c.bf16 %v3507, %v3505
        %v3566 = vpack.c.bf16 %v3510, %v3508
        %v3567 = vpack.c.bf16 %v3511, %v3509
        %v3568 = vpack.c.bf16 %v3514, %v3512
        %v3569 = vpack.c.bf16 %v3515, %v3513
        %v3570 = vpack.c.bf16 %v3518, %v3516
        %v3571 = vpack.c.bf16 %v3519, %v3517
        %v3572 = vpack.c.bf16 %v3522, %v3520
        %v3573 = vpack.c.bf16 %v3523, %v3521
        %v3574 = vpack.c.bf16 %v3526, %v3524
        %v3575 = vpack.c.bf16 %v3527, %v3525
        %v3608 = vunpack.c.l.b16 %v3528
        %v3609 = vunpack.c.l.b16 %v3529
        %v3610 = vunpack.c.l.b16 %v3530
        %v3611 = vunpack.c.l.b16 %v3531
        %v3612 = vunpack.c.l.b16 %v3532
        %v3613 = vunpack.c.l.b16 %v3533
        %v3614 = vunpack.c.l.b16 %v3534
        %v3615 = vunpack.c.l.b16 %v3535
        %v3616 = vunpack.c.l.b16 %v3536
        %v3617 = vunpack.c.l.b16 %v3537
        %v3618 = vunpack.c.l.b16 %v3538
        %v3619 = vunpack.c.l.b16 %v3539
        %v3620 = vunpack.c.l.b16 %v3540
        %v3621 = vunpack.c.l.b16 %v3541
        %v3622 = vunpack.c.l.b16 %v3542
        %v3623 = vunpack.c.l.b16 %v3543
        %v3624 = vunpack.c.l.b16 %v3544
        %v3625 = vunpack.c.l.b16 %v3545
        %v3626 = vunpack.c.l.b16 %v3546
        %v3627 = vunpack.c.l.b16 %v3547
        %v3628 = vunpack.c.l.b16 %v3548
        %v3629 = vunpack.c.l.b16 %v3549
        %v3630 = vunpack.c.l.b16 %v3550
        %v3631 = vunpack.c.l.b16 %v3551
        %v3632 = vunpack.c.l.b16 %v3552
        %v3633 = vunpack.c.l.b16 %v3553
        %v3634 = vunpack.c.l.b16 %v3554
        %v3635 = vunpack.c.l.b16 %v3555
        %v3636 = vunpack.c.l.b16 %v3556
        %v3637 = vunpack.c.l.b16 %v3557
        %v3638 = vunpack.c.l.b16 %v3558
        %v3639 = vunpack.c.l.b16 %v3559
        %v3640 = vpack.c.b16 %v3609, %v3608
        %v3641 = vpack.c.b16 %v3611, %v3610
        %v3642 = vpack.c.b16 %v3613, %v3612
        %v3643 = vpack.c.b16 %v3615, %v3614
        %v3644 = vpack.c.b16 %v3617, %v3616
        %v3645 = vpack.c.b16 %v3619, %v3618
        %v3646 = vpack.c.b16 %v3621, %v3620
        %v3647 = vpack.c.b16 %v3623, %v3622
        %v3648 = vpack.c.b16 %v3625, %v3624
        %v3649 = vpack.c.b16 %v3627, %v3626
        %v3650 = vpack.c.b16 %v3629, %v3628
        %v3651 = vpack.c.b16 %v3631, %v3630
        %v3652 = vpack.c.b16 %v3633, %v3632
        %v3653 = vpack.c.b16 %v3635, %v3634
        %v3654 = vpack.c.b16 %v3637, %v3636
        %v3655 = vpack.c.b16 %v3639, %v3638
        %3672 = vmatprep.subr.bf16.mxu0 0
        %3673 = vmatpush1.bf16.msra.mxu0 %v3640
        %3674 = vmatprep.subr.bf16.mxu0 0
        %3675 = vmatpush1.bf16.msra.mxu0 %v3641
        %3676 = vmatprep.subr.bf16.mxu0 0
        %3677 = vmatpush1.bf16.msra.mxu0 %v3642
        %3678 = vmatprep.subr.bf16.mxu0 0
        %3679 = vmatpush1.bf16.msra.mxu0 %v3643
        %3680 = vmatprep.subr.bf16.mxu0 0
        %3681 = vmatpush1.bf16.msra.mxu0 %v3644
        %3682 = vmatprep.subr.bf16.mxu0 0
        %3683 = vmatpush1.bf16.msra.mxu0 %v3645
        %3684 = vmatprep.subr.bf16.mxu0 0
        %3685 = vmatpush1.bf16.msra.mxu0 %v3646
        %3686 = vmatprep.subr.bf16.mxu0 0
        %3687 = vmatpush1.bf16.msra.mxu0 %v3647
        %3688 = vmatprep.subr.bf16.mxu0 0
        %3689 = vmatpush1.bf16.msra.mxu0 %v3648
        %3690 = vmatprep.subr.bf16.mxu0 0
        %3691 = vmatpush1.bf16.msra.mxu0 %v3649
        %3692 = vmatprep.subr.bf16.mxu0 0
        %3693 = vmatpush1.bf16.msra.mxu0 %v3650
        %3694 = vmatprep.subr.bf16.mxu0 0
        %3695 = vmatpush1.bf16.msra.mxu0 %v3651
        %3696 = vmatprep.subr.bf16.mxu0 0
        %3697 = vmatpush1.bf16.msra.mxu0 %v3652
        %3698 = vmatprep.subr.bf16.mxu0 0
        %3699 = vmatpush1.bf16.msra.mxu0 %v3653
        %3700 = vmatprep.subr.bf16.mxu0 0
        %3701 = vmatpush1.bf16.msra.mxu0 %v3654
        %3702 = vmatprep.subr.bf16.mxu0 0
        %3703 = vmatpush1.bf16.msra.mxu0 %v3655
        %3704 = vmatprep.mubr.bf16.mxu0 %v3561
        %3705 = vmatmul.mubr.bf16.gmra.mrb[0].mxu0 %v3560
        %v3706 = vpop.f32.mrb[0].mxu0
        %v3707 = vadd.f32 0.0, %v3706
        %v3708 = vpop.f32.mrb[0].mxu0
        %v3709 = vpop.f32.mrb[0].mxu0
        %v3710 = vadd.f32 0.0, %v3709
        %v3711 = vpop.f32.mrb[0].mxu0
        %3712 = vmatprep.mubr.bf16.mxu0 %v3563
        %3713 = vmatmul.mubr.bf16.gmra.mrb[0].mxu0 %v3562
        %v3714 = vpop.f32.mrb[0].mxu0
        %v3715 = vadd.f32 0.0, %v3714
        %v3716 = vpop.f32.mrb[0].mxu0
        %v3717 = vpop.f32.mrb[0].mxu0
        %v3718 = vadd.f32 0.0, %v3717
        %v3719 = vpop.f32.mrb[0].mxu0
        %3720 = vmatprep.mubr.bf16.mxu0 %v3565
        %3721 = vmatmul.mubr.bf16.gmra.mrb[0].mxu0 %v3564
        %v3722 = vpop.f32.mrb[0].mxu0
        %v3723 = vadd.f32 0.0, %v3722
        %v3724 = vpop.f32.mrb[0].mxu0
        %v3725 = vpop.f32.mrb[0].mxu0
        %v3726 = vadd.f32 0.0, %v3725
        %v3727 = vpop.f32.mrb[0].mxu0
        %3728 = vmatprep.mubr.bf16.mxu0 %v3567
        %3729 = vmatmul.mubr.bf16.gmra.mrb[0].mxu0 %v3566
        %v3730 = vpop.f32.mrb[0].mxu0
        %v3731 = vadd.f32 0.0, %v3730
        %v3732 = vpop.f32.mrb[0].mxu0
        %v3733 = vpop.f32.mrb[0].mxu0
        %v3734 = vadd.f32 0.0, %v3733
        %v3735 = vpop.f32.mrb[0].mxu0
        %3736 = vmatprep.mubr.bf16.mxu0 %v3569
        %3737 = vmatmul.mubr.bf16.gmra.mrb[0].mxu0 %v3568
        %v3738 = vpop.f32.mrb[0].mxu0
        %v3739 = vadd.f32 0.0, %v3738
        %v3740 = vpop.f32.mrb[0].mxu0
        %v3741 = vpop.f32.mrb[0].mxu0
        %v3742 = vadd.f32 0.0, %v3741
        %v3743 = vpop.f32.mrb[0].mxu0
        %3744 = vmatprep.mubr.bf16.mxu0 %v3571
        %3745 = vmatmul.mubr.bf16.gmra.mrb[0].mxu0 %v3570
        %v3746 = vpop.f32.mrb[0].mxu0
        %v3747 = vadd.f32 0.0, %v3746
        %v3748 = vpop.f32.mrb[0].mxu0
        %v3749 = vpop.f32.mrb[0].mxu0
        %v3750 = vadd.f32 0.0, %v3749
        %v3751 = vpop.f32.mrb[0].mxu0
        %3752 = vmatprep.mubr.bf16.mxu0 %v3573
        %3753 = vmatmul.mubr.bf16.gmra.mrb[0].mxu0 %v3572
        %v3754 = vpop.f32.mrb[0].mxu0
        %v3755 = vadd.f32 0.0, %v3754
        %v3756 = vpop.f32.mrb[0].mxu0
        %v3757 = vpop.f32.mrb[0].mxu0
        %v3758 = vadd.f32 0.0, %v3757
        %v3759 = vpop.f32.mrb[0].mxu0
        %3760 = vmatprep.mubr.bf16.mxu0 %v3575
        %3761 = vmatmul.mubr.bf16.gmra.mrb[0].mxu0 %v3574
        %v3762 = vpop.f32.mrb[0].mxu0
        %v3763 = vadd.f32 0.0, %v3762
        %v3764 = vpop.f32.mrb[0].mxu0
        %v3765 = vpop.f32.mrb[0].mxu0
        %v3766 = vadd.f32 0.0, %v3765
        %v3767 = vpop.f32.mrb[0].mxu0
        %3768 = vdwg.mxu0
        %v3769 = vadd.f32 %v3250, %v3707
        %v3770 = vadd.f32 %v3251, %v3710
        %v3771 = vadd.f32 %v3252, %v3715
        %v3772 = vadd.f32 %v3253, %v3718
        %v3773 = vadd.f32 %v3254, %v3723
        %v3774 = vadd.f32 %v3255, %v3726
        %v3775 = vadd.f32 %v3256, %v3731
        %v3776 = vadd.f32 %v3257, %v3734
        %v3777 = vadd.f32 %v3258, %v3739
        %v3778 = vadd.f32 %v3259, %v3742
        %v3779 = vadd.f32 %v3260, %v3747
        %v3780 = vadd.f32 %v3261, %v3750
        %v3781 = vadd.f32 %v3262, %v3755
        %v3782 = vadd.f32 %v3263, %v3758
        %v3783 = vadd.f32 %v3264, %v3763
        %v3784 = vadd.f32 %v3265, %v3766
        %v3785 = vld [vmem:[#allocation7 + $0x4] ss:$0 sm:$0xff]
        %v3786 = vadd.f32 %v3769, %v3785
        %v3787 = vadd.f32 %v3770, %v3785
        %v3788 = vadd.f32 %v3771, %v3785
        %v3789 = vadd.f32 %v3772, %v3785
        %v3790 = vadd.f32 %v3773, %v3785
        %v3791 = vadd.f32 %v3774, %v3785
        %v3792 = vadd.f32 %v3775, %v3785
        %v3793 = vadd.f32 %v3776, %v3785
        %v3794 = vadd.f32 %v3777, %v3785
        %v3795 = vadd.f32 %v3778, %v3785
        %v3796 = vadd.f32 %v3779, %v3785
        %v3797 = vadd.f32 %v3780, %v3785
        %v3798 = vadd.f32 %v3781, %v3785
        %v3799 = vadd.f32 %v3782, %v3785
        %v3800 = vadd.f32 %v3783, %v3785
        %v3801 = vadd.f32 %v3784, %v3785
        %v3802 = vld [vmem:[#allocation7 + $0x7] ss:$0 sm:$0xff]
        %v3803 = vld [vmem:[#allocation7 + $0x10] ss:$0 sm:$0xff]
        %3804 = vadd.xlane.f32.xlu0 %v3786
        %v3805 = vpop.xlane.xlu0 %3804
        %3806 = vadd.xlane.f32.xlu0 %v3787
        %v3807 = vpop.xlane.xlu0 %3806
        %3808 = vadd.xlane.f32.xlu0 %v3788
        %v3809 = vpop.xlane.xlu0 %3808
        %3810 = vadd.xlane.f32.xlu0 %v3789
        %v3811 = vpop.xlane.xlu0 %3810
        %3812 = vadd.xlane.f32.xlu0 %v3790
        %v3813 = vpop.xlane.xlu0 %3812
        %3814 = vadd.xlane.f32.xlu0 %v3791
        %v3815 = vpop.xlane.xlu0 %3814
        %3816 = vadd.xlane.f32.xlu0 %v3792
        %v3817 = vpop.xlane.xlu0 %3816
        %3818 = vadd.xlane.f32.xlu0 %v3793
        %v3819 = vpop.xlane.xlu0 %3818
        %3820 = vadd.xlane.f32.xlu0 %v3794
        %v3821 = vpop.xlane.xlu0 %3820
        %3822 = vadd.xlane.f32.xlu0 %v3795
        %v3823 = vpop.xlane.xlu0 %3822
        %3824 = vadd.xlane.f32.xlu0 %v3796
        %v3825 = vpop.xlane.xlu0 %3824
        %3826 = vadd.xlane.f32.xlu0 %v3797
        %v3827 = vpop.xlane.xlu0 %3826
        %3828 = vadd.xlane.f32.xlu0 %v3798
        %v3829 = vpop.xlane.xlu0 %3828
        %3830 = vadd.xlane.f32.xlu0 %v3799
        %v3831 = vpop.xlane.xlu0 %3830
        %3832 = vadd.xlane.f32.xlu0 %v3800
        %v3833 = vpop.xlane.xlu0 %3832
        %3834 = vadd.xlane.f32.xlu0 %v3801
        %v3835 = vpop.xlane.xlu0 %3834
        %v3836 = vmul.f32 %v3805, 0.0078125
        %v3837 = vmul.f32 %v3807, 0.0078125
        %v3838 = vmul.f32 %v3809, 0.0078125
        %v3839 = vmul.f32 %v3811, 0.0078125
        %v3840 = vmul.f32 %v3813, 0.0078125
        %v3841 = vmul.f32 %v3815, 0.0078125
        %v3842 = vmul.f32 %v3817, 0.0078125
        %v3843 = vmul.f32 %v3819, 0.0078125
        %v3844 = vmul.f32 %v3821, 0.0078125
        %v3845 = vmul.f32 %v3823, 0.0078125
        %v3846 = vmul.f32 %v3825, 0.0078125
        %v3847 = vmul.f32 %v3827, 0.0078125
        %v3848 = vmul.f32 %v3829, 0.0078125
        %v3849 = vmul.f32 %v3831, 0.0078125
        %v3850 = vmul.f32 %v3833, 0.0078125
        %v3851 = vmul.f32 %v3835, 0.0078125
        %v3852 = vmul.f32 %v3786, %v3786
        %v3853 = vmul.f32 %v3787, %v3787
        %v3854 = vmul.f32 %v3788, %v3788
        %v3855 = vmul.f32 %v3789, %v3789
        %v3856 = vmul.f32 %v3790, %v3790
        %v3857 = vmul.f32 %v3791, %v3791
        %v3858 = vmul.f32 %v3792, %v3792
        %v3859 = vmul.f32 %v3793, %v3793
        %v3860 = vmul.f32 %v3794, %v3794
        %v3861 = vmul.f32 %v3795, %v3795
        %v3862 = vmul.f32 %v3796, %v3796
        %v3863 = vmul.f32 %v3797, %v3797
        %v3864 = vmul.f32 %v3798, %v3798
        %v3865 = vmul.f32 %v3799, %v3799
        %v3866 = vmul.f32 %v3800, %v3800
        %v3867 = vmul.f32 %v3801, %v3801
        %3868 = vadd.xlane.f32.xlu0 %v3852
        %v3869 = vpop.xlane.xlu0 %3868
        %3870 = vadd.xlane.f32.xlu0 %v3853
        %v3871 = vpop.xlane.xlu0 %3870
        %3872 = vadd.xlane.f32.xlu0 %v3854
        %v3873 = vpop.xlane.xlu0 %3872
        %3874 = vadd.xlane.f32.xlu0 %v3855
        %v3875 = vpop.xlane.xlu0 %3874
        %3876 = vadd.xlane.f32.xlu0 %v3856
        %v3877 = vpop.xlane.xlu0 %3876
        %3878 = vadd.xlane.f32.xlu0 %v3857
        %v3879 = vpop.xlane.xlu0 %3878
        %3880 = vadd.xlane.f32.xlu0 %v3858
        %v3881 = vpop.xlane.xlu0 %3880
        %3882 = vadd.xlane.f32.xlu0 %v3859
        %v3883 = vpop.xlane.xlu0 %3882
        %3884 = vadd.xlane.f32.xlu0 %v3860
        %v3885 = vpop.xlane.xlu0 %3884
        %3886 = vadd.xlane.f32.xlu0 %v3861
        %v3887 = vpop.xlane.xlu0 %3886
        %3888 = vadd.xlane.f32.xlu0 %v3862
        %v3889 = vpop.xlane.xlu0 %3888
        %3890 = vadd.xlane.f32.xlu0 %v3863
        %v3891 = vpop.xlane.xlu0 %3890
        %3892 = vadd.xlane.f32.xlu0 %v3864
        %v3893 = vpop.xlane.xlu0 %3892
        %3894 = vadd.xlane.f32.xlu0 %v3865
        %v3895 = vpop.xlane.xlu0 %3894
        %3896 = vadd.xlane.f32.xlu0 %v3866
        %v3897 = vpop.xlane.xlu0 %3896
        %3898 = vadd.xlane.f32.xlu0 %v3867
        %v3899 = vpop.xlane.xlu0 %3898
        %v3900 = vmul.f32 %v3869, 0.0078125
        %v3901 = vmul.f32 %v3871, 0.0078125
        %v3902 = vmul.f32 %v3873, 0.0078125
        %v3903 = vmul.f32 %v3875, 0.0078125
        %v3904 = vmul.f32 %v3877, 0.0078125
        %v3905 = vmul.f32 %v3879, 0.0078125
        %v3906 = vmul.f32 %v3881, 0.0078125
        %v3907 = vmul.f32 %v3883, 0.0078125
        %v3908 = vmul.f32 %v3885, 0.0078125
        %v3909 = vmul.f32 %v3887, 0.0078125
        %v3910 = vmul.f32 %v3889, 0.0078125
        %v3911 = vmul.f32 %v3891, 0.0078125
        %v3912 = vmul.f32 %v3893, 0.0078125
        %v3913 = vmul.f32 %v3895, 0.0078125
        %v3914 = vmul.f32 %v3897, 0.0078125
        %v3915 = vmul.f32 %v3899, 0.0078125
        %v3916 = vmul.f32 %v3836, %v3836
        %v3917 = vmul.f32 %v3837, %v3837
        %v3918 = vmul.f32 %v3838, %v3838
        %v3919 = vmul.f32 %v3839, %v3839
        %v3920 = vmul.f32 %v3840, %v3840
        %v3921 = vmul.f32 %v3841, %v3841
        %v3922 = vmul.f32 %v3842, %v3842
        %v3923 = vmul.f32 %v3843, %v3843
        %v3924 = vmul.f32 %v3844, %v3844
        %v3925 = vmul.f32 %v3845, %v3845
        %v3926 = vmul.f32 %v3846, %v3846
        %v3927 = vmul.f32 %v3847, %v3847
        %v3928 = vmul.f32 %v3848, %v3848
        %v3929 = vmul.f32 %v3849, %v3849
        %v3930 = vmul.f32 %v3850, %v3850
        %v3931 = vmul.f32 %v3851, %v3851
        %v3932 = vsub.f32 %v3900, %v3916
        %v3933 = vsub.f32 %v3901, %v3917
        %v3934 = vsub.f32 %v3902, %v3918
        %v3935 = vsub.f32 %v3903, %v3919
        %v3936 = vsub.f32 %v3904, %v3920
        %v3937 = vsub.f32 %v3905, %v3921
        %v3938 = vsub.f32 %v3906, %v3922
        %v3939 = vsub.f32 %v3907, %v3923
        %v3940 = vsub.f32 %v3908, %v3924
        %v3941 = vsub.f32 %v3909, %v3925
        %v3942 = vsub.f32 %v3910, %v3926
        %v3943 = vsub.f32 %v3911, %v3927
        %v3944 = vsub.f32 %v3912, %v3928
        %v3945 = vsub.f32 %v3913, %v3929
        %v3946 = vsub.f32 %v3914, %v3930
        %v3947 = vsub.f32 %v3915, %v3931
        %v3948 = vsub.f32 %v3786, %v3836
        %v3949 = vsub.f32 %v3787, %v3837
        %v3950 = vsub.f32 %v3788, %v3838
        %v3951 = vsub.f32 %v3789, %v3839
        %v3952 = vsub.f32 %v3790, %v3840
        %v3953 = vsub.f32 %v3791, %v3841
        %v3954 = vsub.f32 %v3792, %v3842
        %v3955 = vsub.f32 %v3793, %v3843
        %v3956 = vsub.f32 %v3794, %v3844
        %v3957 = vsub.f32 %v3795, %v3845
        %v3958 = vsub.f32 %v3796, %v3846
        %v3959 = vsub.f32 %v3797, %v3847
        %v3960 = vsub.f32 %v3798, %v3848
        %v3961 = vsub.f32 %v3799, %v3849
        %v3962 = vsub.f32 %v3800, %v3850
        %v3963 = vsub.f32 %v3801, %v3851
        %v3964 = vadd.f32 %v3932, 1e-05
        %v3965 = vadd.f32 %v3933, 1e-05
        %v3966 = vadd.f32 %v3934, 1e-05
        %v3967 = vadd.f32 %v3935, 1e-05
        %v3968 = vadd.f32 %v3936, 1e-05
        %v3969 = vadd.f32 %v3937, 1e-05
        %v3970 = vadd.f32 %v3938, 1e-05
        %v3971 = vadd.f32 %v3939, 1e-05
        %v3972 = vadd.f32 %v3940, 1e-05
        %v3973 = vadd.f32 %v3941, 1e-05
        %v3974 = vadd.f32 %v3942, 1e-05
        %v3975 = vadd.f32 %v3943, 1e-05
        %v3976 = vadd.f32 %v3944, 1e-05
        %v3977 = vadd.f32 %v3945, 1e-05
        %v3978 = vadd.f32 %v3946, 1e-05
        %v3979 = vadd.f32 %v3947, 1e-05
        %v3980 = vrsqrt.pop %v3964
        %v3981 = vrsqrt.pop %v3965
        %v3982 = vrsqrt.pop %v3966
        %v3983 = vrsqrt.pop %v3967
        %v3984 = vrsqrt.pop %v3968
        %v3985 = vrsqrt.pop %v3969
        %v3986 = vrsqrt.pop %v3970
        %v3987 = vrsqrt.pop %v3971
        %v3988 = vrsqrt.pop %v3972
        %v3989 = vrsqrt.pop %v3973
        %v3990 = vrsqrt.pop %v3974
        %v3991 = vrsqrt.pop %v3975
        %v3992 = vrsqrt.pop %v3976
        %v3993 = vrsqrt.pop %v3977
        %v3994 = vrsqrt.pop %v3978
        %v3995 = vrsqrt.pop %v3979
        %v3996 = vmul.f32 %v3948, %v3980
        %v3997 = vmul.f32 %v3949, %v3981
        %v3998 = vmul.f32 %v3950, %v3982
        %v3999 = vmul.f32 %v3951, %v3983
        %v4000 = vmul.f32 %v3952, %v3984
        %v4001 = vmul.f32 %v3953, %v3985
        %v4002 = vmul.f32 %v3954, %v3986
        %v4003 = vmul.f32 %v3955, %v3987
        %v4004 = vmul.f32 %v3956, %v3988
        %v4005 = vmul.f32 %v3957, %v3989
        %v4006 = vmul.f32 %v3958, %v3990
        %v4007 = vmul.f32 %v3959, %v3991
        %v4008 = vmul.f32 %v3960, %v3992
        %v4009 = vmul.f32 %v3961, %v3993
        %v4010 = vmul.f32 %v3962, %v3994
        %v4011 = vmul.f32 %v3963, %v3995
        %v4012 = vmul.f32 %v3996, %v3802
        %v4013 = vmul.f32 %v3997, %v3802
        %v4014 = vmul.f32 %v3998, %v3802
        %v4015 = vmul.f32 %v3999, %v3802
        %v4016 = vmul.f32 %v4000, %v3802
        %v4017 = vmul.f32 %v4001, %v3802
        %v4018 = vmul.f32 %v4002, %v3802
        %v4019 = vmul.f32 %v4003, %v3802
        %v4020 = vmul.f32 %v4004, %v3802
        %v4021 = vmul.f32 %v4005, %v3802
        %v4022 = vmul.f32 %v4006, %v3802
        %v4023 = vmul.f32 %v4007, %v3802
        %v4024 = vmul.f32 %v4008, %v3802
        %v4025 = vmul.f32 %v4009, %v3802
        %v4026 = vmul.f32 %v4010, %v3802
        %v4027 = vmul.f32 %v4011, %v3802
        %v4028 = vadd.f32 %v4012, %v3803
        %v4029 = vadd.f32 %v4013, %v3803
        %v4030 = vadd.f32 %v4014, %v3803
        %v4031 = vadd.f32 %v4015, %v3803
        %v4032 = vadd.f32 %v4016, %v3803
        %v4033 = vadd.f32 %v4017, %v3803
        %v4034 = vadd.f32 %v4018, %v3803
        %v4035 = vadd.f32 %v4019, %v3803
        %v4036 = vadd.f32 %v4020, %v3803
        %v4037 = vadd.f32 %v4021, %v3803
        %v4038 = vadd.f32 %v4022, %v3803
        %v4039 = vadd.f32 %v4023, %v3803
        %v4040 = vadd.f32 %v4024, %v3803
        %v4041 = vadd.f32 %v4025, %v3803
        %v4042 = vadd.f32 %v4026, %v3803
        %v4043 = vadd.f32 %v4027, %v3803
        %v4044 = vld [vmem:[#allocation5 + $0x300] sm:$0xff]
        %v4045 = vld [vmem:[#allocation5 + $0x308] sm:$0xff]
        %v4046 = vld [vmem:[#allocation5 + $0x310] sm:$0xff]
        %v4047 = vld [vmem:[#allocation5 + $0x318] sm:$0xff]
        %v4048 = vld [vmem:[#allocation5 + $0x320] sm:$0xff]
        %v4049 = vld [vmem:[#allocation5 + $0x328] sm:$0xff]
        %v4050 = vld [vmem:[#allocation5 + $0x330] sm:$0xff]
        %v4051 = vld [vmem:[#allocation5 + $0x338] sm:$0xff]
        %v4052 = vld [vmem:[#allocation5 + $0x340] sm:$0xff]
        %v4053 = vld [vmem:[#allocation5 + $0x348] sm:$0xff]
        %v4054 = vld [vmem:[#allocation5 + $0x350] sm:$0xff]
        %v4055 = vld [vmem:[#allocation5 + $0x358] sm:$0xff]
        %v4056 = vld [vmem:[#allocation5 + $0x360] sm:$0xff]
        %v4057 = vld [vmem:[#allocation5 + $0x368] sm:$0xff]
        %v4058 = vld [vmem:[#allocation5 + $0x370] sm:$0xff]
        %v4059 = vld [vmem:[#allocation5 + $0x378] sm:$0xff]
        %v4060 = vpack.c.bf16 %v4029, %v4028
        %v4061 = vpack.c.bf16 %v4031, %v4030
        %v4062 = vpack.c.bf16 %v4033, %v4032
        %v4063 = vpack.c.bf16 %v4035, %v4034
        %v4064 = vpack.c.bf16 %v4037, %v4036
        %v4065 = vpack.c.bf16 %v4039, %v4038
        %v4066 = vpack.c.bf16 %v4041, %v4040
        %v4067 = vpack.c.bf16 %v4043, %v4042
        %s4068 = scalar_lea.vmem [#allocation7], 17
        %v4069 = vld [vmem:[%s4068] ss:$8 sm:$0x3]
        %v4071 = vlaneseq
        %v4072 = vshrl.u32 %v4071, 7
        %v4073 = vsub.s32 0, %v4072
        %v4074 = vrot.slane %v4069, %v4073
        %v4075 = vlaneseq
        %v4076 = vshrl.u32 %v4075, 7
        %v4077 = vsub.s32 1, %v4076
        %v4078 = vrot.slane %v4069, %v4077
        %v4097 = vunpack.c.l.b16 %v4044
        %v4098 = vunpack.c.h.b16 %v4044
        %v4099 = vunpack.c.l.b16 %v4045
        %v4100 = vunpack.c.h.b16 %v4045
        %v4101 = vunpack.c.l.b16 %v4046
        %v4102 = vunpack.c.h.b16 %v4046
        %v4103 = vunpack.c.l.b16 %v4047
        %v4104 = vunpack.c.h.b16 %v4047
        %v4105 = vunpack.c.l.b16 %v4048
        %v4106 = vunpack.c.h.b16 %v4048
        %v4107 = vunpack.c.l.b16 %v4049
        %v4108 = vunpack.c.h.b16 %v4049
        %v4109 = vunpack.c.l.b16 %v4050
        %v4110 = vunpack.c.h.b16 %v4050
        %v4111 = vunpack.c.l.b16 %v4051
        %v4112 = vunpack.c.h.b16 %v4051
        %v4113 = vunpack.c.l.b16 %v4052
        %v4114 = vunpack.c.h.b16 %v4052
        %v4115 = vunpack.c.l.b16 %v4053
        %v4116 = vunpack.c.h.b16 %v4053
        %v4117 = vunpack.c.l.b16 %v4054
        %v4118 = vunpack.c.h.b16 %v4054
        %v4119 = vunpack.c.l.b16 %v4055
        %v4120 = vunpack.c.h.b16 %v4055
        %v4121 = vunpack.c.l.b16 %v4056
        %v4122 = vunpack.c.h.b16 %v4056
        %v4123 = vunpack.c.l.b16 %v4057
        %v4124 = vunpack.c.h.b16 %v4057
        %v4125 = vunpack.c.l.b16 %v4058
        %v4126 = vunpack.c.h.b16 %v4058
        %v4127 = vunpack.c.l.b16 %v4059
        %v4128 = vunpack.c.h.b16 %v4059
        %v4129 = vpack.c.b16 %v4099, %v4097
        %v4130 = vpack.c.b16 %v4100, %v4098
        %v4131 = vpack.c.b16 %v4103, %v4101
        %v4132 = vpack.c.b16 %v4104, %v4102
        %v4133 = vpack.c.b16 %v4107, %v4105
        %v4134 = vpack.c.b16 %v4108, %v4106
        %v4135 = vpack.c.b16 %v4111, %v4109
        %v4136 = vpack.c.b16 %v4112, %v4110
        %v4137 = vpack.c.b16 %v4115, %v4113
        %v4138 = vpack.c.b16 %v4116, %v4114
        %v4139 = vpack.c.b16 %v4119, %v4117
        %v4140 = vpack.c.b16 %v4120, %v4118
        %v4141 = vpack.c.b16 %v4123, %v4121
        %v4142 = vpack.c.b16 %v4124, %v4122
        %v4143 = vpack.c.b16 %v4127, %v4125
        %v4144 = vpack.c.b16 %v4128, %v4126
        %4161 = vmatprep.subr.bf16.mxu0 %v4130
        %4162 = vmatpush1.bf16.msra.mxu0 %v4129
        %4163 = vmatprep.subr.bf16.mxu0 %v4132
        %4164 = vmatpush1.bf16.msra.mxu0 %v4131
        %4165 = vmatprep.subr.bf16.mxu0 %v4134
        %4166 = vmatpush1.bf16.msra.mxu0 %v4133
        %4167 = vmatprep.subr.bf16.mxu0 %v4136
        %4168 = vmatpush1.bf16.msra.mxu0 %v4135
        %4169 = vmatprep.subr.bf16.mxu0 %v4138
        %4170 = vmatpush1.bf16.msra.mxu0 %v4137
        %4171 = vmatprep.subr.bf16.mxu0 %v4140
        %4172 = vmatpush1.bf16.msra.mxu0 %v4139
        %4173 = vmatprep.subr.bf16.mxu0 %v4142
        %4174 = vmatpush1.bf16.msra.mxu0 %v4141
        %4175 = vmatprep.subr.bf16.mxu0 %v4144
        %4176 = vmatpush1.bf16.msra.mxu0 %v4143
        %4177 = vmatprep.subr.bf16.mxu0 0
        %4178 = vmatpush1.bf16.msra.mxu0 0
        %4179 = vmatprep.subr.bf16.mxu0 0
        %4180 = vmatpush1.bf16.msra.mxu0 0
        %4181 = vmatprep.subr.bf16.mxu0 0
        %4182 = vmatpush1.bf16.msra.mxu0 0
        %4183 = vmatprep.subr.bf16.mxu0 0
        %4184 = vmatpush1.bf16.msra.mxu0 0
        %4185 = vmatprep.subr.bf16.mxu0 0
        %4186 = vmatpush1.bf16.msra.mxu0 0
        %4187 = vmatprep.subr.bf16.mxu0 0
        %4188 = vmatpush1.bf16.msra.mxu0 0
        %4189 = vmatprep.subr.bf16.mxu0 0
        %4190 = vmatpush1.bf16.msra.mxu0 0
        %4191 = vmatprep.subr.bf16.mxu0 0
        %4192 = vmatpush1.bf16.msra.mxu0 0
        %4193 = vmatprep.mubr.bf16.mxu0 0
        %4194 = vmatmul.mubr.bf16.gmra.mrb[0].mxu0 %v4060
        %v4195 = vpop.f32.mrb[0].mxu0
        %v4196 = vadd.f32 %v4074, %v4195
        %v4197 = vpop.f32.mrb[0].mxu0
        %v4198 = vadd.f32 %v4078, %v4197
        %v4199 = vpop.f32.mrb[0].mxu0
        %v4200 = vadd.f32 %v4074, %v4199
        %v4201 = vpop.f32.mrb[0].mxu0
        %v4202 = vadd.f32 %v4078, %v4201
        %4203 = vmatprep.mubr.bf16.mxu0 0
        %4204 = vmatmul.mubr.bf16.gmra.mrb[0].mxu0 %v4061
        %v4205 = vpop.f32.mrb[0].mxu0
        %v4206 = vadd.f32 %v4074, %v4205
        %v4207 = vpop.f32.mrb[0].mxu0
        %v4208 = vadd.f32 %v4078, %v4207
        %v4209 = vpop.f32.mrb[0].mxu0
        %v4210 = vadd.f32 %v4074, %v4209
        %v4211 = vpop.f32.mrb[0].mxu0
        %v4212 = vadd.f32 %v4078, %v4211
        %4213 = vmatprep.mubr.bf16.mxu0 0
        %4214 = vmatmul.mubr.bf16.gmra.mrb[0].mxu0 %v4062
        %v4215 = vpop.f32.mrb[0].mxu0
        %v4216 = vadd.f32 %v4074, %v4215
        %v4217 = vpop.f32.mrb[0].mxu0
        %v4218 = vadd.f32 %v4078, %v4217
        %v4219 = vpop.f32.mrb[0].mxu0
        %v4220 = vadd.f32 %v4074, %v4219
        %v4221 = vpop.f32.mrb[0].mxu0
        %v4222 = vadd.f32 %v4078, %v4221
        %4223 = vmatprep.mubr.bf16.mxu0 0
        %4224 = vmatmul.mubr.bf16.gmra.mrb[0].mxu0 %v4063
        %v4225 = vpop.f32.mrb[0].mxu0
        %v4226 = vadd.f32 %v4074, %v4225
        %v4227 = vpop.f32.mrb[0].mxu0
        %v4228 = vadd.f32 %v4078, %v4227
        %v4229 = vpop.f32.mrb[0].mxu0
        %v4230 = vadd.f32 %v4074, %v4229
        %v4231 = vpop.f32.mrb[0].mxu0
        %v4232 = vadd.f32 %v4078, %v4231
        %4233 = vmatprep.mubr.bf16.mxu0 0
        %4234 = vmatmul.mubr.bf16.gmra.mrb[0].mxu0 %v4064
        %v4235 = vpop.f32.mrb[0].mxu0
        %v4236 = vadd.f32 %v4074, %v4235
        %v4237 = vpop.f32.mrb[0].mxu0
        %v4238 = vadd.f32 %v4078, %v4237
        %v4239 = vpop.f32.mrb[0].mxu0
        %v4240 = vadd.f32 %v4074, %v4239
        %v4241 = vpop.f32.mrb[0].mxu0
        %v4242 = vadd.f32 %v4078, %v4241
        %4243 = vmatprep.mubr.bf16.mxu0 0
        %4244 = vmatmul.mubr.bf16.gmra.mrb[0].mxu0 %v4065
        %v4245 = vpop.f32.mrb[0].mxu0
        %v4246 = vadd.f32 %v4074, %v4245
        %v4247 = vpop.f32.mrb[0].mxu0
        %v4248 = vadd.f32 %v4078, %v4247
        %v4249 = vpop.f32.mrb[0].mxu0
        %v4250 = vadd.f32 %v4074, %v4249
        %v4251 = vpop.f32.mrb[0].mxu0
        %v4252 = vadd.f32 %v4078, %v4251
        %4253 = vmatprep.mubr.bf16.mxu0 0
        %4254 = vmatmul.mubr.bf16.gmra.mrb[0].mxu0 %v4066
        %v4255 = vpop.f32.mrb[0].mxu0
        %v4256 = vadd.f32 %v4074, %v4255
        %v4257 = vpop.f32.mrb[0].mxu0
        %v4258 = vadd.f32 %v4078, %v4257
        %v4259 = vpop.f32.mrb[0].mxu0
        %v4260 = vadd.f32 %v4074, %v4259
        %v4261 = vpop.f32.mrb[0].mxu0
        %v4262 = vadd.f32 %v4078, %v4261
        %4263 = vmatprep.mubr.bf16.mxu0 0
        %4264 = vmatmul.mubr.bf16.gmra.mrb[0].mxu0 %v4067
        %v4265 = vpop.f32.mrb[0].mxu0
        %v4266 = vadd.f32 %v4074, %v4265
        %v4267 = vpop.f32.mrb[0].mxu0
        %v4268 = vadd.f32 %v4078, %v4267
        %v4269 = vpop.f32.mrb[0].mxu0
        %v4270 = vadd.f32 %v4074, %v4269
        %v4271 = vpop.f32.mrb[0].mxu0
        %v4272 = vadd.f32 %v4078, %v4271
        %4273 = vdwg.mxu0
        %v4274 = vpack.c.bf16 %v4198, %v4198
        %v4275 = vpack.c.bf16 %v4202, %v4202
        %v4276 = vpack.c.bf16 %v4208, %v4208
        %v4277 = vpack.c.bf16 %v4212, %v4212
        %v4278 = vpack.c.bf16 %v4218, %v4218
        %v4279 = vpack.c.bf16 %v4222, %v4222
        %v4280 = vpack.c.bf16 %v4228, %v4228
        %v4281 = vpack.c.bf16 %v4232, %v4232
        %v4282 = vpack.c.bf16 %v4238, %v4238
        %v4283 = vpack.c.bf16 %v4242, %v4242
        %v4284 = vpack.c.bf16 %v4248, %v4248
        %v4285 = vpack.c.bf16 %v4252, %v4252
        %v4286 = vpack.c.bf16 %v4258, %v4258
        %v4287 = vpack.c.bf16 %v4262, %v4262
        %v4288 = vpack.c.bf16 %v4268, %v4268
        %v4289 = vpack.c.bf16 %v4272, %v4272
        %v4290 = vmul.f32 %v4198, %v712
        %v4291 = vmul.f32 %v4198, %v714
        %v4292 = vmul.f32 %v4198, %v716
        %v4293 = vmul.f32 %v4198, %v718
        %v4294 = vmul.f32 %v4202, %v712
        %v4295 = vmul.f32 %v4202, %v714
        %v4296 = vmul.f32 %v4202, %v716
        %v4297 = vmul.f32 %v4202, %v718
        %v4298 = vmul.f32 %v4208, %v712
        %v4299 = vmul.f32 %v4208, %v714
        %v4300 = vmul.f32 %v4208, %v716
        %v4301 = vmul.f32 %v4208, %v718
        %v4302 = vmul.f32 %v4212, %v712
        %v4303 = vmul.f32 %v4212, %v714
        %v4304 = vmul.f32 %v4212, %v716
        %v4305 = vmul.f32 %v4212, %v718
        %v4306 = vmul.f32 %v4218, %v712
        %v4307 = vmul.f32 %v4218, %v714
        %v4308 = vmul.f32 %v4218, %v716
        %v4309 = vmul.f32 %v4218, %v718
        %v4310 = vmul.f32 %v4222, %v712
        %v4311 = vmul.f32 %v4222, %v714
        %v4312 = vmul.f32 %v4222, %v716
        %v4313 = vmul.f32 %v4222, %v718
        %v4314 = vmul.f32 %v4228, %v712
        %v4315 = vmul.f32 %v4228, %v714
        %v4316 = vmul.f32 %v4228, %v716
        %v4317 = vmul.f32 %v4228, %v718
        %v4318 = vmul.f32 %v4232, %v712
        %v4319 = vmul.f32 %v4232, %v714
        %v4320 = vmul.f32 %v4232, %v716
        %v4321 = vmul.f32 %v4232, %v718
        %v4322 = vmul.f32 %v4238, %v712
        %v4323 = vmul.f32 %v4238, %v714
        %v4324 = vmul.f32 %v4238, %v716
        %v4325 = vmul.f32 %v4238, %v718
        %v4326 = vmul.f32 %v4242, %v712
        %v4327 = vmul.f32 %v4242, %v714
        %v4328 = vmul.f32 %v4242, %v716
        %v4329 = vmul.f32 %v4242, %v718
        %v4330 = vmul.f32 %v4248, %v712
        %v4331 = vmul.f32 %v4248, %v714
        %v4332 = vmul.f32 %v4248, %v716
        %v4333 = vmul.f32 %v4248, %v718
        %v4334 = vmul.f32 %v4252, %v712
        %v4335 = vmul.f32 %v4252, %v714
        %v4336 = vmul.f32 %v4252, %v716
        %v4337 = vmul.f32 %v4252, %v718
        %v4338 = vmul.f32 %v4258, %v712
        %v4339 = vmul.f32 %v4258, %v714
        %v4340 = vmul.f32 %v4258, %v716
        %v4341 = vmul.f32 %v4258, %v718
        %v4342 = vmul.f32 %v4262, %v712
        %v4343 = vmul.f32 %v4262, %v714
        %v4344 = vmul.f32 %v4262, %v716
        %v4345 = vmul.f32 %v4262, %v718
        %v4346 = vmul.f32 %v4268, %v712
        %v4347 = vmul.f32 %v4268, %v714
        %v4348 = vmul.f32 %v4268, %v716
        %v4349 = vmul.f32 %v4268, %v718
        %v4350 = vmul.f32 %v4272, %v712
        %v4351 = vmul.f32 %v4272, %v714
        %v4352 = vmul.f32 %v4272, %v716
        %v4353 = vmul.f32 %v4272, %v718
        %v4354 = vpack.c.bf16 %v4291, %v4290
        %v4355 = vpack.c.bf16 %v4293, %v4292
        %v4356 = vpack.c.bf16 %v4295, %v4294
        %v4357 = vpack.c.bf16 %v4297, %v4296
        %v4358 = vpack.c.bf16 %v4299, %v4298
        %v4359 = vpack.c.bf16 %v4301, %v4300
        %v4360 = vpack.c.bf16 %v4303, %v4302
        %v4361 = vpack.c.bf16 %v4305, %v4304
        %v4362 = vpack.c.bf16 %v4307, %v4306
        %v4363 = vpack.c.bf16 %v4309, %v4308
        %v4364 = vpack.c.bf16 %v4311, %v4310
        %v4365 = vpack.c.bf16 %v4313, %v4312
        %v4366 = vpack.c.bf16 %v4315, %v4314
        %v4367 = vpack.c.bf16 %v4317, %v4316
        %v4368 = vpack.c.bf16 %v4319, %v4318
        %v4369 = vpack.c.bf16 %v4321, %v4320
        %v4370 = vpack.c.bf16 %v4323, %v4322
        %v4371 = vpack.c.bf16 %v4325, %v4324
        %v4372 = vpack.c.bf16 %v4327, %v4326
        %v4373 = vpack.c.bf16 %v4329, %v4328
        %v4374 = vpack.c.bf16 %v4331, %v4330
        %v4375 = vpack.c.bf16 %v4333, %v4332
        %v4376 = vpack.c.bf16 %v4335, %v4334
        %v4377 = vpack.c.bf16 %v4337, %v4336
        %v4378 = vpack.c.bf16 %v4339, %v4338
        %v4379 = vpack.c.bf16 %v4341, %v4340
        %v4380 = vpack.c.bf16 %v4343, %v4342
        %v4381 = vpack.c.bf16 %v4345, %v4344
        %v4382 = vpack.c.bf16 %v4347, %v4346
        %v4383 = vpack.c.bf16 %v4349, %v4348
        %v4384 = vpack.c.bf16 %v4351, %v4350
        %v4385 = vpack.c.bf16 %v4353, %v4352
        %v4386 = vmul.f32 %v4196, %v271
        %v4387 = vmul.f32 %v4196, %v272
        %v4388 = vmul.f32 %v4196, %v273
        %v4389 = vmul.f32 %v4196, %v274
        %v4390 = vmul.f32 %v4200, %v271
        %v4391 = vmul.f32 %v4200, %v272
        %v4392 = vmul.f32 %v4200, %v273
        %v4393 = vmul.f32 %v4200, %v274
        %v4394 = vmul.f32 %v4206, %v271
        %v4395 = vmul.f32 %v4206, %v272
        %v4396 = vmul.f32 %v4206, %v273
        %v4397 = vmul.f32 %v4206, %v274
        %v4398 = vmul.f32 %v4210, %v271
        %v4399 = vmul.f32 %v4210, %v272
        %v4400 = vmul.f32 %v4210, %v273
        %v4401 = vmul.f32 %v4210, %v274
        %v4402 = vmul.f32 %v4216, %v271
        %v4403 = vmul.f32 %v4216, %v272
        %v4404 = vmul.f32 %v4216, %v273
        %v4405 = vmul.f32 %v4216, %v274
        %v4406 = vmul.f32 %v4220, %v271
        %v4407 = vmul.f32 %v4220, %v272
        %v4408 = vmul.f32 %v4220, %v273
        %v4409 = vmul.f32 %v4220, %v274
        %v4410 = vmul.f32 %v4226, %v271
        %v4411 = vmul.f32 %v4226, %v272
        %v4412 = vmul.f32 %v4226, %v273
        %v4413 = vmul.f32 %v4226, %v274
        %v4414 = vmul.f32 %v4230, %v271
        %v4415 = vmul.f32 %v4230, %v272
        %v4416 = vmul.f32 %v4230, %v273
        %v4417 = vmul.f32 %v4230, %v274
        %v4418 = vmul.f32 %v4236, %v271
        %v4419 = vmul.f32 %v4236, %v272
        %v4420 = vmul.f32 %v4236, %v273
        %v4421 = vmul.f32 %v4236, %v274
        %v4422 = vmul.f32 %v4240, %v271
        %v4423 = vmul.f32 %v4240, %v272
        %v4424 = vmul.f32 %v4240, %v273
        %v4425 = vmul.f32 %v4240, %v274
        %v4426 = vmul.f32 %v4246, %v271
        %v4427 = vmul.f32 %v4246, %v272
        %v4428 = vmul.f32 %v4246, %v273
        %v4429 = vmul.f32 %v4246, %v274
        %v4430 = vmul.f32 %v4250, %v271
        %v4431 = vmul.f32 %v4250, %v272
        %v4432 = vmul.f32 %v4250, %v273
        %v4433 = vmul.f32 %v4250, %v274
        %v4434 = vmul.f32 %v4256, %v271
        %v4435 = vmul.f32 %v4256, %v272
        %v4436 = vmul.f32 %v4256, %v273
        %v4437 = vmul.f32 %v4256, %v274
        %v4438 = vmul.f32 %v4260, %v271
        %v4439 = vmul.f32 %v4260, %v272
        %v4440 = vmul.f32 %v4260, %v273
        %v4441 = vmul.f32 %v4260, %v274
        %v4442 = vmul.f32 %v4266, %v271
        %v4443 = vmul.f32 %v4266, %v272
        %v4444 = vmul.f32 %v4266, %v273
        %v4445 = vmul.f32 %v4266, %v274
        %v4446 = vmul.f32 %v4270, %v271
        %v4447 = vmul.f32 %v4270, %v272
        %v4448 = vmul.f32 %v4270, %v273
        %v4449 = vmul.f32 %v4270, %v274
        %v4450 = vpack.c.bf16 %v4387, %v4386
        %v4451 = vpack.c.bf16 %v4389, %v4388
        %v4452 = vpack.c.bf16 %v4391, %v4390
        %v4453 = vpack.c.bf16 %v4393, %v4392
        %v4454 = vpack.c.bf16 %v4395, %v4394
        %v4455 = vpack.c.bf16 %v4397, %v4396
        %v4456 = vpack.c.bf16 %v4399, %v4398
        %v4457 = vpack.c.bf16 %v4401, %v4400
        %v4458 = vpack.c.bf16 %v4403, %v4402
        %v4459 = vpack.c.bf16 %v4405, %v4404
        %v4460 = vpack.c.bf16 %v4407, %v4406
        %v4461 = vpack.c.bf16 %v4409, %v4408
        %v4462 = vpack.c.bf16 %v4411, %v4410
        %v4463 = vpack.c.bf16 %v4413, %v4412
        %v4464 = vpack.c.bf16 %v4415, %v4414
        %v4465 = vpack.c.bf16 %v4417, %v4416
        %v4466 = vpack.c.bf16 %v4419, %v4418
        %v4467 = vpack.c.bf16 %v4421, %v4420
        %v4468 = vpack.c.bf16 %v4423, %v4422
        %v4469 = vpack.c.bf16 %v4425, %v4424
        %v4470 = vpack.c.bf16 %v4427, %v4426
        %v4471 = vpack.c.bf16 %v4429, %v4428
        %v4472 = vpack.c.bf16 %v4431, %v4430
        %v4473 = vpack.c.bf16 %v4433, %v4432
        %v4474 = vpack.c.bf16 %v4435, %v4434
        %v4475 = vpack.c.bf16 %v4437, %v4436
        %v4476 = vpack.c.bf16 %v4439, %v4438
        %v4477 = vpack.c.bf16 %v4441, %v4440
        %v4478 = vpack.c.bf16 %v4443, %v4442
        %v4479 = vpack.c.bf16 %v4445, %v4444
        %v4480 = vpack.c.bf16 %v4447, %v4446
        %v4481 = vpack.c.bf16 %v4449, %v4448
        %4484 = vrot.lane.b32.xlu0 %v4354, 64
        %v4485 = vpop.permute.xlu0 %4484
        %4486 = vrot.lane.b32.xlu0 %v4355, 64
        %v4487 = vpop.permute.xlu0 %4486
        %v4489 = vsel %vm921, %v4274, 0
        %v4492 = vsel %vm921, %v4485, 0
        %v4495 = vsel %vm921, %v4487, 0
        %4497 = vmatprep.subr.bf16.mxu0 0
        %4498 = vmatpush1.bf16.xpose.msra.mxu0 %v4492
        %4499 = vmatprep.subr.bf16.mxu0 0
        %4500 = vmatpush1.bf16.xpose.msra.mxu0 %v4495
        %4501 = vmatprep.subr.bf16.mxu0 0
        %4502 = vmatpush1.bf16.xpose.msra.mxu0 0
        %4503 = vmatprep.subr.bf16.mxu0 0
        %4504 = vmatpush1.bf16.xpose.msra.mxu0 0
        %4505 = vmatprep.subr.bf16.mxu0 0
        %4506 = vmatpush1.bf16.xpose.msra.mxu0 0
        %4507 = vmatprep.subr.bf16.mxu0 0
        %4508 = vmatpush1.bf16.xpose.msra.mxu0 0
        %4509 = vmatprep.subr.bf16.mxu0 0
        %4510 = vmatpush1.bf16.xpose.msra.mxu0 0
        %4511 = vmatprep.subr.bf16.mxu0 0
        %4512 = vmatpush1.bf16.xpose.msra.mxu0 0
        %4513 = vmatprep.subr.bf16.mxu0 0
        %4514 = vmatpush1.bf16.xpose.msra.mxu0 0
        %4515 = vmatprep.subr.bf16.mxu0 0
        %4516 = vmatpush1.bf16.xpose.msra.mxu0 0
        %4517 = vmatprep.subr.bf16.mxu0 0
        %4518 = vmatpush1.bf16.xpose.msra.mxu0 0
        %4519 = vmatprep.subr.bf16.mxu0 0
        %4520 = vmatpush1.bf16.xpose.msra.mxu0 0
        %4521 = vmatprep.subr.bf16.mxu0 0
        %4522 = vmatpush1.bf16.xpose.msra.mxu0 0
        %4523 = vmatprep.subr.bf16.mxu0 0
        %4524 = vmatpush1.bf16.xpose.msra.mxu0 0
        %4525 = vmatprep.subr.bf16.mxu0 0
        %4526 = vmatpush1.bf16.xpose.msra.mxu0 0
        %4527 = vmatprep.subr.bf16.mxu0 0
        %4528 = vmatpush1.bf16.xpose.msra.mxu0 0
        %4529 = vmatprep.mubr.bf16.mxu0 0
        %4530 = vmatmul.mubr.bf16.gmra.mrb[0].mxu0 %v4489
        %v4531 = vpop.f32.mrb[0].mxu0
        %v4532 = vadd.f32 0.0, %v4531
        %v4533 = vpop.f32.mrb[0].mxu0
        %v4534 = vpop.f32.mrb[0].mxu0
        %v4535 = vpop.f32.mrb[0].mxu0
        %4536 = vdwg.mxu0
        %4539 = vrot.lane.b32.xlu0 %v4356, 64
        %v4540 = vpop.permute.xlu0 %4539
        %4541 = vrot.lane.b32.xlu0 %v4357, 64
        %v4542 = vpop.permute.xlu0 %4541
        %v4544 = vsel %vm921, %v4275, 0
        %v4547 = vsel %vm921, %v4540, 0
        %v4550 = vsel %vm921, %v4542, 0
        %4552 = vmatprep.subr.bf16.mxu0 0
        %4553 = vmatpush1.bf16.xpose.msra.mxu0 %v4547
        %4554 = vmatprep.subr.bf16.mxu0 0
        %4555 = vmatpush1.bf16.xpose.msra.mxu0 %v4550
        %4556 = vmatprep.subr.bf16.mxu0 0
        %4557 = vmatpush1.bf16.xpose.msra.mxu0 0
        %4558 = vmatprep.subr.bf16.mxu0 0
        %4559 = vmatpush1.bf16.xpose.msra.mxu0 0
        %4560 = vmatprep.subr.bf16.mxu0 0
        %4561 = vmatpush1.bf16.xpose.msra.mxu0 0
        %4562 = vmatprep.subr.bf16.mxu0 0
        %4563 = vmatpush1.bf16.xpose.msra.mxu0 0
        %4564 = vmatprep.subr.bf16.mxu0 0
        %4565 = vmatpush1.bf16.xpose.msra.mxu0 0
        %4566 = vmatprep.subr.bf16.mxu0 0
        %4567 = vmatpush1.bf16.xpose.msra.mxu0 0
        %4568 = vmatprep.subr.bf16.mxu0 0
        %4569 = vmatpush1.bf16.xpose.msra.mxu0 0
        %4570 = vmatprep.subr.bf16.mxu0 0
        %4571 = vmatpush1.bf16.xpose.msra.mxu0 0
        %4572 = vmatprep.subr.bf16.mxu0 0
        %4573 = vmatpush1.bf16.xpose.msra.mxu0 0
        %4574 = vmatprep.subr.bf16.mxu0 0
        %4575 = vmatpush1.bf16.xpose.msra.mxu0 0
        %4576 = vmatprep.subr.bf16.mxu0 0
        %4577 = vmatpush1.bf16.xpose.msra.mxu0 0
        %4578 = vmatprep.subr.bf16.mxu0 0
        %4579 = vmatpush1.bf16.xpose.msra.mxu0 0
        %4580 = vmatprep.subr.bf16.mxu0 0
        %4581 = vmatpush1.bf16.xpose.msra.mxu0 0
        %4582 = vmatprep.subr.bf16.mxu0 0
        %4583 = vmatpush1.bf16.xpose.msra.mxu0 0
        %4584 = vmatprep.mubr.bf16.mxu0 0
        %4585 = vmatmul.mubr.bf16.gmra.mrb[0].mxu0 %v4544
        %v4586 = vpop.f32.mrb[0].mxu0
        %v4587 = vadd.f32 0.0, %v4586
        %v4588 = vpop.f32.mrb[0].mxu0
        %v4589 = vpop.f32.mrb[0].mxu0
        %v4590 = vpop.f32.mrb[0].mxu0
        %4591 = vdwg.mxu0
        %4594 = vrot.lane.b32.xlu0 %v4358, 64
        %v4595 = vpop.permute.xlu0 %4594
        %4596 = vrot.lane.b32.xlu0 %v4359, 64
        %v4597 = vpop.permute.xlu0 %4596
        %v4599 = vsel %vm921, %v4276, 0
        %v4602 = vsel %vm921, %v4595, 0
        %v4605 = vsel %vm921, %v4597, 0
        %4607 = vmatprep.subr.bf16.mxu0 0
        %4608 = vmatpush1.bf16.xpose.msra.mxu0 %v4602
        %4609 = vmatprep.subr.bf16.mxu0 0
        %4610 = vmatpush1.bf16.xpose.msra.mxu0 %v4605
        %4611 = vmatprep.subr.bf16.mxu0 0
        %4612 = vmatpush1.bf16.xpose.msra.mxu0 0
        %4613 = vmatprep.subr.bf16.mxu0 0
        %4614 = vmatpush1.bf16.xpose.msra.mxu0 0
        %4615 = vmatprep.subr.bf16.mxu0 0
        %4616 = vmatpush1.bf16.xpose.msra.mxu0 0
        %4617 = vmatprep.subr.bf16.mxu0 0
        %4618 = vmatpush1.bf16.xpose.msra.mxu0 0
        %4619 = vmatprep.subr.bf16.mxu0 0
        %4620 = vmatpush1.bf16.xpose.msra.mxu0 0
        %4621 = vmatprep.subr.bf16.mxu0 0
        %4622 = vmatpush1.bf16.xpose.msra.mxu0 0
        %4623 = vmatprep.subr.bf16.mxu0 0
        %4624 = vmatpush1.bf16.xpose.msra.mxu0 0
        %4625 = vmatprep.subr.bf16.mxu0 0
        %4626 = vmatpush1.bf16.xpose.msra.mxu0 0
        %4627 = vmatprep.subr.bf16.mxu0 0
        %4628 = vmatpush1.bf16.xpose.msra.mxu0 0
        %4629 = vmatprep.subr.bf16.mxu0 0
        %4630 = vmatpush1.bf16.xpose.msra.mxu0 0
        %4631 = vmatprep.subr.bf16.mxu0 0
        %4632 = vmatpush1.bf16.xpose.msra.mxu0 0
        %4633 = vmatprep.subr.bf16.mxu0 0
        %4634 = vmatpush1.bf16.xpose.msra.mxu0 0
        %4635 = vmatprep.subr.bf16.mxu0 0
        %4636 = vmatpush1.bf16.xpose.msra.mxu0 0
        %4637 = vmatprep.subr.bf16.mxu0 0
        %4638 = vmatpush1.bf16.xpose.msra.mxu0 0
        %4639 = vmatprep.mubr.bf16.mxu0 0
        %4640 = vmatmul.mubr.bf16.gmra.mrb[0].mxu0 %v4599
        %v4641 = vpop.f32.mrb[0].mxu0
        %v4642 = vadd.f32 0.0, %v4641
        %v4643 = vpop.f32.mrb[0].mxu0
        %v4644 = vpop.f32.mrb[0].mxu0
        %v4645 = vpop.f32.mrb[0].mxu0
        %4646 = vdwg.mxu0
        %4649 = vrot.lane.b32.xlu0 %v4360, 64
        %v4650 = vpop.permute.xlu0 %4649
        %4651 = vrot.lane.b32.xlu0 %v4361, 64
        %v4652 = vpop.permute.xlu0 %4651
        %v4654 = vsel %vm921, %v4277, 0
        %v4657 = vsel %vm921, %v4650, 0
        %v4660 = vsel %vm921, %v4652, 0
        %4662 = vmatprep.subr.bf16.mxu0 0
        %4663 = vmatpush1.bf16.xpose.msra.mxu0 %v4657
        %4664 = vmatprep.subr.bf16.mxu0 0
        %4665 = vmatpush1.bf16.xpose.msra.mxu0 %v4660
        %4666 = vmatprep.subr.bf16.mxu0 0
        %4667 = vmatpush1.bf16.xpose.msra.mxu0 0
        %4668 = vmatprep.subr.bf16.mxu0 0
        %4669 = vmatpush1.bf16.xpose.msra.mxu0 0
        %4670 = vmatprep.subr.bf16.mxu0 0
        %4671 = vmatpush1.bf16.xpose.msra.mxu0 0
        %4672 = vmatprep.subr.bf16.mxu0 0
        %4673 = vmatpush1.bf16.xpose.msra.mxu0 0
        %4674 = vmatprep.subr.bf16.mxu0 0
        %4675 = vmatpush1.bf16.xpose.msra.mxu0 0
        %4676 = vmatprep.subr.bf16.mxu0 0
        %4677 = vmatpush1.bf16.xpose.msra.mxu0 0
        %4678 = vmatprep.subr.bf16.mxu0 0
        %4679 = vmatpush1.bf16.xpose.msra.mxu0 0
        %4680 = vmatprep.subr.bf16.mxu0 0
        %4681 = vmatpush1.bf16.xpose.msra.mxu0 0
        %4682 = vmatprep.subr.bf16.mxu0 0
        %4683 = vmatpush1.bf16.xpose.msra.mxu0 0
        %4684 = vmatprep.subr.bf16.mxu0 0
        %4685 = vmatpush1.bf16.xpose.msra.mxu0 0
        %4686 = vmatprep.subr.bf16.mxu0 0
        %4687 = vmatpush1.bf16.xpose.msra.mxu0 0
        %4688 = vmatprep.subr.bf16.mxu0 0
        %4689 = vmatpush1.bf16.xpose.msra.mxu0 0
        %4690 = vmatprep.subr.bf16.mxu0 0
        %4691 = vmatpush1.bf16.xpose.msra.mxu0 0
        %4692 = vmatprep.subr.bf16.mxu0 0
        %4693 = vmatpush1.bf16.xpose.msra.mxu0 0
        %4694 = vmatprep.mubr.bf16.mxu0 0
        %4695 = vmatmul.mubr.bf16.gmra.mrb[0].mxu0 %v4654
        %v4696 = vpop.f32.mrb[0].mxu0
        %v4697 = vadd.f32 0.0, %v4696
        %v4698 = vpop.f32.mrb[0].mxu0
        %v4699 = vpop.f32.mrb[0].mxu0
        %v4700 = vpop.f32.mrb[0].mxu0
        %4701 = vdwg.mxu0
        %4704 = vrot.lane.b32.xlu0 %v4362, 64
        %v4705 = vpop.permute.xlu0 %4704
        %4706 = vrot.lane.b32.xlu0 %v4363, 64
        %v4707 = vpop.permute.xlu0 %4706
        %v4709 = vsel %vm921, %v4278, 0
        %v4712 = vsel %vm921, %v4705, 0
        %v4715 = vsel %vm921, %v4707, 0
        %4717 = vmatprep.subr.bf16.mxu0 0
        %4718 = vmatpush1.bf16.xpose.msra.mxu0 %v4712
        %4719 = vmatprep.subr.bf16.mxu0 0
        %4720 = vmatpush1.bf16.xpose.msra.mxu0 %v4715
        %4721 = vmatprep.subr.bf16.mxu0 0
        %4722 = vmatpush1.bf16.xpose.msra.mxu0 0
        %4723 = vmatprep.subr.bf16.mxu0 0
        %4724 = vmatpush1.bf16.xpose.msra.mxu0 0
        %4725 = vmatprep.subr.bf16.mxu0 0
        %4726 = vmatpush1.bf16.xpose.msra.mxu0 0
        %4727 = vmatprep.subr.bf16.mxu0 0
        %4728 = vmatpush1.bf16.xpose.msra.mxu0 0
        %4729 = vmatprep.subr.bf16.mxu0 0
        %4730 = vmatpush1.bf16.xpose.msra.mxu0 0
        %4731 = vmatprep.subr.bf16.mxu0 0
        %4732 = vmatpush1.bf16.xpose.msra.mxu0 0
        %4733 = vmatprep.subr.bf16.mxu0 0
        %4734 = vmatpush1.bf16.xpose.msra.mxu0 0
        %4735 = vmatprep.subr.bf16.mxu0 0
        %4736 = vmatpush1.bf16.xpose.msra.mxu0 0
        %4737 = vmatprep.subr.bf16.mxu0 0
        %4738 = vmatpush1.bf16.xpose.msra.mxu0 0
        %4739 = vmatprep.subr.bf16.mxu0 0
        %4740 = vmatpush1.bf16.xpose.msra.mxu0 0
        %4741 = vmatprep.subr.bf16.mxu0 0
        %4742 = vmatpush1.bf16.xpose.msra.mxu0 0
        %4743 = vmatprep.subr.bf16.mxu0 0
        %4744 = vmatpush1.bf16.xpose.msra.mxu0 0
        %4745 = vmatprep.subr.bf16.mxu0 0
        %4746 = vmatpush1.bf16.xpose.msra.mxu0 0
        %4747 = vmatprep.subr.bf16.mxu0 0
        %4748 = vmatpush1.bf16.xpose.msra.mxu0 0
        %4749 = vmatprep.mubr.bf16.mxu0 0
        %4750 = vmatmul.mubr.bf16.gmra.mrb[0].mxu0 %v4709
        %v4751 = vpop.f32.mrb[0].mxu0
        %v4752 = vadd.f32 0.0, %v4751
        %v4753 = vpop.f32.mrb[0].mxu0
        %v4754 = vpop.f32.mrb[0].mxu0
        %v4755 = vpop.f32.mrb[0].mxu0
        %4756 = vdwg.mxu0
        %4759 = vrot.lane.b32.xlu0 %v4364, 64
        %v4760 = vpop.permute.xlu0 %4759
        %4761 = vrot.lane.b32.xlu0 %v4365, 64
        %v4762 = vpop.permute.xlu0 %4761
        %v4764 = vsel %vm921, %v4279, 0
        %v4767 = vsel %vm921, %v4760, 0
        %v4770 = vsel %vm921, %v4762, 0
        %4772 = vmatprep.subr.bf16.mxu0 0
        %4773 = vmatpush1.bf16.xpose.msra.mxu0 %v4767
        %4774 = vmatprep.subr.bf16.mxu0 0
        %4775 = vmatpush1.bf16.xpose.msra.mxu0 %v4770
        %4776 = vmatprep.subr.bf16.mxu0 0
        %4777 = vmatpush1.bf16.xpose.msra.mxu0 0
        %4778 = vmatprep.subr.bf16.mxu0 0
        %4779 = vmatpush1.bf16.xpose.msra.mxu0 0
        %4780 = vmatprep.subr.bf16.mxu0 0
        %4781 = vmatpush1.bf16.xpose.msra.mxu0 0
        %4782 = vmatprep.subr.bf16.mxu0 0
        %4783 = vmatpush1.bf16.xpose.msra.mxu0 0
        %4784 = vmatprep.subr.bf16.mxu0 0
        %4785 = vmatpush1.bf16.xpose.msra.mxu0 0
        %4786 = vmatprep.subr.bf16.mxu0 0
        %4787 = vmatpush1.bf16.xpose.msra.mxu0 0
        %4788 = vmatprep.subr.bf16.mxu0 0
        %4789 = vmatpush1.bf16.xpose.msra.mxu0 0
        %4790 = vmatprep.subr.bf16.mxu0 0
        %4791 = vmatpush1.bf16.xpose.msra.mxu0 0
        %4792 = vmatprep.subr.bf16.mxu0 0
        %4793 = vmatpush1.bf16.xpose.msra.mxu0 0
        %4794 = vmatprep.subr.bf16.mxu0 0
        %4795 = vmatpush1.bf16.xpose.msra.mxu0 0
        %4796 = vmatprep.subr.bf16.mxu0 0
        %4797 = vmatpush1.bf16.xpose.msra.mxu0 0
        %4798 = vmatprep.subr.bf16.mxu0 0
        %4799 = vmatpush1.bf16.xpose.msra.mxu0 0
        %4800 = vmatprep.subr.bf16.mxu0 0
        %4801 = vmatpush1.bf16.xpose.msra.mxu0 0
        %4802 = vmatprep.subr.bf16.mxu0 0
        %4803 = vmatpush1.bf16.xpose.msra.mxu0 0
        %4804 = vmatprep.mubr.bf16.mxu0 0
        %4805 = vmatmul.mubr.bf16.gmra.mrb[0].mxu0 %v4764
        %v4806 = vpop.f32.mrb[0].mxu0
        %v4807 = vadd.f32 0.0, %v4806
        %v4808 = vpop.f32.mrb[0].mxu0
        %v4809 = vpop.f32.mrb[0].mxu0
        %v4810 = vpop.f32.mrb[0].mxu0
        %4811 = vdwg.mxu0
        %4814 = vrot.lane.b32.xlu0 %v4366, 64
        %v4815 = vpop.permute.xlu0 %4814
        %4816 = vrot.lane.b32.xlu0 %v4367, 64
        %v4817 = vpop.permute.xlu0 %4816
        %v4819 = vsel %vm921, %v4280, 0
        %v4822 = vsel %vm921, %v4815, 0
        %v4825 = vsel %vm921, %v4817, 0
        %4827 = vmatprep.subr.bf16.mxu0 0
        %4828 = vmatpush1.bf16.xpose.msra.mxu0 %v4822
        %4829 = vmatprep.subr.bf16.mxu0 0
        %4830 = vmatpush1.bf16.xpose.msra.mxu0 %v4825
        %4831 = vmatprep.subr.bf16.mxu0 0
        %4832 = vmatpush1.bf16.xpose.msra.mxu0 0
        %4833 = vmatprep.subr.bf16.mxu0 0
        %4834 = vmatpush1.bf16.xpose.msra.mxu0 0
        %4835 = vmatprep.subr.bf16.mxu0 0
        %4836 = vmatpush1.bf16.xpose.msra.mxu0 0
        %4837 = vmatprep.subr.bf16.mxu0 0
        %4838 = vmatpush1.bf16.xpose.msra.mxu0 0
        %4839 = vmatprep.subr.bf16.mxu0 0
        %4840 = vmatpush1.bf16.xpose.msra.mxu0 0
        %4841 = vmatprep.subr.bf16.mxu0 0
        %4842 = vmatpush1.bf16.xpose.msra.mxu0 0
        %4843 = vmatprep.subr.bf16.mxu0 0
        %4844 = vmatpush1.bf16.xpose.msra.mxu0 0
        %4845 = vmatprep.subr.bf16.mxu0 0
        %4846 = vmatpush1.bf16.xpose.msra.mxu0 0
        %4847 = vmatprep.subr.bf16.mxu0 0
        %4848 = vmatpush1.bf16.xpose.msra.mxu0 0
        %4849 = vmatprep.subr.bf16.mxu0 0
        %4850 = vmatpush1.bf16.xpose.msra.mxu0 0
        %4851 = vmatprep.subr.bf16.mxu0 0
        %4852 = vmatpush1.bf16.xpose.msra.mxu0 0
        %4853 = vmatprep.subr.bf16.mxu0 0
        %4854 = vmatpush1.bf16.xpose.msra.mxu0 0
        %4855 = vmatprep.subr.bf16.mxu0 0
        %4856 = vmatpush1.bf16.xpose.msra.mxu0 0
        %4857 = vmatprep.subr.bf16.mxu0 0
        %4858 = vmatpush1.bf16.xpose.msra.mxu0 0
        %4859 = vmatprep.mubr.bf16.mxu0 0
        %4860 = vmatmul.mubr.bf16.gmra.mrb[0].mxu0 %v4819
        %v4861 = vpop.f32.mrb[0].mxu0
        %v4862 = vadd.f32 0.0, %v4861
        %v4863 = vpop.f32.mrb[0].mxu0
        %v4864 = vpop.f32.mrb[0].mxu0
        %v4865 = vpop.f32.mrb[0].mxu0
        %4866 = vdwg.mxu0
        %4869 = vrot.lane.b32.xlu0 %v4368, 64
        %v4870 = vpop.permute.xlu0 %4869
        %4871 = vrot.lane.b32.xlu0 %v4369, 64
        %v4872 = vpop.permute.xlu0 %4871
        %v4874 = vsel %vm921, %v4281, 0
        %v4877 = vsel %vm921, %v4870, 0
        %v4880 = vsel %vm921, %v4872, 0
        %4882 = vmatprep.subr.bf16.mxu0 0
        %4883 = vmatpush1.bf16.xpose.msra.mxu0 %v4877
        %4884 = vmatprep.subr.bf16.mxu0 0
        %4885 = vmatpush1.bf16.xpose.msra.mxu0 %v4880
        %4886 = vmatprep.subr.bf16.mxu0 0
        %4887 = vmatpush1.bf16.xpose.msra.mxu0 0
        %4888 = vmatprep.subr.bf16.mxu0 0
        %4889 = vmatpush1.bf16.xpose.msra.mxu0 0
        %4890 = vmatprep.subr.bf16.mxu0 0
        %4891 = vmatpush1.bf16.xpose.msra.mxu0 0
        %4892 = vmatprep.subr.bf16.mxu0 0
        %4893 = vmatpush1.bf16.xpose.msra.mxu0 0
        %4894 = vmatprep.subr.bf16.mxu0 0
        %4895 = vmatpush1.bf16.xpose.msra.mxu0 0
        %4896 = vmatprep.subr.bf16.mxu0 0
        %4897 = vmatpush1.bf16.xpose.msra.mxu0 0
        %4898 = vmatprep.subr.bf16.mxu0 0
        %4899 = vmatpush1.bf16.xpose.msra.mxu0 0
        %4900 = vmatprep.subr.bf16.mxu0 0
        %4901 = vmatpush1.bf16.xpose.msra.mxu0 0
        %4902 = vmatprep.subr.bf16.mxu0 0
        %4903 = vmatpush1.bf16.xpose.msra.mxu0 0
        %4904 = vmatprep.subr.bf16.mxu0 0
        %4905 = vmatpush1.bf16.xpose.msra.mxu0 0
        %4906 = vmatprep.subr.bf16.mxu0 0
        %4907 = vmatpush1.bf16.xpose.msra.mxu0 0
        %4908 = vmatprep.subr.bf16.mxu0 0
        %4909 = vmatpush1.bf16.xpose.msra.mxu0 0
        %4910 = vmatprep.subr.bf16.mxu0 0
        %4911 = vmatpush1.bf16.xpose.msra.mxu0 0
        %4912 = vmatprep.subr.bf16.mxu0 0
        %4913 = vmatpush1.bf16.xpose.msra.mxu0 0
        %4914 = vmatprep.mubr.bf16.mxu0 0
        %4915 = vmatmul.mubr.bf16.gmra.mrb[0].mxu0 %v4874
        %v4916 = vpop.f32.mrb[0].mxu0
        %v4917 = vadd.f32 0.0, %v4916
        %v4918 = vpop.f32.mrb[0].mxu0
        %v4919 = vpop.f32.mrb[0].mxu0
        %v4920 = vpop.f32.mrb[0].mxu0
        %4921 = vdwg.mxu0
        %4924 = vrot.lane.b32.xlu0 %v4370, 64
        %v4925 = vpop.permute.xlu0 %4924
        %4926 = vrot.lane.b32.xlu0 %v4371, 64
        %v4927 = vpop.permute.xlu0 %4926
        %v4929 = vsel %vm921, %v4282, 0
        %v4932 = vsel %vm921, %v4925, 0
        %v4935 = vsel %vm921, %v4927, 0
        %4937 = vmatprep.subr.bf16.mxu0 0
        %4938 = vmatpush1.bf16.xpose.msra.mxu0 %v4932
        %4939 = vmatprep.subr.bf16.mxu0 0
        %4940 = vmatpush1.bf16.xpose.msra.mxu0 %v4935
        %4941 = vmatprep.subr.bf16.mxu0 0
        %4942 = vmatpush1.bf16.xpose.msra.mxu0 0
        %4943 = vmatprep.subr.bf16.mxu0 0
        %4944 = vmatpush1.bf16.xpose.msra.mxu0 0
        %4945 = vmatprep.subr.bf16.mxu0 0
        %4946 = vmatpush1.bf16.xpose.msra.mxu0 0
        %4947 = vmatprep.subr.bf16.mxu0 0
        %4948 = vmatpush1.bf16.xpose.msra.mxu0 0
        %4949 = vmatprep.subr.bf16.mxu0 0
        %4950 = vmatpush1.bf16.xpose.msra.mxu0 0
        %4951 = vmatprep.subr.bf16.mxu0 0
        %4952 = vmatpush1.bf16.xpose.msra.mxu0 0
        %4953 = vmatprep.subr.bf16.mxu0 0
        %4954 = vmatpush1.bf16.xpose.msra.mxu0 0
        %4955 = vmatprep.subr.bf16.mxu0 0
        %4956 = vmatpush1.bf16.xpose.msra.mxu0 0
        %4957 = vmatprep.subr.bf16.mxu0 0
        %4958 = vmatpush1.bf16.xpose.msra.mxu0 0
        %4959 = vmatprep.subr.bf16.mxu0 0
        %4960 = vmatpush1.bf16.xpose.msra.mxu0 0
        %4961 = vmatprep.subr.bf16.mxu0 0
        %4962 = vmatpush1.bf16.xpose.msra.mxu0 0
        %4963 = vmatprep.subr.bf16.mxu0 0
        %4964 = vmatpush1.bf16.xpose.msra.mxu0 0
        %4965 = vmatprep.subr.bf16.mxu0 0
        %4966 = vmatpush1.bf16.xpose.msra.mxu0 0
        %4967 = vmatprep.subr.bf16.mxu0 0
        %4968 = vmatpush1.bf16.xpose.msra.mxu0 0
        %4969 = vmatprep.mubr.bf16.mxu0 0
        %4970 = vmatmul.mubr.bf16.gmra.mrb[0].mxu0 %v4929
        %v4971 = vpop.f32.mrb[0].mxu0
        %v4972 = vadd.f32 0.0, %v4971
        %v4973 = vpop.f32.mrb[0].mxu0
        %v4974 = vpop.f32.mrb[0].mxu0
        %v4975 = vpop.f32.mrb[0].mxu0
        %4976 = vdwg.mxu0
        %4979 = vrot.lane.b32.xlu0 %v4372, 64
        %v4980 = vpop.permute.xlu0 %4979
        %4981 = vrot.lane.b32.xlu0 %v4373, 64
        %v4982 = vpop.permute.xlu0 %4981
        %v4984 = vsel %vm921, %v4283, 0
        %v4987 = vsel %vm921, %v4980, 0
        %v4990 = vsel %vm921, %v4982, 0
        %4992 = vmatprep.subr.bf16.mxu0 0
        %4993 = vmatpush1.bf16.xpose.msra.mxu0 %v4987
        %4994 = vmatprep.subr.bf16.mxu0 0
        %4995 = vmatpush1.bf16.xpose.msra.mxu0 %v4990
        %4996 = vmatprep.subr.bf16.mxu0 0
        %4997 = vmatpush1.bf16.xpose.msra.mxu0 0
        %4998 = vmatprep.subr.bf16.mxu0 0
        %4999 = vmatpush1.bf16.xpose.msra.mxu0 0
        %5000 = vmatprep.subr.bf16.mxu0 0
        %5001 = vmatpush1.bf16.xpose.msra.mxu0 0
        %5002 = vmatprep.subr.bf16.mxu0 0
        %5003 = vmatpush1.bf16.xpose.msra.mxu0 0
        %5004 = vmatprep.subr.bf16.mxu0 0
        %5005 = vmatpush1.bf16.xpose.msra.mxu0 0
        %5006 = vmatprep.subr.bf16.mxu0 0
        %5007 = vmatpush1.bf16.xpose.msra.mxu0 0
        %5008 = vmatprep.subr.bf16.mxu0 0
        %5009 = vmatpush1.bf16.xpose.msra.mxu0 0
        %5010 = vmatprep.subr.bf16.mxu0 0
        %5011 = vmatpush1.bf16.xpose.msra.mxu0 0
        %5012 = vmatprep.subr.bf16.mxu0 0
        %5013 = vmatpush1.bf16.xpose.msra.mxu0 0
        %5014 = vmatprep.subr.bf16.mxu0 0
        %5015 = vmatpush1.bf16.xpose.msra.mxu0 0
        %5016 = vmatprep.subr.bf16.mxu0 0
        %5017 = vmatpush1.bf16.xpose.msra.mxu0 0
        %5018 = vmatprep.subr.bf16.mxu0 0
        %5019 = vmatpush1.bf16.xpose.msra.mxu0 0
        %5020 = vmatprep.subr.bf16.mxu0 0
        %5021 = vmatpush1.bf16.xpose.msra.mxu0 0
        %5022 = vmatprep.subr.bf16.mxu0 0
        %5023 = vmatpush1.bf16.xpose.msra.mxu0 0
        %5024 = vmatprep.mubr.bf16.mxu0 0
        %5025 = vmatmul.mubr.bf16.gmra.mrb[0].mxu0 %v4984
        %v5026 = vpop.f32.mrb[0].mxu0
        %v5027 = vadd.f32 0.0, %v5026
        %v5028 = vpop.f32.mrb[0].mxu0
        %v5029 = vpop.f32.mrb[0].mxu0
        %v5030 = vpop.f32.mrb[0].mxu0
        %5031 = vdwg.mxu0
        %5034 = vrot.lane.b32.xlu0 %v4374, 64
        %v5035 = vpop.permute.xlu0 %5034
        %5036 = vrot.lane.b32.xlu0 %v4375, 64
        %v5037 = vpop.permute.xlu0 %5036
        %v5039 = vsel %vm921, %v4284, 0
        %v5042 = vsel %vm921, %v5035, 0
        %v5045 = vsel %vm921, %v5037, 0
        %5047 = vmatprep.subr.bf16.mxu0 0
        %5048 = vmatpush1.bf16.xpose.msra.mxu0 %v5042
        %5049 = vmatprep.subr.bf16.mxu0 0
        %5050 = vmatpush1.bf16.xpose.msra.mxu0 %v5045
        %5051 = vmatprep.subr.bf16.mxu0 0
        %5052 = vmatpush1.bf16.xpose.msra.mxu0 0
        %5053 = vmatprep.subr.bf16.mxu0 0
        %5054 = vmatpush1.bf16.xpose.msra.mxu0 0
        %5055 = vmatprep.subr.bf16.mxu0 0
        %5056 = vmatpush1.bf16.xpose.msra.mxu0 0
        %5057 = vmatprep.subr.bf16.mxu0 0
        %5058 = vmatpush1.bf16.xpose.msra.mxu0 0
        %5059 = vmatprep.subr.bf16.mxu0 0
        %5060 = vmatpush1.bf16.xpose.msra.mxu0 0
        %5061 = vmatprep.subr.bf16.mxu0 0
        %5062 = vmatpush1.bf16.xpose.msra.mxu0 0
        %5063 = vmatprep.subr.bf16.mxu0 0
        %5064 = vmatpush1.bf16.xpose.msra.mxu0 0
        %5065 = vmatprep.subr.bf16.mxu0 0
        %5066 = vmatpush1.bf16.xpose.msra.mxu0 0
        %5067 = vmatprep.subr.bf16.mxu0 0
        %5068 = vmatpush1.bf16.xpose.msra.mxu0 0
        %5069 = vmatprep.subr.bf16.mxu0 0
        %5070 = vmatpush1.bf16.xpose.msra.mxu0 0
        %5071 = vmatprep.subr.bf16.mxu0 0
        %5072 = vmatpush1.bf16.xpose.msra.mxu0 0
        %5073 = vmatprep.subr.bf16.mxu0 0
        %5074 = vmatpush1.bf16.xpose.msra.mxu0 0
        %5075 = vmatprep.subr.bf16.mxu0 0
        %5076 = vmatpush1.bf16.xpose.msra.mxu0 0
        %5077 = vmatprep.subr.bf16.mxu0 0
        %5078 = vmatpush1.bf16.xpose.msra.mxu0 0
        %5079 = vmatprep.mubr.bf16.mxu0 0
        %5080 = vmatmul.mubr.bf16.gmra.mrb[0].mxu0 %v5039
        %v5081 = vpop.f32.mrb[0].mxu0
        %v5082 = vadd.f32 0.0, %v5081
        %v5083 = vpop.f32.mrb[0].mxu0
        %v5084 = vpop.f32.mrb[0].mxu0
        %v5085 = vpop.f32.mrb[0].mxu0
        %5086 = vdwg.mxu0
        %5089 = vrot.lane.b32.xlu0 %v4376, 64
        %v5090 = vpop.permute.xlu0 %5089
        %5091 = vrot.lane.b32.xlu0 %v4377, 64
        %v5092 = vpop.permute.xlu0 %5091
        %v5094 = vsel %vm921, %v4285, 0
        %v5097 = vsel %vm921, %v5090, 0
        %v5100 = vsel %vm921, %v5092, 0
        %5102 = vmatprep.subr.bf16.mxu0 0
        %5103 = vmatpush1.bf16.xpose.msra.mxu0 %v5097
        %5104 = vmatprep.subr.bf16.mxu0 0
        %5105 = vmatpush1.bf16.xpose.msra.mxu0 %v5100
        %5106 = vmatprep.subr.bf16.mxu0 0
        %5107 = vmatpush1.bf16.xpose.msra.mxu0 0
        %5108 = vmatprep.subr.bf16.mxu0 0
        %5109 = vmatpush1.bf16.xpose.msra.mxu0 0
        %5110 = vmatprep.subr.bf16.mxu0 0
        %5111 = vmatpush1.bf16.xpose.msra.mxu0 0
        %5112 = vmatprep.subr.bf16.mxu0 0
        %5113 = vmatpush1.bf16.xpose.msra.mxu0 0
        %5114 = vmatprep.subr.bf16.mxu0 0
        %5115 = vmatpush1.bf16.xpose.msra.mxu0 0
        %5116 = vmatprep.subr.bf16.mxu0 0
        %5117 = vmatpush1.bf16.xpose.msra.mxu0 0
        %5118 = vmatprep.subr.bf16.mxu0 0
        %5119 = vmatpush1.bf16.xpose.msra.mxu0 0
        %5120 = vmatprep.subr.bf16.mxu0 0
        %5121 = vmatpush1.bf16.xpose.msra.mxu0 0
        %5122 = vmatprep.subr.bf16.mxu0 0
        %5123 = vmatpush1.bf16.xpose.msra.mxu0 0
        %5124 = vmatprep.subr.bf16.mxu0 0
        %5125 = vmatpush1.bf16.xpose.msra.mxu0 0
        %5126 = vmatprep.subr.bf16.mxu0 0
        %5127 = vmatpush1.bf16.xpose.msra.mxu0 0
        %5128 = vmatprep.subr.bf16.mxu0 0
        %5129 = vmatpush1.bf16.xpose.msra.mxu0 0
        %5130 = vmatprep.subr.bf16.mxu0 0
        %5131 = vmatpush1.bf16.xpose.msra.mxu0 0
        %5132 = vmatprep.subr.bf16.mxu0 0
        %5133 = vmatpush1.bf16.xpose.msra.mxu0 0
        %5134 = vmatprep.mubr.bf16.mxu0 0
        %5135 = vmatmul.mubr.bf16.gmra.mrb[0].mxu0 %v5094
        %v5136 = vpop.f32.mrb[0].mxu0
        %v5137 = vadd.f32 0.0, %v5136
        %v5138 = vpop.f32.mrb[0].mxu0
        %v5139 = vpop.f32.mrb[0].mxu0
        %v5140 = vpop.f32.mrb[0].mxu0
        %5141 = vdwg.mxu0
        %5144 = vrot.lane.b32.xlu0 %v4378, 64
        %v5145 = vpop.permute.xlu0 %5144
        %5146 = vrot.lane.b32.xlu0 %v4379, 64
        %v5147 = vpop.permute.xlu0 %5146
        %v5149 = vsel %vm921, %v4286, 0
        %v5152 = vsel %vm921, %v5145, 0
        %v5155 = vsel %vm921, %v5147, 0
        %5157 = vmatprep.subr.bf16.mxu0 0
        %5158 = vmatpush1.bf16.xpose.msra.mxu0 %v5152
        %5159 = vmatprep.subr.bf16.mxu0 0
        %5160 = vmatpush1.bf16.xpose.msra.mxu0 %v5155
        %5161 = vmatprep.subr.bf16.mxu0 0
        %5162 = vmatpush1.bf16.xpose.msra.mxu0 0
        %5163 = vmatprep.subr.bf16.mxu0 0
        %5164 = vmatpush1.bf16.xpose.msra.mxu0 0
        %5165 = vmatprep.subr.bf16.mxu0 0
        %5166 = vmatpush1.bf16.xpose.msra.mxu0 0
        %5167 = vmatprep.subr.bf16.mxu0 0
        %5168 = vmatpush1.bf16.xpose.msra.mxu0 0
        %5169 = vmatprep.subr.bf16.mxu0 0
        %5170 = vmatpush1.bf16.xpose.msra.mxu0 0
        %5171 = vmatprep.subr.bf16.mxu0 0
        %5172 = vmatpush1.bf16.xpose.msra.mxu0 0
        %5173 = vmatprep.subr.bf16.mxu0 0
        %5174 = vmatpush1.bf16.xpose.msra.mxu0 0
        %5175 = vmatprep.subr.bf16.mxu0 0
        %5176 = vmatpush1.bf16.xpose.msra.mxu0 0
        %5177 = vmatprep.subr.bf16.mxu0 0
        %5178 = vmatpush1.bf16.xpose.msra.mxu0 0
        %5179 = vmatprep.subr.bf16.mxu0 0
        %5180 = vmatpush1.bf16.xpose.msra.mxu0 0
        %5181 = vmatprep.subr.bf16.mxu0 0
        %5182 = vmatpush1.bf16.xpose.msra.mxu0 0
        %5183 = vmatprep.subr.bf16.mxu0 0
        %5184 = vmatpush1.bf16.xpose.msra.mxu0 0
        %5185 = vmatprep.subr.bf16.mxu0 0
        %5186 = vmatpush1.bf16.xpose.msra.mxu0 0
        %5187 = vmatprep.subr.bf16.mxu0 0
        %5188 = vmatpush1.bf16.xpose.msra.mxu0 0
        %5189 = vmatprep.mubr.bf16.mxu0 0
        %5190 = vmatmul.mubr.bf16.gmra.mrb[0].mxu0 %v5149
        %v5191 = vpop.f32.mrb[0].mxu0
        %v5192 = vadd.f32 0.0, %v5191
        %v5193 = vpop.f32.mrb[0].mxu0
        %v5194 = vpop.f32.mrb[0].mxu0
        %v5195 = vpop.f32.mrb[0].mxu0
        %5196 = vdwg.mxu0
        %5199 = vrot.lane.b32.xlu0 %v4380, 64
        %v5200 = vpop.permute.xlu0 %5199
        %5201 = vrot.lane.b32.xlu0 %v4381, 64
        %v5202 = vpop.permute.xlu0 %5201
        %v5204 = vsel %vm921, %v4287, 0
        %v5207 = vsel %vm921, %v5200, 0
        %v5210 = vsel %vm921, %v5202, 0
        %5212 = vmatprep.subr.bf16.mxu0 0
        %5213 = vmatpush1.bf16.xpose.msra.mxu0 %v5207
        %5214 = vmatprep.subr.bf16.mxu0 0
        %5215 = vmatpush1.bf16.xpose.msra.mxu0 %v5210
        %5216 = vmatprep.subr.bf16.mxu0 0
        %5217 = vmatpush1.bf16.xpose.msra.mxu0 0
        %5218 = vmatprep.subr.bf16.mxu0 0
        %5219 = vmatpush1.bf16.xpose.msra.mxu0 0
        %5220 = vmatprep.subr.bf16.mxu0 0
        %5221 = vmatpush1.bf16.xpose.msra.mxu0 0
        %5222 = vmatprep.subr.bf16.mxu0 0
        %5223 = vmatpush1.bf16.xpose.msra.mxu0 0
        %5224 = vmatprep.subr.bf16.mxu0 0
        %5225 = vmatpush1.bf16.xpose.msra.mxu0 0
        %5226 = vmatprep.subr.bf16.mxu0 0
        %5227 = vmatpush1.bf16.xpose.msra.mxu0 0
        %5228 = vmatprep.subr.bf16.mxu0 0
        %5229 = vmatpush1.bf16.xpose.msra.mxu0 0
        %5230 = vmatprep.subr.bf16.mxu0 0
        %5231 = vmatpush1.bf16.xpose.msra.mxu0 0
        %5232 = vmatprep.subr.bf16.mxu0 0
        %5233 = vmatpush1.bf16.xpose.msra.mxu0 0
        %5234 = vmatprep.subr.bf16.mxu0 0
        %5235 = vmatpush1.bf16.xpose.msra.mxu0 0
        %5236 = vmatprep.subr.bf16.mxu0 0
        %5237 = vmatpush1.bf16.xpose.msra.mxu0 0
        %5238 = vmatprep.subr.bf16.mxu0 0
        %5239 = vmatpush1.bf16.xpose.msra.mxu0 0
        %5240 = vmatprep.subr.bf16.mxu0 0
        %5241 = vmatpush1.bf16.xpose.msra.mxu0 0
        %5242 = vmatprep.subr.bf16.mxu0 0
        %5243 = vmatpush1.bf16.xpose.msra.mxu0 0
        %5244 = vmatprep.mubr.bf16.mxu0 0
        %5245 = vmatmul.mubr.bf16.gmra.mrb[0].mxu0 %v5204
        %v5246 = vpop.f32.mrb[0].mxu0
        %v5247 = vadd.f32 0.0, %v5246
        %v5248 = vpop.f32.mrb[0].mxu0
        %v5249 = vpop.f32.mrb[0].mxu0
        %v5250 = vpop.f32.mrb[0].mxu0
        %5251 = vdwg.mxu0
        %5254 = vrot.lane.b32.xlu0 %v4382, 64
        %v5255 = vpop.permute.xlu0 %5254
        %5256 = vrot.lane.b32.xlu0 %v4383, 64
        %v5257 = vpop.permute.xlu0 %5256
        %v5259 = vsel %vm921, %v4288, 0
        %v5262 = vsel %vm921, %v5255, 0
        %v5265 = vsel %vm921, %v5257, 0
        %5267 = vmatprep.subr.bf16.mxu0 0
        %5268 = vmatpush1.bf16.xpose.msra.mxu0 %v5262
        %5269 = vmatprep.subr.bf16.mxu0 0
        %5270 = vmatpush1.bf16.xpose.msra.mxu0 %v5265
        %5271 = vmatprep.subr.bf16.mxu0 0
        %5272 = vmatpush1.bf16.xpose.msra.mxu0 0
        %5273 = vmatprep.subr.bf16.mxu0 0
        %5274 = vmatpush1.bf16.xpose.msra.mxu0 0
        %5275 = vmatprep.subr.bf16.mxu0 0
        %5276 = vmatpush1.bf16.xpose.msra.mxu0 0
        %5277 = vmatprep.subr.bf16.mxu0 0
        %5278 = vmatpush1.bf16.xpose.msra.mxu0 0
        %5279 = vmatprep.subr.bf16.mxu0 0
        %5280 = vmatpush1.bf16.xpose.msra.mxu0 0
        %5281 = vmatprep.subr.bf16.mxu0 0
        %5282 = vmatpush1.bf16.xpose.msra.mxu0 0
        %5283 = vmatprep.subr.bf16.mxu0 0
        %5284 = vmatpush1.bf16.xpose.msra.mxu0 0
        %5285 = vmatprep.subr.bf16.mxu0 0
        %5286 = vmatpush1.bf16.xpose.msra.mxu0 0
        %5287 = vmatprep.subr.bf16.mxu0 0
        %5288 = vmatpush1.bf16.xpose.msra.mxu0 0
        %5289 = vmatprep.subr.bf16.mxu0 0
        %5290 = vmatpush1.bf16.xpose.msra.mxu0 0
        %5291 = vmatprep.subr.bf16.mxu0 0
        %5292 = vmatpush1.bf16.xpose.msra.mxu0 0
        %5293 = vmatprep.subr.bf16.mxu0 0
        %5294 = vmatpush1.bf16.xpose.msra.mxu0 0
        %5295 = vmatprep.subr.bf16.mxu0 0
        %5296 = vmatpush1.bf16.xpose.msra.mxu0 0
        %5297 = vmatprep.subr.bf16.mxu0 0
        %5298 = vmatpush1.bf16.xpose.msra.mxu0 0
        %5299 = vmatprep.mubr.bf16.mxu0 0
        %5300 = vmatmul.mubr.bf16.gmra.mrb[0].mxu0 %v5259
        %v5301 = vpop.f32.mrb[0].mxu0
        %v5302 = vadd.f32 0.0, %v5301
        %v5303 = vpop.f32.mrb[0].mxu0
        %v5304 = vpop.f32.mrb[0].mxu0
        %v5305 = vpop.f32.mrb[0].mxu0
        %5306 = vdwg.mxu0
        %5309 = vrot.lane.b32.xlu0 %v4384, 64
        %v5310 = vpop.permute.xlu0 %5309
        %5311 = vrot.lane.b32.xlu0 %v4385, 64
        %v5312 = vpop.permute.xlu0 %5311
        %v5314 = vsel %vm921, %v4289, 0
        %v5317 = vsel %vm921, %v5310, 0
        %v5320 = vsel %vm921, %v5312, 0
        %5322 = vmatprep.subr.bf16.mxu0 0
        %5323 = vmatpush1.bf16.xpose.msra.mxu0 %v5317
        %5324 = vmatprep.subr.bf16.mxu0 0
        %5325 = vmatpush1.bf16.xpose.msra.mxu0 %v5320
        %5326 = vmatprep.subr.bf16.mxu0 0
        %5327 = vmatpush1.bf16.xpose.msra.mxu0 0
        %5328 = vmatprep.subr.bf16.mxu0 0
        %5329 = vmatpush1.bf16.xpose.msra.mxu0 0
        %5330 = vmatprep.subr.bf16.mxu0 0
        %5331 = vmatpush1.bf16.xpose.msra.mxu0 0
        %5332 = vmatprep.subr.bf16.mxu0 0
        %5333 = vmatpush1.bf16.xpose.msra.mxu0 0
        %5334 = vmatprep.subr.bf16.mxu0 0
        %5335 = vmatpush1.bf16.xpose.msra.mxu0 0
        %5336 = vmatprep.subr.bf16.mxu0 0
        %5337 = vmatpush1.bf16.xpose.msra.mxu0 0
        %5338 = vmatprep.subr.bf16.mxu0 0
        %5339 = vmatpush1.bf16.xpose.msra.mxu0 0
        %5340 = vmatprep.subr.bf16.mxu0 0
        %5341 = vmatpush1.bf16.xpose.msra.mxu0 0
        %5342 = vmatprep.subr.bf16.mxu0 0
        %5343 = vmatpush1.bf16.xpose.msra.mxu0 0
        %5344 = vmatprep.subr.bf16.mxu0 0
        %5345 = vmatpush1.bf16.xpose.msra.mxu0 0
        %5346 = vmatprep.subr.bf16.mxu0 0
        %5347 = vmatpush1.bf16.xpose.msra.mxu0 0
        %5348 = vmatprep.subr.bf16.mxu0 0
        %5349 = vmatpush1.bf16.xpose.msra.mxu0 0
        %5350 = vmatprep.subr.bf16.mxu0 0
        %5351 = vmatpush1.bf16.xpose.msra.mxu0 0
        %5352 = vmatprep.subr.bf16.mxu0 0
        %5353 = vmatpush1.bf16.xpose.msra.mxu0 0
        %5354 = vmatprep.mubr.bf16.mxu0 0
        %5355 = vmatmul.mubr.bf16.gmra.mrb[0].mxu0 %v5314
        %v5356 = vpop.f32.mrb[0].mxu0
        %v5357 = vadd.f32 0.0, %v5356
        %v5358 = vpop.f32.mrb[0].mxu0
        %v5359 = vpop.f32.mrb[0].mxu0
        %v5360 = vpop.f32.mrb[0].mxu0
        %5361 = vdwg.mxu0
        %v5362 = vsel %vm1796, %v4532, -inf
        %5363 = vmax.xlane.f32.xlu0 %v5362
        %v5364 = vpop.xlane.xlu0 %5363
        %v5365 = vsel %vm1796, %v4587, -inf
        %5366 = vmax.xlane.f32.xlu0 %v5365
        %v5367 = vpop.xlane.xlu0 %5366
        %v5368 = vsel %vm1796, %v4642, -inf
        %5369 = vmax.xlane.f32.xlu0 %v5368
        %v5370 = vpop.xlane.xlu0 %5369
        %v5371 = vsel %vm1796, %v4697, -inf
        %5372 = vmax.xlane.f32.xlu0 %v5371
        %v5373 = vpop.xlane.xlu0 %5372
        %v5374 = vsel %vm1796, %v4752, -inf
        %5375 = vmax.xlane.f32.xlu0 %v5374
        %v5376 = vpop.xlane.xlu0 %5375
        %v5377 = vsel %vm1796, %v4807, -inf
        %5378 = vmax.xlane.f32.xlu0 %v5377
        %v5379 = vpop.xlane.xlu0 %5378
        %v5380 = vsel %vm1796, %v4862, -inf
        %5381 = vmax.xlane.f32.xlu0 %v5380
        %v5382 = vpop.xlane.xlu0 %5381
        %v5383 = vsel %vm1796, %v4917, -inf
        %5384 = vmax.xlane.f32.xlu0 %v5383
        %v5385 = vpop.xlane.xlu0 %5384
        %v5386 = vsel %vm1796, %v4972, -inf
        %5387 = vmax.xlane.f32.xlu0 %v5386
        %v5388 = vpop.xlane.xlu0 %5387
        %v5389 = vsel %vm1796, %v5027, -inf
        %5390 = vmax.xlane.f32.xlu0 %v5389
        %v5391 = vpop.xlane.xlu0 %5390
        %v5392 = vsel %vm1796, %v5082, -inf
        %5393 = vmax.xlane.f32.xlu0 %v5392
        %v5394 = vpop.xlane.xlu0 %5393
        %v5395 = vsel %vm1796, %v5137, -inf
        %5396 = vmax.xlane.f32.xlu0 %v5395
        %v5397 = vpop.xlane.xlu0 %5396
        %v5398 = vsel %vm1796, %v5192, -inf
        %5399 = vmax.xlane.f32.xlu0 %v5398
        %v5400 = vpop.xlane.xlu0 %5399
        %v5401 = vsel %vm1796, %v5247, -inf
        %5402 = vmax.xlane.f32.xlu0 %v5401
        %v5403 = vpop.xlane.xlu0 %5402
        %v5404 = vsel %vm1796, %v5302, -inf
        %5405 = vmax.xlane.f32.xlu0 %v5404
        %v5406 = vpop.xlane.xlu0 %5405
        %v5407 = vsel %vm1796, %v5357, -inf
        %5408 = vmax.xlane.f32.xlu0 %v5407
        %v5409 = vpop.xlane.xlu0 %5408
        %v5410 = vsub.f32 %v4532, %v5364
        %v5411 = vsub.f32 %v4587, %v5367
        %v5412 = vsub.f32 %v4642, %v5370
        %v5413 = vsub.f32 %v4697, %v5373
        %v5414 = vsub.f32 %v4752, %v5376
        %v5415 = vsub.f32 %v4807, %v5379
        %v5416 = vsub.f32 %v4862, %v5382
        %v5417 = vsub.f32 %v4917, %v5385
        %v5418 = vsub.f32 %v4972, %v5388
        %v5419 = vsub.f32 %v5027, %v5391
        %v5420 = vsub.f32 %v5082, %v5394
        %v5421 = vsub.f32 %v5137, %v5397
        %v5422 = vsub.f32 %v5192, %v5400
        %v5423 = vsub.f32 %v5247, %v5403
        %v5424 = vsub.f32 %v5302, %v5406
        %v5425 = vsub.f32 %v5357, %v5409
        %v5426 = vmul.f32 %v5410, 1.442695
        %v5427 = vpow.pop %v5426
        %v5428 = vmul.f32 %v5411, 1.442695
        %v5429 = vpow.pop %v5428
        %v5430 = vmul.f32 %v5412, 1.442695
        %v5431 = vpow.pop %v5430
        %v5432 = vmul.f32 %v5413, 1.442695
        %v5433 = vpow.pop %v5432
        %v5434 = vmul.f32 %v5414, 1.442695
        %v5435 = vpow.pop %v5434
        %v5436 = vmul.f32 %v5415, 1.442695
        %v5437 = vpow.pop %v5436
        %v5438 = vmul.f32 %v5416, 1.442695
        %v5439 = vpow.pop %v5438
        %v5440 = vmul.f32 %v5417, 1.442695
        %v5441 = vpow.pop %v5440
        %v5442 = vmul.f32 %v5418, 1.442695
        %v5443 = vpow.pop %v5442
        %v5444 = vmul.f32 %v5419, 1.442695
        %v5445 = vpow.pop %v5444
        %v5446 = vmul.f32 %v5420, 1.442695
        %v5447 = vpow.pop %v5446
        %v5448 = vmul.f32 %v5421, 1.442695
        %v5449 = vpow.pop %v5448
        %v5450 = vmul.f32 %v5422, 1.442695
        %v5451 = vpow.pop %v5450
        %v5452 = vmul.f32 %v5423, 1.442695
        %v5453 = vpow.pop %v5452
        %v5454 = vmul.f32 %v5424, 1.442695
        %v5455 = vpow.pop %v5454
        %v5456 = vmul.f32 %v5425, 1.442695
        %v5457 = vpow.pop %v5456
        %v5459 = vsel %vm1796, %v5427, 0
        %v5462 = vsel %vm1796, %v5429, 0
        %v5465 = vsel %vm1796, %v5431, 0
        %v5468 = vsel %vm1796, %v5433, 0
        %v5471 = vsel %vm1796, %v5435, 0
        %v5474 = vsel %vm1796, %v5437, 0
        %v5477 = vsel %vm1796, %v5439, 0
        %v5480 = vsel %vm1796, %v5441, 0
        %v5483 = vsel %vm1796, %v5443, 0
        %v5486 = vsel %vm1796, %v5445, 0
        %v5489 = vsel %vm1796, %v5447, 0
        %v5492 = vsel %vm1796, %v5449, 0
        %v5495 = vsel %vm1796, %v5451, 0
        %v5498 = vsel %vm1796, %v5453, 0
        %v5501 = vsel %vm1796, %v5455, 0
        %v5504 = vsel %vm1796, %v5457, 0
        %5506 = vmatprep.subr.mxu0 0.0
        %5507 = vmatpush1.msra.mxu0 %v267
        %5508 = vmatprep.subr.mxu0 0.0
        %5509 = vmatpush1.msra.mxu0 %v268
        %5510 = vmatprep.subr.mxu0 0.0
        %5511 = vmatpush1.msra.mxu0 %v269
        %5512 = vmatprep.subr.mxu0 0.0
        %5513 = vmatpush1.msra.mxu0 %v270
        %5514 = vmatprep.subr.mxu0 0.0
        %5515 = vmatpush1.msra.mxu0 0.0
        %5516 = vmatprep.subr.mxu0 0.0
        %5517 = vmatpush1.msra.mxu0 0.0
        %5518 = vmatprep.subr.mxu0 0.0
        %5519 = vmatpush1.msra.mxu0 0.0
        %5520 = vmatprep.subr.mxu0 0.0
        %5521 = vmatpush1.msra.mxu0 0.0
        %5522 = vmatprep.subr.mxu0 0.0
        %5523 = vmatpush1.msra.mxu0 0.0
        %5524 = vmatprep.subr.mxu0 0.0
        %5525 = vmatpush1.msra.mxu0 0.0
        %5526 = vmatprep.subr.mxu0 0.0
        %5527 = vmatpush1.msra.mxu0 0.0
        %5528 = vmatprep.subr.mxu0 0.0
        %5529 = vmatpush1.msra.mxu0 0.0
        %5530 = vmatprep.subr.mxu0 0.0
        %5531 = vmatpush1.msra.mxu0 0.0
        %5532 = vmatprep.subr.mxu0 0.0
        %5533 = vmatpush1.msra.mxu0 0.0
        %5534 = vmatprep.subr.mxu0 0.0
        %5535 = vmatpush1.msra.mxu0 0.0
        %5536 = vmatprep.subr.mxu0 0.0
        %5537 = vmatpush1.msra.mxu0 0.0
        %5538 = vmatprep.subr.mxu0 0.0
        %5539 = vmatpush1.msra.mxu0 0.0
        %5540 = vmatprep.subr.mxu0 0.0
        %5541 = vmatpush1.msra.mxu0 0.0
        %5542 = vmatprep.subr.mxu0 0.0
        %5543 = vmatpush1.msra.mxu0 0.0
        %5544 = vmatprep.subr.mxu0 0.0
        %5545 = vmatpush1.msra.mxu0 0.0
        %5546 = vmatprep.subr.mxu0 0.0
        %5547 = vmatpush1.msra.mxu0 0.0
        %5548 = vmatprep.subr.mxu0 0.0
        %5549 = vmatpush1.msra.mxu0 0.0
        %5550 = vmatprep.subr.mxu0 0.0
        %5551 = vmatpush1.msra.mxu0 0.0
        %5552 = vmatprep.subr.mxu0 0.0
        %5553 = vmatpush1.msra.mxu0 0.0
        %5554 = vmatprep.subr.mxu0 0.0
        %5555 = vmatpush1.msra.mxu0 0.0
        %5556 = vmatprep.subr.mxu0 0.0
        %5557 = vmatpush1.msra.mxu0 0.0
        %5558 = vmatprep.subr.mxu0 0.0
        %5559 = vmatpush1.msra.mxu0 0.0
        %5560 = vmatprep.subr.mxu0 0.0
        %5561 = vmatpush1.msra.mxu0 0.0
        %5562 = vmatprep.subr.mxu0 0.0
        %5563 = vmatpush1.msra.mxu0 0.0
        %5564 = vmatprep.subr.mxu0 0.0
        %5565 = vmatpush1.msra.mxu0 0.0
        %5566 = vmatprep.subr.mxu0 0.0
        %5567 = vmatpush1.msra.mxu0 0.0
        %5568 = vmatprep.subr.mxu0 0.0
        %5569 = vmatpush1.msra.mxu0 0.0
        %5570 = vmatprep.mubr.f32.mxu0 0.0
        %5571 = vmatmul.mubr.f32.gmra.mrb[0].mxu0 %v5459
        %v5572 = vpop.f32.mrb[0].mxu0
        %v5573 = vadd.f32 0.0, %v5572
        %v5574 = vpop.f32.mrb[0].mxu0
        %5575 = vmatprep.mubr.f32.mxu0 0.0
        %5576 = vmatmul.mubr.f32.gmra.mrb[0].mxu0 %v5462
        %v5577 = vpop.f32.mrb[0].mxu0
        %v5578 = vadd.f32 0.0, %v5577
        %v5579 = vpop.f32.mrb[0].mxu0
        %5580 = vmatprep.mubr.f32.mxu0 0.0
        %5581 = vmatmul.mubr.f32.gmra.mrb[0].mxu0 %v5465
        %v5582 = vpop.f32.mrb[0].mxu0
        %v5583 = vadd.f32 0.0, %v5582
        %v5584 = vpop.f32.mrb[0].mxu0
        %5585 = vmatprep.mubr.f32.mxu0 0.0
        %5586 = vmatmul.mubr.f32.gmra.mrb[0].mxu0 %v5468
        %v5587 = vpop.f32.mrb[0].mxu0
        %v5588 = vadd.f32 0.0, %v5587
        %v5589 = vpop.f32.mrb[0].mxu0
        %5590 = vmatprep.mubr.f32.mxu0 0.0
        %5591 = vmatmul.mubr.f32.gmra.mrb[0].mxu0 %v5471
        %v5592 = vpop.f32.mrb[0].mxu0
        %v5593 = vadd.f32 0.0, %v5592
        %v5594 = vpop.f32.mrb[0].mxu0
        %5595 = vmatprep.mubr.f32.mxu0 0.0
        %5596 = vmatmul.mubr.f32.gmra.mrb[0].mxu0 %v5474
        %v5597 = vpop.f32.mrb[0].mxu0
        %v5598 = vadd.f32 0.0, %v5597
        %v5599 = vpop.f32.mrb[0].mxu0
        %5600 = vmatprep.mubr.f32.mxu0 0.0
        %5601 = vmatmul.mubr.f32.gmra.mrb[0].mxu0 %v5477
        %v5602 = vpop.f32.mrb[0].mxu0
        %v5603 = vadd.f32 0.0, %v5602
        %v5604 = vpop.f32.mrb[0].mxu0
        %5605 = vmatprep.mubr.f32.mxu0 0.0
        %5606 = vmatmul.mubr.f32.gmra.mrb[0].mxu0 %v5480
        %v5607 = vpop.f32.mrb[0].mxu0
        %v5608 = vadd.f32 0.0, %v5607
        %v5609 = vpop.f32.mrb[0].mxu0
        %5610 = vmatprep.mubr.f32.mxu0 0.0
        %5611 = vmatmul.mubr.f32.gmra.mrb[0].mxu0 %v5483
        %v5612 = vpop.f32.mrb[0].mxu0
        %v5613 = vadd.f32 0.0, %v5612
        %v5614 = vpop.f32.mrb[0].mxu0
        %5615 = vmatprep.mubr.f32.mxu0 0.0
        %5616 = vmatmul.mubr.f32.gmra.mrb[0].mxu0 %v5486
        %v5617 = vpop.f32.mrb[0].mxu0
        %v5618 = vadd.f32 0.0, %v5617
        %v5619 = vpop.f32.mrb[0].mxu0
        %5620 = vmatprep.mubr.f32.mxu0 0.0
        %5621 = vmatmul.mubr.f32.gmra.mrb[0].mxu0 %v5489
        %v5622 = vpop.f32.mrb[0].mxu0
        %v5623 = vadd.f32 0.0, %v5622
        %v5624 = vpop.f32.mrb[0].mxu0
        %5625 = vmatprep.mubr.f32.mxu0 0.0
        %5626 = vmatmul.mubr.f32.gmra.mrb[0].mxu0 %v5492
        %v5627 = vpop.f32.mrb[0].mxu0
        %v5628 = vadd.f32 0.0, %v5627
        %v5629 = vpop.f32.mrb[0].mxu0
        %5630 = vmatprep.mubr.f32.mxu0 0.0
        %5631 = vmatmul.mubr.f32.gmra.mrb[0].mxu0 %v5495
        %v5632 = vpop.f32.mrb[0].mxu0
        %v5633 = vadd.f32 0.0, %v5632
        %v5634 = vpop.f32.mrb[0].mxu0
        %5635 = vmatprep.mubr.f32.mxu0 0.0
        %5636 = vmatmul.mubr.f32.gmra.mrb[0].mxu0 %v5498
        %v5637 = vpop.f32.mrb[0].mxu0
        %v5638 = vadd.f32 0.0, %v5637
        %v5639 = vpop.f32.mrb[0].mxu0
        %5640 = vmatprep.mubr.f32.mxu0 0.0
        %5641 = vmatmul.mubr.f32.gmra.mrb[0].mxu0 %v5501
        %v5642 = vpop.f32.mrb[0].mxu0
        %v5643 = vadd.f32 0.0, %v5642
        %v5644 = vpop.f32.mrb[0].mxu0
        %5645 = vmatprep.mubr.f32.mxu0 0.0
        %5646 = vmatmul.mubr.f32.gmra.mrb[0].mxu0 %v5504
        %v5647 = vpop.f32.mrb[0].mxu0
        %v5648 = vadd.f32 0.0, %v5647
        %v5649 = vpop.f32.mrb[0].mxu0
        %5650 = vdwg.mxu0
        %v5651 = vrcp.pop %v5573
        %v5652 = vrcp.pop %v5578
        %v5653 = vrcp.pop %v5583
        %v5654 = vrcp.pop %v5588
        %v5655 = vrcp.pop %v5593
        %v5656 = vrcp.pop %v5598
        %v5657 = vrcp.pop %v5603
        %v5658 = vrcp.pop %v5608
        %v5659 = vrcp.pop %v5613
        %v5660 = vrcp.pop %v5618
        %v5661 = vrcp.pop %v5623
        %v5662 = vrcp.pop %v5628
        %v5663 = vrcp.pop %v5633
        %v5664 = vrcp.pop %v5638
        %v5665 = vrcp.pop %v5643
        %v5666 = vrcp.pop %v5648
        %v5667 = vmul.f32 %v5427, %v5651
        %v5668 = vmul.f32 %v5429, %v5652
        %v5669 = vmul.f32 %v5431, %v5653
        %v5670 = vmul.f32 %v5433, %v5654
        %v5671 = vmul.f32 %v5435, %v5655
        %v5672 = vmul.f32 %v5437, %v5656
        %v5673 = vmul.f32 %v5439, %v5657
        %v5674 = vmul.f32 %v5441, %v5658
        %v5675 = vmul.f32 %v5443, %v5659
        %v5676 = vmul.f32 %v5445, %v5660
        %v5677 = vmul.f32 %v5447, %v5661
        %v5678 = vmul.f32 %v5449, %v5662
        %v5679 = vmul.f32 %v5451, %v5663
        %v5680 = vmul.f32 %v5453, %v5664
        %v5681 = vmul.f32 %v5455, %v5665
        %v5682 = vmul.f32 %v5457, %v5666
        %v5683 = vpack.c.bf16 %v5667, %v5667
        %v5684 = vpack.c.bf16 %v5668, %v5668
        %v5685 = vpack.c.bf16 %v5669, %v5669
        %v5686 = vpack.c.bf16 %v5670, %v5670
        %v5687 = vpack.c.bf16 %v5671, %v5671
        %v5688 = vpack.c.bf16 %v5672, %v5672
        %v5689 = vpack.c.bf16 %v5673, %v5673
        %v5690 = vpack.c.bf16 %v5674, %v5674
        %v5691 = vpack.c.bf16 %v5675, %v5675
        %v5692 = vpack.c.bf16 %v5676, %v5676
        %v5693 = vpack.c.bf16 %v5677, %v5677
        %v5694 = vpack.c.bf16 %v5678, %v5678
        %v5695 = vpack.c.bf16 %v5679, %v5679
        %v5696 = vpack.c.bf16 %v5680, %v5680
        %v5697 = vpack.c.bf16 %v5681, %v5681
        %v5698 = vpack.c.bf16 %v5682, %v5682
        %v5700 = vsel %vm1796, %v5683, 0
        %5702 = vmatprep.subr.bf16.mxu0 0
        %5703 = vmatpush1.bf16.msra.mxu0 %v4450
        %5704 = vmatprep.subr.bf16.mxu0 0
        %5705 = vmatpush1.bf16.msra.mxu0 %v4451
        %5706 = vmatprep.subr.bf16.mxu0 0
        %5707 = vmatpush1.bf16.msra.mxu0 0
        %5708 = vmatprep.subr.bf16.mxu0 0
        %5709 = vmatpush1.bf16.msra.mxu0 0
        %5710 = vmatprep.subr.bf16.mxu0 0
        %5711 = vmatpush1.bf16.msra.mxu0 0
        %5712 = vmatprep.subr.bf16.mxu0 0
        %5713 = vmatpush1.bf16.msra.mxu0 0
        %5714 = vmatprep.subr.bf16.mxu0 0
        %5715 = vmatpush1.bf16.msra.mxu0 0
        %5716 = vmatprep.subr.bf16.mxu0 0
        %5717 = vmatpush1.bf16.msra.mxu0 0
        %5718 = vmatprep.subr.bf16.mxu0 0
        %5719 = vmatpush1.bf16.msra.mxu0 0
        %5720 = vmatprep.subr.bf16.mxu0 0
        %5721 = vmatpush1.bf16.msra.mxu0 0
        %5722 = vmatprep.subr.bf16.mxu0 0
        %5723 = vmatpush1.bf16.msra.mxu0 0
        %5724 = vmatprep.subr.bf16.mxu0 0
        %5725 = vmatpush1.bf16.msra.mxu0 0
        %5726 = vmatprep.subr.bf16.mxu0 0
        %5727 = vmatpush1.bf16.msra.mxu0 0
        %5728 = vmatprep.subr.bf16.mxu0 0
        %5729 = vmatpush1.bf16.msra.mxu0 0
        %5730 = vmatprep.subr.bf16.mxu0 0
        %5731 = vmatpush1.bf16.msra.mxu0 0
        %5732 = vmatprep.subr.bf16.mxu0 0
        %5733 = vmatpush1.bf16.msra.mxu0 0
        %5734 = vmatprep.mubr.bf16.mxu0 0
        %5735 = vmatmul.mubr.bf16.gmra.mrb[0].mxu0 %v5700
        %v5736 = vpop.f32.mrb[0].mxu0
        %v5737 = vadd.f32 0.0, %v5736
        %v5738 = vpop.f32.mrb[0].mxu0
        %v5739 = vpop.f32.mrb[0].mxu0
        %v5740 = vpop.f32.mrb[0].mxu0
        %5741 = vdwg.mxu0
        %v5743 = vsel %vm1796, %v5684, 0
        %5745 = vmatprep.subr.bf16.mxu0 0
        %5746 = vmatpush1.bf16.msra.mxu0 %v4452
        %5747 = vmatprep.subr.bf16.mxu0 0
        %5748 = vmatpush1.bf16.msra.mxu0 %v4453
        %5749 = vmatprep.subr.bf16.mxu0 0
        %5750 = vmatpush1.bf16.msra.mxu0 0
        %5751 = vmatprep.subr.bf16.mxu0 0
        %5752 = vmatpush1.bf16.msra.mxu0 0
        %5753 = vmatprep.subr.bf16.mxu0 0
        %5754 = vmatpush1.bf16.msra.mxu0 0
        %5755 = vmatprep.subr.bf16.mxu0 0
        %5756 = vmatpush1.bf16.msra.mxu0 0
        %5757 = vmatprep.subr.bf16.mxu0 0
        %5758 = vmatpush1.bf16.msra.mxu0 0
        %5759 = vmatprep.subr.bf16.mxu0 0
        %5760 = vmatpush1.bf16.msra.mxu0 0
        %5761 = vmatprep.subr.bf16.mxu0 0
        %5762 = vmatpush1.bf16.msra.mxu0 0
        %5763 = vmatprep.subr.bf16.mxu0 0
        %5764 = vmatpush1.bf16.msra.mxu0 0
        %5765 = vmatprep.subr.bf16.mxu0 0
        %5766 = vmatpush1.bf16.msra.mxu0 0
        %5767 = vmatprep.subr.bf16.mxu0 0
        %5768 = vmatpush1.bf16.msra.mxu0 0
        %5769 = vmatprep.subr.bf16.mxu0 0
        %5770 = vmatpush1.bf16.msra.mxu0 0
        %5771 = vmatprep.subr.bf16.mxu0 0
        %5772 = vmatpush1.bf16.msra.mxu0 0
        %5773 = vmatprep.subr.bf16.mxu0 0
        %5774 = vmatpush1.bf16.msra.mxu0 0
        %5775 = vmatprep.subr.bf16.mxu0 0
        %5776 = vmatpush1.bf16.msra.mxu0 0
        %5777 = vmatprep.mubr.bf16.mxu0 0
        %5778 = vmatmul.mubr.bf16.gmra.mrb[0].mxu0 %v5743
        %v5779 = vpop.f32.mrb[0].mxu0
        %v5780 = vadd.f32 0.0, %v5779
        %v5781 = vpop.f32.mrb[0].mxu0
        %v5782 = vpop.f32.mrb[0].mxu0
        %v5783 = vpop.f32.mrb[0].mxu0
        %5784 = vdwg.mxu0
        %v5786 = vsel %vm1796, %v5685, 0
        %5788 = vmatprep.subr.bf16.mxu0 0
        %5789 = vmatpush1.bf16.msra.mxu0 %v4454
        %5790 = vmatprep.subr.bf16.mxu0 0
        %5791 = vmatpush1.bf16.msra.mxu0 %v4455
        %5792 = vmatprep.subr.bf16.mxu0 0
        %5793 = vmatpush1.bf16.msra.mxu0 0
        %5794 = vmatprep.subr.bf16.mxu0 0
        %5795 = vmatpush1.bf16.msra.mxu0 0
        %5796 = vmatprep.subr.bf16.mxu0 0
        %5797 = vmatpush1.bf16.msra.mxu0 0
        %5798 = vmatprep.subr.bf16.mxu0 0
        %5799 = vmatpush1.bf16.msra.mxu0 0
        %5800 = vmatprep.subr.bf16.mxu0 0
        %5801 = vmatpush1.bf16.msra.mxu0 0
        %5802 = vmatprep.subr.bf16.mxu0 0
        %5803 = vmatpush1.bf16.msra.mxu0 0
        %5804 = vmatprep.subr.bf16.mxu0 0
        %5805 = vmatpush1.bf16.msra.mxu0 0
        %5806 = vmatprep.subr.bf16.mxu0 0
        %5807 = vmatpush1.bf16.msra.mxu0 0
        %5808 = vmatprep.subr.bf16.mxu0 0
        %5809 = vmatpush1.bf16.msra.mxu0 0
        %5810 = vmatprep.subr.bf16.mxu0 0
        %5811 = vmatpush1.bf16.msra.mxu0 0
        %5812 = vmatprep.subr.bf16.mxu0 0
        %5813 = vmatpush1.bf16.msra.mxu0 0
        %5814 = vmatprep.subr.bf16.mxu0 0
        %5815 = vmatpush1.bf16.msra.mxu0 0
        %5816 = vmatprep.subr.bf16.mxu0 0
        %5817 = vmatpush1.bf16.msra.mxu0 0
        %5818 = vmatprep.subr.bf16.mxu0 0
        %5819 = vmatpush1.bf16.msra.mxu0 0
        %5820 = vmatprep.mubr.bf16.mxu0 0
        %5821 = vmatmul.mubr.bf16.gmra.mrb[0].mxu0 %v5786
        %v5822 = vpop.f32.mrb[0].mxu0
        %v5823 = vadd.f32 0.0, %v5822
        %v5824 = vpop.f32.mrb[0].mxu0
        %v5825 = vpop.f32.mrb[0].mxu0
        %v5826 = vpop.f32.mrb[0].mxu0
        %5827 = vdwg.mxu0
        %v5829 = vsel %vm1796, %v5686, 0
        %5831 = vmatprep.subr.bf16.mxu0 0
        %5832 = vmatpush1.bf16.msra.mxu0 %v4456
        %5833 = vmatprep.subr.bf16.mxu0 0
        %5834 = vmatpush1.bf16.msra.mxu0 %v4457
        %5835 = vmatprep.subr.bf16.mxu0 0
        %5836 = vmatpush1.bf16.msra.mxu0 0
        %5837 = vmatprep.subr.bf16.mxu0 0
        %5838 = vmatpush1.bf16.msra.mxu0 0
        %5839 = vmatprep.subr.bf16.mxu0 0
        %5840 = vmatpush1.bf16.msra.mxu0 0
        %5841 = vmatprep.subr.bf16.mxu0 0
        %5842 = vmatpush1.bf16.msra.mxu0 0
        %5843 = vmatprep.subr.bf16.mxu0 0
        %5844 = vmatpush1.bf16.msra.mxu0 0
        %5845 = vmatprep.subr.bf16.mxu0 0
        %5846 = vmatpush1.bf16.msra.mxu0 0
        %5847 = vmatprep.subr.bf16.mxu0 0
        %5848 = vmatpush1.bf16.msra.mxu0 0
        %5849 = vmatprep.subr.bf16.mxu0 0
        %5850 = vmatpush1.bf16.msra.mxu0 0
        %5851 = vmatprep.subr.bf16.mxu0 0
        %5852 = vmatpush1.bf16.msra.mxu0 0
        %5853 = vmatprep.subr.bf16.mxu0 0
        %5854 = vmatpush1.bf16.msra.mxu0 0
        %5855 = vmatprep.subr.bf16.mxu0 0
        %5856 = vmatpush1.bf16.msra.mxu0 0
        %5857 = vmatprep.subr.bf16.mxu0 0
        %5858 = vmatpush1.bf16.msra.mxu0 0
        %5859 = vmatprep.subr.bf16.mxu0 0
        %5860 = vmatpush1.bf16.msra.mxu0 0
        %5861 = vmatprep.subr.bf16.mxu0 0
        %5862 = vmatpush1.bf16.msra.mxu0 0
        %5863 = vmatprep.mubr.bf16.mxu0 0
        %5864 = vmatmul.mubr.bf16.gmra.mrb[0].mxu0 %v5829
        %v5865 = vpop.f32.mrb[0].mxu0
        %v5866 = vadd.f32 0.0, %v5865
        %v5867 = vpop.f32.mrb[0].mxu0
        %v5868 = vpop.f32.mrb[0].mxu0
        %v5869 = vpop.f32.mrb[0].mxu0
        %5870 = vdwg.mxu0
        %v5872 = vsel %vm1796, %v5687, 0
        %5874 = vmatprep.subr.bf16.mxu0 0
        %5875 = vmatpush1.bf16.msra.mxu0 %v4458
        %5876 = vmatprep.subr.bf16.mxu0 0
        %5877 = vmatpush1.bf16.msra.mxu0 %v4459
        %5878 = vmatprep.subr.bf16.mxu0 0
        %5879 = vmatpush1.bf16.msra.mxu0 0
        %5880 = vmatprep.subr.bf16.mxu0 0
        %5881 = vmatpush1.bf16.msra.mxu0 0
        %5882 = vmatprep.subr.bf16.mxu0 0
        %5883 = vmatpush1.bf16.msra.mxu0 0
        %5884 = vmatprep.subr.bf16.mxu0 0
        %5885 = vmatpush1.bf16.msra.mxu0 0
        %5886 = vmatprep.subr.bf16.mxu0 0
        %5887 = vmatpush1.bf16.msra.mxu0 0
        %5888 = vmatprep.subr.bf16.mxu0 0
        %5889 = vmatpush1.bf16.msra.mxu0 0
        %5890 = vmatprep.subr.bf16.mxu0 0
        %5891 = vmatpush1.bf16.msra.mxu0 0
        %5892 = vmatprep.subr.bf16.mxu0 0
        %5893 = vmatpush1.bf16.msra.mxu0 0
        %5894 = vmatprep.subr.bf16.mxu0 0
        %5895 = vmatpush1.bf16.msra.mxu0 0
        %5896 = vmatprep.subr.bf16.mxu0 0
        %5897 = vmatpush1.bf16.msra.mxu0 0
        %5898 = vmatprep.subr.bf16.mxu0 0
        %5899 = vmatpush1.bf16.msra.mxu0 0
        %5900 = vmatprep.subr.bf16.mxu0 0
        %5901 = vmatpush1.bf16.msra.mxu0 0
        %5902 = vmatprep.subr.bf16.mxu0 0
        %5903 = vmatpush1.bf16.msra.mxu0 0
        %5904 = vmatprep.subr.bf16.mxu0 0
        %5905 = vmatpush1.bf16.msra.mxu0 0
        %5906 = vmatprep.mubr.bf16.mxu0 0
        %5907 = vmatmul.mubr.bf16.gmra.mrb[0].mxu0 %v5872
        %v5908 = vpop.f32.mrb[0].mxu0
        %v5909 = vadd.f32 0.0, %v5908
        %v5910 = vpop.f32.mrb[0].mxu0
        %v5911 = vpop.f32.mrb[0].mxu0
        %v5912 = vpop.f32.mrb[0].mxu0
        %5913 = vdwg.mxu0
        %v5915 = vsel %vm1796, %v5688, 0
        %5917 = vmatprep.subr.bf16.mxu0 0
        %5918 = vmatpush1.bf16.msra.mxu0 %v4460
        %5919 = vmatprep.subr.bf16.mxu0 0
        %5920 = vmatpush1.bf16.msra.mxu0 %v4461
        %5921 = vmatprep.subr.bf16.mxu0 0
        %5922 = vmatpush1.bf16.msra.mxu0 0
        %5923 = vmatprep.subr.bf16.mxu0 0
        %5924 = vmatpush1.bf16.msra.mxu0 0
        %5925 = vmatprep.subr.bf16.mxu0 0
        %5926 = vmatpush1.bf16.msra.mxu0 0
        %5927 = vmatprep.subr.bf16.mxu0 0
        %5928 = vmatpush1.bf16.msra.mxu0 0
        %5929 = vmatprep.subr.bf16.mxu0 0
        %5930 = vmatpush1.bf16.msra.mxu0 0
        %5931 = vmatprep.subr.bf16.mxu0 0
        %5932 = vmatpush1.bf16.msra.mxu0 0
        %5933 = vmatprep.subr.bf16.mxu0 0
        %5934 = vmatpush1.bf16.msra.mxu0 0
        %5935 = vmatprep.subr.bf16.mxu0 0
        %5936 = vmatpush1.bf16.msra.mxu0 0
        %5937 = vmatprep.subr.bf16.mxu0 0
        %5938 = vmatpush1.bf16.msra.mxu0 0
        %5939 = vmatprep.subr.bf16.mxu0 0
        %5940 = vmatpush1.bf16.msra.mxu0 0
        %5941 = vmatprep.subr.bf16.mxu0 0
        %5942 = vmatpush1.bf16.msra.mxu0 0
        %5943 = vmatprep.subr.bf16.mxu0 0
        %5944 = vmatpush1.bf16.msra.mxu0 0
        %5945 = vmatprep.subr.bf16.mxu0 0
        %5946 = vmatpush1.bf16.msra.mxu0 0
        %5947 = vmatprep.subr.bf16.mxu0 0
        %5948 = vmatpush1.bf16.msra.mxu0 0
        %5949 = vmatprep.mubr.bf16.mxu0 0
        %5950 = vmatmul.mubr.bf16.gmra.mrb[0].mxu0 %v5915
        %v5951 = vpop.f32.mrb[0].mxu0
        %v5952 = vadd.f32 0.0, %v5951
        %v5953 = vpop.f32.mrb[0].mxu0
        %v5954 = vpop.f32.mrb[0].mxu0
        %v5955 = vpop.f32.mrb[0].mxu0
        %5956 = vdwg.mxu0
        %v5958 = vsel %vm1796, %v5689, 0
        %5960 = vmatprep.subr.bf16.mxu0 0
        %5961 = vmatpush1.bf16.msra.mxu0 %v4462
        %5962 = vmatprep.subr.bf16.mxu0 0
        %5963 = vmatpush1.bf16.msra.mxu0 %v4463
        %5964 = vmatprep.subr.bf16.mxu0 0
        %5965 = vmatpush1.bf16.msra.mxu0 0
        %5966 = vmatprep.subr.bf16.mxu0 0
        %5967 = vmatpush1.bf16.msra.mxu0 0
        %5968 = vmatprep.subr.bf16.mxu0 0
        %5969 = vmatpush1.bf16.msra.mxu0 0
        %5970 = vmatprep.subr.bf16.mxu0 0
        %5971 = vmatpush1.bf16.msra.mxu0 0
        %5972 = vmatprep.subr.bf16.mxu0 0
        %5973 = vmatpush1.bf16.msra.mxu0 0
        %5974 = vmatprep.subr.bf16.mxu0 0
        %5975 = vmatpush1.bf16.msra.mxu0 0
        %5976 = vmatprep.subr.bf16.mxu0 0
        %5977 = vmatpush1.bf16.msra.mxu0 0
        %5978 = vmatprep.subr.bf16.mxu0 0
        %5979 = vmatpush1.bf16.msra.mxu0 0
        %5980 = vmatprep.subr.bf16.mxu0 0
        %5981 = vmatpush1.bf16.msra.mxu0 0
        %5982 = vmatprep.subr.bf16.mxu0 0
        %5983 = vmatpush1.bf16.msra.mxu0 0
        %5984 = vmatprep.subr.bf16.mxu0 0
        %5985 = vmatpush1.bf16.msra.mxu0 0
        %5986 = vmatprep.subr.bf16.mxu0 0
        %5987 = vmatpush1.bf16.msra.mxu0 0
        %5988 = vmatprep.subr.bf16.mxu0 0
        %5989 = vmatpush1.bf16.msra.mxu0 0
        %5990 = vmatprep.subr.bf16.mxu0 0
        %5991 = vmatpush1.bf16.msra.mxu0 0
        %5992 = vmatprep.mubr.bf16.mxu0 0
        %5993 = vmatmul.mubr.bf16.gmra.mrb[0].mxu0 %v5958
        %v5994 = vpop.f32.mrb[0].mxu0
        %v5995 = vadd.f32 0.0, %v5994
        %v5996 = vpop.f32.mrb[0].mxu0
        %v5997 = vpop.f32.mrb[0].mxu0
        %v5998 = vpop.f32.mrb[0].mxu0
        %5999 = vdwg.mxu0
        %v6001 = vsel %vm1796, %v5690, 0
        %6003 = vmatprep.subr.bf16.mxu0 0
        %6004 = vmatpush1.bf16.msra.mxu0 %v4464
        %6005 = vmatprep.subr.bf16.mxu0 0
        %6006 = vmatpush1.bf16.msra.mxu0 %v4465
        %6007 = vmatprep.subr.bf16.mxu0 0
        %6008 = vmatpush1.bf16.msra.mxu0 0
        %6009 = vmatprep.subr.bf16.mxu0 0
        %6010 = vmatpush1.bf16.msra.mxu0 0
        %6011 = vmatprep.subr.bf16.mxu0 0
        %6012 = vmatpush1.bf16.msra.mxu0 0
        %6013 = vmatprep.subr.bf16.mxu0 0
        %6014 = vmatpush1.bf16.msra.mxu0 0
        %6015 = vmatprep.subr.bf16.mxu0 0
        %6016 = vmatpush1.bf16.msra.mxu0 0
        %6017 = vmatprep.subr.bf16.mxu0 0
        %6018 = vmatpush1.bf16.msra.mxu0 0
        %6019 = vmatprep.subr.bf16.mxu0 0
        %6020 = vmatpush1.bf16.msra.mxu0 0
        %6021 = vmatprep.subr.bf16.mxu0 0
        %6022 = vmatpush1.bf16.msra.mxu0 0
        %6023 = vmatprep.subr.bf16.mxu0 0
        %6024 = vmatpush1.bf16.msra.mxu0 0
        %6025 = vmatprep.subr.bf16.mxu0 0
        %6026 = vmatpush1.bf16.msra.mxu0 0
        %6027 = vmatprep.subr.bf16.mxu0 0
        %6028 = vmatpush1.bf16.msra.mxu0 0
        %6029 = vmatprep.subr.bf16.mxu0 0
        %6030 = vmatpush1.bf16.msra.mxu0 0
        %6031 = vmatprep.subr.bf16.mxu0 0
        %6032 = vmatpush1.bf16.msra.mxu0 0
        %6033 = vmatprep.subr.bf16.mxu0 0
        %6034 = vmatpush1.bf16.msra.mxu0 0
        %6035 = vmatprep.mubr.bf16.mxu0 0
        %6036 = vmatmul.mubr.bf16.gmra.mrb[0].mxu0 %v6001
        %v6037 = vpop.f32.mrb[0].mxu0
        %v6038 = vadd.f32 0.0, %v6037
        %v6039 = vpop.f32.mrb[0].mxu0
        %v6040 = vpop.f32.mrb[0].mxu0
        %v6041 = vpop.f32.mrb[0].mxu0
        %6042 = vdwg.mxu0
        %v6044 = vsel %vm1796, %v5691, 0
        %6046 = vmatprep.subr.bf16.mxu0 0
        %6047 = vmatpush1.bf16.msra.mxu0 %v4466
        %6048 = vmatprep.subr.bf16.mxu0 0
        %6049 = vmatpush1.bf16.msra.mxu0 %v4467
        %6050 = vmatprep.subr.bf16.mxu0 0
        %6051 = vmatpush1.bf16.msra.mxu0 0
        %6052 = vmatprep.subr.bf16.mxu0 0
        %6053 = vmatpush1.bf16.msra.mxu0 0
        %6054 = vmatprep.subr.bf16.mxu0 0
        %6055 = vmatpush1.bf16.msra.mxu0 0
        %6056 = vmatprep.subr.bf16.mxu0 0
        %6057 = vmatpush1.bf16.msra.mxu0 0
        %6058 = vmatprep.subr.bf16.mxu0 0
        %6059 = vmatpush1.bf16.msra.mxu0 0
        %6060 = vmatprep.subr.bf16.mxu0 0
        %6061 = vmatpush1.bf16.msra.mxu0 0
        %6062 = vmatprep.subr.bf16.mxu0 0
        %6063 = vmatpush1.bf16.msra.mxu0 0
        %6064 = vmatprep.subr.bf16.mxu0 0
        %6065 = vmatpush1.bf16.msra.mxu0 0
        %6066 = vmatprep.subr.bf16.mxu0 0
        %6067 = vmatpush1.bf16.msra.mxu0 0
        %6068 = vmatprep.subr.bf16.mxu0 0
        %6069 = vmatpush1.bf16.msra.mxu0 0
        %6070 = vmatprep.subr.bf16.mxu0 0
        %6071 = vmatpush1.bf16.msra.mxu0 0
        %6072 = vmatprep.subr.bf16.mxu0 0
        %6073 = vmatpush1.bf16.msra.mxu0 0
        %6074 = vmatprep.subr.bf16.mxu0 0
        %6075 = vmatpush1.bf16.msra.mxu0 0
        %6076 = vmatprep.subr.bf16.mxu0 0
        %6077 = vmatpush1.bf16.msra.mxu0 0
        %6078 = vmatprep.mubr.bf16.mxu0 0
        %6079 = vmatmul.mubr.bf16.gmra.mrb[0].mxu0 %v6044
        %v6080 = vpop.f32.mrb[0].mxu0
        %v6081 = vadd.f32 0.0, %v6080
        %v6082 = vpop.f32.mrb[0].mxu0
        %v6083 = vpop.f32.mrb[0].mxu0
        %v6084 = vpop.f32.mrb[0].mxu0
        %6085 = vdwg.mxu0
        %v6087 = vsel %vm1796, %v5692, 0
        %6089 = vmatprep.subr.bf16.mxu0 0
        %6090 = vmatpush1.bf16.msra.mxu0 %v4468
        %6091 = vmatprep.subr.bf16.mxu0 0
        %6092 = vmatpush1.bf16.msra.mxu0 %v4469
        %6093 = vmatprep.subr.bf16.mxu0 0
        %6094 = vmatpush1.bf16.msra.mxu0 0
        %6095 = vmatprep.subr.bf16.mxu0 0
        %6096 = vmatpush1.bf16.msra.mxu0 0
        %6097 = vmatprep.subr.bf16.mxu0 0
        %6098 = vmatpush1.bf16.msra.mxu0 0
        %6099 = vmatprep.subr.bf16.mxu0 0
        %6100 = vmatpush1.bf16.msra.mxu0 0
        %6101 = vmatprep.subr.bf16.mxu0 0
        %6102 = vmatpush1.bf16.msra.mxu0 0
        %6103 = vmatprep.subr.bf16.mxu0 0
        %6104 = vmatpush1.bf16.msra.mxu0 0
        %6105 = vmatprep.subr.bf16.mxu0 0
        %6106 = vmatpush1.bf16.msra.mxu0 0
        %6107 = vmatprep.subr.bf16.mxu0 0
        %6108 = vmatpush1.bf16.msra.mxu0 0
        %6109 = vmatprep.subr.bf16.mxu0 0
        %6110 = vmatpush1.bf16.msra.mxu0 0
        %6111 = vmatprep.subr.bf16.mxu0 0
        %6112 = vmatpush1.bf16.msra.mxu0 0
        %6113 = vmatprep.subr.bf16.mxu0 0
        %6114 = vmatpush1.bf16.msra.mxu0 0
        %6115 = vmatprep.subr.bf16.mxu0 0
        %6116 = vmatpush1.bf16.msra.mxu0 0
        %6117 = vmatprep.subr.bf16.mxu0 0
        %6118 = vmatpush1.bf16.msra.mxu0 0
        %6119 = vmatprep.subr.bf16.mxu0 0
        %6120 = vmatpush1.bf16.msra.mxu0 0
        %6121 = vmatprep.mubr.bf16.mxu0 0
        %6122 = vmatmul.mubr.bf16.gmra.mrb[0].mxu0 %v6087
        %v6123 = vpop.f32.mrb[0].mxu0
        %v6124 = vadd.f32 0.0, %v6123
        %v6125 = vpop.f32.mrb[0].mxu0
        %v6126 = vpop.f32.mrb[0].mxu0
        %v6127 = vpop.f32.mrb[0].mxu0
        %6128 = vdwg.mxu0
        %v6130 = vsel %vm1796, %v5693, 0
        %6132 = vmatprep.subr.bf16.mxu0 0
        %6133 = vmatpush1.bf16.msra.mxu0 %v4470
        %6134 = vmatprep.subr.bf16.mxu0 0
        %6135 = vmatpush1.bf16.msra.mxu0 %v4471
        %6136 = vmatprep.subr.bf16.mxu0 0
        %6137 = vmatpush1.bf16.msra.mxu0 0
        %6138 = vmatprep.subr.bf16.mxu0 0
        %6139 = vmatpush1.bf16.msra.mxu0 0
        %6140 = vmatprep.subr.bf16.mxu0 0
        %6141 = vmatpush1.bf16.msra.mxu0 0
        %6142 = vmatprep.subr.bf16.mxu0 0
        %6143 = vmatpush1.bf16.msra.mxu0 0
        %6144 = vmatprep.subr.bf16.mxu0 0
        %6145 = vmatpush1.bf16.msra.mxu0 0
        %6146 = vmatprep.subr.bf16.mxu0 0
        %6147 = vmatpush1.bf16.msra.mxu0 0
        %6148 = vmatprep.subr.bf16.mxu0 0
        %6149 = vmatpush1.bf16.msra.mxu0 0
        %6150 = vmatprep.subr.bf16.mxu0 0
        %6151 = vmatpush1.bf16.msra.mxu0 0
        %6152 = vmatprep.subr.bf16.mxu0 0
        %6153 = vmatpush1.bf16.msra.mxu0 0
        %6154 = vmatprep.subr.bf16.mxu0 0
        %6155 = vmatpush1.bf16.msra.mxu0 0
        %6156 = vmatprep.subr.bf16.mxu0 0
        %6157 = vmatpush1.bf16.msra.mxu0 0
        %6158 = vmatprep.subr.bf16.mxu0 0
        %6159 = vmatpush1.bf16.msra.mxu0 0
        %6160 = vmatprep.subr.bf16.mxu0 0
        %6161 = vmatpush1.bf16.msra.mxu0 0
        %6162 = vmatprep.subr.bf16.mxu0 0
        %6163 = vmatpush1.bf16.msra.mxu0 0
        %6164 = vmatprep.mubr.bf16.mxu0 0
        %6165 = vmatmul.mubr.bf16.gmra.mrb[0].mxu0 %v6130
        %v6166 = vpop.f32.mrb[0].mxu0
        %v6167 = vadd.f32 0.0, %v6166
        %v6168 = vpop.f32.mrb[0].mxu0
        %v6169 = vpop.f32.mrb[0].mxu0
        %v6170 = vpop.f32.mrb[0].mxu0
        %6171 = vdwg.mxu0
        %v6173 = vsel %vm1796, %v5694, 0
        %6175 = vmatprep.subr.bf16.mxu0 0
        %6176 = vmatpush1.bf16.msra.mxu0 %v4472
        %6177 = vmatprep.subr.bf16.mxu0 0
        %6178 = vmatpush1.bf16.msra.mxu0 %v4473
        %6179 = vmatprep.subr.bf16.mxu0 0
        %6180 = vmatpush1.bf16.msra.mxu0 0
        %6181 = vmatprep.subr.bf16.mxu0 0
        %6182 = vmatpush1.bf16.msra.mxu0 0
        %6183 = vmatprep.subr.bf16.mxu0 0
        %6184 = vmatpush1.bf16.msra.mxu0 0
        %6185 = vmatprep.subr.bf16.mxu0 0
        %6186 = vmatpush1.bf16.msra.mxu0 0
        %6187 = vmatprep.subr.bf16.mxu0 0
        %6188 = vmatpush1.bf16.msra.mxu0 0
        %6189 = vmatprep.subr.bf16.mxu0 0
        %6190 = vmatpush1.bf16.msra.mxu0 0
        %6191 = vmatprep.subr.bf16.mxu0 0
        %6192 = vmatpush1.bf16.msra.mxu0 0
        %6193 = vmatprep.subr.bf16.mxu0 0
        %6194 = vmatpush1.bf16.msra.mxu0 0
        %6195 = vmatprep.subr.bf16.mxu0 0
        %6196 = vmatpush1.bf16.msra.mxu0 0
        %6197 = vmatprep.subr.bf16.mxu0 0
        %6198 = vmatpush1.bf16.msra.mxu0 0
        %6199 = vmatprep.subr.bf16.mxu0 0
        %6200 = vmatpush1.bf16.msra.mxu0 0
        %6201 = vmatprep.subr.bf16.mxu0 0
        %6202 = vmatpush1.bf16.msra.mxu0 0
        %6203 = vmatprep.subr.bf16.mxu0 0
        %6204 = vmatpush1.bf16.msra.mxu0 0
        %6205 = vmatprep.subr.bf16.mxu0 0
        %6206 = vmatpush1.bf16.msra.mxu0 0
        %6207 = vmatprep.mubr.bf16.mxu0 0
        %6208 = vmatmul.mubr.bf16.gmra.mrb[0].mxu0 %v6173
        %v6209 = vpop.f32.mrb[0].mxu0
        %v6210 = vadd.f32 0.0, %v6209
        %v6211 = vpop.f32.mrb[0].mxu0
        %v6212 = vpop.f32.mrb[0].mxu0
        %v6213 = vpop.f32.mrb[0].mxu0
        %6214 = vdwg.mxu0
        %v6216 = vsel %vm1796, %v5695, 0
        %6218 = vmatprep.subr.bf16.mxu0 0
        %6219 = vmatpush1.bf16.msra.mxu0 %v4474
        %6220 = vmatprep.subr.bf16.mxu0 0
        %6221 = vmatpush1.bf16.msra.mxu0 %v4475
        %6222 = vmatprep.subr.bf16.mxu0 0
        %6223 = vmatpush1.bf16.msra.mxu0 0
        %6224 = vmatprep.subr.bf16.mxu0 0
        %6225 = vmatpush1.bf16.msra.mxu0 0
        %6226 = vmatprep.subr.bf16.mxu0 0
        %6227 = vmatpush1.bf16.msra.mxu0 0
        %6228 = vmatprep.subr.bf16.mxu0 0
        %6229 = vmatpush1.bf16.msra.mxu0 0
        %6230 = vmatprep.subr.bf16.mxu0 0
        %6231 = vmatpush1.bf16.msra.mxu0 0
        %6232 = vmatprep.subr.bf16.mxu0 0
        %6233 = vmatpush1.bf16.msra.mxu0 0
        %6234 = vmatprep.subr.bf16.mxu0 0
        %6235 = vmatpush1.bf16.msra.mxu0 0
        %6236 = vmatprep.subr.bf16.mxu0 0
        %6237 = vmatpush1.bf16.msra.mxu0 0
        %6238 = vmatprep.subr.bf16.mxu0 0
        %6239 = vmatpush1.bf16.msra.mxu0 0
        %6240 = vmatprep.subr.bf16.mxu0 0
        %6241 = vmatpush1.bf16.msra.mxu0 0
        %6242 = vmatprep.subr.bf16.mxu0 0
        %6243 = vmatpush1.bf16.msra.mxu0 0
        %6244 = vmatprep.subr.bf16.mxu0 0
        %6245 = vmatpush1.bf16.msra.mxu0 0
        %6246 = vmatprep.subr.bf16.mxu0 0
        %6247 = vmatpush1.bf16.msra.mxu0 0
        %6248 = vmatprep.subr.bf16.mxu0 0
        %6249 = vmatpush1.bf16.msra.mxu0 0
        %6250 = vmatprep.mubr.bf16.mxu0 0
        %6251 = vmatmul.mubr.bf16.gmra.mrb[0].mxu0 %v6216
        %v6252 = vpop.f32.mrb[0].mxu0
        %v6253 = vadd.f32 0.0, %v6252
        %v6254 = vpop.f32.mrb[0].mxu0
        %v6255 = vpop.f32.mrb[0].mxu0
        %v6256 = vpop.f32.mrb[0].mxu0
        %6257 = vdwg.mxu0
        %v6259 = vsel %vm1796, %v5696, 0
        %6261 = vmatprep.subr.bf16.mxu0 0
        %6262 = vmatpush1.bf16.msra.mxu0 %v4476
        %6263 = vmatprep.subr.bf16.mxu0 0
        %6264 = vmatpush1.bf16.msra.mxu0 %v4477
        %6265 = vmatprep.subr.bf16.mxu0 0
        %6266 = vmatpush1.bf16.msra.mxu0 0
        %6267 = vmatprep.subr.bf16.mxu0 0
        %6268 = vmatpush1.bf16.msra.mxu0 0
        %6269 = vmatprep.subr.bf16.mxu0 0
        %6270 = vmatpush1.bf16.msra.mxu0 0
        %6271 = vmatprep.subr.bf16.mxu0 0
        %6272 = vmatpush1.bf16.msra.mxu0 0
        %6273 = vmatprep.subr.bf16.mxu0 0
        %6274 = vmatpush1.bf16.msra.mxu0 0
        %6275 = vmatprep.subr.bf16.mxu0 0
        %6276 = vmatpush1.bf16.msra.mxu0 0
        %6277 = vmatprep.subr.bf16.mxu0 0
        %6278 = vmatpush1.bf16.msra.mxu0 0
        %6279 = vmatprep.subr.bf16.mxu0 0
        %6280 = vmatpush1.bf16.msra.mxu0 0
        %6281 = vmatprep.subr.bf16.mxu0 0
        %6282 = vmatpush1.bf16.msra.mxu0 0
        %6283 = vmatprep.subr.bf16.mxu0 0
        %6284 = vmatpush1.bf16.msra.mxu0 0
        %6285 = vmatprep.subr.bf16.mxu0 0
        %6286 = vmatpush1.bf16.msra.mxu0 0
        %6287 = vmatprep.subr.bf16.mxu0 0
        %6288 = vmatpush1.bf16.msra.mxu0 0
        %6289 = vmatprep.subr.bf16.mxu0 0
        %6290 = vmatpush1.bf16.msra.mxu0 0
        %6291 = vmatprep.subr.bf16.mxu0 0
        %6292 = vmatpush1.bf16.msra.mxu0 0
        %6293 = vmatprep.mubr.bf16.mxu0 0
        %6294 = vmatmul.mubr.bf16.gmra.mrb[0].mxu0 %v6259
        %v6295 = vpop.f32.mrb[0].mxu0
        %v6296 = vadd.f32 0.0, %v6295
        %v6297 = vpop.f32.mrb[0].mxu0
        %v6298 = vpop.f32.mrb[0].mxu0
        %v6299 = vpop.f32.mrb[0].mxu0
        %6300 = vdwg.mxu0
        %v6302 = vsel %vm1796, %v5697, 0
        %6304 = vmatprep.subr.bf16.mxu0 0
        %6305 = vmatpush1.bf16.msra.mxu0 %v4478
        %6306 = vmatprep.subr.bf16.mxu0 0
        %6307 = vmatpush1.bf16.msra.mxu0 %v4479
        %6308 = vmatprep.subr.bf16.mxu0 0
        %6309 = vmatpush1.bf16.msra.mxu0 0
        %6310 = vmatprep.subr.bf16.mxu0 0
        %6311 = vmatpush1.bf16.msra.mxu0 0
        %6312 = vmatprep.subr.bf16.mxu0 0
        %6313 = vmatpush1.bf16.msra.mxu0 0
        %6314 = vmatprep.subr.bf16.mxu0 0
        %6315 = vmatpush1.bf16.msra.mxu0 0
        %6316 = vmatprep.subr.bf16.mxu0 0
        %6317 = vmatpush1.bf16.msra.mxu0 0
        %6318 = vmatprep.subr.bf16.mxu0 0
        %6319 = vmatpush1.bf16.msra.mxu0 0
        %6320 = vmatprep.subr.bf16.mxu0 0
        %6321 = vmatpush1.bf16.msra.mxu0 0
        %6322 = vmatprep.subr.bf16.mxu0 0
        %6323 = vmatpush1.bf16.msra.mxu0 0
        %6324 = vmatprep.subr.bf16.mxu0 0
        %6325 = vmatpush1.bf16.msra.mxu0 0
        %6326 = vmatprep.subr.bf16.mxu0 0
        %6327 = vmatpush1.bf16.msra.mxu0 0
        %6328 = vmatprep.subr.bf16.mxu0 0
        %6329 = vmatpush1.bf16.msra.mxu0 0
        %6330 = vmatprep.subr.bf16.mxu0 0
        %6331 = vmatpush1.bf16.msra.mxu0 0
        %6332 = vmatprep.subr.bf16.mxu0 0
        %6333 = vmatpush1.bf16.msra.mxu0 0
        %6334 = vmatprep.subr.bf16.mxu0 0
        %6335 = vmatpush1.bf16.msra.mxu0 0
        %6336 = vmatprep.mubr.bf16.mxu0 0
        %6337 = vmatmul.mubr.bf16.gmra.mrb[0].mxu0 %v6302
        %v6338 = vpop.f32.mrb[0].mxu0
        %v6339 = vadd.f32 0.0, %v6338
        %v6340 = vpop.f32.mrb[0].mxu0
        %v6341 = vpop.f32.mrb[0].mxu0
        %v6342 = vpop.f32.mrb[0].mxu0
        %6343 = vdwg.mxu0
        %v6345 = vsel %vm1796, %v5698, 0
        %6347 = vmatprep.subr.bf16.mxu0 0
        %6348 = vmatpush1.bf16.msra.mxu0 %v4480
        %6349 = vmatprep.subr.bf16.mxu0 0
        %6350 = vmatpush1.bf16.msra.mxu0 %v4481
        %6351 = vmatprep.subr.bf16.mxu0 0
        %6352 = vmatpush1.bf16.msra.mxu0 0
        %6353 = vmatprep.subr.bf16.mxu0 0
        %6354 = vmatpush1.bf16.msra.mxu0 0
        %6355 = vmatprep.subr.bf16.mxu0 0
        %6356 = vmatpush1.bf16.msra.mxu0 0
        %6357 = vmatprep.subr.bf16.mxu0 0
        %6358 = vmatpush1.bf16.msra.mxu0 0
        %6359 = vmatprep.subr.bf16.mxu0 0
        %6360 = vmatpush1.bf16.msra.mxu0 0
        %6361 = vmatprep.subr.bf16.mxu0 0
        %6362 = vmatpush1.bf16.msra.mxu0 0
        %6363 = vmatprep.subr.bf16.mxu0 0
        %6364 = vmatpush1.bf16.msra.mxu0 0
        %6365 = vmatprep.subr.bf16.mxu0 0
        %6366 = vmatpush1.bf16.msra.mxu0 0
        %6367 = vmatprep.subr.bf16.mxu0 0
        %6368 = vmatpush1.bf16.msra.mxu0 0
        %6369 = vmatprep.subr.bf16.mxu0 0
        %6370 = vmatpush1.bf16.msra.mxu0 0
        %6371 = vmatprep.subr.bf16.mxu0 0
        %6372 = vmatpush1.bf16.msra.mxu0 0
        %6373 = vmatprep.subr.bf16.mxu0 0
        %6374 = vmatpush1.bf16.msra.mxu0 0
        %6375 = vmatprep.subr.bf16.mxu0 0
        %6376 = vmatpush1.bf16.msra.mxu0 0
        %6377 = vmatprep.subr.bf16.mxu0 0
        %6378 = vmatpush1.bf16.msra.mxu0 0
        %6379 = vmatprep.mubr.bf16.mxu0 0
        %6380 = vmatmul.mubr.bf16.gmra.mrb[0].mxu0 %v6345
        %v6381 = vpop.f32.mrb[0].mxu0
        %v6382 = vadd.f32 0.0, %v6381
        %v6383 = vpop.f32.mrb[0].mxu0
        %v6384 = vpop.f32.mrb[0].mxu0
        %v6385 = vpop.f32.mrb[0].mxu0
        %6386 = vdwg.mxu0
        %v6387 = vld [vmem:[#allocation5 + $0x380] sm:$0xf]
        %v6388 = vld [vmem:[#allocation5 + $0x388] sm:$0xf]
        %v6389 = vld [vmem:[#allocation5 + $0x390] sm:$0xf]
        %v6390 = vld [vmem:[#allocation5 + $0x398] sm:$0xf]
        %v6391 = vld [vmem:[#allocation5 + $0x3a0] sm:$0xf]
        %v6392 = vld [vmem:[#allocation5 + $0x3a8] sm:$0xf]
        %v6393 = vld [vmem:[#allocation5 + $0x3b0] sm:$0xf]
        %v6394 = vld [vmem:[#allocation5 + $0x3b8] sm:$0xf]
        %v6395 = vld [vmem:[#allocation5 + $0x3c0] sm:$0xf]
        %v6396 = vld [vmem:[#allocation5 + $0x3c8] sm:$0xf]
        %v6397 = vld [vmem:[#allocation5 + $0x3d0] sm:$0xf]
        %v6398 = vld [vmem:[#allocation5 + $0x3d8] sm:$0xf]
        %v6399 = vld [vmem:[#allocation5 + $0x3e0] sm:$0xf]
        %v6400 = vld [vmem:[#allocation5 + $0x3e8] sm:$0xf]
        %v6401 = vld [vmem:[#allocation5 + $0x3f0] sm:$0xf]
        %v6402 = vld [vmem:[#allocation5 + $0x3f8] sm:$0xf]
        %v6403 = vpack.c.bf16 %v5780, %v5737
        %v6404 = vpack.c.bf16 %v5866, %v5823
        %v6405 = vpack.c.bf16 %v5952, %v5909
        %v6406 = vpack.c.bf16 %v6038, %v5995
        %v6407 = vpack.c.bf16 %v6124, %v6081
        %v6408 = vpack.c.bf16 %v6210, %v6167
        %v6409 = vpack.c.bf16 %v6296, %v6253
        %v6410 = vpack.c.bf16 %v6382, %v6339
        %v6427 = vunpack.c.l.b16 %v6387
        %v6428 = vunpack.c.l.b16 %v6388
        %v6429 = vunpack.c.l.b16 %v6389
        %v6430 = vunpack.c.l.b16 %v6390
        %v6431 = vunpack.c.l.b16 %v6391
        %v6432 = vunpack.c.l.b16 %v6392
        %v6433 = vunpack.c.l.b16 %v6393
        %v6434 = vunpack.c.l.b16 %v6394
        %v6435 = vunpack.c.l.b16 %v6395
        %v6436 = vunpack.c.l.b16 %v6396
        %v6437 = vunpack.c.l.b16 %v6397
        %v6438 = vunpack.c.l.b16 %v6398
        %v6439 = vunpack.c.l.b16 %v6399
        %v6440 = vunpack.c.l.b16 %v6400
        %v6441 = vunpack.c.l.b16 %v6401
        %v6442 = vunpack.c.l.b16 %v6402
        %v6443 = vpack.c.b16 %v6428, %v6427
        %v6444 = vpack.c.b16 %v6430, %v6429
        %v6445 = vpack.c.b16 %v6432, %v6431
        %v6446 = vpack.c.b16 %v6434, %v6433
        %v6447 = vpack.c.b16 %v6436, %v6435
        %v6448 = vpack.c.b16 %v6438, %v6437
        %v6449 = vpack.c.b16 %v6440, %v6439
        %v6450 = vpack.c.b16 %v6442, %v6441
        %6459 = vmatprep.subr.bf16.mxu0 0
        %6460 = vmatpush1.bf16.msra.mxu0 %v6443
        %6461 = vmatprep.subr.bf16.mxu0 0
        %6462 = vmatpush1.bf16.msra.mxu0 %v6444
        %6463 = vmatprep.subr.bf16.mxu0 0
        %6464 = vmatpush1.bf16.msra.mxu0 %v6445
        %6465 = vmatprep.subr.bf16.mxu0 0
        %6466 = vmatpush1.bf16.msra.mxu0 %v6446
        %6467 = vmatprep.subr.bf16.mxu0 0
        %6468 = vmatpush1.bf16.msra.mxu0 %v6447
        %6469 = vmatprep.subr.bf16.mxu0 0
        %6470 = vmatpush1.bf16.msra.mxu0 %v6448
        %6471 = vmatprep.subr.bf16.mxu0 0
        %6472 = vmatpush1.bf16.msra.mxu0 %v6449
        %6473 = vmatprep.subr.bf16.mxu0 0
        %6474 = vmatpush1.bf16.msra.mxu0 %v6450
        %6475 = vmatprep.subr.bf16.mxu0 0
        %6476 = vmatpush1.bf16.msra.mxu0 0
        %6477 = vmatprep.subr.bf16.mxu0 0
        %6478 = vmatpush1.bf16.msra.mxu0 0
        %6479 = vmatprep.subr.bf16.mxu0 0
        %6480 = vmatpush1.bf16.msra.mxu0 0
        %6481 = vmatprep.subr.bf16.mxu0 0
        %6482 = vmatpush1.bf16.msra.mxu0 0
        %6483 = vmatprep.subr.bf16.mxu0 0
        %6484 = vmatpush1.bf16.msra.mxu0 0
        %6485 = vmatprep.subr.bf16.mxu0 0
        %6486 = vmatpush1.bf16.msra.mxu0 0
        %6487 = vmatprep.subr.bf16.mxu0 0
        %6488 = vmatpush1.bf16.msra.mxu0 0
        %6489 = vmatprep.subr.bf16.mxu0 0
        %6490 = vmatpush1.bf16.msra.mxu0 0
        %6491 = vmatprep.mubr.bf16.mxu0 0
        %6492 = vmatmul.mubr.bf16.gmra.mrb[0].mxu0 %v6403
        %v6493 = vpop.f32.mrb[0].mxu0
        %v6494 = vadd.f32 0.0, %v6493
        %v6495 = vpop.f32.mrb[0].mxu0
        %v6496 = vpop.f32.mrb[0].mxu0
        %v6497 = vadd.f32 0.0, %v6496
        %v6498 = vpop.f32.mrb[0].mxu0
        %6499 = vmatprep.mubr.bf16.mxu0 0
        %6500 = vmatmul.mubr.bf16.gmra.mrb[0].mxu0 %v6404
        %v6501 = vpop.f32.mrb[0].mxu0
        %v6502 = vadd.f32 0.0, %v6501
        %v6503 = vpop.f32.mrb[0].mxu0
        %v6504 = vpop.f32.mrb[0].mxu0
        %v6505 = vadd.f32 0.0, %v6504
        %v6506 = vpop.f32.mrb[0].mxu0
        %6507 = vmatprep.mubr.bf16.mxu0 0
        %6508 = vmatmul.mubr.bf16.gmra.mrb[0].mxu0 %v6405
        %v6509 = vpop.f32.mrb[0].mxu0
        %v6510 = vadd.f32 0.0, %v6509
        %v6511 = vpop.f32.mrb[0].mxu0
        %v6512 = vpop.f32.mrb[0].mxu0
        %v6513 = vadd.f32 0.0, %v6512
        %v6514 = vpop.f32.mrb[0].mxu0
        %6515 = vmatprep.mubr.bf16.mxu0 0
        %6516 = vmatmul.mubr.bf16.gmra.mrb[0].mxu0 %v6406
        %v6517 = vpop.f32.mrb[0].mxu0
        %v6518 = vadd.f32 0.0, %v6517
        %v6519 = vpop.f32.mrb[0].mxu0
        %v6520 = vpop.f32.mrb[0].mxu0
        %v6521 = vadd.f32 0.0, %v6520
        %v6522 = vpop.f32.mrb[0].mxu0
        %6523 = vmatprep.mubr.bf16.mxu0 0
        %6524 = vmatmul.mubr.bf16.gmra.mrb[0].mxu0 %v6407
        %v6525 = vpop.f32.mrb[0].mxu0
        %v6526 = vadd.f32 0.0, %v6525
        %v6527 = vpop.f32.mrb[0].mxu0
        %v6528 = vpop.f32.mrb[0].mxu0
        %v6529 = vadd.f32 0.0, %v6528
        %v6530 = vpop.f32.mrb[0].mxu0
        %6531 = vmatprep.mubr.bf16.mxu0 0
        %6532 = vmatmul.mubr.bf16.gmra.mrb[0].mxu0 %v6408
        %v6533 = vpop.f32.mrb[0].mxu0
        %v6534 = vadd.f32 0.0, %v6533
        %v6535 = vpop.f32.mrb[0].mxu0
        %v6536 = vpop.f32.mrb[0].mxu0
        %v6537 = vadd.f32 0.0, %v6536
        %v6538 = vpop.f32.mrb[0].mxu0
        %6539 = vmatprep.mubr.bf16.mxu0 0
        %6540 = vmatmul.mubr.bf16.gmra.mrb[0].mxu0 %v6409
        %v6541 = vpop.f32.mrb[0].mxu0
        %v6542 = vadd.f32 0.0, %v6541
        %v6543 = vpop.f32.mrb[0].mxu0
        %v6544 = vpop.f32.mrb[0].mxu0
        %v6545 = vadd.f32 0.0, %v6544
        %v6546 = vpop.f32.mrb[0].mxu0
        %6547 = vmatprep.mubr.bf16.mxu0 0
        %6548 = vmatmul.mubr.bf16.gmra.mrb[0].mxu0 %v6410
        %v6549 = vpop.f32.mrb[0].mxu0
        %v6550 = vadd.f32 0.0, %v6549
        %v6551 = vpop.f32.mrb[0].mxu0
        %v6552 = vpop.f32.mrb[0].mxu0
        %v6553 = vadd.f32 0.0, %v6552
        %v6554 = vpop.f32.mrb[0].mxu0
        %6555 = vdwg.mxu0
        %v6556 = vadd.f32 %v4028, %v6494
        %v6557 = vadd.f32 %v4029, %v6497
        %v6558 = vadd.f32 %v4030, %v6502
        %v6559 = vadd.f32 %v4031, %v6505
        %v6560 = vadd.f32 %v4032, %v6510
        %v6561 = vadd.f32 %v4033, %v6513
        %v6562 = vadd.f32 %v4034, %v6518
        %v6563 = vadd.f32 %v4035, %v6521
        %v6564 = vadd.f32 %v4036, %v6526
        %v6565 = vadd.f32 %v4037, %v6529
        %v6566 = vadd.f32 %v4038, %v6534
        %v6567 = vadd.f32 %v4039, %v6537
        %v6568 = vadd.f32 %v4040, %v6542
        %v6569 = vadd.f32 %v4041, %v6545
        %v6570 = vadd.f32 %v4042, %v6550
        %v6571 = vadd.f32 %v4043, %v6553
        %v6572 = vld [vmem:[#allocation7 + $0x12] ss:$0 sm:$0xff]
        %v6573 = vadd.f32 %v6556, %v6572
        %v6574 = vadd.f32 %v6557, %v6572
        %v6575 = vadd.f32 %v6558, %v6572
        %v6576 = vadd.f32 %v6559, %v6572
        %v6577 = vadd.f32 %v6560, %v6572
        %v6578 = vadd.f32 %v6561, %v6572
        %v6579 = vadd.f32 %v6562, %v6572
        %v6580 = vadd.f32 %v6563, %v6572
        %v6581 = vadd.f32 %v6564, %v6572
        %v6582 = vadd.f32 %v6565, %v6572
        %v6583 = vadd.f32 %v6566, %v6572
        %v6584 = vadd.f32 %v6567, %v6572
        %v6585 = vadd.f32 %v6568, %v6572
        %v6586 = vadd.f32 %v6569, %v6572
        %v6587 = vadd.f32 %v6570, %v6572
        %v6588 = vadd.f32 %v6571, %v6572
        %v6589 = vld [vmem:[#allocation7 + $0x15] ss:$0 sm:$0xff]
        %v6590 = vld [vmem:[#allocation7 + $0x16] ss:$0 sm:$0xff]
        %6591 = vadd.xlane.f32.xlu0 %v6573
        %v6592 = vpop.xlane.xlu0 %6591
        %6593 = vadd.xlane.f32.xlu0 %v6574
        %v6594 = vpop.xlane.xlu0 %6593
        %6595 = vadd.xlane.f32.xlu0 %v6575
        %v6596 = vpop.xlane.xlu0 %6595
        %6597 = vadd.xlane.f32.xlu0 %v6576
        %v6598 = vpop.xlane.xlu0 %6597
        %6599 = vadd.xlane.f32.xlu0 %v6577
        %v6600 = vpop.xlane.xlu0 %6599
        %6601 = vadd.xlane.f32.xlu0 %v6578
        %v6602 = vpop.xlane.xlu0 %6601
        %6603 = vadd.xlane.f32.xlu0 %v6579
        %v6604 = vpop.xlane.xlu0 %6603
        %6605 = vadd.xlane.f32.xlu0 %v6580
        %v6606 = vpop.xlane.xlu0 %6605
        %6607 = vadd.xlane.f32.xlu0 %v6581
        %v6608 = vpop.xlane.xlu0 %6607
        %6609 = vadd.xlane.f32.xlu0 %v6582
        %v6610 = vpop.xlane.xlu0 %6609
        %6611 = vadd.xlane.f32.xlu0 %v6583
        %v6612 = vpop.xlane.xlu0 %6611
        %6613 = vadd.xlane.f32.xlu0 %v6584
        %v6614 = vpop.xlane.xlu0 %6613
        %6615 = vadd.xlane.f32.xlu0 %v6585
        %v6616 = vpop.xlane.xlu0 %6615
        %6617 = vadd.xlane.f32.xlu0 %v6586
        %v6618 = vpop.xlane.xlu0 %6617
        %6619 = vadd.xlane.f32.xlu0 %v6587
        %v6620 = vpop.xlane.xlu0 %6619
        %6621 = vadd.xlane.f32.xlu0 %v6588
        %v6622 = vpop.xlane.xlu0 %6621
        %v6623 = vmul.f32 %v6592, 0.0078125
        %v6624 = vmul.f32 %v6594, 0.0078125
        %v6625 = vmul.f32 %v6596, 0.0078125
        %v6626 = vmul.f32 %v6598, 0.0078125
        %v6627 = vmul.f32 %v6600, 0.0078125
        %v6628 = vmul.f32 %v6602, 0.0078125
        %v6629 = vmul.f32 %v6604, 0.0078125
        %v6630 = vmul.f32 %v6606, 0.0078125
        %v6631 = vmul.f32 %v6608, 0.0078125
        %v6632 = vmul.f32 %v6610, 0.0078125
        %v6633 = vmul.f32 %v6612, 0.0078125
        %v6634 = vmul.f32 %v6614, 0.0078125
        %v6635 = vmul.f32 %v6616, 0.0078125
        %v6636 = vmul.f32 %v6618, 0.0078125
        %v6637 = vmul.f32 %v6620, 0.0078125
        %v6638 = vmul.f32 %v6622, 0.0078125
        %v6639 = vmul.f32 %v6573, %v6573
        %v6640 = vmul.f32 %v6574, %v6574
        %v6641 = vmul.f32 %v6575, %v6575
        %v6642 = vmul.f32 %v6576, %v6576
        %v6643 = vmul.f32 %v6577, %v6577
        %v6644 = vmul.f32 %v6578, %v6578
        %v6645 = vmul.f32 %v6579, %v6579
        %v6646 = vmul.f32 %v6580, %v6580
        %v6647 = vmul.f32 %v6581, %v6581
        %v6648 = vmul.f32 %v6582, %v6582
        %v6649 = vmul.f32 %v6583, %v6583
        %v6650 = vmul.f32 %v6584, %v6584
        %v6651 = vmul.f32 %v6585, %v6585
        %v6652 = vmul.f32 %v6586, %v6586
        %v6653 = vmul.f32 %v6587, %v6587
        %v6654 = vmul.f32 %v6588, %v6588
        %6655 = vadd.xlane.f32.xlu0 %v6639
        %v6656 = vpop.xlane.xlu0 %6655
        %6657 = vadd.xlane.f32.xlu0 %v6640
        %v6658 = vpop.xlane.xlu0 %6657
        %6659 = vadd.xlane.f32.xlu0 %v6641
        %v6660 = vpop.xlane.xlu0 %6659
        %6661 = vadd.xlane.f32.xlu0 %v6642
        %v6662 = vpop.xlane.xlu0 %6661
        %6663 = vadd.xlane.f32.xlu0 %v6643
        %v6664 = vpop.xlane.xlu0 %6663
        %6665 = vadd.xlane.f32.xlu0 %v6644
        %v6666 = vpop.xlane.xlu0 %6665
        %6667 = vadd.xlane.f32.xlu0 %v6645
        %v6668 = vpop.xlane.xlu0 %6667
        %6669 = vadd.xlane.f32.xlu0 %v6646
        %v6670 = vpop.xlane.xlu0 %6669
        %6671 = vadd.xlane.f32.xlu0 %v6647
        %v6672 = vpop.xlane.xlu0 %6671
        %6673 = vadd.xlane.f32.xlu0 %v6648
        %v6674 = vpop.xlane.xlu0 %6673
        %6675 = vadd.xlane.f32.xlu0 %v6649
        %v6676 = vpop.xlane.xlu0 %6675
        %6677 = vadd.xlane.f32.xlu0 %v6650
        %v6678 = vpop.xlane.xlu0 %6677
        %6679 = vadd.xlane.f32.xlu0 %v6651
        %v6680 = vpop.xlane.xlu0 %6679
        %6681 = vadd.xlane.f32.xlu0 %v6652
        %v6682 = vpop.xlane.xlu0 %6681
        %6683 = vadd.xlane.f32.xlu0 %v6653
        %v6684 = vpop.xlane.xlu0 %6683
        %6685 = vadd.xlane.f32.xlu0 %v6654
        %v6686 = vpop.xlane.xlu0 %6685
        %v6687 = vmul.f32 %v6656, 0.0078125
        %v6688 = vmul.f32 %v6658, 0.0078125
        %v6689 = vmul.f32 %v6660, 0.0078125
        %v6690 = vmul.f32 %v6662, 0.0078125
        %v6691 = vmul.f32 %v6664, 0.0078125
        %v6692 = vmul.f32 %v6666, 0.0078125
        %v6693 = vmul.f32 %v6668, 0.0078125
        %v6694 = vmul.f32 %v6670, 0.0078125
        %v6695 = vmul.f32 %v6672, 0.0078125
        %v6696 = vmul.f32 %v6674, 0.0078125
        %v6697 = vmul.f32 %v6676, 0.0078125
        %v6698 = vmul.f32 %v6678, 0.0078125
        %v6699 = vmul.f32 %v6680, 0.0078125
        %v6700 = vmul.f32 %v6682, 0.0078125
        %v6701 = vmul.f32 %v6684, 0.0078125
        %v6702 = vmul.f32 %v6686, 0.0078125
        %v6703 = vmul.f32 %v6623, %v6623
        %v6704 = vmul.f32 %v6624, %v6624
        %v6705 = vmul.f32 %v6625, %v6625
        %v6706 = vmul.f32 %v6626, %v6626
        %v6707 = vmul.f32 %v6627, %v6627
        %v6708 = vmul.f32 %v6628, %v6628
        %v6709 = vmul.f32 %v6629, %v6629
        %v6710 = vmul.f32 %v6630, %v6630
        %v6711 = vmul.f32 %v6631, %v6631
        %v6712 = vmul.f32 %v6632, %v6632
        %v6713 = vmul.f32 %v6633, %v6633
        %v6714 = vmul.f32 %v6634, %v6634
        %v6715 = vmul.f32 %v6635, %v6635
        %v6716 = vmul.f32 %v6636, %v6636
        %v6717 = vmul.f32 %v6637, %v6637
        %v6718 = vmul.f32 %v6638, %v6638
        %v6719 = vsub.f32 %v6687, %v6703
        %v6720 = vsub.f32 %v6688, %v6704
        %v6721 = vsub.f32 %v6689, %v6705
        %v6722 = vsub.f32 %v6690, %v6706
        %v6723 = vsub.f32 %v6691, %v6707
        %v6724 = vsub.f32 %v6692, %v6708
        %v6725 = vsub.f32 %v6693, %v6709
        %v6726 = vsub.f32 %v6694, %v6710
        %v6727 = vsub.f32 %v6695, %v6711
        %v6728 = vsub.f32 %v6696, %v6712
        %v6729 = vsub.f32 %v6697, %v6713
        %v6730 = vsub.f32 %v6698, %v6714
        %v6731 = vsub.f32 %v6699, %v6715
        %v6732 = vsub.f32 %v6700, %v6716
        %v6733 = vsub.f32 %v6701, %v6717
        %v6734 = vsub.f32 %v6702, %v6718
        %v6735 = vsub.f32 %v6573, %v6623
        %v6736 = vsub.f32 %v6574, %v6624
        %v6737 = vsub.f32 %v6575, %v6625
        %v6738 = vsub.f32 %v6576, %v6626
        %v6739 = vsub.f32 %v6577, %v6627
        %v6740 = vsub.f32 %v6578, %v6628
        %v6741 = vsub.f32 %v6579, %v6629
        %v6742 = vsub.f32 %v6580, %v6630
        %v6743 = vsub.f32 %v6581, %v6631
        %v6744 = vsub.f32 %v6582, %v6632
        %v6745 = vsub.f32 %v6583, %v6633
        %v6746 = vsub.f32 %v6584, %v6634
        %v6747 = vsub.f32 %v6585, %v6635
        %v6748 = vsub.f32 %v6586, %v6636
        %v6749 = vsub.f32 %v6587, %v6637
        %v6750 = vsub.f32 %v6588, %v6638
        %v6751 = vadd.f32 %v6719, 1e-05
        %v6752 = vadd.f32 %v6720, 1e-05
        %v6753 = vadd.f32 %v6721, 1e-05
        %v6754 = vadd.f32 %v6722, 1e-05
        %v6755 = vadd.f32 %v6723, 1e-05
        %v6756 = vadd.f32 %v6724, 1e-05
        %v6757 = vadd.f32 %v6725, 1e-05
        %v6758 = vadd.f32 %v6726, 1e-05
        %v6759 = vadd.f32 %v6727, 1e-05
        %v6760 = vadd.f32 %v6728, 1e-05
        %v6761 = vadd.f32 %v6729, 1e-05
        %v6762 = vadd.f32 %v6730, 1e-05
        %v6763 = vadd.f32 %v6731, 1e-05
        %v6764 = vadd.f32 %v6732, 1e-05
        %v6765 = vadd.f32 %v6733, 1e-05
        %v6766 = vadd.f32 %v6734, 1e-05
        %v6767 = vrsqrt.pop %v6751
        %v6768 = vrsqrt.pop %v6752
        %v6769 = vrsqrt.pop %v6753
        %v6770 = vrsqrt.pop %v6754
        %v6771 = vrsqrt.pop %v6755
        %v6772 = vrsqrt.pop %v6756
        %v6773 = vrsqrt.pop %v6757
        %v6774 = vrsqrt.pop %v6758
        %v6775 = vrsqrt.pop %v6759
        %v6776 = vrsqrt.pop %v6760
        %v6777 = vrsqrt.pop %v6761
        %v6778 = vrsqrt.pop %v6762
        %v6779 = vrsqrt.pop %v6763
        %v6780 = vrsqrt.pop %v6764
        %v6781 = vrsqrt.pop %v6765
        %v6782 = vrsqrt.pop %v6766
        %v6783 = vmul.f32 %v6735, %v6767
        %v6784 = vmul.f32 %v6736, %v6768
        %v6785 = vmul.f32 %v6737, %v6769
        %v6786 = vmul.f32 %v6738, %v6770
        %v6787 = vmul.f32 %v6739, %v6771
        %v6788 = vmul.f32 %v6740, %v6772
        %v6789 = vmul.f32 %v6741, %v6773
        %v6790 = vmul.f32 %v6742, %v6774
        %v6791 = vmul.f32 %v6743, %v6775
        %v6792 = vmul.f32 %v6744, %v6776
        %v6793 = vmul.f32 %v6745, %v6777
        %v6794 = vmul.f32 %v6746, %v6778
        %v6795 = vmul.f32 %v6747, %v6779
        %v6796 = vmul.f32 %v6748, %v6780
        %v6797 = vmul.f32 %v6749, %v6781
        %v6798 = vmul.f32 %v6750, %v6782
        %v6799 = vmul.f32 %v6783, %v6589
        %v6800 = vmul.f32 %v6784, %v6589
        %v6801 = vmul.f32 %v6785, %v6589
        %v6802 = vmul.f32 %v6786, %v6589
        %v6803 = vmul.f32 %v6787, %v6589
        %v6804 = vmul.f32 %v6788, %v6589
        %v6805 = vmul.f32 %v6789, %v6589
        %v6806 = vmul.f32 %v6790, %v6589
        %v6807 = vmul.f32 %v6791, %v6589
        %v6808 = vmul.f32 %v6792, %v6589
        %v6809 = vmul.f32 %v6793, %v6589
        %v6810 = vmul.f32 %v6794, %v6589
        %v6811 = vmul.f32 %v6795, %v6589
        %v6812 = vmul.f32 %v6796, %v6589
        %v6813 = vmul.f32 %v6797, %v6589
        %v6814 = vmul.f32 %v6798, %v6589
        %v6815 = vadd.f32 %v6799, %v6590
        %v6816 = vadd.f32 %v6800, %v6590
        %v6817 = vadd.f32 %v6801, %v6590
        %v6818 = vadd.f32 %v6802, %v6590
        %v6819 = vadd.f32 %v6803, %v6590
        %v6820 = vadd.f32 %v6804, %v6590
        %v6821 = vadd.f32 %v6805, %v6590
        %v6822 = vadd.f32 %v6806, %v6590
        %v6823 = vadd.f32 %v6807, %v6590
        %v6824 = vadd.f32 %v6808, %v6590
        %v6825 = vadd.f32 %v6809, %v6590
        %v6826 = vadd.f32 %v6810, %v6590
        %v6827 = vadd.f32 %v6811, %v6590
        %v6828 = vadd.f32 %v6812, %v6590
        %v6829 = vadd.f32 %v6813, %v6590
        %v6830 = vadd.f32 %v6814, %v6590
        %v6831 = vld [vmem:[#allocation5 + $0x400] sm:$0xff]
        %v6832 = vld [vmem:[#allocation5 + $0x408] sm:$0xff]
        %v6833 = vld [vmem:[#allocation5 + $0x410] sm:$0xff]
        %v6834 = vld [vmem:[#allocation5 + $0x418] sm:$0xff]
        %v6835 = vld [vmem:[#allocation5 + $0x420] sm:$0xff]
        %v6836 = vld [vmem:[#allocation5 + $0x428] sm:$0xff]
        %v6837 = vld [vmem:[#allocation5 + $0x430] sm:$0xff]
        %v6838 = vld [vmem:[#allocation5 + $0x438] sm:$0xff]
        %v6839 = vld [vmem:[#allocation5 + $0x440] sm:$0xff]
        %v6840 = vld [vmem:[#allocation5 + $0x448] sm:$0xff]
        %v6841 = vld [vmem:[#allocation5 + $0x450] sm:$0xff]
        %v6842 = vld [vmem:[#allocation5 + $0x458] sm:$0xff]
        %v6843 = vld [vmem:[#allocation5 + $0x460] sm:$0xff]
        %v6844 = vld [vmem:[#allocation5 + $0x468] sm:$0xff]
        %v6845 = vld [vmem:[#allocation5 + $0x470] sm:$0xff]
        %v6846 = vld [vmem:[#allocation5 + $0x478] sm:$0xff]
        %v6847 = vpack.c.bf16 %v6816, %v6815
        %v6848 = vpack.c.bf16 %v6818, %v6817
        %v6849 = vpack.c.bf16 %v6820, %v6819
        %v6850 = vpack.c.bf16 %v6822, %v6821
        %v6851 = vpack.c.bf16 %v6824, %v6823
        %v6852 = vpack.c.bf16 %v6826, %v6825
        %v6853 = vpack.c.bf16 %v6828, %v6827
        %v6854 = vpack.c.bf16 %v6830, %v6829
        %s6855 = scalar_lea.vmem [#allocation7], 19
        %v6856 = vld [vmem:[%s6855] ss:$8 sm:$0x3]
        %v6858 = vlaneseq
        %v6859 = vshrl.u32 %v6858, 7
        %v6860 = vsub.s32 0, %v6859
        %v6861 = vrot.slane %v6856, %v6860
        %v6862 = vlaneseq
        %v6863 = vshrl.u32 %v6862, 7
        %v6864 = vsub.s32 1, %v6863
        %v6865 = vrot.slane %v6856, %v6864
        %v6884 = vunpack.c.l.b16 %v6831
        %v6885 = vunpack.c.h.b16 %v6831
        %v6886 = vunpack.c.l.b16 %v6832
        %v6887 = vunpack.c.h.b16 %v6832
        %v6888 = vunpack.c.l.b16 %v6833
        %v6889 = vunpack.c.h.b16 %v6833
        %v6890 = vunpack.c.l.b16 %v6834
        %v6891 = vunpack.c.h.b16 %v6834
        %v6892 = vunpack.c.l.b16 %v6835
        %v6893 = vunpack.c.h.b16 %v6835
        %v6894 = vunpack.c.l.b16 %v6836
        %v6895 = vunpack.c.h.b16 %v6836
        %v6896 = vunpack.c.l.b16 %v6837
        %v6897 = vunpack.c.h.b16 %v6837
        %v6898 = vunpack.c.l.b16 %v6838
        %v6899 = vunpack.c.h.b16 %v6838
        %v6900 = vunpack.c.l.b16 %v6839
        %v6901 = vunpack.c.h.b16 %v6839
        %v6902 = vunpack.c.l.b16 %v6840
        %v6903 = vunpack.c.h.b16 %v6840
        %v6904 = vunpack.c.l.b16 %v6841
        %v6905 = vunpack.c.h.b16 %v6841
        %v6906 = vunpack.c.l.b16 %v6842
        %v6907 = vunpack.c.h.b16 %v6842
        %v6908 = vunpack.c.l.b16 %v6843
        %v6909 = vunpack.c.h.b16 %v6843
        %v6910 = vunpack.c.l.b16 %v6844
        %v6911 = vunpack.c.h.b16 %v6844
        %v6912 = vunpack.c.l.b16 %v6845
        %v6913 = vunpack.c.h.b16 %v6845
        %v6914 = vunpack.c.l.b16 %v6846
        %v6915 = vunpack.c.h.b16 %v6846
        %v6916 = vpack.c.b16 %v6886, %v6884
        %v6917 = vpack.c.b16 %v6887, %v6885
        %v6918 = vpack.c.b16 %v6890, %v6888
        %v6919 = vpack.c.b16 %v6891, %v6889
        %v6920 = vpack.c.b16 %v6894, %v6892
        %v6921 = vpack.c.b16 %v6895, %v6893
        %v6922 = vpack.c.b16 %v6898, %v6896
        %v6923 = vpack.c.b16 %v6899, %v6897
        %v6924 = vpack.c.b16 %v6902, %v6900
        %v6925 = vpack.c.b16 %v6903, %v6901
        %v6926 = vpack.c.b16 %v6906, %v6904
        %v6927 = vpack.c.b16 %v6907, %v6905
        %v6928 = vpack.c.b16 %v6910, %v6908
        %v6929 = vpack.c.b16 %v6911, %v6909
        %v6930 = vpack.c.b16 %v6914, %v6912
        %v6931 = vpack.c.b16 %v6915, %v6913
        %6948 = vmatprep.subr.bf16.mxu0 %v6917
        %6949 = vmatpush1.bf16.msra.mxu0 %v6916
        %6950 = vmatprep.subr.bf16.mxu0 %v6919
        %6951 = vmatpush1.bf16.msra.mxu0 %v6918
        %6952 = vmatprep.subr.bf16.mxu0 %v6921
        %6953 = vmatpush1.bf16.msra.mxu0 %v6920
        %6954 = vmatprep.subr.bf16.mxu0 %v6923
        %6955 = vmatpush1.bf16.msra.mxu0 %v6922
        %6956 = vmatprep.subr.bf16.mxu0 %v6925
        %6957 = vmatpush1.bf16.msra.mxu0 %v6924
        %6958 = vmatprep.subr.bf16.mxu0 %v6927
        %6959 = vmatpush1.bf16.msra.mxu0 %v6926
        %6960 = vmatprep.subr.bf16.mxu0 %v6929
        %6961 = vmatpush1.bf16.msra.mxu0 %v6928
        %6962 = vmatprep.subr.bf16.mxu0 %v6931
        %6963 = vmatpush1.bf16.msra.mxu0 %v6930
        %6964 = vmatprep.subr.bf16.mxu0 0
        %6965 = vmatpush1.bf16.msra.mxu0 0
        %6966 = vmatprep.subr.bf16.mxu0 0
        %6967 = vmatpush1.bf16.msra.mxu0 0
        %6968 = vmatprep.subr.bf16.mxu0 0
        %6969 = vmatpush1.bf16.msra.mxu0 0
        %6970 = vmatprep.subr.bf16.mxu0 0
        %6971 = vmatpush1.bf16.msra.mxu0 0
        %6972 = vmatprep.subr.bf16.mxu0 0
        %6973 = vmatpush1.bf16.msra.mxu0 0
        %6974 = vmatprep.subr.bf16.mxu0 0
        %6975 = vmatpush1.bf16.msra.mxu0 0
        %6976 = vmatprep.subr.bf16.mxu0 0
        %6977 = vmatpush1.bf16.msra.mxu0 0
        %6978 = vmatprep.subr.bf16.mxu0 0
        %6979 = vmatpush1.bf16.msra.mxu0 0
        %6980 = vmatprep.mubr.bf16.mxu0 0
        %6981 = vmatmul.mubr.bf16.gmra.mrb[0].mxu0 %v6847
        %v6982 = vpop.f32.mrb[0].mxu0
        %v6983 = vadd.f32 %v6861, %v6982
        %v6984 = vpop.f32.mrb[0].mxu0
        %v6985 = vadd.f32 %v6865, %v6984
        %v6986 = vpop.f32.mrb[0].mxu0
        %v6987 = vadd.f32 %v6861, %v6986
        %v6988 = vpop.f32.mrb[0].mxu0
        %v6989 = vadd.f32 %v6865, %v6988
        %6990 = vmatprep.mubr.bf16.mxu0 0
        %6991 = vmatmul.mubr.bf16.gmra.mrb[0].mxu0 %v6848
        %v6992 = vpop.f32.mrb[0].mxu0
        %v6993 = vadd.f32 %v6861, %v6992
        %v6994 = vpop.f32.mrb[0].mxu0
        %v6995 = vadd.f32 %v6865, %v6994
        %v6996 = vpop.f32.mrb[0].mxu0
        %v6997 = vadd.f32 %v6861, %v6996
        %v6998 = vpop.f32.mrb[0].mxu0
        %v6999 = vadd.f32 %v6865, %v6998
        %7000 = vmatprep.mubr.bf16.mxu0 0
        %7001 = vmatmul.mubr.bf16.gmra.mrb[0].mxu0 %v6849
        %v7002 = vpop.f32.mrb[0].mxu0
        %v7003 = vadd.f32 %v6861, %v7002
        %v7004 = vpop.f32.mrb[0].mxu0
        %v7005 = vadd.f32 %v6865, %v7004
        %v7006 = vpop.f32.mrb[0].mxu0
        %v7007 = vadd.f32 %v6861, %v7006
        %v7008 = vpop.f32.mrb[0].mxu0
        %v7009 = vadd.f32 %v6865, %v7008
        %7010 = vmatprep.mubr.bf16.mxu0 0
        %7011 = vmatmul.mubr.bf16.gmra.mrb[0].mxu0 %v6850
        %v7012 = vpop.f32.mrb[0].mxu0
        %v7013 = vadd.f32 %v6861, %v7012
        %v7014 = vpop.f32.mrb[0].mxu0
        %v7015 = vadd.f32 %v6865, %v7014
        %v7016 = vpop.f32.mrb[0].mxu0
        %v7017 = vadd.f32 %v6861, %v7016
        %v7018 = vpop.f32.mrb[0].mxu0
        %v7019 = vadd.f32 %v6865, %v7018
        %7020 = vmatprep.mubr.bf16.mxu0 0
        %7021 = vmatmul.mubr.bf16.gmra.mrb[0].mxu0 %v6851
        %v7022 = vpop.f32.mrb[0].mxu0
        %v7023 = vadd.f32 %v6861, %v7022
        %v7024 = vpop.f32.mrb[0].mxu0
        %v7025 = vadd.f32 %v6865, %v7024
        %v7026 = vpop.f32.mrb[0].mxu0
        %v7027 = vadd.f32 %v6861, %v7026
        %v7028 = vpop.f32.mrb[0].mxu0
        %v7029 = vadd.f32 %v6865, %v7028
        %7030 = vmatprep.mubr.bf16.mxu0 0
        %7031 = vmatmul.mubr.bf16.gmra.mrb[0].mxu0 %v6852
        %v7032 = vpop.f32.mrb[0].mxu0
        %v7033 = vadd.f32 %v6861, %v7032
        %v7034 = vpop.f32.mrb[0].mxu0
        %v7035 = vadd.f32 %v6865, %v7034
        %v7036 = vpop.f32.mrb[0].mxu0
        %v7037 = vadd.f32 %v6861, %v7036
        %v7038 = vpop.f32.mrb[0].mxu0
        %v7039 = vadd.f32 %v6865, %v7038
        %7040 = vmatprep.mubr.bf16.mxu0 0
        %7041 = vmatmul.mubr.bf16.gmra.mrb[0].mxu0 %v6853
        %v7042 = vpop.f32.mrb[0].mxu0
        %v7043 = vadd.f32 %v6861, %v7042
        %v7044 = vpop.f32.mrb[0].mxu0
        %v7045 = vadd.f32 %v6865, %v7044
        %v7046 = vpop.f32.mrb[0].mxu0
        %v7047 = vadd.f32 %v6861, %v7046
        %v7048 = vpop.f32.mrb[0].mxu0
        %v7049 = vadd.f32 %v6865, %v7048
        %7050 = vmatprep.mubr.bf16.mxu0 0
        %7051 = vmatmul.mubr.bf16.gmra.mrb[0].mxu0 %v6854
        %v7052 = vpop.f32.mrb[0].mxu0
        %v7053 = vadd.f32 %v6861, %v7052
        %v7054 = vpop.f32.mrb[0].mxu0
        %v7055 = vadd.f32 %v6865, %v7054
        %v7056 = vpop.f32.mrb[0].mxu0
        %v7057 = vadd.f32 %v6861, %v7056
        %v7058 = vpop.f32.mrb[0].mxu0
        %v7059 = vadd.f32 %v6865, %v7058
        %7060 = vdwg.mxu0
        %v7061 = vmax.f32 %v6983, 0.0
        %v7062 = vmax.f32 %v6985, 0.0
        %v7063 = vmax.f32 %v6987, 0.0
        %v7064 = vmax.f32 %v6989, 0.0
        %v7065 = vmax.f32 %v6993, 0.0
        %v7066 = vmax.f32 %v6995, 0.0
        %v7067 = vmax.f32 %v6997, 0.0
        %v7068 = vmax.f32 %v6999, 0.0
        %v7069 = vmax.f32 %v7003, 0.0
        %v7070 = vmax.f32 %v7005, 0.0
        %v7071 = vmax.f32 %v7007, 0.0
        %v7072 = vmax.f32 %v7009, 0.0
        %v7073 = vmax.f32 %v7013, 0.0
        %v7074 = vmax.f32 %v7015, 0.0
        %v7075 = vmax.f32 %v7017, 0.0
        %v7076 = vmax.f32 %v7019, 0.0
        %v7077 = vmax.f32 %v7023, 0.0
        %v7078 = vmax.f32 %v7025, 0.0
        %v7079 = vmax.f32 %v7027, 0.0
        %v7080 = vmax.f32 %v7029, 0.0
        %v7081 = vmax.f32 %v7033, 0.0
        %v7082 = vmax.f32 %v7035, 0.0
        %v7083 = vmax.f32 %v7037, 0.0
        %v7084 = vmax.f32 %v7039, 0.0
        %v7085 = vmax.f32 %v7043, 0.0
        %v7086 = vmax.f32 %v7045, 0.0
        %v7087 = vmax.f32 %v7047, 0.0
        %v7088 = vmax.f32 %v7049, 0.0
        %v7089 = vmax.f32 %v7053, 0.0
        %v7090 = vmax.f32 %v7055, 0.0
        %v7091 = vmax.f32 %v7057, 0.0
        %v7092 = vmax.f32 %v7059, 0.0
        %v7093 = vld [vmem:[#allocation5 + $0x480] sm:$0xf]
        %v7094 = vld [vmem:[#allocation5 + $0x488] sm:$0xf]
        %v7095 = vld [vmem:[#allocation5 + $0x490] sm:$0xf]
        %v7096 = vld [vmem:[#allocation5 + $0x498] sm:$0xf]
        %v7097 = vld [vmem:[#allocation5 + $0x4a0] sm:$0xf]
        %v7098 = vld [vmem:[#allocation5 + $0x4a8] sm:$0xf]
        %v7099 = vld [vmem:[#allocation5 + $0x4b0] sm:$0xf]
        %v7100 = vld [vmem:[#allocation5 + $0x4b8] sm:$0xf]
        %v7101 = vld [vmem:[#allocation5 + $0x4c0] sm:$0xf]
        %v7102 = vld [vmem:[#allocation5 + $0x4c8] sm:$0xf]
        %v7103 = vld [vmem:[#allocation5 + $0x4d0] sm:$0xf]
        %v7104 = vld [vmem:[#allocation5 + $0x4d8] sm:$0xf]
        %v7105 = vld [vmem:[#allocation5 + $0x4e0] sm:$0xf]
        %v7106 = vld [vmem:[#allocation5 + $0x4e8] sm:$0xf]
        %v7107 = vld [vmem:[#allocation5 + $0x4f0] sm:$0xf]
        %v7108 = vld [vmem:[#allocation5 + $0x4f8] sm:$0xf]
        %v7109 = vld [vmem:[#allocation5 + $0x500] sm:$0xf]
        %v7110 = vld [vmem:[#allocation5 + $0x508] sm:$0xf]
        %v7111 = vld [vmem:[#allocation5 + $0x510] sm:$0xf]
        %v7112 = vld [vmem:[#allocation5 + $0x518] sm:$0xf]
        %v7113 = vld [vmem:[#allocation5 + $0x520] sm:$0xf]
        %v7114 = vld [vmem:[#allocation5 + $0x528] sm:$0xf]
        %v7115 = vld [vmem:[#allocation5 + $0x530] sm:$0xf]
        %v7116 = vld [vmem:[#allocation5 + $0x538] sm:$0xf]
        %v7117 = vld [vmem:[#allocation5 + $0x540] sm:$0xf]
        %v7118 = vld [vmem:[#allocation5 + $0x548] sm:$0xf]
        %v7119 = vld [vmem:[#allocation5 + $0x550] sm:$0xf]
        %v7120 = vld [vmem:[#allocation5 + $0x558] sm:$0xf]
        %v7121 = vld [vmem:[#allocation5 + $0x560] sm:$0xf]
        %v7122 = vld [vmem:[#allocation5 + $0x568] sm:$0xf]
        %v7123 = vld [vmem:[#allocation5 + $0x570] sm:$0xf]
        %v7124 = vld [vmem:[#allocation5 + $0x578] sm:$0xf]
        %v7125 = vpack.c.bf16 %v7063, %v7061
        %v7126 = vpack.c.bf16 %v7064, %v7062
        %v7127 = vpack.c.bf16 %v7067, %v7065
        %v7128 = vpack.c.bf16 %v7068, %v7066
        %v7129 = vpack.c.bf16 %v7071, %v7069
        %v7130 = vpack.c.bf16 %v7072, %v7070
        %v7131 = vpack.c.bf16 %v7075, %v7073
        %v7132 = vpack.c.bf16 %v7076, %v7074
        %v7133 = vpack.c.bf16 %v7079, %v7077
        %v7134 = vpack.c.bf16 %v7080, %v7078
        %v7135 = vpack.c.bf16 %v7083, %v7081
        %v7136 = vpack.c.bf16 %v7084, %v7082
        %v7137 = vpack.c.bf16 %v7087, %v7085
        %v7138 = vpack.c.bf16 %v7088, %v7086
        %v7139 = vpack.c.bf16 %v7091, %v7089
        %v7140 = vpack.c.bf16 %v7092, %v7090
        %v7173 = vunpack.c.l.b16 %v7093
        %v7174 = vunpack.c.l.b16 %v7094
        %v7175 = vunpack.c.l.b16 %v7095
        %v7176 = vunpack.c.l.b16 %v7096
        %v7177 = vunpack.c.l.b16 %v7097
        %v7178 = vunpack.c.l.b16 %v7098
        %v7179 = vunpack.c.l.b16 %v7099
        %v7180 = vunpack.c.l.b16 %v7100
        %v7181 = vunpack.c.l.b16 %v7101
        %v7182 = vunpack.c.l.b16 %v7102
        %v7183 = vunpack.c.l.b16 %v7103
        %v7184 = vunpack.c.l.b16 %v7104
        %v7185 = vunpack.c.l.b16 %v7105
        %v7186 = vunpack.c.l.b16 %v7106
        %v7187 = vunpack.c.l.b16 %v7107
        %v7188 = vunpack.c.l.b16 %v7108
        %v7189 = vunpack.c.l.b16 %v7109
        %v7190 = vunpack.c.l.b16 %v7110
        %v7191 = vunpack.c.l.b16 %v7111
        %v7192 = vunpack.c.l.b16 %v7112
        %v7193 = vunpack.c.l.b16 %v7113
        %v7194 = vunpack.c.l.b16 %v7114
        %v7195 = vunpack.c.l.b16 %v7115
        %v7196 = vunpack.c.l.b16 %v7116
        %v7197 = vunpack.c.l.b16 %v7117
        %v7198 = vunpack.c.l.b16 %v7118
        %v7199 = vunpack.c.l.b16 %v7119
        %v7200 = vunpack.c.l.b16 %v7120
        %v7201 = vunpack.c.l.b16 %v7121
        %v7202 = vunpack.c.l.b16 %v7122
        %v7203 = vunpack.c.l.b16 %v7123
        %v7204 = vunpack.c.l.b16 %v7124
        %v7205 = vpack.c.b16 %v7174, %v7173
        %v7206 = vpack.c.b16 %v7176, %v7175
        %v7207 = vpack.c.b16 %v7178, %v7177
        %v7208 = vpack.c.b16 %v7180, %v7179
        %v7209 = vpack.c.b16 %v7182, %v7181
        %v7210 = vpack.c.b16 %v7184, %v7183
        %v7211 = vpack.c.b16 %v7186, %v7185
        %v7212 = vpack.c.b16 %v7188, %v7187
        %v7213 = vpack.c.b16 %v7190, %v7189
        %v7214 = vpack.c.b16 %v7192, %v7191
        %v7215 = vpack.c.b16 %v7194, %v7193
        %v7216 = vpack.c.b16 %v7196, %v7195
        %v7217 = vpack.c.b16 %v7198, %v7197
        %v7218 = vpack.c.b16 %v7200, %v7199
        %v7219 = vpack.c.b16 %v7202, %v7201
        %v7220 = vpack.c.b16 %v7204, %v7203
        %7237 = vmatprep.subr.bf16.mxu0 0
        %7238 = vmatpush1.bf16.msra.mxu0 %v7205
        %7239 = vmatprep.subr.bf16.mxu0 0
        %7240 = vmatpush1.bf16.msra.mxu0 %v7206
        %7241 = vmatprep.subr.bf16.mxu0 0
        %7242 = vmatpush1.bf16.msra.mxu0 %v7207
        %7243 = vmatprep.subr.bf16.mxu0 0
        %7244 = vmatpush1.bf16.msra.mxu0 %v7208
        %7245 = vmatprep.subr.bf16.mxu0 0
        %7246 = vmatpush1.bf16.msra.mxu0 %v7209
        %7247 = vmatprep.subr.bf16.mxu0 0
        %7248 = vmatpush1.bf16.msra.mxu0 %v7210
        %7249 = vmatprep.subr.bf16.mxu0 0
        %7250 = vmatpush1.bf16.msra.mxu0 %v7211
        %7251 = vmatprep.subr.bf16.mxu0 0
        %7252 = vmatpush1.bf16.msra.mxu0 %v7212
        %7253 = vmatprep.subr.bf16.mxu0 0
        %7254 = vmatpush1.bf16.msra.mxu0 %v7213
        %7255 = vmatprep.subr.bf16.mxu0 0
        %7256 = vmatpush1.bf16.msra.mxu0 %v7214
        %7257 = vmatprep.subr.bf16.mxu0 0
        %7258 = vmatpush1.bf16.msra.mxu0 %v7215
        %7259 = vmatprep.subr.bf16.mxu0 0
        %7260 = vmatpush1.bf16.msra.mxu0 %v7216
        %7261 = vmatprep.subr.bf16.mxu0 0
        %7262 = vmatpush1.bf16.msra.mxu0 %v7217
        %7263 = vmatprep.subr.bf16.mxu0 0
        %7264 = vmatpush1.bf16.msra.mxu0 %v7218
        %7265 = vmatprep.subr.bf16.mxu0 0
        %7266 = vmatpush1.bf16.msra.mxu0 %v7219
        %7267 = vmatprep.subr.bf16.mxu0 0
        %7268 = vmatpush1.bf16.msra.mxu0 %v7220
        %7269 = vmatprep.mubr.bf16.mxu0 %v7126
        %7270 = vmatmul.mubr.bf16.gmra.mrb[0].mxu0 %v7125
        %v7271 = vpop.f32.mrb[0].mxu0
        %v7272 = vadd.f32 0.0, %v7271
        %v7273 = vpop.f32.mrb[0].mxu0
        %v7274 = vpop.f32.mrb[0].mxu0
        %v7275 = vadd.f32 0.0, %v7274
        %v7276 = vpop.f32.mrb[0].mxu0
        %7277 = vmatprep.mubr.bf16.mxu0 %v7128
        %7278 = vmatmul.mubr.bf16.gmra.mrb[0].mxu0 %v7127
        %v7279 = vpop.f32.mrb[0].mxu0
        %v7280 = vadd.f32 0.0, %v7279
        %v7281 = vpop.f32.mrb[0].mxu0
        %v7282 = vpop.f32.mrb[0].mxu0
        %v7283 = vadd.f32 0.0, %v7282
        %v7284 = vpop.f32.mrb[0].mxu0
        %7285 = vmatprep.mubr.bf16.mxu0 %v7130
        %7286 = vmatmul.mubr.bf16.gmra.mrb[0].mxu0 %v7129
        %v7287 = vpop.f32.mrb[0].mxu0
        %v7288 = vadd.f32 0.0, %v7287
        %v7289 = vpop.f32.mrb[0].mxu0
        %v7290 = vpop.f32.mrb[0].mxu0
        %v7291 = vadd.f32 0.0, %v7290
        %v7292 = vpop.f32.mrb[0].mxu0
        %7293 = vmatprep.mubr.bf16.mxu0 %v7132
        %7294 = vmatmul.mubr.bf16.gmra.mrb[0].mxu0 %v7131
        %v7295 = vpop.f32.mrb[0].mxu0
        %v7296 = vadd.f32 0.0, %v7295
        %v7297 = vpop.f32.mrb[0].mxu0
        %v7298 = vpop.f32.mrb[0].mxu0
        %v7299 = vadd.f32 0.0, %v7298
        %v7300 = vpop.f32.mrb[0].mxu0
        %7301 = vmatprep.mubr.bf16.mxu0 %v7134
        %7302 = vmatmul.mubr.bf16.gmra.mrb[0].mxu0 %v7133
        %v7303 = vpop.f32.mrb[0].mxu0
        %v7304 = vadd.f32 0.0, %v7303
        %v7305 = vpop.f32.mrb[0].mxu0
        %v7306 = vpop.f32.mrb[0].mxu0
        %v7307 = vadd.f32 0.0, %v7306
        %v7308 = vpop.f32.mrb[0].mxu0
        %7309 = vmatprep.mubr.bf16.mxu0 %v7136
        %7310 = vmatmul.mubr.bf16.gmra.mrb[0].mxu0 %v7135
        %v7311 = vpop.f32.mrb[0].mxu0
        %v7312 = vadd.f32 0.0, %v7311
        %v7313 = vpop.f32.mrb[0].mxu0
        %v7314 = vpop.f32.mrb[0].mxu0
        %v7315 = vadd.f32 0.0, %v7314
        %v7316 = vpop.f32.mrb[0].mxu0
        %7317 = vmatprep.mubr.bf16.mxu0 %v7138
        %7318 = vmatmul.mubr.bf16.gmra.mrb[0].mxu0 %v7137
        %v7319 = vpop.f32.mrb[0].mxu0
        %v7320 = vadd.f32 0.0, %v7319
        %v7321 = vpop.f32.mrb[0].mxu0
        %v7322 = vpop.f32.mrb[0].mxu0
        %v7323 = vadd.f32 0.0, %v7322
        %v7324 = vpop.f32.mrb[0].mxu0
        %7325 = vmatprep.mubr.bf16.mxu0 %v7140
        %7326 = vmatmul.mubr.bf16.gmra.mrb[0].mxu0 %v7139
        %v7327 = vpop.f32.mrb[0].mxu0
        %v7328 = vadd.f32 0.0, %v7327
        %v7329 = vpop.f32.mrb[0].mxu0
        %v7330 = vpop.f32.mrb[0].mxu0
        %v7331 = vadd.f32 0.0, %v7330
        %v7332 = vpop.f32.mrb[0].mxu0
        %7333 = vdwg.mxu0
        %v7334 = vadd.f32 %v6815, %v7272
        %v7335 = vadd.f32 %v6816, %v7275
        %v7336 = vadd.f32 %v6817, %v7280
        %v7337 = vadd.f32 %v6818, %v7283
        %v7338 = vadd.f32 %v6819, %v7288
        %v7339 = vadd.f32 %v6820, %v7291
        %v7340 = vadd.f32 %v6821, %v7296
        %v7341 = vadd.f32 %v6822, %v7299
        %v7342 = vadd.f32 %v6823, %v7304
        %v7343 = vadd.f32 %v6824, %v7307
        %v7344 = vadd.f32 %v6825, %v7312
        %v7345 = vadd.f32 %v6826, %v7315
        %v7346 = vadd.f32 %v6827, %v7320
        %v7347 = vadd.f32 %v6828, %v7323
        %v7348 = vadd.f32 %v6829, %v7328
        %v7349 = vadd.f32 %v6830, %v7331
        %v7350 = vld [vmem:[#allocation7 + $0x14] ss:$0 sm:$0xff]
        %v7351 = vadd.f32 %v7334, %v7350
        %v7352 = vadd.f32 %v7335, %v7350
        %v7353 = vadd.f32 %v7336, %v7350
        %v7354 = vadd.f32 %v7337, %v7350
        %v7355 = vadd.f32 %v7338, %v7350
        %v7356 = vadd.f32 %v7339, %v7350
        %v7357 = vadd.f32 %v7340, %v7350
        %v7358 = vadd.f32 %v7341, %v7350
        %v7359 = vadd.f32 %v7342, %v7350
        %v7360 = vadd.f32 %v7343, %v7350
        %v7361 = vadd.f32 %v7344, %v7350
        %v7362 = vadd.f32 %v7345, %v7350
        %v7363 = vadd.f32 %v7346, %v7350
        %v7364 = vadd.f32 %v7347, %v7350
        %v7365 = vadd.f32 %v7348, %v7350
        %v7366 = vadd.f32 %v7349, %v7350
        %v7367 = vld [vmem:[#allocation7 + $0x17] ss:$0 sm:$0xff]
        %v7368 = vld [vmem:[#allocation7 + $0x20] ss:$0 sm:$0xff]
        %7369 = vadd.xlane.f32.xlu0 %v7351
        %v7370 = vpop.xlane.xlu0 %7369
        %7371 = vadd.xlane.f32.xlu0 %v7352
        %v7372 = vpop.xlane.xlu0 %7371
        %7373 = vadd.xlane.f32.xlu0 %v7353
        %v7374 = vpop.xlane.xlu0 %7373
        %7375 = vadd.xlane.f32.xlu0 %v7354
        %v7376 = vpop.xlane.xlu0 %7375
        %7377 = vadd.xlane.f32.xlu0 %v7355
        %v7378 = vpop.xlane.xlu0 %7377
        %7379 = vadd.xlane.f32.xlu0 %v7356
        %v7380 = vpop.xlane.xlu0 %7379
        %7381 = vadd.xlane.f32.xlu0 %v7357
        %v7382 = vpop.xlane.xlu0 %7381
        %7383 = vadd.xlane.f32.xlu0 %v7358
        %v7384 = vpop.xlane.xlu0 %7383
        %7385 = vadd.xlane.f32.xlu0 %v7359
        %v7386 = vpop.xlane.xlu0 %7385
        %7387 = vadd.xlane.f32.xlu0 %v7360
        %v7388 = vpop.xlane.xlu0 %7387
        %7389 = vadd.xlane.f32.xlu0 %v7361
        %v7390 = vpop.xlane.xlu0 %7389
        %7391 = vadd.xlane.f32.xlu0 %v7362
        %v7392 = vpop.xlane.xlu0 %7391
        %7393 = vadd.xlane.f32.xlu0 %v7363
        %v7394 = vpop.xlane.xlu0 %7393
        %7395 = vadd.xlane.f32.xlu0 %v7364
        %v7396 = vpop.xlane.xlu0 %7395
        %7397 = vadd.xlane.f32.xlu0 %v7365
        %v7398 = vpop.xlane.xlu0 %7397
        %7399 = vadd.xlane.f32.xlu0 %v7366
        %v7400 = vpop.xlane.xlu0 %7399
        %v7401 = vmul.f32 %v7370, 0.0078125
        %v7402 = vmul.f32 %v7372, 0.0078125
        %v7403 = vmul.f32 %v7374, 0.0078125
        %v7404 = vmul.f32 %v7376, 0.0078125
        %v7405 = vmul.f32 %v7378, 0.0078125
        %v7406 = vmul.f32 %v7380, 0.0078125
        %v7407 = vmul.f32 %v7382, 0.0078125
        %v7408 = vmul.f32 %v7384, 0.0078125
        %v7409 = vmul.f32 %v7386, 0.0078125
        %v7410 = vmul.f32 %v7388, 0.0078125
        %v7411 = vmul.f32 %v7390, 0.0078125
        %v7412 = vmul.f32 %v7392, 0.0078125
        %v7413 = vmul.f32 %v7394, 0.0078125
        %v7414 = vmul.f32 %v7396, 0.0078125
        %v7415 = vmul.f32 %v7398, 0.0078125
        %v7416 = vmul.f32 %v7400, 0.0078125
        %v7417 = vmul.f32 %v7351, %v7351
        %v7418 = vmul.f32 %v7352, %v7352
        %v7419 = vmul.f32 %v7353, %v7353
        %v7420 = vmul.f32 %v7354, %v7354
        %v7421 = vmul.f32 %v7355, %v7355
        %v7422 = vmul.f32 %v7356, %v7356
        %v7423 = vmul.f32 %v7357, %v7357
        %v7424 = vmul.f32 %v7358, %v7358
        %v7425 = vmul.f32 %v7359, %v7359
        %v7426 = vmul.f32 %v7360, %v7360
        %v7427 = vmul.f32 %v7361, %v7361
        %v7428 = vmul.f32 %v7362, %v7362
        %v7429 = vmul.f32 %v7363, %v7363
        %v7430 = vmul.f32 %v7364, %v7364
        %v7431 = vmul.f32 %v7365, %v7365
        %v7432 = vmul.f32 %v7366, %v7366
        %7433 = vadd.xlane.f32.xlu0 %v7417
        %v7434 = vpop.xlane.xlu0 %7433
        %7435 = vadd.xlane.f32.xlu0 %v7418
        %v7436 = vpop.xlane.xlu0 %7435
        %7437 = vadd.xlane.f32.xlu0 %v7419
        %v7438 = vpop.xlane.xlu0 %7437
        %7439 = vadd.xlane.f32.xlu0 %v7420
        %v7440 = vpop.xlane.xlu0 %7439
        %7441 = vadd.xlane.f32.xlu0 %v7421
        %v7442 = vpop.xlane.xlu0 %7441
        %7443 = vadd.xlane.f32.xlu0 %v7422
        %v7444 = vpop.xlane.xlu0 %7443
        %7445 = vadd.xlane.f32.xlu0 %v7423
        %v7446 = vpop.xlane.xlu0 %7445
        %7447 = vadd.xlane.f32.xlu0 %v7424
        %v7448 = vpop.xlane.xlu0 %7447
        %7449 = vadd.xlane.f32.xlu0 %v7425
        %v7450 = vpop.xlane.xlu0 %7449
        %7451 = vadd.xlane.f32.xlu0 %v7426
        %v7452 = vpop.xlane.xlu0 %7451
        %7453 = vadd.xlane.f32.xlu0 %v7427
        %v7454 = vpop.xlane.xlu0 %7453
        %7455 = vadd.xlane.f32.xlu0 %v7428
        %v7456 = vpop.xlane.xlu0 %7455
        %7457 = vadd.xlane.f32.xlu0 %v7429
        %v7458 = vpop.xlane.xlu0 %7457
        %7459 = vadd.xlane.f32.xlu0 %v7430
        %v7460 = vpop.xlane.xlu0 %7459
        %7461 = vadd.xlane.f32.xlu0 %v7431
        %v7462 = vpop.xlane.xlu0 %7461
        %7463 = vadd.xlane.f32.xlu0 %v7432
        %v7464 = vpop.xlane.xlu0 %7463
        %v7465 = vmul.f32 %v7434, 0.0078125
        %v7466 = vmul.f32 %v7436, 0.0078125
        %v7467 = vmul.f32 %v7438, 0.0078125
        %v7468 = vmul.f32 %v7440, 0.0078125
        %v7469 = vmul.f32 %v7442, 0.0078125
        %v7470 = vmul.f32 %v7444, 0.0078125
        %v7471 = vmul.f32 %v7446, 0.0078125
        %v7472 = vmul.f32 %v7448, 0.0078125
        %v7473 = vmul.f32 %v7450, 0.0078125
        %v7474 = vmul.f32 %v7452, 0.0078125
        %v7475 = vmul.f32 %v7454, 0.0078125
        %v7476 = vmul.f32 %v7456, 0.0078125
        %v7477 = vmul.f32 %v7458, 0.0078125
        %v7478 = vmul.f32 %v7460, 0.0078125
        %v7479 = vmul.f32 %v7462, 0.0078125
        %v7480 = vmul.f32 %v7464, 0.0078125
        %v7481 = vmul.f32 %v7401, %v7401
        %v7482 = vmul.f32 %v7402, %v7402
        %v7483 = vmul.f32 %v7403, %v7403
        %v7484 = vmul.f32 %v7404, %v7404
        %v7485 = vmul.f32 %v7405, %v7405
        %v7486 = vmul.f32 %v7406, %v7406
        %v7487 = vmul.f32 %v7407, %v7407
        %v7488 = vmul.f32 %v7408, %v7408
        %v7489 = vmul.f32 %v7409, %v7409
        %v7490 = vmul.f32 %v7410, %v7410
        %v7491 = vmul.f32 %v7411, %v7411
        %v7492 = vmul.f32 %v7412, %v7412
        %v7493 = vmul.f32 %v7413, %v7413
        %v7494 = vmul.f32 %v7414, %v7414
        %v7495 = vmul.f32 %v7415, %v7415
        %v7496 = vmul.f32 %v7416, %v7416
        %v7497 = vsub.f32 %v7465, %v7481
        %v7498 = vsub.f32 %v7466, %v7482
        %v7499 = vsub.f32 %v7467, %v7483
        %v7500 = vsub.f32 %v7468, %v7484
        %v7501 = vsub.f32 %v7469, %v7485
        %v7502 = vsub.f32 %v7470, %v7486
        %v7503 = vsub.f32 %v7471, %v7487
        %v7504 = vsub.f32 %v7472, %v7488
        %v7505 = vsub.f32 %v7473, %v7489
        %v7506 = vsub.f32 %v7474, %v7490
        %v7507 = vsub.f32 %v7475, %v7491
        %v7508 = vsub.f32 %v7476, %v7492
        %v7509 = vsub.f32 %v7477, %v7493
        %v7510 = vsub.f32 %v7478, %v7494
        %v7511 = vsub.f32 %v7479, %v7495
        %v7512 = vsub.f32 %v7480, %v7496
        %v7513 = vsub.f32 %v7351, %v7401
        %v7514 = vsub.f32 %v7352, %v7402
        %v7515 = vsub.f32 %v7353, %v7403
        %v7516 = vsub.f32 %v7354, %v7404
        %v7517 = vsub.f32 %v7355, %v7405
        %v7518 = vsub.f32 %v7356, %v7406
        %v7519 = vsub.f32 %v7357, %v7407
        %v7520 = vsub.f32 %v7358, %v7408
        %v7521 = vsub.f32 %v7359, %v7409
        %v7522 = vsub.f32 %v7360, %v7410
        %v7523 = vsub.f32 %v7361, %v7411
        %v7524 = vsub.f32 %v7362, %v7412
        %v7525 = vsub.f32 %v7363, %v7413
        %v7526 = vsub.f32 %v7364, %v7414
        %v7527 = vsub.f32 %v7365, %v7415
        %v7528 = vsub.f32 %v7366, %v7416
        %v7529 = vadd.f32 %v7497, 1e-05
        %v7530 = vadd.f32 %v7498, 1e-05
        %v7531 = vadd.f32 %v7499, 1e-05
        %v7532 = vadd.f32 %v7500, 1e-05
        %v7533 = vadd.f32 %v7501, 1e-05
        %v7534 = vadd.f32 %v7502, 1e-05
        %v7535 = vadd.f32 %v7503, 1e-05
        %v7536 = vadd.f32 %v7504, 1e-05
        %v7537 = vadd.f32 %v7505, 1e-05
        %v7538 = vadd.f32 %v7506, 1e-05
        %v7539 = vadd.f32 %v7507, 1e-05
        %v7540 = vadd.f32 %v7508, 1e-05
        %v7541 = vadd.f32 %v7509, 1e-05
        %v7542 = vadd.f32 %v7510, 1e-05
        %v7543 = vadd.f32 %v7511, 1e-05
        %v7544 = vadd.f32 %v7512, 1e-05
        %v7545 = vrsqrt.pop %v7529
        %v7546 = vrsqrt.pop %v7530
        %v7547 = vrsqrt.pop %v7531
        %v7548 = vrsqrt.pop %v7532
        %v7549 = vrsqrt.pop %v7533
        %v7550 = vrsqrt.pop %v7534
        %v7551 = vrsqrt.pop %v7535
        %v7552 = vrsqrt.pop %v7536
        %v7553 = vrsqrt.pop %v7537
        %v7554 = vrsqrt.pop %v7538
        %v7555 = vrsqrt.pop %v7539
        %v7556 = vrsqrt.pop %v7540
        %v7557 = vrsqrt.pop %v7541
        %v7558 = vrsqrt.pop %v7542
        %v7559 = vrsqrt.pop %v7543
        %v7560 = vrsqrt.pop %v7544
        %v7561 = vmul.f32 %v7513, %v7545
        %v7562 = vmul.f32 %v7514, %v7546
        %v7563 = vmul.f32 %v7515, %v7547
        %v7564 = vmul.f32 %v7516, %v7548
        %v7565 = vmul.f32 %v7517, %v7549
        %v7566 = vmul.f32 %v7518, %v7550
        %v7567 = vmul.f32 %v7519, %v7551
        %v7568 = vmul.f32 %v7520, %v7552
        %v7569 = vmul.f32 %v7521, %v7553
        %v7570 = vmul.f32 %v7522, %v7554
        %v7571 = vmul.f32 %v7523, %v7555
        %v7572 = vmul.f32 %v7524, %v7556
        %v7573 = vmul.f32 %v7525, %v7557
        %v7574 = vmul.f32 %v7526, %v7558
        %v7575 = vmul.f32 %v7527, %v7559
        %v7576 = vmul.f32 %v7528, %v7560
        %v7577 = vmul.f32 %v7561, %v7367
        %v7578 = vmul.f32 %v7562, %v7367
        %v7579 = vmul.f32 %v7563, %v7367
        %v7580 = vmul.f32 %v7564, %v7367
        %v7581 = vmul.f32 %v7565, %v7367
        %v7582 = vmul.f32 %v7566, %v7367
        %v7583 = vmul.f32 %v7567, %v7367
        %v7584 = vmul.f32 %v7568, %v7367
        %v7585 = vmul.f32 %v7569, %v7367
        %v7586 = vmul.f32 %v7570, %v7367
        %v7587 = vmul.f32 %v7571, %v7367
        %v7588 = vmul.f32 %v7572, %v7367
        %v7589 = vmul.f32 %v7573, %v7367
        %v7590 = vmul.f32 %v7574, %v7367
        %v7591 = vmul.f32 %v7575, %v7367
        %v7592 = vmul.f32 %v7576, %v7367
        %v7593 = vadd.f32 %v7577, %v7368
        %v7594 = vadd.f32 %v7578, %v7368
        %v7595 = vadd.f32 %v7579, %v7368
        %v7596 = vadd.f32 %v7580, %v7368
        %v7597 = vadd.f32 %v7581, %v7368
        %v7598 = vadd.f32 %v7582, %v7368
        %v7599 = vadd.f32 %v7583, %v7368
        %v7600 = vadd.f32 %v7584, %v7368
        %v7601 = vadd.f32 %v7585, %v7368
        %v7602 = vadd.f32 %v7586, %v7368
        %v7603 = vadd.f32 %v7587, %v7368
        %v7604 = vadd.f32 %v7588, %v7368
        %v7605 = vadd.f32 %v7589, %v7368
        %v7606 = vadd.f32 %v7590, %v7368
        %v7607 = vadd.f32 %v7591, %v7368
        %v7608 = vadd.f32 %v7592, %v7368
        %7609 = vst [vmem:[%s259] sm:$0xff] %v7593
        %7610 = vst [vmem:[%s259 + $0x8] sm:$0xff] %v7594
        %7611 = vst [vmem:[%s259 + $0x10] sm:$0xff] %v7595
        %7612 = vst [vmem:[%s259 + $0x18] sm:$0xff] %v7596
        %7613 = vst [vmem:[%s259 + $0x20] sm:$0xff] %v7597
        %7614 = vst [vmem:[%s259 + $0x28] sm:$0xff] %v7598
        %7615 = vst [vmem:[%s259 + $0x30] sm:$0xff] %v7599
        %7616 = vst [vmem:[%s259 + $0x38] sm:$0xff] %v7600
        %7617 = vst [vmem:[%s259 + $0x40] sm:$0xff] %v7601
        %7618 = vst [vmem:[%s259 + $0x48] sm:$0xff] %v7602
        %7619 = vst [vmem:[%s259 + $0x50] sm:$0xff] %v7603
        %7620 = vst [vmem:[%s259 + $0x58] sm:$0xff] %v7604
        %7621 = vst [vmem:[%s259 + $0x60] sm:$0xff] %v7605
        %7622 = vst [vmem:[%s259 + $0x68] sm:$0xff] %v7606
        %7623 = vst [vmem:[%s259 + $0x70] sm:$0xff] %v7607
        %7624 = vst [vmem:[%s259 + $0x78] sm:$0xff] %v7608
        %s7625 = sand.u32 %s120, 1
        %s7626 = scalar_lea.sflag [#allocation4], %s7625
        %s7627 = sand.u32 %s120, 1
        %s7628 = smul.addr %s7627, 128
        %s7629 = scalar_lea.vmem [#allocation10], %s7628
        // Predicated region
        $region53: #{tpu_custom_call.1} parent=35 // pred_check
          %p7630 = pneg %p130
        $region54: #{tpu_custom_call.1} parent=35 // pred_check_branch
          %7632 = sbr.rel (%p7630) target = $region56
        $region55: #{tpu_custom_call.1} parent=35 // pred_region
          %s7633 = smul.u32 16, %s23
          %s7635 = ssub.s32 2048, 2048
          %7636 = vsyncadd %s7626, %s7635
          %s7637 = smul.addr %s7633, 128
          %s7638 = scalar_lea.hbm %s4, %s7637
          %s7639 = sshll.u32 %s7629, 4
          %s7640 = int_to_ptr.vmem [resolvable:$true] %s7639
          %7645 = dma.vmem_to_hbm [thread:$0]  %s7640, 2048, %s7638, %s7626, 128, 128, 8
        $region56: #{tpu_custom_call.1} parent=35 // pred_fallthru
          _
      $region36: #{tpu_custom_call.1} parent=5 // pred_fallthru
        _
      %p7646 = scmp.le.s32.totalorder 2, %s18
      // Predicated region
      $region57: #{tpu_custom_call.1} parent=5 // pred_check
        %p7647 = pneg %p7646
      $region58: #{tpu_custom_call.1} parent=5 // pred_check_branch
        %7649 = sbr.rel (%p7647) target = $region60
      $region59: #{tpu_custom_call.1} parent=5 // pred_region
        %s7650 = ssub.s32 %s18, 2
        // Predicated region
        $region61: #{tpu_custom_call.1} parent=59 // pred_check
          %p7651 = pneg %p136
        $region62: #{tpu_custom_call.1} parent=59 // pred_check_branch
          %7653 = sbr.rel (%p7651) target = $region64
        $region63: #{tpu_custom_call.1} parent=59 // pred_region
          %s7654 = sand.u32 %s121, 1
          %s7655 = scalar_lea.sflag [#allocation4], %s7654
          %s7656 = sand.u32 %s121, 1
          %s7657 = smul.addr %s7656, 128
          %s7658 = scalar_lea.vmem [#allocation10], %s7657
          %7659 = dma.done %s7655, 2048
        $region64: #{tpu_custom_call.1} parent=59 // pred_fallthru
          _
      $region60: #{tpu_custom_call.1} parent=5 // pred_fallthru
        _
    $region6: #{tpu_custom_call.1} parent=1 // loop_footer
      %s22 = sadd.s32 1, %s18
    $region7: #{tpu_custom_call.1} parent=1 // loop_footer_branch
      %17 = sbr.rel target = $region3
    $region8: #{tpu_custom_call.1} parent=1 // loop_exit
      _
    %7660 = vsyncpa [#allocation3], 1
    %s7661 = scalar_lea.sflag [#allocation3], 1
    %7662 = vsyncpa %s7661, 1
    %7663 = vsyncpa [#allocation6], 1
    %7664 = vsyncpa [#allocation9], 1
    %7665 = vsyncpa [#allocation4], 1
    %s7666 = scalar_lea.sflag [#allocation4], 1
    %7667 = vsyncpa %s7666, 1

</llo_original>
